<compile_context>
chip_gen: v5e
topology: v5e:2x2
jax: 0.10.0
libtpu: 0.0.40
codegen_flags: <defaults>
</compile_context>

<pallas_src>
import math

import jax
import jax.numpy as jnp
from jax.experimental import pallas as pl
from jax.experimental.pallas import tpu as pltpu

# ----------------------------- configuration (module defaults, small sizes) -------------
D_MODEL = 32          # d_model (== hidden_size_per_partition at world_size=1)
EMB_DIM = 5           # odd, >= 3  -> bands = (emb_dim - 1) // 2 = 2
EMB_PAD = 8           # emb_dim padded to a full sublane group (zero rows/cols, exact math)
ORDER = 16            # FFN width
SEQ_LEN = 1024        # L (module default seq_len)
NUM_INNER_MLPS = 2
W_SIN = 1.0           # Sin(dim=order, w=w) with w=1
SHIFT = 0.0           # ParallelExponentialModulation shift default
FAST_DECAY_PCT = 0.3  # global_config.hyena_filter_fast_decay (savanna default)
SLOW_DECAY_PCT = 1.5  # global_config.hyena_filter_slow_decay (savanna default)
TARGET = 1e-2

# Packed-parameter block layout (rows x 16 lanes, zero padded):
R_W0 = 0                          # rows [0, 16):   freq-folded w0^T  (ORDER, EMB_PAD)
R_W1 = R_W0 + ORDER               # rows [16, 32):  freq-folded w1^T  (ORDER, ORDER)
R_W2 = R_W1 + ORDER               # rows [32, 48):  freq-folded w2^T  (ORDER, ORDER)
R_WF = R_W2 + ORDER               # rows [48, 80):  w_final^T         (D_MODEL, ORDER)
R_SM = R_WF + D_MODEL             # rows [80, 112): cols 0..2 = b0',b1',b2' ; col 3 = -|deltas|
P_ROWS = ((R_SM + D_MODEL + 7) // 8) * 8   # 112 (sublane-group aligned)
P_COLS = max(ORDER, EMB_PAD, 4)            # 16

# TODO(synk): normalized=True (post-modulation LayerNorm) path not exercised (default is
# False in the module); filter_dropout is not implemented in the reference module either.


# ----------------------------- Pallas kernel --------------------------------------------
def _filter_kernel(zt_ref, wp_ref, o_ref):
    """One lane-tile of TL positions: implicit-filter MLP + exponential modulation.

    zt_ref: (EMB_PAD, TL)     z^T, zero-padded rows; row 0 is normalized time t
    wp_ref: (P_ROWS, P_COLS)  packed freq-folded weights, biases and -|deltas| (see layout)
    o_ref:  (D_MODEL, TL)     output, already in 'D L' layout (lane-dense)
    """
    zt = zt_ref[...]                                   # (EMB_PAD, TL)
    t = zt[0:1, :]                                     # (1, TL) normalized time

    # Static slices of the single packed parameter block (one replicated DMA).
    w0t = wp_ref[R_W0:R_W0 + ORDER, 0:EMB_PAD]         # (ORDER, EMB_PAD)
    w1t = wp_ref[R_W1:R_W1 + ORDER, 0:ORDER]           # (ORDER, ORDER)
    w2t = wp_ref[R_W2:R_W2 + ORDER, 0:ORDER]           # (ORDER, ORDER)
    wft = wp_ref[R_WF:R_WF + D_MODEL, 0:ORDER]         # (D_MODEL, ORDER)
    b0 = wp_ref[R_SM:R_SM + ORDER, 0:1]                # (ORDER, 1)
    b1 = wp_ref[R_SM:R_SM + ORDER, 1:2]
    b2 = wp_ref[R_SM:R_SM + ORDER, 2:3]
    neg_abs_deltas = wp_ref[R_SM:R_SM + D_MODEL, 3:4]  # (D_MODEL, 1)

    # implicit_filter: Linear -> Sin -> (Linear -> Sin) x num_inner_mlps
    # (sin frequency already folded into weights/biases at prep time)
    h = jnp.sin(jnp.dot(w0t, zt, preferred_element_type=jnp.float32) + b0)   # (ORDER, TL)
    h = jnp.sin(jnp.dot(w1t, h, preferred_element_type=jnp.float32) + b1)
    h = jnp.sin(jnp.dot(w2t, h, preferred_element_type=jnp.float32) + b2)

    # final_filter (bias-free)
    h = jnp.dot(wft, h, preferred_element_type=jnp.float32)                  # (D_MODEL, TL)

    # ParallelExponentialModulation: x * (exp(-t * |deltas|) + shift)
    # Kept in-kernel: the exp runs on the EUP slot, hidden under the matmul/sin work.
    decay = jnp.exp(t * neg_abs_deltas)                                      # (D_MODEL, TL)
    mod = decay + SHIFT if SHIFT != 0.0 else decay
    o_ref[...] = (h * mod).astype(o_ref.dtype)


# ----------------------------- one-time operand preparation -----------------------------
def prepare_operands(z, params):
    """One-time constant folding / layout prep.

    zt depends only on L (build once at init); the packed weight block depends only on the
    parameters (cache it alongside them for inference) -- neither is rebuilt per forward.
    """
    L = z.shape[0]
    freq = params["sin_freq"]                               # (1, ORDER)

    # Fold Sin frequency into the preceding Linear layers (column scaling).
    w0f = params["w0"] * freq
    b0f = params["b0"] * freq
    w1f = params["w1"] * freq
    b1f = params["b1"] * freq
    w2f = params["w2"] * freq
    b2f = params["b2"] * freq

    # Single packed, zero-padded parameter block (one aligned DMA in the kernel).
    packed = jnp.zeros((P_ROWS, P_COLS), jnp.float32)
    packed = packed.at[R_W0:R_W0 + ORDER, :EMB_DIM].set(w0f.T)
    packed = packed.at[R_W1:R_W1 + ORDER, :ORDER].set(w1f.T)
    packed = packed.at[R_W2:R_W2 + ORDER, :ORDER].set(w2f.T)
    packed = packed.at[R_WF:R_WF + D_MODEL, :ORDER].set(params["w_final"].T)
    packed = packed.at[R_SM:R_SM + ORDER, 0].set(b0f[0])
    packed = packed.at[R_SM:R_SM + ORDER, 1].set(b1f[0])
    packed = packed.at[R_SM:R_SM + ORDER, 2].set(b2f[0])
    packed = packed.at[R_SM:R_SM + D_MODEL, 3].set(-jnp.abs(params["deltas"][0]))

    # z^T, zero-padded to EMB_PAD rows (row 0 is t, reused by the modulation).
    zt = jnp.zeros((EMB_PAD, L), jnp.float32).at[:EMB_DIM, :].set(z.T)

    return zt, packed


def _pick_seq_tile(L):
    """Generation-aware sequence tile.

    v5e/v6e: single TensorCore -> a multi-step grid is a serial loop paying ~0.35 us/step
    of revolving-buffer overhead; use one full-length tile.
    v7x: two TensorCores/chip -> split the sequence in two so the 'parallel' grid axis can
    be sharded across cores.
    """
    try:
        kind = jax.devices()[0].device_kind.lower()
    except Exception:
        kind = ""
    if "v7" in kind and (L // 2) % 128 == 0:
        return L // 2
    return L


# ----------------------------- forward (pallas_call wrapper) ----------------------------
def implicit_freeform_filter(zt, packed, *, out_dtype=jnp.float32):
    """Runs the Pallas kernel; output is already in the 'D (1 L)' layout.

    Pass out_dtype=jnp.bfloat16 to halve the dominant HBM writeback if the downstream
    FFT-convolution accepts a bf16 filter.
    """
    emb_pad, L = zt.shape
    assert emb_pad == EMB_PAD and packed.shape == (P_ROWS, P_COLS)

    tl = _pick_seq_tile(L)
    assert L % tl == 0 and tl % 128 == 0
    grid = (L // tl,)

    seq = lambda i: (0, i)    # tiled along L (lane axis)
    full = lambda i: (0, 0)   # replicated packed-parameter block

    # VMEM guard: per-step footprint here is ~0.3 MiB (double-buffered). When d_model
    # scales to production size, the (D_MODEL, tl) output block dominates -- shrink tl
    # or add a D_MODEL grid axis and set vmem_limit_bytes (v7x has only 64 MiB VMEM).
    return pl.pallas_call(
        _filter_kernel,
        out_shape=jax.ShapeDtypeStruct((D_MODEL, L), out_dtype),
        grid=grid,
        in_specs=[
            pl.BlockSpec((EMB_PAD, tl), seq),        # z^T
            pl.BlockSpec((P_ROWS, P_COLS), full),    # packed weights/biases/-|deltas|
        ],
        out_specs=pl.BlockSpec((D_MODEL, tl), seq),
        compiler_params=pltpu.CompilerParams(dimension_semantics=("parallel",)),
    )(zt, packed)


# ----------------------------- plain-JAX glue: buffers & parameters ---------------------
def positional_embedding(L, emb_dim):
    """fourier_fixed PositionalEmbedding: z = [t, Re(exp(-i f w)), Im(exp(-i f w))]."""
    t = jnp.linspace(0.0, 1.0, L, dtype=jnp.float32)[:, None]              # (L, 1)
    bands = (emb_dim - 1) // 2
    t_rescaled = jnp.linspace(0.0, L - 1, L, dtype=jnp.float32)[:, None]   # (L, 1)
    w = 2.0 * math.pi * t_rescaled / L                                     # (L, 1)
    f = jnp.linspace(1e-4, bands - 1, bands, dtype=jnp.float32)[None, :]   # (1, bands)
    z_real = jnp.cos(f * w)                                                # Re(exp(-i f w))
    z_imag = -jnp.sin(f * w)                                               # Im(exp(-i f w))
    z = jnp.concatenate([t, z_real, z_imag], axis=-1)                      # (L, emb_dim)
    return z, t


def init_params(key):
    """Deterministic synthetic weights matching the module's parameter shapes."""
    ks = jax.random.split(key, 8)

    def lin(kw, fan_in, fan_out):
        bound = 1.0 / math.sqrt(fan_in)
        return jax.random.uniform(kw, (fan_in, fan_out), jnp.float32, -bound, bound)

    def bias(kb, fan_in, fan_out):
        bound = 1.0 / math.sqrt(fan_in)
        return jax.random.uniform(kb, (1, fan_out), jnp.float32, -bound, bound)

    # xavier_normal_ for final_filter
    xav_std = math.sqrt(2.0 / (ORDER + D_MODEL))
    w_final = xav_std * jax.random.normal(ks[6], (ORDER, D_MODEL), jnp.float32)

    # ParallelExponentialModulation deltas (world_size=1 -> full slice)
    max_decay = math.log(TARGET) / FAST_DECAY_PCT
    min_decay = math.log(TARGET) / SLOW_DECAY_PCT
    deltas = jnp.linspace(min_decay, max_decay, D_MODEL, dtype=jnp.float32)[None, :]

    return {
        "w0": lin(ks[0], EMB_DIM, ORDER), "b0": bias(ks[1], EMB_DIM, ORDER),
        "w1": lin(ks[2], ORDER, ORDER),   "b1": bias(ks[3], ORDER, ORDER),
        "w2": lin(ks[4], ORDER, ORDER),   "b2": bias(ks[5], ORDER, ORDER),
        "sin_freq": W_SIN * jnp.ones((1, ORDER), jnp.float32),
        "w_final": w_final,
        "deltas": deltas,
    }


def reference_forward(z, t, p):
    """Pure-JAX reference of the PyTorch forward (for validation)."""
    h = jnp.sin(p["sin_freq"] * (z @ p["w0"] + p["b0"]))
    h = jnp.sin(p["sin_freq"] * (h @ p["w1"] + p["b1"]))
    h = jnp.sin(p["sin_freq"] * (h @ p["w2"] + p["b2"]))
    h = h @ p["w_final"]
    h = h * (jnp.exp(-t * jnp.abs(p["deltas"])) + SHIFT)
    return h.T  # '1 L D -> D (1 L)'


# ----------------------------- main ------------------------------------------------------
if __name__ == "__main__":
    key = jax.random.PRNGKey(0)
    params = init_params(key)

    L = SEQ_LEN
    z, t = positional_embedding(L, EMB_DIM)

    # One-time prep, hoisted out of the per-call path (zt depends only on L; the packed
    # weight block only on the parameters -- cache both across forwards).
    zt, packed = prepare_operands(z, params)
    zt, packed = jax.block_until_ready((zt, packed))

    fwd = jax.jit(implicit_freeform_filter)
    out = jax.block_until_ready(fwd(zt, packed))

    assert out.shape == (D_MODEL, L), out.shape

    ref = reference_forward(z, t, params)
    err = float(jnp.max(jnp.abs(out - ref)))
    assert jnp.allclose(out, ref, rtol=1e-5, atol=1e-5), err

    print("KERNEL_OK")
</pallas_src>

<mosaic_0001>
module attributes {stable_mosaic.version = 11 : i64} {
  func.func @_filter_kernel(%arg0: i32, %arg1: memref<8x1024xf32, #tpu.memory_space<vmem>>, %arg2: memref<112x16xf32, #tpu.memory_space<vmem>>, %arg3: memref<32x1024xf32, #tpu.memory_space<vmem>>) attributes {dimension_semantics = [#tpu.dimension_semantics<parallel>], iteration_bounds = array<i64: 1>, scalar_prefetch = 0 : i64, scratch_operands = 0 : i64, tpu.core_type = #tpu.core_type<tc>, window_params = [{transform_indices = @transform_0, window_bounds = array<i64: 8, 1024>}, {pipeline_mode = #tpu.pipeline_mode<synchronous>, transform_indices = @transform_1, window_bounds = array<i64: 112, 16>}, {transform_indices = @transform_2, window_bounds = array<i64: 32, 1024>}]} {
    %c0 = arith.constant 0 : index
    %c0_0 = arith.constant 0 : index
    %0 = vector.load %arg1[%c0, %c0_0] : memref<8x1024xf32, #tpu.memory_space<vmem>>, vector<8x1024xf32>
    %1 = vector.extract_strided_slice %0 {offsets = [0, 0], sizes = [1, 1024], strides = [1, 1]} : vector<8x1024xf32> to vector<1x1024xf32>
    %c0_1 = arith.constant 0 : index
    %c0_2 = arith.constant 0 : index
    %2 = vector.load %arg2[%c0_1, %c0_2] : memref<112x16xf32, #tpu.memory_space<vmem>>, vector<16x8xf32>
    %c16 = arith.constant 16 : index
    %c0_3 = arith.constant 0 : index
    %3 = vector.load %arg2[%c16, %c0_3] : memref<112x16xf32, #tpu.memory_space<vmem>>, vector<16x16xf32>
    %c32 = arith.constant 32 : index
    %c0_4 = arith.constant 0 : index
    %4 = vector.load %arg2[%c32, %c0_4] : memref<112x16xf32, #tpu.memory_space<vmem>>, vector<16x16xf32>
    %c48 = arith.constant 48 : index
    %c0_5 = arith.constant 0 : index
    %5 = vector.load %arg2[%c48, %c0_5] : memref<112x16xf32, #tpu.memory_space<vmem>>, vector<32x16xf32>
    %c80 = arith.constant 80 : index
    %c0_6 = arith.constant 0 : index
    %6 = vector.load %arg2[%c80, %c0_6] : memref<112x16xf32, #tpu.memory_space<vmem>>, vector<16x1xf32>
    %c80_7 = arith.constant 80 : index
    %c1 = arith.constant 1 : index
    %7 = vector.load %arg2[%c80_7, %c1] : memref<112x16xf32, #tpu.memory_space<vmem>>, vector<16x1xf32>
    %c80_8 = arith.constant 80 : index
    %c2 = arith.constant 2 : index
    %8 = vector.load %arg2[%c80_8, %c2] : memref<112x16xf32, #tpu.memory_space<vmem>>, vector<16x1xf32>
    %c80_9 = arith.constant 80 : index
    %c3 = arith.constant 3 : index
    %9 = vector.load %arg2[%c80_9, %c3] : memref<112x16xf32, #tpu.memory_space<vmem>>, vector<32x1xf32>
    %cst = arith.constant dense<0.000000e+00> : vector<16x1024xf32>
    %10 = tpu.matmul %2, %0, %cst {dimension_numbers = #tpu.dot_dimension_numbers<[1], [0], [0], [1], [0, 0, 1, 1], [], []>} : vector<16x8xf32>, vector<8x1024xf32>, vector<16x1024xf32> -> vector<16x1024xf32>
    %11 = vector.broadcast %6 : vector<16x1xf32> to vector<16x1024xf32>
    %12 = arith.addf %10, %11 : vector<16x1024xf32>
    %13 = math.sin %12 : vector<16x1024xf32>
    %cst_10 = arith.constant dense<0.000000e+00> : vector<16x1024xf32>
    %14 = tpu.matmul %3, %13, %cst_10 {dimension_numbers = #tpu.dot_dimension_numbers<[1], [0], [0], [1], [0, 0, 1, 1], [], []>} : vector<16x16xf32>, vector<16x1024xf32>, vector<16x1024xf32> -> vector<16x1024xf32>
    %15 = vector.broadcast %7 : vector<16x1xf32> to vector<16x1024xf32>
    %16 = arith.addf %14, %15 : vector<16x1024xf32>
    %17 = math.sin %16 : vector<16x1024xf32>
    %cst_11 = arith.constant dense<0.000000e+00> : vector<16x1024xf32>
    %18 = tpu.matmul %4, %17, %cst_11 {dimension_numbers = #tpu.dot_dimension_numbers<[1], [0], [0], [1], [0, 0, 1, 1], [], []>} : vector<16x16xf32>, vector<16x1024xf32>, vector<16x1024xf32> -> vector<16x1024xf32>
    %19 = vector.broadcast %8 : vector<16x1xf32> to vector<16x1024xf32>
    %20 = arith.addf %18, %19 : vector<16x1024xf32>
    %21 = math.sin %20 : vector<16x1024xf32>
    %cst_12 = arith.constant dense<0.000000e+00> : vector<32x1024xf32>
    %22 = tpu.matmul %5, %21, %cst_12 {dimension_numbers = #tpu.dot_dimension_numbers<[1], [0], [0], [1], [0, 0, 1, 1], [], []>} : vector<32x16xf32>, vector<16x1024xf32>, vector<32x1024xf32> -> vector<32x1024xf32>
    %23 = vector.broadcast %1 : vector<1x1024xf32> to vector<32x1024xf32>
    %24 = vector.broadcast %9 : vector<32x1xf32> to vector<32x1024xf32>
    %25 = arith.mulf %23, %24 : vector<32x1024xf32>
    %26 = math.exp %25 : vector<32x1024xf32>
    %27 = arith.mulf %22, %26 : vector<32x1024xf32>
    %c0_13 = arith.constant 0 : index
    %c0_14 = arith.constant 0 : index
    %28 = vector.load %arg3[%c0_13, %c0_14] : memref<32x1024xf32, #tpu.memory_space<vmem>>, vector<32x1024xf32>
    tpu.vector_store %arg3[%c0_13, %c0_14], %27 {strides = array<i32>} : memref<32x1024xf32, #tpu.memory_space<vmem>>, vector<32x1024xf32>,
    return
  }
  func.func @transform_0(%arg0: i32) -> (i32, i32) {
    %c0_i32 = arith.constant 0 : i32
    %c0_i32_0 = arith.constant 0 : i32
    return %c0_i32, %arg0 : i32, i32
  }
  func.func @transform_1(%arg0: i32) -> (i32, i32) {
    %c0_i32 = arith.constant 0 : i32
    %c0_i32_0 = arith.constant 0 : i32
    %c0_i32_1 = arith.constant 0 : i32
    return %c0_i32, %c0_i32_0 : i32, i32
  }
  func.func @transform_2(%arg0: i32) -> (i32, i32) {
    %c0_i32 = arith.constant 0 : i32
    %c0_i32_0 = arith.constant 0 : i32
    return %c0_i32, %arg0 : i32, i32
  }
}

</mosaic_0001>

<llo_original>
// kernel: implicit_freeform_filter.1
$region0: #{implicit_freeform_filter.1}
  #allocation0 [shape = 'u32[]', space=smem, size = 0x4, offset = 0x4, fixed_abs, tag = 'smem constant byte address 0x4 - core index']
  #allocation1 [shape = 'u32[72,128]{1,0:T(1,128)}', space=vmem, size = 0x9000, scoped, tag = 'internal scratch']
  %s0 = inlined_call_operand.vmem [shape: f32[8,1024], index: 0, kind: input, shape index: {}]
  %s1 = inlined_call_operand.vmem [shape: f32[112,16], index: 1, kind: input, shape index: {}]
  %s2 = inlined_call_operand.hbm [shape: f32[32,1024], index: 2, kind: output, shape index: {}]
  %s3 = sld [smem:[#allocation0]]
  $region18: #{implicit_freeform_filter.1} parent=0
    _
  %s5 = ssub.s32 1, %s3
  %s6 = scalar_select 0, %s5, %s3
  $region1: #{implicit_freeform_filter.1} parent=0
    #allocation2 [shape = 'u8[131072]{0}', space=vmem, size = 0x20000, scoped, tag = 'output window, operand 0, single buffered']
    #allocation3 [shape = 's32[1]{0}', space=sflag, size = 0x4, scoped, tag = 'scoped memory for implicit_freeform_filter.1']
    %7 = vsyncpa [#allocation3], 0
    // Predicated region
    $region2: #{implicit_freeform_filter.1} parent=1 // pred_check
      _
    $region3: #{implicit_freeform_filter.1} parent=1 // pred_check_branch
      %9 = sbr.rel (0) target = $region5
    $region4: #{implicit_freeform_filter.1} parent=1 // pred_region
      _
    $region5: #{implicit_freeform_filter.1} parent=1 // pred_fallthru
      _
    // Predicated region
    $region6: #{implicit_freeform_filter.1} parent=1 // pred_check
      _
    $region7: #{implicit_freeform_filter.1} parent=1 // pred_check_branch
      %11 = sbr.rel (0) target = $region9
    $region8: #{implicit_freeform_filter.1} parent=1 // pred_region
      _
    $region9: #{implicit_freeform_filter.1} parent=1 // pred_fallthru
      _
    %v12 = vld [vmem:[%s0] sm:$0xff]
    %v13 = vld [vmem:[%s0 + $0x8] sm:$0xff]
    %v14 = vld [vmem:[%s0 + $0x10] sm:$0xff]
    %v15 = vld [vmem:[%s0 + $0x18] sm:$0xff]
    %v16 = vld [vmem:[%s0 + $0x20] sm:$0xff]
    %v17 = vld [vmem:[%s0 + $0x28] sm:$0xff]
    %v18 = vld [vmem:[%s0 + $0x30] sm:$0xff]
    %v19 = vld [vmem:[%s0 + $0x38] sm:$0xff]
    %v20 = vld [vmem:[%s1] sm:$0xff]
    %v21 = vld [vmem:[%s1 + $0x8] sm:$0xff]
    %v22 = vld [vmem:[%s1 + $0x10] sm:$0xff]
    %v23 = vld [vmem:[%s1 + $0x18] sm:$0xff]
    %v24 = vld [vmem:[%s1 + $0x20] sm:$0xff]
    %v25 = vld [vmem:[%s1 + $0x28] sm:$0xff]
    %v26 = vld [vmem:[%s1 + $0x30] sm:$0xff]
    %v27 = vld [vmem:[%s1 + $0x38] sm:$0xff]
    %v28 = vld [vmem:[%s1 + $0x40] sm:$0xff]
    %v29 = vld [vmem:[%s1 + $0x48] sm:$0xff]
    %v30 = vld [vmem:[%s1 + $0x50] sm:$0xff]
    %v31 = vld [vmem:[%s1 + $0x58] sm:$0xff]
    %v32 = vld [vmem:[%s1 + $0x60] sm:$0xff]
    %v33 = vld [vmem:[%s1 + $0x68] sm:$0xff]
    %35 = vset.pattern.permute.xlu0 0
    %36 = vperm.xlu0 %35, %v30
    %v37 = vpop.permute.xlu0 %36
    %40 = vset.pattern.permute.xlu0 0
    %41 = vperm.xlu0 %40, %v31
    %v42 = vpop.permute.xlu0 %41
    %vm44 = vcmask 64512
    %v46 = vsel %vm44, %v20, 0
    %v49 = vsel %vm44, %v21, 0
    %51 = vmatpush.msra.mxu0 0.0
    %52 = vmatpush.msra.mxu0 0.0
    %53 = vmatpush.msra.mxu0 0.0
    %54 = vmatpush.msra.mxu0 0.0
    %55 = vmatpush.msra.mxu0 0.0
    %56 = vmatpush.msra.mxu0 0.0
    %57 = vmatpush.msra.mxu0 0.0
    %58 = vmatpush.msra.mxu0 0.0
    %59 = vmatpush.msra.mxu0 0.0
    %60 = vmatpush.msra.mxu0 0.0
    %61 = vmatpush.msra.mxu0 0.0
    %62 = vmatpush.msra.mxu0 0.0
    %63 = vmatpush.msra.mxu0 0.0
    %64 = vmatpush.msra.mxu0 0.0
    %65 = vmatpush.msra.mxu0 0.0
    %66 = vmatpush.msra.mxu0 %v12
    %67 = vmatmul.f32.gmra.mxu0 %v46
    %v68 = vpop.f32.mrf.mxu0
    %v69 = vadd.f32 %v37, %v68
    %70 = vmatmul.f32.gmra.mxu0 %v49
    %v71 = vpop.f32.mrf.mxu0
    %v72 = vadd.f32 %v42, %v71
    %73 = vdwg.mxu0
    %74 = vmatpush.msra.mxu0 0.0
    %75 = vmatpush.msra.mxu0 0.0
    %76 = vmatpush.msra.mxu0 0.0
    %77 = vmatpush.msra.mxu0 0.0
    %78 = vmatpush.msra.mxu0 0.0
    %79 = vmatpush.msra.mxu0 0.0
    %80 = vmatpush.msra.mxu0 0.0
    %81 = vmatpush.msra.mxu0 0.0
    %82 = vmatpush.msra.mxu0 0.0
    %83 = vmatpush.msra.mxu0 0.0
    %84 = vmatpush.msra.mxu0 0.0
    %85 = vmatpush.msra.mxu0 0.0
    %86 = vmatpush.msra.mxu0 0.0
    %87 = vmatpush.msra.mxu0 0.0
    %88 = vmatpush.msra.mxu0 0.0
    %89 = vmatpush.msra.mxu0 %v13
    %90 = vmatmul.f32.gmra.mxu0 %v46
    %v91 = vpop.f32.mrf.mxu0
    %v92 = vadd.f32 %v37, %v91
    %93 = vmatmul.f32.gmra.mxu0 %v49
    %v94 = vpop.f32.mrf.mxu0
    %v95 = vadd.f32 %v42, %v94
    %96 = vdwg.mxu0
    %97 = vmatpush.msra.mxu0 0.0
    %98 = vmatpush.msra.mxu0 0.0
    %99 = vmatpush.msra.mxu0 0.0
    %100 = vmatpush.msra.mxu0 0.0
    %101 = vmatpush.msra.mxu0 0.0
    %102 = vmatpush.msra.mxu0 0.0
    %103 = vmatpush.msra.mxu0 0.0
    %104 = vmatpush.msra.mxu0 0.0
    %105 = vmatpush.msra.mxu0 0.0
    %106 = vmatpush.msra.mxu0 0.0
    %107 = vmatpush.msra.mxu0 0.0
    %108 = vmatpush.msra.mxu0 0.0
    %109 = vmatpush.msra.mxu0 0.0
    %110 = vmatpush.msra.mxu0 0.0
    %111 = vmatpush.msra.mxu0 0.0
    %112 = vmatpush.msra.mxu0 %v14
    %113 = vmatmul.f32.gmra.mxu0 %v46
    %v114 = vpop.f32.mrf.mxu0
    %v115 = vadd.f32 %v37, %v114
    %116 = vmatmul.f32.gmra.mxu0 %v49
    %v117 = vpop.f32.mrf.mxu0
    %v118 = vadd.f32 %v42, %v117
    %119 = vdwg.mxu0
    %120 = vmatpush.msra.mxu0 0.0
    %121 = vmatpush.msra.mxu0 0.0
    %122 = vmatpush.msra.mxu0 0.0
    %123 = vmatpush.msra.mxu0 0.0
    %124 = vmatpush.msra.mxu0 0.0
    %125 = vmatpush.msra.mxu0 0.0
    %126 = vmatpush.msra.mxu0 0.0
    %127 = vmatpush.msra.mxu0 0.0
    %128 = vmatpush.msra.mxu0 0.0
    %129 = vmatpush.msra.mxu0 0.0
    %130 = vmatpush.msra.mxu0 0.0
    %131 = vmatpush.msra.mxu0 0.0
    %132 = vmatpush.msra.mxu0 0.0
    %133 = vmatpush.msra.mxu0 0.0
    %134 = vmatpush.msra.mxu0 0.0
    %135 = vmatpush.msra.mxu0 %v15
    %136 = vmatmul.f32.gmra.mxu0 %v46
    %v137 = vpop.f32.mrf.mxu0
    %v138 = vadd.f32 %v37, %v137
    %139 = vmatmul.f32.gmra.mxu0 %v49
    %v140 = vpop.f32.mrf.mxu0
    %v141 = vadd.f32 %v42, %v140
    %142 = vdwg.mxu0
    %143 = vmatpush.msra.mxu0 0.0
    %144 = vmatpush.msra.mxu0 0.0
    %145 = vmatpush.msra.mxu0 0.0
    %146 = vmatpush.msra.mxu0 0.0
    %147 = vmatpush.msra.mxu0 0.0
    %148 = vmatpush.msra.mxu0 0.0
    %149 = vmatpush.msra.mxu0 0.0
    %150 = vmatpush.msra.mxu0 0.0
    %151 = vmatpush.msra.mxu0 0.0
    %152 = vmatpush.msra.mxu0 0.0
    %153 = vmatpush.msra.mxu0 0.0
    %154 = vmatpush.msra.mxu0 0.0
    %155 = vmatpush.msra.mxu0 0.0
    %156 = vmatpush.msra.mxu0 0.0
    %157 = vmatpush.msra.mxu0 0.0
    %158 = vmatpush.msra.mxu0 %v16
    %159 = vmatmul.f32.gmra.mxu0 %v46
    %v160 = vpop.f32.mrf.mxu0
    %v161 = vadd.f32 %v37, %v160
    %162 = vmatmul.f32.gmra.mxu0 %v49
    %v163 = vpop.f32.mrf.mxu0
    %v164 = vadd.f32 %v42, %v163
    %165 = vdwg.mxu0
    %166 = vmatpush.msra.mxu0 0.0
    %167 = vmatpush.msra.mxu0 0.0
    %168 = vmatpush.msra.mxu0 0.0
    %169 = vmatpush.msra.mxu0 0.0
    %170 = vmatpush.msra.mxu0 0.0
    %171 = vmatpush.msra.mxu0 0.0
    %172 = vmatpush.msra.mxu0 0.0
    %173 = vmatpush.msra.mxu0 0.0
    %174 = vmatpush.msra.mxu0 0.0
    %175 = vmatpush.msra.mxu0 0.0
    %176 = vmatpush.msra.mxu0 0.0
    %177 = vmatpush.msra.mxu0 0.0
    %178 = vmatpush.msra.mxu0 0.0
    %179 = vmatpush.msra.mxu0 0.0
    %180 = vmatpush.msra.mxu0 0.0
    %181 = vmatpush.msra.mxu0 %v17
    %182 = vmatmul.f32.gmra.mxu0 %v46
    %v183 = vpop.f32.mrf.mxu0
    %v184 = vadd.f32 %v37, %v183
    %185 = vmatmul.f32.gmra.mxu0 %v49
    %v186 = vpop.f32.mrf.mxu0
    %v187 = vadd.f32 %v42, %v186
    %188 = vdwg.mxu0
    %189 = vmatpush.msra.mxu0 0.0
    %190 = vmatpush.msra.mxu0 0.0
    %191 = vmatpush.msra.mxu0 0.0
    %192 = vmatpush.msra.mxu0 0.0
    %193 = vmatpush.msra.mxu0 0.0
    %194 = vmatpush.msra.mxu0 0.0
    %195 = vmatpush.msra.mxu0 0.0
    %196 = vmatpush.msra.mxu0 0.0
    %197 = vmatpush.msra.mxu0 0.0
    %198 = vmatpush.msra.mxu0 0.0
    %199 = vmatpush.msra.mxu0 0.0
    %200 = vmatpush.msra.mxu0 0.0
    %201 = vmatpush.msra.mxu0 0.0
    %202 = vmatpush.msra.mxu0 0.0
    %203 = vmatpush.msra.mxu0 0.0
    %204 = vmatpush.msra.mxu0 %v18
    %205 = vmatmul.f32.gmra.mxu0 %v46
    %v206 = vpop.f32.mrf.mxu0
    %v207 = vadd.f32 %v37, %v206
    %208 = vmatmul.f32.gmra.mxu0 %v49
    %v209 = vpop.f32.mrf.mxu0
    %v210 = vadd.f32 %v42, %v209
    %211 = vdwg.mxu0
    %212 = vmatpush.msra.mxu0 0.0
    %213 = vmatpush.msra.mxu0 0.0
    %214 = vmatpush.msra.mxu0 0.0
    %215 = vmatpush.msra.mxu0 0.0
    %216 = vmatpush.msra.mxu0 0.0
    %217 = vmatpush.msra.mxu0 0.0
    %218 = vmatpush.msra.mxu0 0.0
    %219 = vmatpush.msra.mxu0 0.0
    %220 = vmatpush.msra.mxu0 0.0
    %221 = vmatpush.msra.mxu0 0.0
    %222 = vmatpush.msra.mxu0 0.0
    %223 = vmatpush.msra.mxu0 0.0
    %224 = vmatpush.msra.mxu0 0.0
    %225 = vmatpush.msra.mxu0 0.0
    %226 = vmatpush.msra.mxu0 0.0
    %227 = vmatpush.msra.mxu0 %v19
    %228 = vmatmul.f32.gmra.mxu0 %v46
    %v229 = vpop.f32.mrf.mxu0
    %v230 = vadd.f32 %v37, %v229
    %231 = vmatmul.f32.gmra.mxu0 %v49
    %v232 = vpop.f32.mrf.mxu0
    %v233 = vadd.f32 %v42, %v232
    %234 = vdwg.mxu0
    %v235 = vand.u32 2147483647, %v69
    %vm236 = vcmp.le.f32.partialorder %v235, 0.7853982
    %vm237 = vcmp.lt.s32.totalorder %v69, 0
    %v238 = vand.u32 %v69, 2139095040
    %v239 = vshrl.u32 %v238, 23
    %v240 = vsub.s32 %v239, 127
    %v241 = vand.u32 2147483647, %v69
    %v242 = vand.u32 %v241, 8388607
    %v243 = vor.u32 %v242, 8388608
    %v244 = vsub.s32 0, %v243
    %v245 = vadd.s32 %v240, 1
    %vm246 = vcmp.gt.s32.totalorder %v245, 0
    %v247 = vsel %vm246, %v245, 0
    %v248 = vshrl.u32 %v247, 5
    %v249 = vand.u32 %v247, 31
    %v250 = vsub.s32 32, %v249
    %v251 = vshrl.u32 683565275, %v250
    %v252 = vshll.u32 683565275, %v249
    %v253 = vshrl.u32 2475754826, %v250
    %v254 = vor.u32 %v252, %v253
    %v255 = vshll.u32 2475754826, %v249
    %v256 = vshrl.u32 2131351028, %v250
    %v257 = vor.u32 %v255, %v256
    %v258 = vshll.u32 2131351028, %v249
    %v259 = vshrl.u32 2102212464, %v250
    %v260 = vor.u32 %v258, %v259
    %v261 = vshll.u32 2102212464, %v249
    %v262 = vshrl.u32 920167782, %v250
    %v263 = vor.u32 %v261, %v262
    %v264 = vshll.u32 920167782, %v249
    %v265 = vshrl.u32 1326507024, %v250
    %v266 = vor.u32 %v264, %v265
    %vm267 = vcmp.lt.s32.totalorder %v248, 1
    %vm268 = vcmp.lt.s32.totalorder %v248, 2
    %vm269 = vcmp.lt.s32.totalorder %v248, 3
    %vm270 = vcmp.lt.s32.totalorder %v248, 4
    %v271 = vsel %vm267, %v251, %v254
    %v272 = vsel %vm270, %v260, 2102212464
    %v273 = vsel %vm269, %v257, %v272
    %v274 = vsel %vm268, %v271, %v273
    %v275 = vsel %vm267, %v254, %v257
    %v276 = vsel %vm270, %v263, 920167782
    %v277 = vsel %vm269, %v260, %v276
    %v278 = vsel %vm268, %v275, %v277
    %v279 = vsel %vm267, %v257, %v260
    %v280 = vsel %vm270, %v266, 1326507024
    %v281 = vsel %vm269, %v263, %v280
    %v282 = vsel %vm268, %v279, %v281
    %v283 = vshll.u32 %v243, 8
    %v284 = vand.u32 %v283, 65535
    %v285 = vshrl.u32 %v283, 16
    %v286 = vand.u32 %v282, 65535
    %v287 = vshrl.u32 %v282, 16
    %v288 = vmul.u32 %v284, %v286
    %v289 = vmul.u32 %v284, %v287
    %v290 = vmul.u32 %v285, %v286
    %v291 = vmul.u32 %v285, %v287
    %v292 = vshll.u32 %v289, 16
    %v293 = vshrl.u32 %v289, 16
    %v294 = vshll.u32 %v290, 16
    %v295 = vshrl.u32 %v290, 16
    %vm296 = vc.u32 %v288, %v292
    %v297 = vsel %vm296, 1, 0
    %v298 = vadd.s32 %v288, %v292
    %v299 = vadd.s32 %v291, %v297
    %vm300 = vc.u32 %v298, %v294
    %v301 = vsel %vm300, 1, 0
    %v302 = vadd.s32 %v298, %v294
    %v303 = vadd.s32 %v299, %v301
    %v304 = vadd.s32 %v303, %v293
    %v305 = vadd.s32 %v304, %v295
    %v306 = vand.u32 %v283, 65535
    %v307 = vshrl.u32 %v283, 16
    %v308 = vand.u32 %v278, 65535
    %v309 = vshrl.u32 %v278, 16
    %v310 = vmul.u32 %v306, %v308
    %v311 = vmul.u32 %v306, %v309
    %v312 = vmul.u32 %v307, %v308
    %v313 = vmul.u32 %v307, %v309
    %v314 = vshll.u32 %v311, 16
    %v315 = vshrl.u32 %v311, 16
    %v316 = vshll.u32 %v312, 16
    %v317 = vshrl.u32 %v312, 16
    %vm318 = vc.u32 %v310, %v314
    %v319 = vsel %vm318, 1, 0
    %v320 = vadd.s32 %v310, %v314
    %v321 = vadd.s32 %v313, %v319
    %vm322 = vc.u32 %v320, %v316
    %v323 = vsel %vm322, 1, 0
    %v324 = vadd.s32 %v320, %v316
    %v325 = vadd.s32 %v321, %v323
    %v326 = vadd.s32 %v325, %v315
    %v327 = vadd.s32 %v326, %v317
    %v328 = vmul.u32 %v283, %v274
    %v329 = vadd.s32 %v305, %v324
    %vm330 = vc.u32 %v305, %v324
    %v331 = vadd.s32 %v327, 1
    %v332 = vsel %vm330, %v331, %v327
    %v333 = vadd.s32 %v328, %v332
    %v334 = vadd.s32 %v333, 536870912
    %v335 = vshrl.u32 %v334, 30
    %v336 = vshll.u32 %v335, 30
    %v337 = vsub.s32 %v333, %v336
    %vm338 = vcmp.lt.s32.totalorder %v337, 0
    %v339 = vsub.s32 0, %v337
    %v340 = vsel %vm338, %v339, %v337
    %v341 = vclz %v340
    %v342 = vsub.s32 %v341, 2
    %vm343 = vcmp.gt.s32.totalorder 0, %v342
    %v344 = vsel %vm343, 0, %v342
    %v345 = vsub.s32 32, %v344
    %v346 = vshll.u32 %v337, %v344
    %v347 = vshrl.u32 %v329, %v345
    %v348 = vor.u32 %v346, %v347
    %v349 = vsub.s32 4294967266, %v344
    %v350 = vadd.s32 %v349, 127
    %v351 = vshll.u32 %v350, 23
    %v352 = vor.u32 4788187, %v351
    %v353 = vand.u32 2147483647, %v352
    %v355 = vcvt.s32.f32 %v348
    %v356 = vmul.f32 %v355, %v353
    %v357 = vxor.u32 %v356, 2147483648
    %v358 = vsel %vm237, %v357, %v356
    %v359 = vsub.s32 4, %v335
    %v360 = vsel %vm237, %v359, %v335
    %v361 = vsel %vm236, %v69, %v358
    %v362 = vsel %vm236, 0, %v360
    %v363 = vmul.f32 %v361, %v361
    %v364 = vmul.f32 %v363, -0.001358992
    %v365 = vadd.f32 %v364, 0.041655596
    %v366 = vmul.f32 %v363, %v365
    %v367 = vadd.f32 %v366, -0.4999988
    %v368 = vmul.f32 %v363, %v367
    %v369 = vadd.f32 1.0, %v368
    %v370 = vmul.f32 %v361, %v361
    %v371 = vmul.f32 %v370, -0.00019511016
    %v372 = vadd.f32 %v371, 0.008332121
    %v373 = vmul.f32 %v370, %v372
    %v374 = vadd.f32 %v373, -0.16666654
    %v375 = vmul.f32 %v370, %v374
    %v376 = vadd.f32 %v375, 1.0
    %v377 = vmul.f32 %v376, %v361
    %vm378 = vweird.f32 %v69
    %v379 = vadd.s32 %v362, 3
    %v380 = vand.u32 %v379, 3
    %vm381 = vcmp.lt.s32.totalorder %v380, 2
    %vm382 = vcmp.eq.s32.totalorder %v380, 0
    %v383 = vxor.u32 %v377, 2147483648
    %v384 = vsel %vm382, %v369, %v383
    %vm385 = vcmp.eq.s32.totalorder %v380, 2
    %v386 = vxor.u32 %v369, 2147483648
    %v387 = vsel %vm385, %v386, %v377
    %v388 = vsel %vm381, %v384, %v387
    %v389 = vsel %vm378, nan, %v388
    %v390 = vand.u32 2147483647, %v92
    %vm391 = vcmp.le.f32.partialorder %v390, 0.7853982
    %vm392 = vcmp.lt.s32.totalorder %v92, 0
    %v393 = vand.u32 %v92, 2139095040
    %v394 = vshrl.u32 %v393, 23
    %v395 = vsub.s32 %v394, 127
    %v396 = vand.u32 2147483647, %v92
    %v397 = vand.u32 %v396, 8388607
    %v398 = vor.u32 %v397, 8388608
    %v399 = vsub.s32 0, %v398
    %v400 = vadd.s32 %v395, 1
    %vm401 = vcmp.gt.s32.totalorder %v400, 0
    %v402 = vsel %vm401, %v400, 0
    %v403 = vshrl.u32 %v402, 5
    %v404 = vand.u32 %v402, 31
    %v405 = vsub.s32 32, %v404
    %v406 = vshrl.u32 683565275, %v405
    %v407 = vshll.u32 683565275, %v404
    %v408 = vshrl.u32 2475754826, %v405
    %v409 = vor.u32 %v407, %v408
    %v410 = vshll.u32 2475754826, %v404
    %v411 = vshrl.u32 2131351028, %v405
    %v412 = vor.u32 %v410, %v411
    %v413 = vshll.u32 2131351028, %v404
    %v414 = vshrl.u32 2102212464, %v405
    %v415 = vor.u32 %v413, %v414
    %v416 = vshll.u32 2102212464, %v404
    %v417 = vshrl.u32 920167782, %v405
    %v418 = vor.u32 %v416, %v417
    %v419 = vshll.u32 920167782, %v404
    %v420 = vshrl.u32 1326507024, %v405
    %v421 = vor.u32 %v419, %v420
    %vm422 = vcmp.lt.s32.totalorder %v403, 1
    %vm423 = vcmp.lt.s32.totalorder %v403, 2
    %vm424 = vcmp.lt.s32.totalorder %v403, 3
    %vm425 = vcmp.lt.s32.totalorder %v403, 4
    %v426 = vsel %vm422, %v406, %v409
    %v427 = vsel %vm425, %v415, 2102212464
    %v428 = vsel %vm424, %v412, %v427
    %v429 = vsel %vm423, %v426, %v428
    %v430 = vsel %vm422, %v409, %v412
    %v431 = vsel %vm425, %v418, 920167782
    %v432 = vsel %vm424, %v415, %v431
    %v433 = vsel %vm423, %v430, %v432
    %v434 = vsel %vm422, %v412, %v415
    %v435 = vsel %vm425, %v421, 1326507024
    %v436 = vsel %vm424, %v418, %v435
    %v437 = vsel %vm423, %v434, %v436
    %v438 = vshll.u32 %v398, 8
    %v439 = vand.u32 %v438, 65535
    %v440 = vshrl.u32 %v438, 16
    %v441 = vand.u32 %v437, 65535
    %v442 = vshrl.u32 %v437, 16
    %v443 = vmul.u32 %v439, %v441
    %v444 = vmul.u32 %v439, %v442
    %v445 = vmul.u32 %v440, %v441
    %v446 = vmul.u32 %v440, %v442
    %v447 = vshll.u32 %v444, 16
    %v448 = vshrl.u32 %v444, 16
    %v449 = vshll.u32 %v445, 16
    %v450 = vshrl.u32 %v445, 16
    %vm451 = vc.u32 %v443, %v447
    %v452 = vsel %vm451, 1, 0
    %v453 = vadd.s32 %v443, %v447
    %v454 = vadd.s32 %v446, %v452
    %vm455 = vc.u32 %v453, %v449
    %v456 = vsel %vm455, 1, 0
    %v457 = vadd.s32 %v453, %v449
    %v458 = vadd.s32 %v454, %v456
    %v459 = vadd.s32 %v458, %v448
    %v460 = vadd.s32 %v459, %v450
    %v461 = vand.u32 %v438, 65535
    %v462 = vshrl.u32 %v438, 16
    %v463 = vand.u32 %v433, 65535
    %v464 = vshrl.u32 %v433, 16
    %v465 = vmul.u32 %v461, %v463
    %v466 = vmul.u32 %v461, %v464
    %v467 = vmul.u32 %v462, %v463
    %v468 = vmul.u32 %v462, %v464
    %v469 = vshll.u32 %v466, 16
    %v470 = vshrl.u32 %v466, 16
    %v471 = vshll.u32 %v467, 16
    %v472 = vshrl.u32 %v467, 16
    %vm473 = vc.u32 %v465, %v469
    %v474 = vsel %vm473, 1, 0
    %v475 = vadd.s32 %v465, %v469
    %v476 = vadd.s32 %v468, %v474
    %vm477 = vc.u32 %v475, %v471
    %v478 = vsel %vm477, 1, 0
    %v479 = vadd.s32 %v475, %v471
    %v480 = vadd.s32 %v476, %v478
    %v481 = vadd.s32 %v480, %v470
    %v482 = vadd.s32 %v481, %v472
    %v483 = vmul.u32 %v438, %v429
    %v484 = vadd.s32 %v460, %v479
    %vm485 = vc.u32 %v460, %v479
    %v486 = vadd.s32 %v482, 1
    %v487 = vsel %vm485, %v486, %v482
    %v488 = vadd.s32 %v483, %v487
    %v489 = vadd.s32 %v488, 536870912
    %v490 = vshrl.u32 %v489, 30
    %v491 = vshll.u32 %v490, 30
    %v492 = vsub.s32 %v488, %v491
    %vm493 = vcmp.lt.s32.totalorder %v492, 0
    %v494 = vsub.s32 0, %v492
    %v495 = vsel %vm493, %v494, %v492
    %v496 = vclz %v495
    %v497 = vsub.s32 %v496, 2
    %vm498 = vcmp.gt.s32.totalorder 0, %v497
    %v499 = vsel %vm498, 0, %v497
    %v500 = vsub.s32 32, %v499
    %v501 = vshll.u32 %v492, %v499
    %v502 = vshrl.u32 %v484, %v500
    %v503 = vor.u32 %v501, %v502
    %v504 = vsub.s32 4294967266, %v499
    %v505 = vadd.s32 %v504, 127
    %v506 = vshll.u32 %v505, 23
    %v507 = vor.u32 4788187, %v506
    %v508 = vand.u32 2147483647, %v507
    %v510 = vcvt.s32.f32 %v503
    %v511 = vmul.f32 %v510, %v508
    %v512 = vxor.u32 %v511, 2147483648
    %v513 = vsel %vm392, %v512, %v511
    %v514 = vsub.s32 4, %v490
    %v515 = vsel %vm392, %v514, %v490
    %v516 = vsel %vm391, %v92, %v513
    %v517 = vsel %vm391, 0, %v515
    %v518 = vmul.f32 %v516, %v516
    %v519 = vmul.f32 %v518, -0.001358992
    %v520 = vadd.f32 %v519, 0.041655596
    %v521 = vmul.f32 %v518, %v520
    %v522 = vadd.f32 %v521, -0.4999988
    %v523 = vmul.f32 %v518, %v522
    %v524 = vadd.f32 1.0, %v523
    %v525 = vmul.f32 %v516, %v516
    %v526 = vmul.f32 %v525, -0.00019511016
    %v527 = vadd.f32 %v526, 0.008332121
    %v528 = vmul.f32 %v525, %v527
    %v529 = vadd.f32 %v528, -0.16666654
    %v530 = vmul.f32 %v525, %v529
    %v531 = vadd.f32 %v530, 1.0
    %v532 = vmul.f32 %v531, %v516
    %vm533 = vweird.f32 %v92
    %v534 = vadd.s32 %v517, 3
    %v535 = vand.u32 %v534, 3
    %vm536 = vcmp.lt.s32.totalorder %v535, 2
    %vm537 = vcmp.eq.s32.totalorder %v535, 0
    %v538 = vxor.u32 %v532, 2147483648
    %v539 = vsel %vm537, %v524, %v538
    %vm540 = vcmp.eq.s32.totalorder %v535, 2
    %v541 = vxor.u32 %v524, 2147483648
    %v542 = vsel %vm540, %v541, %v532
    %v543 = vsel %vm536, %v539, %v542
    %v544 = vsel %vm533, nan, %v543
    %v545 = vand.u32 2147483647, %v115
    %vm546 = vcmp.le.f32.partialorder %v545, 0.7853982
    %vm547 = vcmp.lt.s32.totalorder %v115, 0
    %v548 = vand.u32 %v115, 2139095040
    %v549 = vshrl.u32 %v548, 23
    %v550 = vsub.s32 %v549, 127
    %v551 = vand.u32 2147483647, %v115
    %v552 = vand.u32 %v551, 8388607
    %v553 = vor.u32 %v552, 8388608
    %v554 = vsub.s32 0, %v553
    %v555 = vadd.s32 %v550, 1
    %vm556 = vcmp.gt.s32.totalorder %v555, 0
    %v557 = vsel %vm556, %v555, 0
    %v558 = vshrl.u32 %v557, 5
    %v559 = vand.u32 %v557, 31
    %v560 = vsub.s32 32, %v559
    %v561 = vshrl.u32 683565275, %v560
    %v562 = vshll.u32 683565275, %v559
    %v563 = vshrl.u32 2475754826, %v560
    %v564 = vor.u32 %v562, %v563
    %v565 = vshll.u32 2475754826, %v559
    %v566 = vshrl.u32 2131351028, %v560
    %v567 = vor.u32 %v565, %v566
    %v568 = vshll.u32 2131351028, %v559
    %v569 = vshrl.u32 2102212464, %v560
    %v570 = vor.u32 %v568, %v569
    %v571 = vshll.u32 2102212464, %v559
    %v572 = vshrl.u32 920167782, %v560
    %v573 = vor.u32 %v571, %v572
    %v574 = vshll.u32 920167782, %v559
    %v575 = vshrl.u32 1326507024, %v560
    %v576 = vor.u32 %v574, %v575
    %vm577 = vcmp.lt.s32.totalorder %v558, 1
    %vm578 = vcmp.lt.s32.totalorder %v558, 2
    %vm579 = vcmp.lt.s32.totalorder %v558, 3
    %vm580 = vcmp.lt.s32.totalorder %v558, 4
    %v581 = vsel %vm577, %v561, %v564
    %v582 = vsel %vm580, %v570, 2102212464
    %v583 = vsel %vm579, %v567, %v582
    %v584 = vsel %vm578, %v581, %v583
    %v585 = vsel %vm577, %v564, %v567
    %v586 = vsel %vm580, %v573, 920167782
    %v587 = vsel %vm579, %v570, %v586
    %v588 = vsel %vm578, %v585, %v587
    %v589 = vsel %vm577, %v567, %v570
    %v590 = vsel %vm580, %v576, 1326507024
    %v591 = vsel %vm579, %v573, %v590
    %v592 = vsel %vm578, %v589, %v591
    %v593 = vshll.u32 %v553, 8
    %v594 = vand.u32 %v593, 65535
    %v595 = vshrl.u32 %v593, 16
    %v596 = vand.u32 %v592, 65535
    %v597 = vshrl.u32 %v592, 16
    %v598 = vmul.u32 %v594, %v596
    %v599 = vmul.u32 %v594, %v597
    %v600 = vmul.u32 %v595, %v596
    %v601 = vmul.u32 %v595, %v597
    %v602 = vshll.u32 %v599, 16
    %v603 = vshrl.u32 %v599, 16
    %v604 = vshll.u32 %v600, 16
    %v605 = vshrl.u32 %v600, 16
    %vm606 = vc.u32 %v598, %v602
    %v607 = vsel %vm606, 1, 0
    %v608 = vadd.s32 %v598, %v602
    %v609 = vadd.s32 %v601, %v607
    %vm610 = vc.u32 %v608, %v604
    %v611 = vsel %vm610, 1, 0
    %v612 = vadd.s32 %v608, %v604
    %v613 = vadd.s32 %v609, %v611
    %v614 = vadd.s32 %v613, %v603
    %v615 = vadd.s32 %v614, %v605
    %v616 = vand.u32 %v593, 65535
    %v617 = vshrl.u32 %v593, 16
    %v618 = vand.u32 %v588, 65535
    %v619 = vshrl.u32 %v588, 16
    %v620 = vmul.u32 %v616, %v618
    %v621 = vmul.u32 %v616, %v619
    %v622 = vmul.u32 %v617, %v618
    %v623 = vmul.u32 %v617, %v619
    %v624 = vshll.u32 %v621, 16
    %v625 = vshrl.u32 %v621, 16
    %v626 = vshll.u32 %v622, 16
    %v627 = vshrl.u32 %v622, 16
    %vm628 = vc.u32 %v620, %v624
    %v629 = vsel %vm628, 1, 0
    %v630 = vadd.s32 %v620, %v624
    %v631 = vadd.s32 %v623, %v629
    %vm632 = vc.u32 %v630, %v626
    %v633 = vsel %vm632, 1, 0
    %v634 = vadd.s32 %v630, %v626
    %v635 = vadd.s32 %v631, %v633
    %v636 = vadd.s32 %v635, %v625
    %v637 = vadd.s32 %v636, %v627
    %v638 = vmul.u32 %v593, %v584
    %v639 = vadd.s32 %v615, %v634
    %vm640 = vc.u32 %v615, %v634
    %v641 = vadd.s32 %v637, 1
    %v642 = vsel %vm640, %v641, %v637
    %v643 = vadd.s32 %v638, %v642
    %v644 = vadd.s32 %v643, 536870912
    %v645 = vshrl.u32 %v644, 30
    %v646 = vshll.u32 %v645, 30
    %v647 = vsub.s32 %v643, %v646
    %vm648 = vcmp.lt.s32.totalorder %v647, 0
    %v649 = vsub.s32 0, %v647
    %v650 = vsel %vm648, %v649, %v647
    %v651 = vclz %v650
    %v652 = vsub.s32 %v651, 2
    %vm653 = vcmp.gt.s32.totalorder 0, %v652
    %v654 = vsel %vm653, 0, %v652
    %v655 = vsub.s32 32, %v654
    %v656 = vshll.u32 %v647, %v654
    %v657 = vshrl.u32 %v639, %v655
    %v658 = vor.u32 %v656, %v657
    %v659 = vsub.s32 4294967266, %v654
    %v660 = vadd.s32 %v659, 127
    %v661 = vshll.u32 %v660, 23
    %v662 = vor.u32 4788187, %v661
    %v663 = vand.u32 2147483647, %v662
    %v665 = vcvt.s32.f32 %v658
    %v666 = vmul.f32 %v665, %v663
    %v667 = vxor.u32 %v666, 2147483648
    %v668 = vsel %vm547, %v667, %v666
    %v669 = vsub.s32 4, %v645
    %v670 = vsel %vm547, %v669, %v645
    %v671 = vsel %vm546, %v115, %v668
    %v672 = vsel %vm546, 0, %v670
    %v673 = vmul.f32 %v671, %v671
    %v674 = vmul.f32 %v673, -0.001358992
    %v675 = vadd.f32 %v674, 0.041655596
    %v676 = vmul.f32 %v673, %v675
    %v677 = vadd.f32 %v676, -0.4999988
    %v678 = vmul.f32 %v673, %v677
    %v679 = vadd.f32 1.0, %v678
    %v680 = vmul.f32 %v671, %v671
    %v681 = vmul.f32 %v680, -0.00019511016
    %v682 = vadd.f32 %v681, 0.008332121
    %v683 = vmul.f32 %v680, %v682
    %v684 = vadd.f32 %v683, -0.16666654
    %v685 = vmul.f32 %v680, %v684
    %v686 = vadd.f32 %v685, 1.0
    %v687 = vmul.f32 %v686, %v671
    %vm688 = vweird.f32 %v115
    %v689 = vadd.s32 %v672, 3
    %v690 = vand.u32 %v689, 3
    %vm691 = vcmp.lt.s32.totalorder %v690, 2
    %vm692 = vcmp.eq.s32.totalorder %v690, 0
    %v693 = vxor.u32 %v687, 2147483648
    %v694 = vsel %vm692, %v679, %v693
    %vm695 = vcmp.eq.s32.totalorder %v690, 2
    %v696 = vxor.u32 %v679, 2147483648
    %v697 = vsel %vm695, %v696, %v687
    %v698 = vsel %vm691, %v694, %v697
    %v699 = vsel %vm688, nan, %v698
    %v700 = vand.u32 2147483647, %v138
    %vm701 = vcmp.le.f32.partialorder %v700, 0.7853982
    %vm702 = vcmp.lt.s32.totalorder %v138, 0
    %v703 = vand.u32 %v138, 2139095040
    %v704 = vshrl.u32 %v703, 23
    %v705 = vsub.s32 %v704, 127
    %v706 = vand.u32 2147483647, %v138
    %v707 = vand.u32 %v706, 8388607
    %v708 = vor.u32 %v707, 8388608
    %v709 = vsub.s32 0, %v708
    %v710 = vadd.s32 %v705, 1
    %vm711 = vcmp.gt.s32.totalorder %v710, 0
    %v712 = vsel %vm711, %v710, 0
    %v713 = vshrl.u32 %v712, 5
    %v714 = vand.u32 %v712, 31
    %v715 = vsub.s32 32, %v714
    %v716 = vshrl.u32 683565275, %v715
    %v717 = vshll.u32 683565275, %v714
    %v718 = vshrl.u32 2475754826, %v715
    %v719 = vor.u32 %v717, %v718
    %v720 = vshll.u32 2475754826, %v714
    %v721 = vshrl.u32 2131351028, %v715
    %v722 = vor.u32 %v720, %v721
    %v723 = vshll.u32 2131351028, %v714
    %v724 = vshrl.u32 2102212464, %v715
    %v725 = vor.u32 %v723, %v724
    %v726 = vshll.u32 2102212464, %v714
    %v727 = vshrl.u32 920167782, %v715
    %v728 = vor.u32 %v726, %v727
    %v729 = vshll.u32 920167782, %v714
    %v730 = vshrl.u32 1326507024, %v715
    %v731 = vor.u32 %v729, %v730
    %vm732 = vcmp.lt.s32.totalorder %v713, 1
    %vm733 = vcmp.lt.s32.totalorder %v713, 2
    %vm734 = vcmp.lt.s32.totalorder %v713, 3
    %vm735 = vcmp.lt.s32.totalorder %v713, 4
    %v736 = vsel %vm732, %v716, %v719
    %v737 = vsel %vm735, %v725, 2102212464
    %v738 = vsel %vm734, %v722, %v737
    %v739 = vsel %vm733, %v736, %v738
    %v740 = vsel %vm732, %v719, %v722
    %v741 = vsel %vm735, %v728, 920167782
    %v742 = vsel %vm734, %v725, %v741
    %v743 = vsel %vm733, %v740, %v742
    %v744 = vsel %vm732, %v722, %v725
    %v745 = vsel %vm735, %v731, 1326507024
    %v746 = vsel %vm734, %v728, %v745
    %v747 = vsel %vm733, %v744, %v746
    %v748 = vshll.u32 %v708, 8
    %v749 = vand.u32 %v748, 65535
    %v750 = vshrl.u32 %v748, 16
    %v751 = vand.u32 %v747, 65535
    %v752 = vshrl.u32 %v747, 16
    %v753 = vmul.u32 %v749, %v751
    %v754 = vmul.u32 %v749, %v752
    %v755 = vmul.u32 %v750, %v751
    %v756 = vmul.u32 %v750, %v752
    %v757 = vshll.u32 %v754, 16
    %v758 = vshrl.u32 %v754, 16
    %v759 = vshll.u32 %v755, 16
    %v760 = vshrl.u32 %v755, 16
    %vm761 = vc.u32 %v753, %v757
    %v762 = vsel %vm761, 1, 0
    %v763 = vadd.s32 %v753, %v757
    %v764 = vadd.s32 %v756, %v762
    %vm765 = vc.u32 %v763, %v759
    %v766 = vsel %vm765, 1, 0
    %v767 = vadd.s32 %v763, %v759
    %v768 = vadd.s32 %v764, %v766
    %v769 = vadd.s32 %v768, %v758
    %v770 = vadd.s32 %v769, %v760
    %v771 = vand.u32 %v748, 65535
    %v772 = vshrl.u32 %v748, 16
    %v773 = vand.u32 %v743, 65535
    %v774 = vshrl.u32 %v743, 16
    %v775 = vmul.u32 %v771, %v773
    %v776 = vmul.u32 %v771, %v774
    %v777 = vmul.u32 %v772, %v773
    %v778 = vmul.u32 %v772, %v774
    %v779 = vshll.u32 %v776, 16
    %v780 = vshrl.u32 %v776, 16
    %v781 = vshll.u32 %v777, 16
    %v782 = vshrl.u32 %v777, 16
    %vm783 = vc.u32 %v775, %v779
    %v784 = vsel %vm783, 1, 0
    %v785 = vadd.s32 %v775, %v779
    %v786 = vadd.s32 %v778, %v784
    %vm787 = vc.u32 %v785, %v781
    %v788 = vsel %vm787, 1, 0
    %v789 = vadd.s32 %v785, %v781
    %v790 = vadd.s32 %v786, %v788
    %v791 = vadd.s32 %v790, %v780
    %v792 = vadd.s32 %v791, %v782
    %v793 = vmul.u32 %v748, %v739
    %v794 = vadd.s32 %v770, %v789
    %vm795 = vc.u32 %v770, %v789
    %v796 = vadd.s32 %v792, 1
    %v797 = vsel %vm795, %v796, %v792
    %v798 = vadd.s32 %v793, %v797
    %v799 = vadd.s32 %v798, 536870912
    %v800 = vshrl.u32 %v799, 30
    %v801 = vshll.u32 %v800, 30
    %v802 = vsub.s32 %v798, %v801
    %vm803 = vcmp.lt.s32.totalorder %v802, 0
    %v804 = vsub.s32 0, %v802
    %v805 = vsel %vm803, %v804, %v802
    %v806 = vclz %v805
    %v807 = vsub.s32 %v806, 2
    %vm808 = vcmp.gt.s32.totalorder 0, %v807
    %v809 = vsel %vm808, 0, %v807
    %v810 = vsub.s32 32, %v809
    %v811 = vshll.u32 %v802, %v809
    %v812 = vshrl.u32 %v794, %v810
    %v813 = vor.u32 %v811, %v812
    %v814 = vsub.s32 4294967266, %v809
    %v815 = vadd.s32 %v814, 127
    %v816 = vshll.u32 %v815, 23
    %v817 = vor.u32 4788187, %v816
    %v818 = vand.u32 2147483647, %v817
    %v820 = vcvt.s32.f32 %v813
    %v821 = vmul.f32 %v820, %v818
    %v822 = vxor.u32 %v821, 2147483648
    %v823 = vsel %vm702, %v822, %v821
    %v824 = vsub.s32 4, %v800
    %v825 = vsel %vm702, %v824, %v800
    %v826 = vsel %vm701, %v138, %v823
    %v827 = vsel %vm701, 0, %v825
    %v828 = vmul.f32 %v826, %v826
    %v829 = vmul.f32 %v828, -0.001358992
    %v830 = vadd.f32 %v829, 0.041655596
    %v831 = vmul.f32 %v828, %v830
    %v832 = vadd.f32 %v831, -0.4999988
    %v833 = vmul.f32 %v828, %v832
    %v834 = vadd.f32 1.0, %v833
    %v835 = vmul.f32 %v826, %v826
    %v836 = vmul.f32 %v835, -0.00019511016
    %v837 = vadd.f32 %v836, 0.008332121
    %v838 = vmul.f32 %v835, %v837
    %v839 = vadd.f32 %v838, -0.16666654
    %v840 = vmul.f32 %v835, %v839
    %v841 = vadd.f32 %v840, 1.0
    %v842 = vmul.f32 %v841, %v826
    %vm843 = vweird.f32 %v138
    %v844 = vadd.s32 %v827, 3
    %v845 = vand.u32 %v844, 3
    %vm846 = vcmp.lt.s32.totalorder %v845, 2
    %vm847 = vcmp.eq.s32.totalorder %v845, 0
    %v848 = vxor.u32 %v842, 2147483648
    %v849 = vsel %vm847, %v834, %v848
    %vm850 = vcmp.eq.s32.totalorder %v845, 2
    %v851 = vxor.u32 %v834, 2147483648
    %v852 = vsel %vm850, %v851, %v842
    %v853 = vsel %vm846, %v849, %v852
    %v854 = vsel %vm843, nan, %v853
    %v855 = vand.u32 2147483647, %v161
    %vm856 = vcmp.le.f32.partialorder %v855, 0.7853982
    %vm857 = vcmp.lt.s32.totalorder %v161, 0
    %v858 = vand.u32 %v161, 2139095040
    %v859 = vshrl.u32 %v858, 23
    %v860 = vsub.s32 %v859, 127
    %v861 = vand.u32 2147483647, %v161
    %v862 = vand.u32 %v861, 8388607
    %v863 = vor.u32 %v862, 8388608
    %v864 = vsub.s32 0, %v863
    %v865 = vadd.s32 %v860, 1
    %vm866 = vcmp.gt.s32.totalorder %v865, 0
    %v867 = vsel %vm866, %v865, 0
    %v868 = vshrl.u32 %v867, 5
    %v869 = vand.u32 %v867, 31
    %v870 = vsub.s32 32, %v869
    %v871 = vshrl.u32 683565275, %v870
    %v872 = vshll.u32 683565275, %v869
    %v873 = vshrl.u32 2475754826, %v870
    %v874 = vor.u32 %v872, %v873
    %v875 = vshll.u32 2475754826, %v869
    %v876 = vshrl.u32 2131351028, %v870
    %v877 = vor.u32 %v875, %v876
    %v878 = vshll.u32 2131351028, %v869
    %v879 = vshrl.u32 2102212464, %v870
    %v880 = vor.u32 %v878, %v879
    %v881 = vshll.u32 2102212464, %v869
    %v882 = vshrl.u32 920167782, %v870
    %v883 = vor.u32 %v881, %v882
    %v884 = vshll.u32 920167782, %v869
    %v885 = vshrl.u32 1326507024, %v870
    %v886 = vor.u32 %v884, %v885
    %vm887 = vcmp.lt.s32.totalorder %v868, 1
    %vm888 = vcmp.lt.s32.totalorder %v868, 2
    %vm889 = vcmp.lt.s32.totalorder %v868, 3
    %vm890 = vcmp.lt.s32.totalorder %v868, 4
    %v891 = vsel %vm887, %v871, %v874
    %v892 = vsel %vm890, %v880, 2102212464
    %v893 = vsel %vm889, %v877, %v892
    %v894 = vsel %vm888, %v891, %v893
    %v895 = vsel %vm887, %v874, %v877
    %v896 = vsel %vm890, %v883, 920167782
    %v897 = vsel %vm889, %v880, %v896
    %v898 = vsel %vm888, %v895, %v897
    %v899 = vsel %vm887, %v877, %v880
    %v900 = vsel %vm890, %v886, 1326507024
    %v901 = vsel %vm889, %v883, %v900
    %v902 = vsel %vm888, %v899, %v901
    %v903 = vshll.u32 %v863, 8
    %v904 = vand.u32 %v903, 65535
    %v905 = vshrl.u32 %v903, 16
    %v906 = vand.u32 %v902, 65535
    %v907 = vshrl.u32 %v902, 16
    %v908 = vmul.u32 %v904, %v906
    %v909 = vmul.u32 %v904, %v907
    %v910 = vmul.u32 %v905, %v906
    %v911 = vmul.u32 %v905, %v907
    %v912 = vshll.u32 %v909, 16
    %v913 = vshrl.u32 %v909, 16
    %v914 = vshll.u32 %v910, 16
    %v915 = vshrl.u32 %v910, 16
    %vm916 = vc.u32 %v908, %v912
    %v917 = vsel %vm916, 1, 0
    %v918 = vadd.s32 %v908, %v912
    %v919 = vadd.s32 %v911, %v917
    %vm920 = vc.u32 %v918, %v914
    %v921 = vsel %vm920, 1, 0
    %v922 = vadd.s32 %v918, %v914
    %v923 = vadd.s32 %v919, %v921
    %v924 = vadd.s32 %v923, %v913
    %v925 = vadd.s32 %v924, %v915
    %v926 = vand.u32 %v903, 65535
    %v927 = vshrl.u32 %v903, 16
    %v928 = vand.u32 %v898, 65535
    %v929 = vshrl.u32 %v898, 16
    %v930 = vmul.u32 %v926, %v928
    %v931 = vmul.u32 %v926, %v929
    %v932 = vmul.u32 %v927, %v928
    %v933 = vmul.u32 %v927, %v929
    %v934 = vshll.u32 %v931, 16
    %v935 = vshrl.u32 %v931, 16
    %v936 = vshll.u32 %v932, 16
    %v937 = vshrl.u32 %v932, 16
    %vm938 = vc.u32 %v930, %v934
    %v939 = vsel %vm938, 1, 0
    %v940 = vadd.s32 %v930, %v934
    %v941 = vadd.s32 %v933, %v939
    %vm942 = vc.u32 %v940, %v936
    %v943 = vsel %vm942, 1, 0
    %v944 = vadd.s32 %v940, %v936
    %v945 = vadd.s32 %v941, %v943
    %v946 = vadd.s32 %v945, %v935
    %v947 = vadd.s32 %v946, %v937
    %v948 = vmul.u32 %v903, %v894
    %v949 = vadd.s32 %v925, %v944
    %vm950 = vc.u32 %v925, %v944
    %v951 = vadd.s32 %v947, 1
    %v952 = vsel %vm950, %v951, %v947
    %v953 = vadd.s32 %v948, %v952
    %v954 = vadd.s32 %v953, 536870912
    %v955 = vshrl.u32 %v954, 30
    %v956 = vshll.u32 %v955, 30
    %v957 = vsub.s32 %v953, %v956
    %vm958 = vcmp.lt.s32.totalorder %v957, 0
    %v959 = vsub.s32 0, %v957
    %v960 = vsel %vm958, %v959, %v957
    %v961 = vclz %v960
    %v962 = vsub.s32 %v961, 2
    %vm963 = vcmp.gt.s32.totalorder 0, %v962
    %v964 = vsel %vm963, 0, %v962
    %v965 = vsub.s32 32, %v964
    %v966 = vshll.u32 %v957, %v964
    %v967 = vshrl.u32 %v949, %v965
    %v968 = vor.u32 %v966, %v967
    %v969 = vsub.s32 4294967266, %v964
    %v970 = vadd.s32 %v969, 127
    %v971 = vshll.u32 %v970, 23
    %v972 = vor.u32 4788187, %v971
    %v973 = vand.u32 2147483647, %v972
    %v975 = vcvt.s32.f32 %v968
    %v976 = vmul.f32 %v975, %v973
    %v977 = vxor.u32 %v976, 2147483648
    %v978 = vsel %vm857, %v977, %v976
    %v979 = vsub.s32 4, %v955
    %v980 = vsel %vm857, %v979, %v955
    %v981 = vsel %vm856, %v161, %v978
    %v982 = vsel %vm856, 0, %v980
    %v983 = vmul.f32 %v981, %v981
    %v984 = vmul.f32 %v983, -0.001358992
    %v985 = vadd.f32 %v984, 0.041655596
    %v986 = vmul.f32 %v983, %v985
    %v987 = vadd.f32 %v986, -0.4999988
    %v988 = vmul.f32 %v983, %v987
    %v989 = vadd.f32 1.0, %v988
    %v990 = vmul.f32 %v981, %v981
    %v991 = vmul.f32 %v990, -0.00019511016
    %v992 = vadd.f32 %v991, 0.008332121
    %v993 = vmul.f32 %v990, %v992
    %v994 = vadd.f32 %v993, -0.16666654
    %v995 = vmul.f32 %v990, %v994
    %v996 = vadd.f32 %v995, 1.0
    %v997 = vmul.f32 %v996, %v981
    %vm998 = vweird.f32 %v161
    %v999 = vadd.s32 %v982, 3
    %v1000 = vand.u32 %v999, 3
    %vm1001 = vcmp.lt.s32.totalorder %v1000, 2
    %vm1002 = vcmp.eq.s32.totalorder %v1000, 0
    %v1003 = vxor.u32 %v997, 2147483648
    %v1004 = vsel %vm1002, %v989, %v1003
    %vm1005 = vcmp.eq.s32.totalorder %v1000, 2
    %v1006 = vxor.u32 %v989, 2147483648
    %v1007 = vsel %vm1005, %v1006, %v997
    %v1008 = vsel %vm1001, %v1004, %v1007
    %v1009 = vsel %vm998, nan, %v1008
    %v1010 = vand.u32 2147483647, %v184
    %vm1011 = vcmp.le.f32.partialorder %v1010, 0.7853982
    %vm1012 = vcmp.lt.s32.totalorder %v184, 0
    %v1013 = vand.u32 %v184, 2139095040
    %v1014 = vshrl.u32 %v1013, 23
    %v1015 = vsub.s32 %v1014, 127
    %v1016 = vand.u32 2147483647, %v184
    %v1017 = vand.u32 %v1016, 8388607
    %v1018 = vor.u32 %v1017, 8388608
    %v1019 = vsub.s32 0, %v1018
    %v1020 = vadd.s32 %v1015, 1
    %vm1021 = vcmp.gt.s32.totalorder %v1020, 0
    %v1022 = vsel %vm1021, %v1020, 0
    %v1023 = vshrl.u32 %v1022, 5
    %v1024 = vand.u32 %v1022, 31
    %v1025 = vsub.s32 32, %v1024
    %v1026 = vshrl.u32 683565275, %v1025
    %v1027 = vshll.u32 683565275, %v1024
    %v1028 = vshrl.u32 2475754826, %v1025
    %v1029 = vor.u32 %v1027, %v1028
    %v1030 = vshll.u32 2475754826, %v1024
    %v1031 = vshrl.u32 2131351028, %v1025
    %v1032 = vor.u32 %v1030, %v1031
    %v1033 = vshll.u32 2131351028, %v1024
    %v1034 = vshrl.u32 2102212464, %v1025
    %v1035 = vor.u32 %v1033, %v1034
    %v1036 = vshll.u32 2102212464, %v1024
    %v1037 = vshrl.u32 920167782, %v1025
    %v1038 = vor.u32 %v1036, %v1037
    %v1039 = vshll.u32 920167782, %v1024
    %v1040 = vshrl.u32 1326507024, %v1025
    %v1041 = vor.u32 %v1039, %v1040
    %vm1042 = vcmp.lt.s32.totalorder %v1023, 1
    %vm1043 = vcmp.lt.s32.totalorder %v1023, 2
    %vm1044 = vcmp.lt.s32.totalorder %v1023, 3
    %vm1045 = vcmp.lt.s32.totalorder %v1023, 4
    %v1046 = vsel %vm1042, %v1026, %v1029
    %v1047 = vsel %vm1045, %v1035, 2102212464
    %v1048 = vsel %vm1044, %v1032, %v1047
    %v1049 = vsel %vm1043, %v1046, %v1048
    %v1050 = vsel %vm1042, %v1029, %v1032
    %v1051 = vsel %vm1045, %v1038, 920167782
    %v1052 = vsel %vm1044, %v1035, %v1051
    %v1053 = vsel %vm1043, %v1050, %v1052
    %v1054 = vsel %vm1042, %v1032, %v1035
    %v1055 = vsel %vm1045, %v1041, 1326507024
    %v1056 = vsel %vm1044, %v1038, %v1055
    %v1057 = vsel %vm1043, %v1054, %v1056
    %v1058 = vshll.u32 %v1018, 8
    %v1059 = vand.u32 %v1058, 65535
    %v1060 = vshrl.u32 %v1058, 16
    %v1061 = vand.u32 %v1057, 65535
    %v1062 = vshrl.u32 %v1057, 16
    %v1063 = vmul.u32 %v1059, %v1061
    %v1064 = vmul.u32 %v1059, %v1062
    %v1065 = vmul.u32 %v1060, %v1061
    %v1066 = vmul.u32 %v1060, %v1062
    %v1067 = vshll.u32 %v1064, 16
    %v1068 = vshrl.u32 %v1064, 16
    %v1069 = vshll.u32 %v1065, 16
    %v1070 = vshrl.u32 %v1065, 16
    %vm1071 = vc.u32 %v1063, %v1067
    %v1072 = vsel %vm1071, 1, 0
    %v1073 = vadd.s32 %v1063, %v1067
    %v1074 = vadd.s32 %v1066, %v1072
    %vm1075 = vc.u32 %v1073, %v1069
    %v1076 = vsel %vm1075, 1, 0
    %v1077 = vadd.s32 %v1073, %v1069
    %v1078 = vadd.s32 %v1074, %v1076
    %v1079 = vadd.s32 %v1078, %v1068
    %v1080 = vadd.s32 %v1079, %v1070
    %v1081 = vand.u32 %v1058, 65535
    %v1082 = vshrl.u32 %v1058, 16
    %v1083 = vand.u32 %v1053, 65535
    %v1084 = vshrl.u32 %v1053, 16
    %v1085 = vmul.u32 %v1081, %v1083
    %v1086 = vmul.u32 %v1081, %v1084
    %v1087 = vmul.u32 %v1082, %v1083
    %v1088 = vmul.u32 %v1082, %v1084
    %v1089 = vshll.u32 %v1086, 16
    %v1090 = vshrl.u32 %v1086, 16
    %v1091 = vshll.u32 %v1087, 16
    %v1092 = vshrl.u32 %v1087, 16
    %vm1093 = vc.u32 %v1085, %v1089
    %v1094 = vsel %vm1093, 1, 0
    %v1095 = vadd.s32 %v1085, %v1089
    %v1096 = vadd.s32 %v1088, %v1094
    %vm1097 = vc.u32 %v1095, %v1091
    %v1098 = vsel %vm1097, 1, 0
    %v1099 = vadd.s32 %v1095, %v1091
    %v1100 = vadd.s32 %v1096, %v1098
    %v1101 = vadd.s32 %v1100, %v1090
    %v1102 = vadd.s32 %v1101, %v1092
    %v1103 = vmul.u32 %v1058, %v1049
    %v1104 = vadd.s32 %v1080, %v1099
    %vm1105 = vc.u32 %v1080, %v1099
    %v1106 = vadd.s32 %v1102, 1
    %v1107 = vsel %vm1105, %v1106, %v1102
    %v1108 = vadd.s32 %v1103, %v1107
    %v1109 = vadd.s32 %v1108, 536870912
    %v1110 = vshrl.u32 %v1109, 30
    %v1111 = vshll.u32 %v1110, 30
    %v1112 = vsub.s32 %v1108, %v1111
    %vm1113 = vcmp.lt.s32.totalorder %v1112, 0
    %v1114 = vsub.s32 0, %v1112
    %v1115 = vsel %vm1113, %v1114, %v1112
    %v1116 = vclz %v1115
    %v1117 = vsub.s32 %v1116, 2
    %vm1118 = vcmp.gt.s32.totalorder 0, %v1117
    %v1119 = vsel %vm1118, 0, %v1117
    %v1120 = vsub.s32 32, %v1119
    %v1121 = vshll.u32 %v1112, %v1119
    %v1122 = vshrl.u32 %v1104, %v1120
    %v1123 = vor.u32 %v1121, %v1122
    %v1124 = vsub.s32 4294967266, %v1119
    %v1125 = vadd.s32 %v1124, 127
    %v1126 = vshll.u32 %v1125, 23
    %v1127 = vor.u32 4788187, %v1126
    %v1128 = vand.u32 2147483647, %v1127
    %v1130 = vcvt.s32.f32 %v1123
    %v1131 = vmul.f32 %v1130, %v1128
    %v1132 = vxor.u32 %v1131, 2147483648
    %v1133 = vsel %vm1012, %v1132, %v1131
    %v1134 = vsub.s32 4, %v1110
    %v1135 = vsel %vm1012, %v1134, %v1110
    %v1136 = vsel %vm1011, %v184, %v1133
    %v1137 = vsel %vm1011, 0, %v1135
    %v1138 = vmul.f32 %v1136, %v1136
    %v1139 = vmul.f32 %v1138, -0.001358992
    %v1140 = vadd.f32 %v1139, 0.041655596
    %v1141 = vmul.f32 %v1138, %v1140
    %v1142 = vadd.f32 %v1141, -0.4999988
    %v1143 = vmul.f32 %v1138, %v1142
    %v1144 = vadd.f32 1.0, %v1143
    %v1145 = vmul.f32 %v1136, %v1136
    %v1146 = vmul.f32 %v1145, -0.00019511016
    %v1147 = vadd.f32 %v1146, 0.008332121
    %v1148 = vmul.f32 %v1145, %v1147
    %v1149 = vadd.f32 %v1148, -0.16666654
    %v1150 = vmul.f32 %v1145, %v1149
    %v1151 = vadd.f32 %v1150, 1.0
    %v1152 = vmul.f32 %v1151, %v1136
    %vm1153 = vweird.f32 %v184
    %v1154 = vadd.s32 %v1137, 3
    %v1155 = vand.u32 %v1154, 3
    %vm1156 = vcmp.lt.s32.totalorder %v1155, 2
    %vm1157 = vcmp.eq.s32.totalorder %v1155, 0
    %v1158 = vxor.u32 %v1152, 2147483648
    %v1159 = vsel %vm1157, %v1144, %v1158
    %vm1160 = vcmp.eq.s32.totalorder %v1155, 2
    %v1161 = vxor.u32 %v1144, 2147483648
    %v1162 = vsel %vm1160, %v1161, %v1152
    %v1163 = vsel %vm1156, %v1159, %v1162
    %v1164 = vsel %vm1153, nan, %v1163
    %v1165 = vand.u32 2147483647, %v207
    %vm1166 = vcmp.le.f32.partialorder %v1165, 0.7853982
    %vm1167 = vcmp.lt.s32.totalorder %v207, 0
    %v1168 = vand.u32 %v207, 2139095040
    %v1169 = vshrl.u32 %v1168, 23
    %v1170 = vsub.s32 %v1169, 127
    %v1171 = vand.u32 2147483647, %v207
    %v1172 = vand.u32 %v1171, 8388607
    %v1173 = vor.u32 %v1172, 8388608
    %v1174 = vsub.s32 0, %v1173
    %v1175 = vadd.s32 %v1170, 1
    %vm1176 = vcmp.gt.s32.totalorder %v1175, 0
    %v1177 = vsel %vm1176, %v1175, 0
    %v1178 = vshrl.u32 %v1177, 5
    %v1179 = vand.u32 %v1177, 31
    %v1180 = vsub.s32 32, %v1179
    %v1181 = vshrl.u32 683565275, %v1180
    %v1182 = vshll.u32 683565275, %v1179
    %v1183 = vshrl.u32 2475754826, %v1180
    %v1184 = vor.u32 %v1182, %v1183
    %v1185 = vshll.u32 2475754826, %v1179
    %v1186 = vshrl.u32 2131351028, %v1180
    %v1187 = vor.u32 %v1185, %v1186
    %v1188 = vshll.u32 2131351028, %v1179
    %v1189 = vshrl.u32 2102212464, %v1180
    %v1190 = vor.u32 %v1188, %v1189
    %v1191 = vshll.u32 2102212464, %v1179
    %v1192 = vshrl.u32 920167782, %v1180
    %v1193 = vor.u32 %v1191, %v1192
    %v1194 = vshll.u32 920167782, %v1179
    %v1195 = vshrl.u32 1326507024, %v1180
    %v1196 = vor.u32 %v1194, %v1195
    %vm1197 = vcmp.lt.s32.totalorder %v1178, 1
    %vm1198 = vcmp.lt.s32.totalorder %v1178, 2
    %vm1199 = vcmp.lt.s32.totalorder %v1178, 3
    %vm1200 = vcmp.lt.s32.totalorder %v1178, 4
    %v1201 = vsel %vm1197, %v1181, %v1184
    %v1202 = vsel %vm1200, %v1190, 2102212464
    %v1203 = vsel %vm1199, %v1187, %v1202
    %v1204 = vsel %vm1198, %v1201, %v1203
    %v1205 = vsel %vm1197, %v1184, %v1187
    %v1206 = vsel %vm1200, %v1193, 920167782
    %v1207 = vsel %vm1199, %v1190, %v1206
    %v1208 = vsel %vm1198, %v1205, %v1207
    %v1209 = vsel %vm1197, %v1187, %v1190
    %v1210 = vsel %vm1200, %v1196, 1326507024
    %v1211 = vsel %vm1199, %v1193, %v1210
    %v1212 = vsel %vm1198, %v1209, %v1211
    %v1213 = vshll.u32 %v1173, 8
    %v1214 = vand.u32 %v1213, 65535
    %v1215 = vshrl.u32 %v1213, 16
    %v1216 = vand.u32 %v1212, 65535
    %v1217 = vshrl.u32 %v1212, 16
    %v1218 = vmul.u32 %v1214, %v1216
    %v1219 = vmul.u32 %v1214, %v1217
    %v1220 = vmul.u32 %v1215, %v1216
    %v1221 = vmul.u32 %v1215, %v1217
    %v1222 = vshll.u32 %v1219, 16
    %v1223 = vshrl.u32 %v1219, 16
    %v1224 = vshll.u32 %v1220, 16
    %v1225 = vshrl.u32 %v1220, 16
    %vm1226 = vc.u32 %v1218, %v1222
    %v1227 = vsel %vm1226, 1, 0
    %v1228 = vadd.s32 %v1218, %v1222
    %v1229 = vadd.s32 %v1221, %v1227
    %vm1230 = vc.u32 %v1228, %v1224
    %v1231 = vsel %vm1230, 1, 0
    %v1232 = vadd.s32 %v1228, %v1224
    %v1233 = vadd.s32 %v1229, %v1231
    %v1234 = vadd.s32 %v1233, %v1223
    %v1235 = vadd.s32 %v1234, %v1225
    %v1236 = vand.u32 %v1213, 65535
    %v1237 = vshrl.u32 %v1213, 16
    %v1238 = vand.u32 %v1208, 65535
    %v1239 = vshrl.u32 %v1208, 16
    %v1240 = vmul.u32 %v1236, %v1238
    %v1241 = vmul.u32 %v1236, %v1239
    %v1242 = vmul.u32 %v1237, %v1238
    %v1243 = vmul.u32 %v1237, %v1239
    %v1244 = vshll.u32 %v1241, 16
    %v1245 = vshrl.u32 %v1241, 16
    %v1246 = vshll.u32 %v1242, 16
    %v1247 = vshrl.u32 %v1242, 16
    %vm1248 = vc.u32 %v1240, %v1244
    %v1249 = vsel %vm1248, 1, 0
    %v1250 = vadd.s32 %v1240, %v1244
    %v1251 = vadd.s32 %v1243, %v1249
    %vm1252 = vc.u32 %v1250, %v1246
    %v1253 = vsel %vm1252, 1, 0
    %v1254 = vadd.s32 %v1250, %v1246
    %v1255 = vadd.s32 %v1251, %v1253
    %v1256 = vadd.s32 %v1255, %v1245
    %v1257 = vadd.s32 %v1256, %v1247
    %v1258 = vmul.u32 %v1213, %v1204
    %v1259 = vadd.s32 %v1235, %v1254
    %vm1260 = vc.u32 %v1235, %v1254
    %v1261 = vadd.s32 %v1257, 1
    %v1262 = vsel %vm1260, %v1261, %v1257
    %v1263 = vadd.s32 %v1258, %v1262
    %v1264 = vadd.s32 %v1263, 536870912
    %v1265 = vshrl.u32 %v1264, 30
    %v1266 = vshll.u32 %v1265, 30
    %v1267 = vsub.s32 %v1263, %v1266
    %vm1268 = vcmp.lt.s32.totalorder %v1267, 0
    %v1269 = vsub.s32 0, %v1267
    %v1270 = vsel %vm1268, %v1269, %v1267
    %v1271 = vclz %v1270
    %v1272 = vsub.s32 %v1271, 2
    %vm1273 = vcmp.gt.s32.totalorder 0, %v1272
    %v1274 = vsel %vm1273, 0, %v1272
    %v1275 = vsub.s32 32, %v1274
    %v1276 = vshll.u32 %v1267, %v1274
    %v1277 = vshrl.u32 %v1259, %v1275
    %v1278 = vor.u32 %v1276, %v1277
    %v1279 = vsub.s32 4294967266, %v1274
    %v1280 = vadd.s32 %v1279, 127
    %v1281 = vshll.u32 %v1280, 23
    %v1282 = vor.u32 4788187, %v1281
    %v1283 = vand.u32 2147483647, %v1282
    %v1285 = vcvt.s32.f32 %v1278
    %v1286 = vmul.f32 %v1285, %v1283
    %v1287 = vxor.u32 %v1286, 2147483648
    %v1288 = vsel %vm1167, %v1287, %v1286
    %v1289 = vsub.s32 4, %v1265
    %v1290 = vsel %vm1167, %v1289, %v1265
    %v1291 = vsel %vm1166, %v207, %v1288
    %v1292 = vsel %vm1166, 0, %v1290
    %v1293 = vmul.f32 %v1291, %v1291
    %v1294 = vmul.f32 %v1293, -0.001358992
    %v1295 = vadd.f32 %v1294, 0.041655596
    %v1296 = vmul.f32 %v1293, %v1295
    %v1297 = vadd.f32 %v1296, -0.4999988
    %v1298 = vmul.f32 %v1293, %v1297
    %v1299 = vadd.f32 1.0, %v1298
    %v1300 = vmul.f32 %v1291, %v1291
    %v1301 = vmul.f32 %v1300, -0.00019511016
    %v1302 = vadd.f32 %v1301, 0.008332121
    %v1303 = vmul.f32 %v1300, %v1302
    %v1304 = vadd.f32 %v1303, -0.16666654
    %v1305 = vmul.f32 %v1300, %v1304
    %v1306 = vadd.f32 %v1305, 1.0
    %v1307 = vmul.f32 %v1306, %v1291
    %vm1308 = vweird.f32 %v207
    %v1309 = vadd.s32 %v1292, 3
    %v1310 = vand.u32 %v1309, 3
    %vm1311 = vcmp.lt.s32.totalorder %v1310, 2
    %vm1312 = vcmp.eq.s32.totalorder %v1310, 0
    %v1313 = vxor.u32 %v1307, 2147483648
    %v1314 = vsel %vm1312, %v1299, %v1313
    %vm1315 = vcmp.eq.s32.totalorder %v1310, 2
    %v1316 = vxor.u32 %v1299, 2147483648
    %v1317 = vsel %vm1315, %v1316, %v1307
    %v1318 = vsel %vm1311, %v1314, %v1317
    %v1319 = vsel %vm1308, nan, %v1318
    %v1320 = vand.u32 2147483647, %v230
    %vm1321 = vcmp.le.f32.partialorder %v1320, 0.7853982
    %vm1322 = vcmp.lt.s32.totalorder %v230, 0
    %v1323 = vand.u32 %v230, 2139095040
    %v1324 = vshrl.u32 %v1323, 23
    %v1325 = vsub.s32 %v1324, 127
    %v1326 = vand.u32 2147483647, %v230
    %v1327 = vand.u32 %v1326, 8388607
    %v1328 = vor.u32 %v1327, 8388608
    %v1329 = vsub.s32 0, %v1328
    %v1330 = vadd.s32 %v1325, 1
    %vm1331 = vcmp.gt.s32.totalorder %v1330, 0
    %v1332 = vsel %vm1331, %v1330, 0
    %v1333 = vshrl.u32 %v1332, 5
    %v1334 = vand.u32 %v1332, 31
    %v1335 = vsub.s32 32, %v1334
    %v1336 = vshrl.u32 683565275, %v1335
    %v1337 = vshll.u32 683565275, %v1334
    %v1338 = vshrl.u32 2475754826, %v1335
    %v1339 = vor.u32 %v1337, %v1338
    %v1340 = vshll.u32 2475754826, %v1334
    %v1341 = vshrl.u32 2131351028, %v1335
    %v1342 = vor.u32 %v1340, %v1341
    %v1343 = vshll.u32 2131351028, %v1334
    %v1344 = vshrl.u32 2102212464, %v1335
    %v1345 = vor.u32 %v1343, %v1344
    %v1346 = vshll.u32 2102212464, %v1334
    %v1347 = vshrl.u32 920167782, %v1335
    %v1348 = vor.u32 %v1346, %v1347
    %v1349 = vshll.u32 920167782, %v1334
    %v1350 = vshrl.u32 1326507024, %v1335
    %v1351 = vor.u32 %v1349, %v1350
    %vm1352 = vcmp.lt.s32.totalorder %v1333, 1
    %vm1353 = vcmp.lt.s32.totalorder %v1333, 2
    %vm1354 = vcmp.lt.s32.totalorder %v1333, 3
    %vm1355 = vcmp.lt.s32.totalorder %v1333, 4
    %v1356 = vsel %vm1352, %v1336, %v1339
    %v1357 = vsel %vm1355, %v1345, 2102212464
    %v1358 = vsel %vm1354, %v1342, %v1357
    %v1359 = vsel %vm1353, %v1356, %v1358
    %v1360 = vsel %vm1352, %v1339, %v1342
    %v1361 = vsel %vm1355, %v1348, 920167782
    %v1362 = vsel %vm1354, %v1345, %v1361
    %v1363 = vsel %vm1353, %v1360, %v1362
    %v1364 = vsel %vm1352, %v1342, %v1345
    %v1365 = vsel %vm1355, %v1351, 1326507024
    %v1366 = vsel %vm1354, %v1348, %v1365
    %v1367 = vsel %vm1353, %v1364, %v1366
    %v1368 = vshll.u32 %v1328, 8
    %v1369 = vand.u32 %v1368, 65535
    %v1370 = vshrl.u32 %v1368, 16
    %v1371 = vand.u32 %v1367, 65535
    %v1372 = vshrl.u32 %v1367, 16
    %v1373 = vmul.u32 %v1369, %v1371
    %v1374 = vmul.u32 %v1369, %v1372
    %v1375 = vmul.u32 %v1370, %v1371
    %v1376 = vmul.u32 %v1370, %v1372
    %v1377 = vshll.u32 %v1374, 16
    %v1378 = vshrl.u32 %v1374, 16
    %v1379 = vshll.u32 %v1375, 16
    %v1380 = vshrl.u32 %v1375, 16
    %vm1381 = vc.u32 %v1373, %v1377
    %v1382 = vsel %vm1381, 1, 0
    %v1383 = vadd.s32 %v1373, %v1377
    %v1384 = vadd.s32 %v1376, %v1382
    %vm1385 = vc.u32 %v1383, %v1379
    %v1386 = vsel %vm1385, 1, 0
    %v1387 = vadd.s32 %v1383, %v1379
    %v1388 = vadd.s32 %v1384, %v1386
    %v1389 = vadd.s32 %v1388, %v1378
    %v1390 = vadd.s32 %v1389, %v1380
    %v1391 = vand.u32 %v1368, 65535
    %v1392 = vshrl.u32 %v1368, 16
    %v1393 = vand.u32 %v1363, 65535
    %v1394 = vshrl.u32 %v1363, 16
    %v1395 = vmul.u32 %v1391, %v1393
    %v1396 = vmul.u32 %v1391, %v1394
    %v1397 = vmul.u32 %v1392, %v1393
    %v1398 = vmul.u32 %v1392, %v1394
    %v1399 = vshll.u32 %v1396, 16
    %v1400 = vshrl.u32 %v1396, 16
    %v1401 = vshll.u32 %v1397, 16
    %v1402 = vshrl.u32 %v1397, 16
    %vm1403 = vc.u32 %v1395, %v1399
    %v1404 = vsel %vm1403, 1, 0
    %v1405 = vadd.s32 %v1395, %v1399
    %v1406 = vadd.s32 %v1398, %v1404
    %vm1407 = vc.u32 %v1405, %v1401
    %v1408 = vsel %vm1407, 1, 0
    %v1409 = vadd.s32 %v1405, %v1401
    %v1410 = vadd.s32 %v1406, %v1408
    %v1411 = vadd.s32 %v1410, %v1400
    %v1412 = vadd.s32 %v1411, %v1402
    %v1413 = vmul.u32 %v1368, %v1359
    %v1414 = vadd.s32 %v1390, %v1409
    %vm1415 = vc.u32 %v1390, %v1409
    %v1416 = vadd.s32 %v1412, 1
    %v1417 = vsel %vm1415, %v1416, %v1412
    %v1418 = vadd.s32 %v1413, %v1417
    %v1419 = vadd.s32 %v1418, 536870912
    %v1420 = vshrl.u32 %v1419, 30
    %v1421 = vshll.u32 %v1420, 30
    %v1422 = vsub.s32 %v1418, %v1421
    %vm1423 = vcmp.lt.s32.totalorder %v1422, 0
    %v1424 = vsub.s32 0, %v1422
    %v1425 = vsel %vm1423, %v1424, %v1422
    %v1426 = vclz %v1425
    %v1427 = vsub.s32 %v1426, 2
    %vm1428 = vcmp.gt.s32.totalorder 0, %v1427
    %v1429 = vsel %vm1428, 0, %v1427
    %v1430 = vsub.s32 32, %v1429
    %v1431 = vshll.u32 %v1422, %v1429
    %v1432 = vshrl.u32 %v1414, %v1430
    %v1433 = vor.u32 %v1431, %v1432
    %v1434 = vsub.s32 4294967266, %v1429
    %v1435 = vadd.s32 %v1434, 127
    %v1436 = vshll.u32 %v1435, 23
    %v1437 = vor.u32 4788187, %v1436
    %v1438 = vand.u32 2147483647, %v1437
    %v1440 = vcvt.s32.f32 %v1433
    %v1441 = vmul.f32 %v1440, %v1438
    %v1442 = vxor.u32 %v1441, 2147483648
    %v1443 = vsel %vm1322, %v1442, %v1441
    %v1444 = vsub.s32 4, %v1420
    %v1445 = vsel %vm1322, %v1444, %v1420
    %v1446 = vsel %vm1321, %v230, %v1443
    %v1447 = vsel %vm1321, 0, %v1445
    %v1448 = vmul.f32 %v1446, %v1446
    %v1449 = vmul.f32 %v1448, -0.001358992
    %v1450 = vadd.f32 %v1449, 0.041655596
    %v1451 = vmul.f32 %v1448, %v1450
    %v1452 = vadd.f32 %v1451, -0.4999988
    %v1453 = vmul.f32 %v1448, %v1452
    %v1454 = vadd.f32 1.0, %v1453
    %v1455 = vmul.f32 %v1446, %v1446
    %v1456 = vmul.f32 %v1455, -0.00019511016
    %v1457 = vadd.f32 %v1456, 0.008332121
    %v1458 = vmul.f32 %v1455, %v1457
    %v1459 = vadd.f32 %v1458, -0.16666654
    %v1460 = vmul.f32 %v1455, %v1459
    %v1461 = vadd.f32 %v1460, 1.0
    %v1462 = vmul.f32 %v1461, %v1446
    %vm1463 = vweird.f32 %v230
    %v1464 = vadd.s32 %v1447, 3
    %v1465 = vand.u32 %v1464, 3
    %vm1466 = vcmp.lt.s32.totalorder %v1465, 2
    %vm1467 = vcmp.eq.s32.totalorder %v1465, 0
    %v1468 = vxor.u32 %v1462, 2147483648
    %v1469 = vsel %vm1467, %v1454, %v1468
    %vm1470 = vcmp.eq.s32.totalorder %v1465, 2
    %v1471 = vxor.u32 %v1454, 2147483648
    %v1472 = vsel %vm1470, %v1471, %v1462
    %v1473 = vsel %vm1466, %v1469, %v1472
    %v1474 = vsel %vm1463, nan, %v1473
    %v1475 = vand.u32 2147483647, %v72
    %vm1476 = vcmp.le.f32.partialorder %v1475, 0.7853982
    %vm1477 = vcmp.lt.s32.totalorder %v72, 0
    %v1478 = vand.u32 %v72, 2139095040
    %v1479 = vshrl.u32 %v1478, 23
    %v1480 = vsub.s32 %v1479, 127
    %v1481 = vand.u32 2147483647, %v72
    %v1482 = vand.u32 %v1481, 8388607
    %v1483 = vor.u32 %v1482, 8388608
    %v1484 = vsub.s32 0, %v1483
    %v1485 = vadd.s32 %v1480, 1
    %vm1486 = vcmp.gt.s32.totalorder %v1485, 0
    %v1487 = vsel %vm1486, %v1485, 0
    %v1488 = vshrl.u32 %v1487, 5
    %v1489 = vand.u32 %v1487, 31
    %v1490 = vsub.s32 32, %v1489
    %v1491 = vshrl.u32 683565275, %v1490
    %v1492 = vshll.u32 683565275, %v1489
    %v1493 = vshrl.u32 2475754826, %v1490
    %v1494 = vor.u32 %v1492, %v1493
    %v1495 = vshll.u32 2475754826, %v1489
    %v1496 = vshrl.u32 2131351028, %v1490
    %v1497 = vor.u32 %v1495, %v1496
    %v1498 = vshll.u32 2131351028, %v1489
    %v1499 = vshrl.u32 2102212464, %v1490
    %v1500 = vor.u32 %v1498, %v1499
    %v1501 = vshll.u32 2102212464, %v1489
    %v1502 = vshrl.u32 920167782, %v1490
    %v1503 = vor.u32 %v1501, %v1502
    %v1504 = vshll.u32 920167782, %v1489
    %v1505 = vshrl.u32 1326507024, %v1490
    %v1506 = vor.u32 %v1504, %v1505
    %vm1507 = vcmp.lt.s32.totalorder %v1488, 1
    %vm1508 = vcmp.lt.s32.totalorder %v1488, 2
    %vm1509 = vcmp.lt.s32.totalorder %v1488, 3
    %vm1510 = vcmp.lt.s32.totalorder %v1488, 4
    %v1511 = vsel %vm1507, %v1491, %v1494
    %v1512 = vsel %vm1510, %v1500, 2102212464
    %v1513 = vsel %vm1509, %v1497, %v1512
    %v1514 = vsel %vm1508, %v1511, %v1513
    %v1515 = vsel %vm1507, %v1494, %v1497
    %v1516 = vsel %vm1510, %v1503, 920167782
    %v1517 = vsel %vm1509, %v1500, %v1516
    %v1518 = vsel %vm1508, %v1515, %v1517
    %v1519 = vsel %vm1507, %v1497, %v1500
    %v1520 = vsel %vm1510, %v1506, 1326507024
    %v1521 = vsel %vm1509, %v1503, %v1520
    %v1522 = vsel %vm1508, %v1519, %v1521
    %v1523 = vshll.u32 %v1483, 8
    %v1524 = vand.u32 %v1523, 65535
    %v1525 = vshrl.u32 %v1523, 16
    %v1526 = vand.u32 %v1522, 65535
    %v1527 = vshrl.u32 %v1522, 16
    %v1528 = vmul.u32 %v1524, %v1526
    %v1529 = vmul.u32 %v1524, %v1527
    %v1530 = vmul.u32 %v1525, %v1526
    %v1531 = vmul.u32 %v1525, %v1527
    %v1532 = vshll.u32 %v1529, 16
    %v1533 = vshrl.u32 %v1529, 16
    %v1534 = vshll.u32 %v1530, 16
    %v1535 = vshrl.u32 %v1530, 16
    %vm1536 = vc.u32 %v1528, %v1532
    %v1537 = vsel %vm1536, 1, 0
    %v1538 = vadd.s32 %v1528, %v1532
    %v1539 = vadd.s32 %v1531, %v1537
    %vm1540 = vc.u32 %v1538, %v1534
    %v1541 = vsel %vm1540, 1, 0
    %v1542 = vadd.s32 %v1538, %v1534
    %v1543 = vadd.s32 %v1539, %v1541
    %v1544 = vadd.s32 %v1543, %v1533
    %v1545 = vadd.s32 %v1544, %v1535
    %v1546 = vand.u32 %v1523, 65535
    %v1547 = vshrl.u32 %v1523, 16
    %v1548 = vand.u32 %v1518, 65535
    %v1549 = vshrl.u32 %v1518, 16
    %v1550 = vmul.u32 %v1546, %v1548
    %v1551 = vmul.u32 %v1546, %v1549
    %v1552 = vmul.u32 %v1547, %v1548
    %v1553 = vmul.u32 %v1547, %v1549
    %v1554 = vshll.u32 %v1551, 16
    %v1555 = vshrl.u32 %v1551, 16
    %v1556 = vshll.u32 %v1552, 16
    %v1557 = vshrl.u32 %v1552, 16
    %vm1558 = vc.u32 %v1550, %v1554
    %v1559 = vsel %vm1558, 1, 0
    %v1560 = vadd.s32 %v1550, %v1554
    %v1561 = vadd.s32 %v1553, %v1559
    %vm1562 = vc.u32 %v1560, %v1556
    %v1563 = vsel %vm1562, 1, 0
    %v1564 = vadd.s32 %v1560, %v1556
    %v1565 = vadd.s32 %v1561, %v1563
    %v1566 = vadd.s32 %v1565, %v1555
    %v1567 = vadd.s32 %v1566, %v1557
    %v1568 = vmul.u32 %v1523, %v1514
    %v1569 = vadd.s32 %v1545, %v1564
    %vm1570 = vc.u32 %v1545, %v1564
    %v1571 = vadd.s32 %v1567, 1
    %v1572 = vsel %vm1570, %v1571, %v1567
    %v1573 = vadd.s32 %v1568, %v1572
    %v1574 = vadd.s32 %v1573, 536870912
    %v1575 = vshrl.u32 %v1574, 30
    %v1576 = vshll.u32 %v1575, 30
    %v1577 = vsub.s32 %v1573, %v1576
    %vm1578 = vcmp.lt.s32.totalorder %v1577, 0
    %v1579 = vsub.s32 0, %v1577
    %v1580 = vsel %vm1578, %v1579, %v1577
    %v1581 = vclz %v1580
    %v1582 = vsub.s32 %v1581, 2
    %vm1583 = vcmp.gt.s32.totalorder 0, %v1582
    %v1584 = vsel %vm1583, 0, %v1582
    %v1585 = vsub.s32 32, %v1584
    %v1586 = vshll.u32 %v1577, %v1584
    %v1587 = vshrl.u32 %v1569, %v1585
    %v1588 = vor.u32 %v1586, %v1587
    %v1589 = vsub.s32 4294967266, %v1584
    %v1590 = vadd.s32 %v1589, 127
    %v1591 = vshll.u32 %v1590, 23
    %v1592 = vor.u32 4788187, %v1591
    %v1593 = vand.u32 2147483647, %v1592
    %v1595 = vcvt.s32.f32 %v1588
    %v1596 = vmul.f32 %v1595, %v1593
    %v1597 = vxor.u32 %v1596, 2147483648
    %v1598 = vsel %vm1477, %v1597, %v1596
    %v1599 = vsub.s32 4, %v1575
    %v1600 = vsel %vm1477, %v1599, %v1575
    %v1601 = vsel %vm1476, %v72, %v1598
    %v1602 = vsel %vm1476, 0, %v1600
    %v1603 = vmul.f32 %v1601, %v1601
    %v1604 = vmul.f32 %v1603, -0.001358992
    %v1605 = vadd.f32 %v1604, 0.041655596
    %v1606 = vmul.f32 %v1603, %v1605
    %v1607 = vadd.f32 %v1606, -0.4999988
    %v1608 = vmul.f32 %v1603, %v1607
    %v1609 = vadd.f32 1.0, %v1608
    %v1610 = vmul.f32 %v1601, %v1601
    %v1611 = vmul.f32 %v1610, -0.00019511016
    %v1612 = vadd.f32 %v1611, 0.008332121
    %v1613 = vmul.f32 %v1610, %v1612
    %v1614 = vadd.f32 %v1613, -0.16666654
    %v1615 = vmul.f32 %v1610, %v1614
    %v1616 = vadd.f32 %v1615, 1.0
    %v1617 = vmul.f32 %v1616, %v1601
    %vm1618 = vweird.f32 %v72
    %v1619 = vadd.s32 %v1602, 3
    %v1620 = vand.u32 %v1619, 3
    %vm1621 = vcmp.lt.s32.totalorder %v1620, 2
    %vm1622 = vcmp.eq.s32.totalorder %v1620, 0
    %v1623 = vxor.u32 %v1617, 2147483648
    %v1624 = vsel %vm1622, %v1609, %v1623
    %vm1625 = vcmp.eq.s32.totalorder %v1620, 2
    %v1626 = vxor.u32 %v1609, 2147483648
    %v1627 = vsel %vm1625, %v1626, %v1617
    %v1628 = vsel %vm1621, %v1624, %v1627
    %v1629 = vsel %vm1618, nan, %v1628
    %v1630 = vand.u32 2147483647, %v95
    %vm1631 = vcmp.le.f32.partialorder %v1630, 0.7853982
    %vm1632 = vcmp.lt.s32.totalorder %v95, 0
    %v1633 = vand.u32 %v95, 2139095040
    %v1634 = vshrl.u32 %v1633, 23
    %v1635 = vsub.s32 %v1634, 127
    %v1636 = vand.u32 2147483647, %v95
    %v1637 = vand.u32 %v1636, 8388607
    %v1638 = vor.u32 %v1637, 8388608
    %v1639 = vsub.s32 0, %v1638
    %v1640 = vadd.s32 %v1635, 1
    %vm1641 = vcmp.gt.s32.totalorder %v1640, 0
    %v1642 = vsel %vm1641, %v1640, 0
    %v1643 = vshrl.u32 %v1642, 5
    %v1644 = vand.u32 %v1642, 31
    %v1645 = vsub.s32 32, %v1644
    %v1646 = vshrl.u32 683565275, %v1645
    %v1647 = vshll.u32 683565275, %v1644
    %v1648 = vshrl.u32 2475754826, %v1645
    %v1649 = vor.u32 %v1647, %v1648
    %v1650 = vshll.u32 2475754826, %v1644
    %v1651 = vshrl.u32 2131351028, %v1645
    %v1652 = vor.u32 %v1650, %v1651
    %v1653 = vshll.u32 2131351028, %v1644
    %v1654 = vshrl.u32 2102212464, %v1645
    %v1655 = vor.u32 %v1653, %v1654
    %v1656 = vshll.u32 2102212464, %v1644
    %v1657 = vshrl.u32 920167782, %v1645
    %v1658 = vor.u32 %v1656, %v1657
    %v1659 = vshll.u32 920167782, %v1644
    %v1660 = vshrl.u32 1326507024, %v1645
    %v1661 = vor.u32 %v1659, %v1660
    %vm1662 = vcmp.lt.s32.totalorder %v1643, 1
    %vm1663 = vcmp.lt.s32.totalorder %v1643, 2
    %vm1664 = vcmp.lt.s32.totalorder %v1643, 3
    %vm1665 = vcmp.lt.s32.totalorder %v1643, 4
    %v1666 = vsel %vm1662, %v1646, %v1649
    %v1667 = vsel %vm1665, %v1655, 2102212464
    %v1668 = vsel %vm1664, %v1652, %v1667
    %v1669 = vsel %vm1663, %v1666, %v1668
    %v1670 = vsel %vm1662, %v1649, %v1652
    %v1671 = vsel %vm1665, %v1658, 920167782
    %v1672 = vsel %vm1664, %v1655, %v1671
    %v1673 = vsel %vm1663, %v1670, %v1672
    %v1674 = vsel %vm1662, %v1652, %v1655
    %v1675 = vsel %vm1665, %v1661, 1326507024
    %v1676 = vsel %vm1664, %v1658, %v1675
    %v1677 = vsel %vm1663, %v1674, %v1676
    %v1678 = vshll.u32 %v1638, 8
    %v1679 = vand.u32 %v1678, 65535
    %v1680 = vshrl.u32 %v1678, 16
    %v1681 = vand.u32 %v1677, 65535
    %v1682 = vshrl.u32 %v1677, 16
    %v1683 = vmul.u32 %v1679, %v1681
    %v1684 = vmul.u32 %v1679, %v1682
    %v1685 = vmul.u32 %v1680, %v1681
    %v1686 = vmul.u32 %v1680, %v1682
    %v1687 = vshll.u32 %v1684, 16
    %v1688 = vshrl.u32 %v1684, 16
    %v1689 = vshll.u32 %v1685, 16
    %v1690 = vshrl.u32 %v1685, 16
    %vm1691 = vc.u32 %v1683, %v1687
    %v1692 = vsel %vm1691, 1, 0
    %v1693 = vadd.s32 %v1683, %v1687
    %v1694 = vadd.s32 %v1686, %v1692
    %vm1695 = vc.u32 %v1693, %v1689
    %v1696 = vsel %vm1695, 1, 0
    %v1697 = vadd.s32 %v1693, %v1689
    %v1698 = vadd.s32 %v1694, %v1696
    %v1699 = vadd.s32 %v1698, %v1688
    %v1700 = vadd.s32 %v1699, %v1690
    %v1701 = vand.u32 %v1678, 65535
    %v1702 = vshrl.u32 %v1678, 16
    %v1703 = vand.u32 %v1673, 65535
    %v1704 = vshrl.u32 %v1673, 16
    %v1705 = vmul.u32 %v1701, %v1703
    %v1706 = vmul.u32 %v1701, %v1704
    %v1707 = vmul.u32 %v1702, %v1703
    %v1708 = vmul.u32 %v1702, %v1704
    %v1709 = vshll.u32 %v1706, 16
    %v1710 = vshrl.u32 %v1706, 16
    %v1711 = vshll.u32 %v1707, 16
    %v1712 = vshrl.u32 %v1707, 16
    %vm1713 = vc.u32 %v1705, %v1709
    %v1714 = vsel %vm1713, 1, 0
    %v1715 = vadd.s32 %v1705, %v1709
    %v1716 = vadd.s32 %v1708, %v1714
    %vm1717 = vc.u32 %v1715, %v1711
    %v1718 = vsel %vm1717, 1, 0
    %v1719 = vadd.s32 %v1715, %v1711
    %v1720 = vadd.s32 %v1716, %v1718
    %v1721 = vadd.s32 %v1720, %v1710
    %v1722 = vadd.s32 %v1721, %v1712
    %v1723 = vmul.u32 %v1678, %v1669
    %v1724 = vadd.s32 %v1700, %v1719
    %vm1725 = vc.u32 %v1700, %v1719
    %v1726 = vadd.s32 %v1722, 1
    %v1727 = vsel %vm1725, %v1726, %v1722
    %v1728 = vadd.s32 %v1723, %v1727
    %v1729 = vadd.s32 %v1728, 536870912
    %v1730 = vshrl.u32 %v1729, 30
    %v1731 = vshll.u32 %v1730, 30
    %v1732 = vsub.s32 %v1728, %v1731
    %vm1733 = vcmp.lt.s32.totalorder %v1732, 0
    %v1734 = vsub.s32 0, %v1732
    %v1735 = vsel %vm1733, %v1734, %v1732
    %v1736 = vclz %v1735
    %v1737 = vsub.s32 %v1736, 2
    %vm1738 = vcmp.gt.s32.totalorder 0, %v1737
    %v1739 = vsel %vm1738, 0, %v1737
    %v1740 = vsub.s32 32, %v1739
    %v1741 = vshll.u32 %v1732, %v1739
    %v1742 = vshrl.u32 %v1724, %v1740
    %v1743 = vor.u32 %v1741, %v1742
    %v1744 = vsub.s32 4294967266, %v1739
    %v1745 = vadd.s32 %v1744, 127
    %v1746 = vshll.u32 %v1745, 23
    %v1747 = vor.u32 4788187, %v1746
    %v1748 = vand.u32 2147483647, %v1747
    %v1750 = vcvt.s32.f32 %v1743
    %v1751 = vmul.f32 %v1750, %v1748
    %v1752 = vxor.u32 %v1751, 2147483648
    %v1753 = vsel %vm1632, %v1752, %v1751
    %v1754 = vsub.s32 4, %v1730
    %v1755 = vsel %vm1632, %v1754, %v1730
    %v1756 = vsel %vm1631, %v95, %v1753
    %v1757 = vsel %vm1631, 0, %v1755
    %v1758 = vmul.f32 %v1756, %v1756
    %v1759 = vmul.f32 %v1758, -0.001358992
    %v1760 = vadd.f32 %v1759, 0.041655596
    %v1761 = vmul.f32 %v1758, %v1760
    %v1762 = vadd.f32 %v1761, -0.4999988
    %v1763 = vmul.f32 %v1758, %v1762
    %v1764 = vadd.f32 1.0, %v1763
    %v1765 = vmul.f32 %v1756, %v1756
    %v1766 = vmul.f32 %v1765, -0.00019511016
    %v1767 = vadd.f32 %v1766, 0.008332121
    %v1768 = vmul.f32 %v1765, %v1767
    %v1769 = vadd.f32 %v1768, -0.16666654
    %v1770 = vmul.f32 %v1765, %v1769
    %v1771 = vadd.f32 %v1770, 1.0
    %v1772 = vmul.f32 %v1771, %v1756
    %vm1773 = vweird.f32 %v95
    %v1774 = vadd.s32 %v1757, 3
    %v1775 = vand.u32 %v1774, 3
    %vm1776 = vcmp.lt.s32.totalorder %v1775, 2
    %vm1777 = vcmp.eq.s32.totalorder %v1775, 0
    %v1778 = vxor.u32 %v1772, 2147483648
    %v1779 = vsel %vm1777, %v1764, %v1778
    %vm1780 = vcmp.eq.s32.totalorder %v1775, 2
    %v1781 = vxor.u32 %v1764, 2147483648
    %v1782 = vsel %vm1780, %v1781, %v1772
    %v1783 = vsel %vm1776, %v1779, %v1782
    %v1784 = vsel %vm1773, nan, %v1783
    %v1785 = vand.u32 2147483647, %v118
    %vm1786 = vcmp.le.f32.partialorder %v1785, 0.7853982
    %vm1787 = vcmp.lt.s32.totalorder %v118, 0
    %v1788 = vand.u32 %v118, 2139095040
    %v1789 = vshrl.u32 %v1788, 23
    %v1790 = vsub.s32 %v1789, 127
    %v1791 = vand.u32 2147483647, %v118
    %v1792 = vand.u32 %v1791, 8388607
    %v1793 = vor.u32 %v1792, 8388608
    %v1794 = vsub.s32 0, %v1793
    %v1795 = vadd.s32 %v1790, 1
    %vm1796 = vcmp.gt.s32.totalorder %v1795, 0
    %v1797 = vsel %vm1796, %v1795, 0
    %v1798 = vshrl.u32 %v1797, 5
    %v1799 = vand.u32 %v1797, 31
    %v1800 = vsub.s32 32, %v1799
    %v1801 = vshrl.u32 683565275, %v1800
    %v1802 = vshll.u32 683565275, %v1799
    %v1803 = vshrl.u32 2475754826, %v1800
    %v1804 = vor.u32 %v1802, %v1803
    %v1805 = vshll.u32 2475754826, %v1799
    %v1806 = vshrl.u32 2131351028, %v1800
    %v1807 = vor.u32 %v1805, %v1806
    %v1808 = vshll.u32 2131351028, %v1799
    %v1809 = vshrl.u32 2102212464, %v1800
    %v1810 = vor.u32 %v1808, %v1809
    %v1811 = vshll.u32 2102212464, %v1799
    %v1812 = vshrl.u32 920167782, %v1800
    %v1813 = vor.u32 %v1811, %v1812
    %v1814 = vshll.u32 920167782, %v1799
    %v1815 = vshrl.u32 1326507024, %v1800
    %v1816 = vor.u32 %v1814, %v1815
    %vm1817 = vcmp.lt.s32.totalorder %v1798, 1
    %vm1818 = vcmp.lt.s32.totalorder %v1798, 2
    %vm1819 = vcmp.lt.s32.totalorder %v1798, 3
    %vm1820 = vcmp.lt.s32.totalorder %v1798, 4
    %v1821 = vsel %vm1817, %v1801, %v1804
    %v1822 = vsel %vm1820, %v1810, 2102212464
    %v1823 = vsel %vm1819, %v1807, %v1822
    %v1824 = vsel %vm1818, %v1821, %v1823
    %v1825 = vsel %vm1817, %v1804, %v1807
    %v1826 = vsel %vm1820, %v1813, 920167782
    %v1827 = vsel %vm1819, %v1810, %v1826
    %v1828 = vsel %vm1818, %v1825, %v1827
    %v1829 = vsel %vm1817, %v1807, %v1810
    %v1830 = vsel %vm1820, %v1816, 1326507024
    %v1831 = vsel %vm1819, %v1813, %v1830
    %v1832 = vsel %vm1818, %v1829, %v1831
    %v1833 = vshll.u32 %v1793, 8
    %v1834 = vand.u32 %v1833, 65535
    %v1835 = vshrl.u32 %v1833, 16
    %v1836 = vand.u32 %v1832, 65535
    %v1837 = vshrl.u32 %v1832, 16
    %v1838 = vmul.u32 %v1834, %v1836
    %v1839 = vmul.u32 %v1834, %v1837
    %v1840 = vmul.u32 %v1835, %v1836
    %v1841 = vmul.u32 %v1835, %v1837
    %v1842 = vshll.u32 %v1839, 16
    %v1843 = vshrl.u32 %v1839, 16
    %v1844 = vshll.u32 %v1840, 16
    %v1845 = vshrl.u32 %v1840, 16
    %vm1846 = vc.u32 %v1838, %v1842
    %v1847 = vsel %vm1846, 1, 0
    %v1848 = vadd.s32 %v1838, %v1842
    %v1849 = vadd.s32 %v1841, %v1847
    %vm1850 = vc.u32 %v1848, %v1844
    %v1851 = vsel %vm1850, 1, 0
    %v1852 = vadd.s32 %v1848, %v1844
    %v1853 = vadd.s32 %v1849, %v1851
    %v1854 = vadd.s32 %v1853, %v1843
    %v1855 = vadd.s32 %v1854, %v1845
    %v1856 = vand.u32 %v1833, 65535
    %v1857 = vshrl.u32 %v1833, 16
    %v1858 = vand.u32 %v1828, 65535
    %v1859 = vshrl.u32 %v1828, 16
    %v1860 = vmul.u32 %v1856, %v1858
    %v1861 = vmul.u32 %v1856, %v1859
    %v1862 = vmul.u32 %v1857, %v1858
    %v1863 = vmul.u32 %v1857, %v1859
    %v1864 = vshll.u32 %v1861, 16
    %v1865 = vshrl.u32 %v1861, 16
    %v1866 = vshll.u32 %v1862, 16
    %v1867 = vshrl.u32 %v1862, 16
    %vm1868 = vc.u32 %v1860, %v1864
    %v1869 = vsel %vm1868, 1, 0
    %v1870 = vadd.s32 %v1860, %v1864
    %v1871 = vadd.s32 %v1863, %v1869
    %vm1872 = vc.u32 %v1870, %v1866
    %v1873 = vsel %vm1872, 1, 0
    %v1874 = vadd.s32 %v1870, %v1866
    %v1875 = vadd.s32 %v1871, %v1873
    %v1876 = vadd.s32 %v1875, %v1865
    %v1877 = vadd.s32 %v1876, %v1867
    %v1878 = vmul.u32 %v1833, %v1824
    %v1879 = vadd.s32 %v1855, %v1874
    %vm1880 = vc.u32 %v1855, %v1874
    %v1881 = vadd.s32 %v1877, 1
    %v1882 = vsel %vm1880, %v1881, %v1877
    %v1883 = vadd.s32 %v1878, %v1882
    %v1884 = vadd.s32 %v1883, 536870912
    %v1885 = vshrl.u32 %v1884, 30
    %v1886 = vshll.u32 %v1885, 30
    %v1887 = vsub.s32 %v1883, %v1886
    %vm1888 = vcmp.lt.s32.totalorder %v1887, 0
    %v1889 = vsub.s32 0, %v1887
    %v1890 = vsel %vm1888, %v1889, %v1887
    %v1891 = vclz %v1890
    %v1892 = vsub.s32 %v1891, 2
    %vm1893 = vcmp.gt.s32.totalorder 0, %v1892
    %v1894 = vsel %vm1893, 0, %v1892
    %v1895 = vsub.s32 32, %v1894
    %v1896 = vshll.u32 %v1887, %v1894
    %v1897 = vshrl.u32 %v1879, %v1895
    %v1898 = vor.u32 %v1896, %v1897
    %v1899 = vsub.s32 4294967266, %v1894
    %v1900 = vadd.s32 %v1899, 127
    %v1901 = vshll.u32 %v1900, 23
    %v1902 = vor.u32 4788187, %v1901
    %v1903 = vand.u32 2147483647, %v1902
    %v1905 = vcvt.s32.f32 %v1898
    %v1906 = vmul.f32 %v1905, %v1903
    %v1907 = vxor.u32 %v1906, 2147483648
    %v1908 = vsel %vm1787, %v1907, %v1906
    %v1909 = vsub.s32 4, %v1885
    %v1910 = vsel %vm1787, %v1909, %v1885
    %v1911 = vsel %vm1786, %v118, %v1908
    %v1912 = vsel %vm1786, 0, %v1910
    %v1913 = vmul.f32 %v1911, %v1911
    %v1914 = vmul.f32 %v1913, -0.001358992
    %v1915 = vadd.f32 %v1914, 0.041655596
    %v1916 = vmul.f32 %v1913, %v1915
    %v1917 = vadd.f32 %v1916, -0.4999988
    %v1918 = vmul.f32 %v1913, %v1917
    %v1919 = vadd.f32 1.0, %v1918
    %v1920 = vmul.f32 %v1911, %v1911
    %v1921 = vmul.f32 %v1920, -0.00019511016
    %v1922 = vadd.f32 %v1921, 0.008332121
    %v1923 = vmul.f32 %v1920, %v1922
    %v1924 = vadd.f32 %v1923, -0.16666654
    %v1925 = vmul.f32 %v1920, %v1924
    %v1926 = vadd.f32 %v1925, 1.0
    %v1927 = vmul.f32 %v1926, %v1911
    %vm1928 = vweird.f32 %v118
    %v1929 = vadd.s32 %v1912, 3
    %v1930 = vand.u32 %v1929, 3
    %vm1931 = vcmp.lt.s32.totalorder %v1930, 2
    %vm1932 = vcmp.eq.s32.totalorder %v1930, 0
    %v1933 = vxor.u32 %v1927, 2147483648
    %v1934 = vsel %vm1932, %v1919, %v1933
    %vm1935 = vcmp.eq.s32.totalorder %v1930, 2
    %v1936 = vxor.u32 %v1919, 2147483648
    %v1937 = vsel %vm1935, %v1936, %v1927
    %v1938 = vsel %vm1931, %v1934, %v1937
    %v1939 = vsel %vm1928, nan, %v1938
    %v1940 = vand.u32 2147483647, %v141
    %vm1941 = vcmp.le.f32.partialorder %v1940, 0.7853982
    %vm1942 = vcmp.lt.s32.totalorder %v141, 0
    %v1943 = vand.u32 %v141, 2139095040
    %v1944 = vshrl.u32 %v1943, 23
    %v1945 = vsub.s32 %v1944, 127
    %v1946 = vand.u32 2147483647, %v141
    %v1947 = vand.u32 %v1946, 8388607
    %v1948 = vor.u32 %v1947, 8388608
    %v1949 = vsub.s32 0, %v1948
    %v1950 = vadd.s32 %v1945, 1
    %vm1951 = vcmp.gt.s32.totalorder %v1950, 0
    %v1952 = vsel %vm1951, %v1950, 0
    %v1953 = vshrl.u32 %v1952, 5
    %v1954 = vand.u32 %v1952, 31
    %v1955 = vsub.s32 32, %v1954
    %v1956 = vshrl.u32 683565275, %v1955
    %v1957 = vshll.u32 683565275, %v1954
    %v1958 = vshrl.u32 2475754826, %v1955
    %v1959 = vor.u32 %v1957, %v1958
    %v1960 = vshll.u32 2475754826, %v1954
    %v1961 = vshrl.u32 2131351028, %v1955
    %v1962 = vor.u32 %v1960, %v1961
    %v1963 = vshll.u32 2131351028, %v1954
    %v1964 = vshrl.u32 2102212464, %v1955
    %v1965 = vor.u32 %v1963, %v1964
    %v1966 = vshll.u32 2102212464, %v1954
    %v1967 = vshrl.u32 920167782, %v1955
    %v1968 = vor.u32 %v1966, %v1967
    %v1969 = vshll.u32 920167782, %v1954
    %v1970 = vshrl.u32 1326507024, %v1955
    %v1971 = vor.u32 %v1969, %v1970
    %vm1972 = vcmp.lt.s32.totalorder %v1953, 1
    %vm1973 = vcmp.lt.s32.totalorder %v1953, 2
    %vm1974 = vcmp.lt.s32.totalorder %v1953, 3
    %vm1975 = vcmp.lt.s32.totalorder %v1953, 4
    %v1976 = vsel %vm1972, %v1956, %v1959
    %v1977 = vsel %vm1975, %v1965, 2102212464
    %v1978 = vsel %vm1974, %v1962, %v1977
    %v1979 = vsel %vm1973, %v1976, %v1978
    %v1980 = vsel %vm1972, %v1959, %v1962
    %v1981 = vsel %vm1975, %v1968, 920167782
    %v1982 = vsel %vm1974, %v1965, %v1981
    %v1983 = vsel %vm1973, %v1980, %v1982
    %v1984 = vsel %vm1972, %v1962, %v1965
    %v1985 = vsel %vm1975, %v1971, 1326507024
    %v1986 = vsel %vm1974, %v1968, %v1985
    %v1987 = vsel %vm1973, %v1984, %v1986
    %v1988 = vshll.u32 %v1948, 8
    %v1989 = vand.u32 %v1988, 65535
    %v1990 = vshrl.u32 %v1988, 16
    %v1991 = vand.u32 %v1987, 65535
    %v1992 = vshrl.u32 %v1987, 16
    %v1993 = vmul.u32 %v1989, %v1991
    %v1994 = vmul.u32 %v1989, %v1992
    %v1995 = vmul.u32 %v1990, %v1991
    %v1996 = vmul.u32 %v1990, %v1992
    %v1997 = vshll.u32 %v1994, 16
    %v1998 = vshrl.u32 %v1994, 16
    %v1999 = vshll.u32 %v1995, 16
    %v2000 = vshrl.u32 %v1995, 16
    %vm2001 = vc.u32 %v1993, %v1997
    %v2002 = vsel %vm2001, 1, 0
    %v2003 = vadd.s32 %v1993, %v1997
    %v2004 = vadd.s32 %v1996, %v2002
    %vm2005 = vc.u32 %v2003, %v1999
    %v2006 = vsel %vm2005, 1, 0
    %v2007 = vadd.s32 %v2003, %v1999
    %v2008 = vadd.s32 %v2004, %v2006
    %v2009 = vadd.s32 %v2008, %v1998
    %v2010 = vadd.s32 %v2009, %v2000
    %v2011 = vand.u32 %v1988, 65535
    %v2012 = vshrl.u32 %v1988, 16
    %v2013 = vand.u32 %v1983, 65535
    %v2014 = vshrl.u32 %v1983, 16
    %v2015 = vmul.u32 %v2011, %v2013
    %v2016 = vmul.u32 %v2011, %v2014
    %v2017 = vmul.u32 %v2012, %v2013
    %v2018 = vmul.u32 %v2012, %v2014
    %v2019 = vshll.u32 %v2016, 16
    %v2020 = vshrl.u32 %v2016, 16
    %v2021 = vshll.u32 %v2017, 16
    %v2022 = vshrl.u32 %v2017, 16
    %vm2023 = vc.u32 %v2015, %v2019
    %v2024 = vsel %vm2023, 1, 0
    %v2025 = vadd.s32 %v2015, %v2019
    %v2026 = vadd.s32 %v2018, %v2024
    %vm2027 = vc.u32 %v2025, %v2021
    %v2028 = vsel %vm2027, 1, 0
    %v2029 = vadd.s32 %v2025, %v2021
    %v2030 = vadd.s32 %v2026, %v2028
    %v2031 = vadd.s32 %v2030, %v2020
    %v2032 = vadd.s32 %v2031, %v2022
    %v2033 = vmul.u32 %v1988, %v1979
    %v2034 = vadd.s32 %v2010, %v2029
    %vm2035 = vc.u32 %v2010, %v2029
    %v2036 = vadd.s32 %v2032, 1
    %v2037 = vsel %vm2035, %v2036, %v2032
    %v2038 = vadd.s32 %v2033, %v2037
    %v2039 = vadd.s32 %v2038, 536870912
    %v2040 = vshrl.u32 %v2039, 30
    %v2041 = vshll.u32 %v2040, 30
    %v2042 = vsub.s32 %v2038, %v2041
    %vm2043 = vcmp.lt.s32.totalorder %v2042, 0
    %v2044 = vsub.s32 0, %v2042
    %v2045 = vsel %vm2043, %v2044, %v2042
    %v2046 = vclz %v2045
    %v2047 = vsub.s32 %v2046, 2
    %vm2048 = vcmp.gt.s32.totalorder 0, %v2047
    %v2049 = vsel %vm2048, 0, %v2047
    %v2050 = vsub.s32 32, %v2049
    %v2051 = vshll.u32 %v2042, %v2049
    %v2052 = vshrl.u32 %v2034, %v2050
    %v2053 = vor.u32 %v2051, %v2052
    %v2054 = vsub.s32 4294967266, %v2049
    %v2055 = vadd.s32 %v2054, 127
    %v2056 = vshll.u32 %v2055, 23
    %v2057 = vor.u32 4788187, %v2056
    %v2058 = vand.u32 2147483647, %v2057
    %v2060 = vcvt.s32.f32 %v2053
    %v2061 = vmul.f32 %v2060, %v2058
    %v2062 = vxor.u32 %v2061, 2147483648
    %v2063 = vsel %vm1942, %v2062, %v2061
    %v2064 = vsub.s32 4, %v2040
    %v2065 = vsel %vm1942, %v2064, %v2040
    %v2066 = vsel %vm1941, %v141, %v2063
    %v2067 = vsel %vm1941, 0, %v2065
    %v2068 = vmul.f32 %v2066, %v2066
    %v2069 = vmul.f32 %v2068, -0.001358992
    %v2070 = vadd.f32 %v2069, 0.041655596
    %v2071 = vmul.f32 %v2068, %v2070
    %v2072 = vadd.f32 %v2071, -0.4999988
    %v2073 = vmul.f32 %v2068, %v2072
    %v2074 = vadd.f32 1.0, %v2073
    %v2075 = vmul.f32 %v2066, %v2066
    %v2076 = vmul.f32 %v2075, -0.00019511016
    %v2077 = vadd.f32 %v2076, 0.008332121
    %v2078 = vmul.f32 %v2075, %v2077
    %v2079 = vadd.f32 %v2078, -0.16666654
    %v2080 = vmul.f32 %v2075, %v2079
    %v2081 = vadd.f32 %v2080, 1.0
    %v2082 = vmul.f32 %v2081, %v2066
    %vm2083 = vweird.f32 %v141
    %v2084 = vadd.s32 %v2067, 3
    %v2085 = vand.u32 %v2084, 3
    %vm2086 = vcmp.lt.s32.totalorder %v2085, 2
    %vm2087 = vcmp.eq.s32.totalorder %v2085, 0
    %v2088 = vxor.u32 %v2082, 2147483648
    %v2089 = vsel %vm2087, %v2074, %v2088
    %vm2090 = vcmp.eq.s32.totalorder %v2085, 2
    %v2091 = vxor.u32 %v2074, 2147483648
    %v2092 = vsel %vm2090, %v2091, %v2082
    %v2093 = vsel %vm2086, %v2089, %v2092
    %v2094 = vsel %vm2083, nan, %v2093
    %v2095 = vand.u32 2147483647, %v164
    %vm2096 = vcmp.le.f32.partialorder %v2095, 0.7853982
    %vm2097 = vcmp.lt.s32.totalorder %v164, 0
    %v2098 = vand.u32 %v164, 2139095040
    %v2099 = vshrl.u32 %v2098, 23
    %v2100 = vsub.s32 %v2099, 127
    %v2101 = vand.u32 2147483647, %v164
    %v2102 = vand.u32 %v2101, 8388607
    %v2103 = vor.u32 %v2102, 8388608
    %v2104 = vsub.s32 0, %v2103
    %v2105 = vadd.s32 %v2100, 1
    %vm2106 = vcmp.gt.s32.totalorder %v2105, 0
    %v2107 = vsel %vm2106, %v2105, 0
    %v2108 = vshrl.u32 %v2107, 5
    %v2109 = vand.u32 %v2107, 31
    %v2110 = vsub.s32 32, %v2109
    %v2111 = vshrl.u32 683565275, %v2110
    %v2112 = vshll.u32 683565275, %v2109
    %v2113 = vshrl.u32 2475754826, %v2110
    %v2114 = vor.u32 %v2112, %v2113
    %v2115 = vshll.u32 2475754826, %v2109
    %v2116 = vshrl.u32 2131351028, %v2110
    %v2117 = vor.u32 %v2115, %v2116
    %v2118 = vshll.u32 2131351028, %v2109
    %v2119 = vshrl.u32 2102212464, %v2110
    %v2120 = vor.u32 %v2118, %v2119
    %v2121 = vshll.u32 2102212464, %v2109
    %v2122 = vshrl.u32 920167782, %v2110
    %v2123 = vor.u32 %v2121, %v2122
    %v2124 = vshll.u32 920167782, %v2109
    %v2125 = vshrl.u32 1326507024, %v2110
    %v2126 = vor.u32 %v2124, %v2125
    %vm2127 = vcmp.lt.s32.totalorder %v2108, 1
    %vm2128 = vcmp.lt.s32.totalorder %v2108, 2
    %vm2129 = vcmp.lt.s32.totalorder %v2108, 3
    %vm2130 = vcmp.lt.s32.totalorder %v2108, 4
    %v2131 = vsel %vm2127, %v2111, %v2114
    %v2132 = vsel %vm2130, %v2120, 2102212464
    %v2133 = vsel %vm2129, %v2117, %v2132
    %v2134 = vsel %vm2128, %v2131, %v2133
    %v2135 = vsel %vm2127, %v2114, %v2117
    %v2136 = vsel %vm2130, %v2123, 920167782
    %v2137 = vsel %vm2129, %v2120, %v2136
    %v2138 = vsel %vm2128, %v2135, %v2137
    %v2139 = vsel %vm2127, %v2117, %v2120
    %v2140 = vsel %vm2130, %v2126, 1326507024
    %v2141 = vsel %vm2129, %v2123, %v2140
    %v2142 = vsel %vm2128, %v2139, %v2141
    %v2143 = vshll.u32 %v2103, 8
    %v2144 = vand.u32 %v2143, 65535
    %v2145 = vshrl.u32 %v2143, 16
    %v2146 = vand.u32 %v2142, 65535
    %v2147 = vshrl.u32 %v2142, 16
    %v2148 = vmul.u32 %v2144, %v2146
    %v2149 = vmul.u32 %v2144, %v2147
    %v2150 = vmul.u32 %v2145, %v2146
    %v2151 = vmul.u32 %v2145, %v2147
    %v2152 = vshll.u32 %v2149, 16
    %v2153 = vshrl.u32 %v2149, 16
    %v2154 = vshll.u32 %v2150, 16
    %v2155 = vshrl.u32 %v2150, 16
    %vm2156 = vc.u32 %v2148, %v2152
    %v2157 = vsel %vm2156, 1, 0
    %v2158 = vadd.s32 %v2148, %v2152
    %v2159 = vadd.s32 %v2151, %v2157
    %vm2160 = vc.u32 %v2158, %v2154
    %v2161 = vsel %vm2160, 1, 0
    %v2162 = vadd.s32 %v2158, %v2154
    %v2163 = vadd.s32 %v2159, %v2161
    %v2164 = vadd.s32 %v2163, %v2153
    %v2165 = vadd.s32 %v2164, %v2155
    %v2166 = vand.u32 %v2143, 65535
    %v2167 = vshrl.u32 %v2143, 16
    %v2168 = vand.u32 %v2138, 65535
    %v2169 = vshrl.u32 %v2138, 16
    %v2170 = vmul.u32 %v2166, %v2168
    %v2171 = vmul.u32 %v2166, %v2169
    %v2172 = vmul.u32 %v2167, %v2168
    %v2173 = vmul.u32 %v2167, %v2169
    %v2174 = vshll.u32 %v2171, 16
    %v2175 = vshrl.u32 %v2171, 16
    %v2176 = vshll.u32 %v2172, 16
    %v2177 = vshrl.u32 %v2172, 16
    %vm2178 = vc.u32 %v2170, %v2174
    %v2179 = vsel %vm2178, 1, 0
    %v2180 = vadd.s32 %v2170, %v2174
    %v2181 = vadd.s32 %v2173, %v2179
    %vm2182 = vc.u32 %v2180, %v2176
    %v2183 = vsel %vm2182, 1, 0
    %v2184 = vadd.s32 %v2180, %v2176
    %v2185 = vadd.s32 %v2181, %v2183
    %v2186 = vadd.s32 %v2185, %v2175
    %v2187 = vadd.s32 %v2186, %v2177
    %v2188 = vmul.u32 %v2143, %v2134
    %v2189 = vadd.s32 %v2165, %v2184
    %vm2190 = vc.u32 %v2165, %v2184
    %v2191 = vadd.s32 %v2187, 1
    %v2192 = vsel %vm2190, %v2191, %v2187
    %v2193 = vadd.s32 %v2188, %v2192
    %v2194 = vadd.s32 %v2193, 536870912
    %v2195 = vshrl.u32 %v2194, 30
    %v2196 = vshll.u32 %v2195, 30
    %v2197 = vsub.s32 %v2193, %v2196
    %vm2198 = vcmp.lt.s32.totalorder %v2197, 0
    %v2199 = vsub.s32 0, %v2197
    %v2200 = vsel %vm2198, %v2199, %v2197
    %v2201 = vclz %v2200
    %v2202 = vsub.s32 %v2201, 2
    %vm2203 = vcmp.gt.s32.totalorder 0, %v2202
    %v2204 = vsel %vm2203, 0, %v2202
    %v2205 = vsub.s32 32, %v2204
    %v2206 = vshll.u32 %v2197, %v2204
    %v2207 = vshrl.u32 %v2189, %v2205
    %v2208 = vor.u32 %v2206, %v2207
    %v2209 = vsub.s32 4294967266, %v2204
    %v2210 = vadd.s32 %v2209, 127
    %v2211 = vshll.u32 %v2210, 23
    %v2212 = vor.u32 4788187, %v2211
    %v2213 = vand.u32 2147483647, %v2212
    %v2215 = vcvt.s32.f32 %v2208
    %v2216 = vmul.f32 %v2215, %v2213
    %v2217 = vxor.u32 %v2216, 2147483648
    %v2218 = vsel %vm2097, %v2217, %v2216
    %v2219 = vsub.s32 4, %v2195
    %v2220 = vsel %vm2097, %v2219, %v2195
    %v2221 = vsel %vm2096, %v164, %v2218
    %v2222 = vsel %vm2096, 0, %v2220
    %v2223 = vmul.f32 %v2221, %v2221
    %v2224 = vmul.f32 %v2223, -0.001358992
    %v2225 = vadd.f32 %v2224, 0.041655596
    %v2226 = vmul.f32 %v2223, %v2225
    %v2227 = vadd.f32 %v2226, -0.4999988
    %v2228 = vmul.f32 %v2223, %v2227
    %v2229 = vadd.f32 1.0, %v2228
    %v2230 = vmul.f32 %v2221, %v2221
    %v2231 = vmul.f32 %v2230, -0.00019511016
    %v2232 = vadd.f32 %v2231, 0.008332121
    %v2233 = vmul.f32 %v2230, %v2232
    %v2234 = vadd.f32 %v2233, -0.16666654
    %v2235 = vmul.f32 %v2230, %v2234
    %v2236 = vadd.f32 %v2235, 1.0
    %v2237 = vmul.f32 %v2236, %v2221
    %vm2238 = vweird.f32 %v164
    %v2239 = vadd.s32 %v2222, 3
    %v2240 = vand.u32 %v2239, 3
    %vm2241 = vcmp.lt.s32.totalorder %v2240, 2
    %vm2242 = vcmp.eq.s32.totalorder %v2240, 0
    %v2243 = vxor.u32 %v2237, 2147483648
    %v2244 = vsel %vm2242, %v2229, %v2243
    %vm2245 = vcmp.eq.s32.totalorder %v2240, 2
    %v2246 = vxor.u32 %v2229, 2147483648
    %v2247 = vsel %vm2245, %v2246, %v2237
    %v2248 = vsel %vm2241, %v2244, %v2247
    %v2249 = vsel %vm2238, nan, %v2248
    %v2250 = vand.u32 2147483647, %v187
    %vm2251 = vcmp.le.f32.partialorder %v2250, 0.7853982
    %vm2252 = vcmp.lt.s32.totalorder %v187, 0
    %v2253 = vand.u32 %v187, 2139095040
    %v2254 = vshrl.u32 %v2253, 23
    %v2255 = vsub.s32 %v2254, 127
    %v2256 = vand.u32 2147483647, %v187
    %v2257 = vand.u32 %v2256, 8388607
    %v2258 = vor.u32 %v2257, 8388608
    %v2259 = vsub.s32 0, %v2258
    %v2260 = vadd.s32 %v2255, 1
    %vm2261 = vcmp.gt.s32.totalorder %v2260, 0
    %v2262 = vsel %vm2261, %v2260, 0
    %v2263 = vshrl.u32 %v2262, 5
    %v2264 = vand.u32 %v2262, 31
    %v2265 = vsub.s32 32, %v2264
    %v2266 = vshrl.u32 683565275, %v2265
    %v2267 = vshll.u32 683565275, %v2264
    %v2268 = vshrl.u32 2475754826, %v2265
    %v2269 = vor.u32 %v2267, %v2268
    %v2270 = vshll.u32 2475754826, %v2264
    %v2271 = vshrl.u32 2131351028, %v2265
    %v2272 = vor.u32 %v2270, %v2271
    %v2273 = vshll.u32 2131351028, %v2264
    %v2274 = vshrl.u32 2102212464, %v2265
    %v2275 = vor.u32 %v2273, %v2274
    %v2276 = vshll.u32 2102212464, %v2264
    %v2277 = vshrl.u32 920167782, %v2265
    %v2278 = vor.u32 %v2276, %v2277
    %v2279 = vshll.u32 920167782, %v2264
    %v2280 = vshrl.u32 1326507024, %v2265
    %v2281 = vor.u32 %v2279, %v2280
    %vm2282 = vcmp.lt.s32.totalorder %v2263, 1
    %vm2283 = vcmp.lt.s32.totalorder %v2263, 2
    %vm2284 = vcmp.lt.s32.totalorder %v2263, 3
    %vm2285 = vcmp.lt.s32.totalorder %v2263, 4
    %v2286 = vsel %vm2282, %v2266, %v2269
    %v2287 = vsel %vm2285, %v2275, 2102212464
    %v2288 = vsel %vm2284, %v2272, %v2287
    %v2289 = vsel %vm2283, %v2286, %v2288
    %v2290 = vsel %vm2282, %v2269, %v2272
    %v2291 = vsel %vm2285, %v2278, 920167782
    %v2292 = vsel %vm2284, %v2275, %v2291
    %v2293 = vsel %vm2283, %v2290, %v2292
    %v2294 = vsel %vm2282, %v2272, %v2275
    %v2295 = vsel %vm2285, %v2281, 1326507024
    %v2296 = vsel %vm2284, %v2278, %v2295
    %v2297 = vsel %vm2283, %v2294, %v2296
    %v2298 = vshll.u32 %v2258, 8
    %v2299 = vand.u32 %v2298, 65535
    %v2300 = vshrl.u32 %v2298, 16
    %v2301 = vand.u32 %v2297, 65535
    %v2302 = vshrl.u32 %v2297, 16
    %v2303 = vmul.u32 %v2299, %v2301
    %v2304 = vmul.u32 %v2299, %v2302
    %v2305 = vmul.u32 %v2300, %v2301
    %v2306 = vmul.u32 %v2300, %v2302
    %v2307 = vshll.u32 %v2304, 16
    %v2308 = vshrl.u32 %v2304, 16
    %v2309 = vshll.u32 %v2305, 16
    %v2310 = vshrl.u32 %v2305, 16
    %vm2311 = vc.u32 %v2303, %v2307
    %v2312 = vsel %vm2311, 1, 0
    %v2313 = vadd.s32 %v2303, %v2307
    %v2314 = vadd.s32 %v2306, %v2312
    %vm2315 = vc.u32 %v2313, %v2309
    %v2316 = vsel %vm2315, 1, 0
    %v2317 = vadd.s32 %v2313, %v2309
    %v2318 = vadd.s32 %v2314, %v2316
    %v2319 = vadd.s32 %v2318, %v2308
    %v2320 = vadd.s32 %v2319, %v2310
    %v2321 = vand.u32 %v2298, 65535
    %v2322 = vshrl.u32 %v2298, 16
    %v2323 = vand.u32 %v2293, 65535
    %v2324 = vshrl.u32 %v2293, 16
    %v2325 = vmul.u32 %v2321, %v2323
    %v2326 = vmul.u32 %v2321, %v2324
    %v2327 = vmul.u32 %v2322, %v2323
    %v2328 = vmul.u32 %v2322, %v2324
    %v2329 = vshll.u32 %v2326, 16
    %v2330 = vshrl.u32 %v2326, 16
    %v2331 = vshll.u32 %v2327, 16
    %v2332 = vshrl.u32 %v2327, 16
    %vm2333 = vc.u32 %v2325, %v2329
    %v2334 = vsel %vm2333, 1, 0
    %v2335 = vadd.s32 %v2325, %v2329
    %v2336 = vadd.s32 %v2328, %v2334
    %vm2337 = vc.u32 %v2335, %v2331
    %v2338 = vsel %vm2337, 1, 0
    %v2339 = vadd.s32 %v2335, %v2331
    %v2340 = vadd.s32 %v2336, %v2338
    %v2341 = vadd.s32 %v2340, %v2330
    %v2342 = vadd.s32 %v2341, %v2332
    %v2343 = vmul.u32 %v2298, %v2289
    %v2344 = vadd.s32 %v2320, %v2339
    %vm2345 = vc.u32 %v2320, %v2339
    %v2346 = vadd.s32 %v2342, 1
    %v2347 = vsel %vm2345, %v2346, %v2342
    %v2348 = vadd.s32 %v2343, %v2347
    %v2349 = vadd.s32 %v2348, 536870912
    %v2350 = vshrl.u32 %v2349, 30
    %v2351 = vshll.u32 %v2350, 30
    %v2352 = vsub.s32 %v2348, %v2351
    %vm2353 = vcmp.lt.s32.totalorder %v2352, 0
    %v2354 = vsub.s32 0, %v2352
    %v2355 = vsel %vm2353, %v2354, %v2352
    %v2356 = vclz %v2355
    %v2357 = vsub.s32 %v2356, 2
    %vm2358 = vcmp.gt.s32.totalorder 0, %v2357
    %v2359 = vsel %vm2358, 0, %v2357
    %v2360 = vsub.s32 32, %v2359
    %v2361 = vshll.u32 %v2352, %v2359
    %v2362 = vshrl.u32 %v2344, %v2360
    %v2363 = vor.u32 %v2361, %v2362
    %v2364 = vsub.s32 4294967266, %v2359
    %v2365 = vadd.s32 %v2364, 127
    %v2366 = vshll.u32 %v2365, 23
    %v2367 = vor.u32 4788187, %v2366
    %v2368 = vand.u32 2147483647, %v2367
    %v2370 = vcvt.s32.f32 %v2363
    %v2371 = vmul.f32 %v2370, %v2368
    %v2372 = vxor.u32 %v2371, 2147483648
    %v2373 = vsel %vm2252, %v2372, %v2371
    %v2374 = vsub.s32 4, %v2350
    %v2375 = vsel %vm2252, %v2374, %v2350
    %v2376 = vsel %vm2251, %v187, %v2373
    %v2377 = vsel %vm2251, 0, %v2375
    %v2378 = vmul.f32 %v2376, %v2376
    %v2379 = vmul.f32 %v2378, -0.001358992
    %v2380 = vadd.f32 %v2379, 0.041655596
    %v2381 = vmul.f32 %v2378, %v2380
    %v2382 = vadd.f32 %v2381, -0.4999988
    %v2383 = vmul.f32 %v2378, %v2382
    %v2384 = vadd.f32 1.0, %v2383
    %v2385 = vmul.f32 %v2376, %v2376
    %v2386 = vmul.f32 %v2385, -0.00019511016
    %v2387 = vadd.f32 %v2386, 0.008332121
    %v2388 = vmul.f32 %v2385, %v2387
    %v2389 = vadd.f32 %v2388, -0.16666654
    %v2390 = vmul.f32 %v2385, %v2389
    %v2391 = vadd.f32 %v2390, 1.0
    %v2392 = vmul.f32 %v2391, %v2376
    %vm2393 = vweird.f32 %v187
    %v2394 = vadd.s32 %v2377, 3
    %v2395 = vand.u32 %v2394, 3
    %vm2396 = vcmp.lt.s32.totalorder %v2395, 2
    %vm2397 = vcmp.eq.s32.totalorder %v2395, 0
    %v2398 = vxor.u32 %v2392, 2147483648
    %v2399 = vsel %vm2397, %v2384, %v2398
    %vm2400 = vcmp.eq.s32.totalorder %v2395, 2
    %v2401 = vxor.u32 %v2384, 2147483648
    %v2402 = vsel %vm2400, %v2401, %v2392
    %v2403 = vsel %vm2396, %v2399, %v2402
    %v2404 = vsel %vm2393, nan, %v2403
    %v2405 = vand.u32 2147483647, %v210
    %vm2406 = vcmp.le.f32.partialorder %v2405, 0.7853982
    %vm2407 = vcmp.lt.s32.totalorder %v210, 0
    %v2408 = vand.u32 %v210, 2139095040
    %v2409 = vshrl.u32 %v2408, 23
    %v2410 = vsub.s32 %v2409, 127
    %v2411 = vand.u32 2147483647, %v210
    %v2412 = vand.u32 %v2411, 8388607
    %v2413 = vor.u32 %v2412, 8388608
    %v2414 = vsub.s32 0, %v2413
    %v2415 = vadd.s32 %v2410, 1
    %vm2416 = vcmp.gt.s32.totalorder %v2415, 0
    %v2417 = vsel %vm2416, %v2415, 0
    %v2418 = vshrl.u32 %v2417, 5
    %v2419 = vand.u32 %v2417, 31
    %v2420 = vsub.s32 32, %v2419
    %v2421 = vshrl.u32 683565275, %v2420
    %v2422 = vshll.u32 683565275, %v2419
    %v2423 = vshrl.u32 2475754826, %v2420
    %v2424 = vor.u32 %v2422, %v2423
    %v2425 = vshll.u32 2475754826, %v2419
    %v2426 = vshrl.u32 2131351028, %v2420
    %v2427 = vor.u32 %v2425, %v2426
    %v2428 = vshll.u32 2131351028, %v2419
    %v2429 = vshrl.u32 2102212464, %v2420
    %v2430 = vor.u32 %v2428, %v2429
    %v2431 = vshll.u32 2102212464, %v2419
    %v2432 = vshrl.u32 920167782, %v2420
    %v2433 = vor.u32 %v2431, %v2432
    %v2434 = vshll.u32 920167782, %v2419
    %v2435 = vshrl.u32 1326507024, %v2420
    %v2436 = vor.u32 %v2434, %v2435
    %vm2437 = vcmp.lt.s32.totalorder %v2418, 1
    %vm2438 = vcmp.lt.s32.totalorder %v2418, 2
    %vm2439 = vcmp.lt.s32.totalorder %v2418, 3
    %vm2440 = vcmp.lt.s32.totalorder %v2418, 4
    %v2441 = vsel %vm2437, %v2421, %v2424
    %v2442 = vsel %vm2440, %v2430, 2102212464
    %v2443 = vsel %vm2439, %v2427, %v2442
    %v2444 = vsel %vm2438, %v2441, %v2443
    %v2445 = vsel %vm2437, %v2424, %v2427
    %v2446 = vsel %vm2440, %v2433, 920167782
    %v2447 = vsel %vm2439, %v2430, %v2446
    %v2448 = vsel %vm2438, %v2445, %v2447
    %v2449 = vsel %vm2437, %v2427, %v2430
    %v2450 = vsel %vm2440, %v2436, 1326507024
    %v2451 = vsel %vm2439, %v2433, %v2450
    %v2452 = vsel %vm2438, %v2449, %v2451
    %v2453 = vshll.u32 %v2413, 8
    %v2454 = vand.u32 %v2453, 65535
    %v2455 = vshrl.u32 %v2453, 16
    %v2456 = vand.u32 %v2452, 65535
    %v2457 = vshrl.u32 %v2452, 16
    %v2458 = vmul.u32 %v2454, %v2456
    %v2459 = vmul.u32 %v2454, %v2457
    %v2460 = vmul.u32 %v2455, %v2456
    %v2461 = vmul.u32 %v2455, %v2457
    %v2462 = vshll.u32 %v2459, 16
    %v2463 = vshrl.u32 %v2459, 16
    %v2464 = vshll.u32 %v2460, 16
    %v2465 = vshrl.u32 %v2460, 16
    %vm2466 = vc.u32 %v2458, %v2462
    %v2467 = vsel %vm2466, 1, 0
    %v2468 = vadd.s32 %v2458, %v2462
    %v2469 = vadd.s32 %v2461, %v2467
    %vm2470 = vc.u32 %v2468, %v2464
    %v2471 = vsel %vm2470, 1, 0
    %v2472 = vadd.s32 %v2468, %v2464
    %v2473 = vadd.s32 %v2469, %v2471
    %v2474 = vadd.s32 %v2473, %v2463
    %v2475 = vadd.s32 %v2474, %v2465
    %v2476 = vand.u32 %v2453, 65535
    %v2477 = vshrl.u32 %v2453, 16
    %v2478 = vand.u32 %v2448, 65535
    %v2479 = vshrl.u32 %v2448, 16
    %v2480 = vmul.u32 %v2476, %v2478
    %v2481 = vmul.u32 %v2476, %v2479
    %v2482 = vmul.u32 %v2477, %v2478
    %v2483 = vmul.u32 %v2477, %v2479
    %v2484 = vshll.u32 %v2481, 16
    %v2485 = vshrl.u32 %v2481, 16
    %v2486 = vshll.u32 %v2482, 16
    %v2487 = vshrl.u32 %v2482, 16
    %vm2488 = vc.u32 %v2480, %v2484
    %v2489 = vsel %vm2488, 1, 0
    %v2490 = vadd.s32 %v2480, %v2484
    %v2491 = vadd.s32 %v2483, %v2489
    %vm2492 = vc.u32 %v2490, %v2486
    %v2493 = vsel %vm2492, 1, 0
    %v2494 = vadd.s32 %v2490, %v2486
    %v2495 = vadd.s32 %v2491, %v2493
    %v2496 = vadd.s32 %v2495, %v2485
    %v2497 = vadd.s32 %v2496, %v2487
    %v2498 = vmul.u32 %v2453, %v2444
    %v2499 = vadd.s32 %v2475, %v2494
    %vm2500 = vc.u32 %v2475, %v2494
    %v2501 = vadd.s32 %v2497, 1
    %v2502 = vsel %vm2500, %v2501, %v2497
    %v2503 = vadd.s32 %v2498, %v2502
    %v2504 = vadd.s32 %v2503, 536870912
    %v2505 = vshrl.u32 %v2504, 30
    %v2506 = vshll.u32 %v2505, 30
    %v2507 = vsub.s32 %v2503, %v2506
    %vm2508 = vcmp.lt.s32.totalorder %v2507, 0
    %v2509 = vsub.s32 0, %v2507
    %v2510 = vsel %vm2508, %v2509, %v2507
    %v2511 = vclz %v2510
    %v2512 = vsub.s32 %v2511, 2
    %vm2513 = vcmp.gt.s32.totalorder 0, %v2512
    %v2514 = vsel %vm2513, 0, %v2512
    %v2515 = vsub.s32 32, %v2514
    %v2516 = vshll.u32 %v2507, %v2514
    %v2517 = vshrl.u32 %v2499, %v2515
    %v2518 = vor.u32 %v2516, %v2517
    %v2519 = vsub.s32 4294967266, %v2514
    %v2520 = vadd.s32 %v2519, 127
    %v2521 = vshll.u32 %v2520, 23
    %v2522 = vor.u32 4788187, %v2521
    %v2523 = vand.u32 2147483647, %v2522
    %v2525 = vcvt.s32.f32 %v2518
    %v2526 = vmul.f32 %v2525, %v2523
    %v2527 = vxor.u32 %v2526, 2147483648
    %v2528 = vsel %vm2407, %v2527, %v2526
    %v2529 = vsub.s32 4, %v2505
    %v2530 = vsel %vm2407, %v2529, %v2505
    %v2531 = vsel %vm2406, %v210, %v2528
    %v2532 = vsel %vm2406, 0, %v2530
    %v2533 = vmul.f32 %v2531, %v2531
    %v2534 = vmul.f32 %v2533, -0.001358992
    %v2535 = vadd.f32 %v2534, 0.041655596
    %v2536 = vmul.f32 %v2533, %v2535
    %v2537 = vadd.f32 %v2536, -0.4999988
    %v2538 = vmul.f32 %v2533, %v2537
    %v2539 = vadd.f32 1.0, %v2538
    %v2540 = vmul.f32 %v2531, %v2531
    %v2541 = vmul.f32 %v2540, -0.00019511016
    %v2542 = vadd.f32 %v2541, 0.008332121
    %v2543 = vmul.f32 %v2540, %v2542
    %v2544 = vadd.f32 %v2543, -0.16666654
    %v2545 = vmul.f32 %v2540, %v2544
    %v2546 = vadd.f32 %v2545, 1.0
    %v2547 = vmul.f32 %v2546, %v2531
    %vm2548 = vweird.f32 %v210
    %v2549 = vadd.s32 %v2532, 3
    %v2550 = vand.u32 %v2549, 3
    %vm2551 = vcmp.lt.s32.totalorder %v2550, 2
    %vm2552 = vcmp.eq.s32.totalorder %v2550, 0
    %v2553 = vxor.u32 %v2547, 2147483648
    %v2554 = vsel %vm2552, %v2539, %v2553
    %vm2555 = vcmp.eq.s32.totalorder %v2550, 2
    %v2556 = vxor.u32 %v2539, 2147483648
    %v2557 = vsel %vm2555, %v2556, %v2547
    %v2558 = vsel %vm2551, %v2554, %v2557
    %v2559 = vsel %vm2548, nan, %v2558
    %v2560 = vand.u32 2147483647, %v233
    %vm2561 = vcmp.le.f32.partialorder %v2560, 0.7853982
    %vm2562 = vcmp.lt.s32.totalorder %v233, 0
    %v2563 = vand.u32 %v233, 2139095040
    %v2564 = vshrl.u32 %v2563, 23
    %v2565 = vsub.s32 %v2564, 127
    %v2566 = vand.u32 2147483647, %v233
    %v2567 = vand.u32 %v2566, 8388607
    %v2568 = vor.u32 %v2567, 8388608
    %v2569 = vsub.s32 0, %v2568
    %v2570 = vadd.s32 %v2565, 1
    %vm2571 = vcmp.gt.s32.totalorder %v2570, 0
    %v2572 = vsel %vm2571, %v2570, 0
    %v2573 = vshrl.u32 %v2572, 5
    %v2574 = vand.u32 %v2572, 31
    %v2575 = vsub.s32 32, %v2574
    %v2576 = vshrl.u32 683565275, %v2575
    %v2577 = vshll.u32 683565275, %v2574
    %v2578 = vshrl.u32 2475754826, %v2575
    %v2579 = vor.u32 %v2577, %v2578
    %v2580 = vshll.u32 2475754826, %v2574
    %v2581 = vshrl.u32 2131351028, %v2575
    %v2582 = vor.u32 %v2580, %v2581
    %v2583 = vshll.u32 2131351028, %v2574
    %v2584 = vshrl.u32 2102212464, %v2575
    %v2585 = vor.u32 %v2583, %v2584
    %v2586 = vshll.u32 2102212464, %v2574
    %v2587 = vshrl.u32 920167782, %v2575
    %v2588 = vor.u32 %v2586, %v2587
    %v2589 = vshll.u32 920167782, %v2574
    %v2590 = vshrl.u32 1326507024, %v2575
    %v2591 = vor.u32 %v2589, %v2590
    %vm2592 = vcmp.lt.s32.totalorder %v2573, 1
    %vm2593 = vcmp.lt.s32.totalorder %v2573, 2
    %vm2594 = vcmp.lt.s32.totalorder %v2573, 3
    %vm2595 = vcmp.lt.s32.totalorder %v2573, 4
    %v2596 = vsel %vm2592, %v2576, %v2579
    %v2597 = vsel %vm2595, %v2585, 2102212464
    %v2598 = vsel %vm2594, %v2582, %v2597
    %v2599 = vsel %vm2593, %v2596, %v2598
    %v2600 = vsel %vm2592, %v2579, %v2582
    %v2601 = vsel %vm2595, %v2588, 920167782
    %v2602 = vsel %vm2594, %v2585, %v2601
    %v2603 = vsel %vm2593, %v2600, %v2602
    %v2604 = vsel %vm2592, %v2582, %v2585
    %v2605 = vsel %vm2595, %v2591, 1326507024
    %v2606 = vsel %vm2594, %v2588, %v2605
    %v2607 = vsel %vm2593, %v2604, %v2606
    %v2608 = vshll.u32 %v2568, 8
    %v2609 = vand.u32 %v2608, 65535
    %v2610 = vshrl.u32 %v2608, 16
    %v2611 = vand.u32 %v2607, 65535
    %v2612 = vshrl.u32 %v2607, 16
    %v2613 = vmul.u32 %v2609, %v2611
    %v2614 = vmul.u32 %v2609, %v2612
    %v2615 = vmul.u32 %v2610, %v2611
    %v2616 = vmul.u32 %v2610, %v2612
    %v2617 = vshll.u32 %v2614, 16
    %v2618 = vshrl.u32 %v2614, 16
    %v2619 = vshll.u32 %v2615, 16
    %v2620 = vshrl.u32 %v2615, 16
    %vm2621 = vc.u32 %v2613, %v2617
    %v2622 = vsel %vm2621, 1, 0
    %v2623 = vadd.s32 %v2613, %v2617
    %v2624 = vadd.s32 %v2616, %v2622
    %vm2625 = vc.u32 %v2623, %v2619
    %v2626 = vsel %vm2625, 1, 0
    %v2627 = vadd.s32 %v2623, %v2619
    %v2628 = vadd.s32 %v2624, %v2626
    %v2629 = vadd.s32 %v2628, %v2618
    %v2630 = vadd.s32 %v2629, %v2620
    %v2631 = vand.u32 %v2608, 65535
    %v2632 = vshrl.u32 %v2608, 16
    %v2633 = vand.u32 %v2603, 65535
    %v2634 = vshrl.u32 %v2603, 16
    %v2635 = vmul.u32 %v2631, %v2633
    %v2636 = vmul.u32 %v2631, %v2634
    %v2637 = vmul.u32 %v2632, %v2633
    %v2638 = vmul.u32 %v2632, %v2634
    %v2639 = vshll.u32 %v2636, 16
    %v2640 = vshrl.u32 %v2636, 16
    %v2641 = vshll.u32 %v2637, 16
    %v2642 = vshrl.u32 %v2637, 16
    %vm2643 = vc.u32 %v2635, %v2639
    %v2644 = vsel %vm2643, 1, 0
    %v2645 = vadd.s32 %v2635, %v2639
    %v2646 = vadd.s32 %v2638, %v2644
    %vm2647 = vc.u32 %v2645, %v2641
    %v2648 = vsel %vm2647, 1, 0
    %v2649 = vadd.s32 %v2645, %v2641
    %v2650 = vadd.s32 %v2646, %v2648
    %v2651 = vadd.s32 %v2650, %v2640
    %v2652 = vadd.s32 %v2651, %v2642
    %v2653 = vmul.u32 %v2608, %v2599
    %v2654 = vadd.s32 %v2630, %v2649
    %vm2655 = vc.u32 %v2630, %v2649
    %v2656 = vadd.s32 %v2652, 1
    %v2657 = vsel %vm2655, %v2656, %v2652
    %v2658 = vadd.s32 %v2653, %v2657
    %v2659 = vadd.s32 %v2658, 536870912
    %v2660 = vshrl.u32 %v2659, 30
    %v2661 = vshll.u32 %v2660, 30
    %v2662 = vsub.s32 %v2658, %v2661
    %vm2663 = vcmp.lt.s32.totalorder %v2662, 0
    %v2664 = vsub.s32 0, %v2662
    %v2665 = vsel %vm2663, %v2664, %v2662
    %v2666 = vclz %v2665
    %v2667 = vsub.s32 %v2666, 2
    %vm2668 = vcmp.gt.s32.totalorder 0, %v2667
    %v2669 = vsel %vm2668, 0, %v2667
    %v2670 = vsub.s32 32, %v2669
    %v2671 = vshll.u32 %v2662, %v2669
    %v2672 = vshrl.u32 %v2654, %v2670
    %v2673 = vor.u32 %v2671, %v2672
    %v2674 = vsub.s32 4294967266, %v2669
    %v2675 = vadd.s32 %v2674, 127
    %v2676 = vshll.u32 %v2675, 23
    %v2677 = vor.u32 4788187, %v2676
    %v2678 = vand.u32 2147483647, %v2677
    %v2680 = vcvt.s32.f32 %v2673
    %v2681 = vmul.f32 %v2680, %v2678
    %v2682 = vxor.u32 %v2681, 2147483648
    %v2683 = vsel %vm2562, %v2682, %v2681
    %v2684 = vsub.s32 4, %v2660
    %v2685 = vsel %vm2562, %v2684, %v2660
    %v2686 = vsel %vm2561, %v233, %v2683
    %v2687 = vsel %vm2561, 0, %v2685
    %v2688 = vmul.f32 %v2686, %v2686
    %v2689 = vmul.f32 %v2688, -0.001358992
    %v2690 = vadd.f32 %v2689, 0.041655596
    %v2691 = vmul.f32 %v2688, %v2690
    %v2692 = vadd.f32 %v2691, -0.4999988
    %v2693 = vmul.f32 %v2688, %v2692
    %v2694 = vadd.f32 1.0, %v2693
    %v2695 = vmul.f32 %v2686, %v2686
    %v2696 = vmul.f32 %v2695, -0.00019511016
    %v2697 = vadd.f32 %v2696, 0.008332121
    %v2698 = vmul.f32 %v2695, %v2697
    %v2699 = vadd.f32 %v2698, -0.16666654
    %v2700 = vmul.f32 %v2695, %v2699
    %v2701 = vadd.f32 %v2700, 1.0
    %v2702 = vmul.f32 %v2701, %v2686
    %vm2703 = vweird.f32 %v233
    %v2704 = vadd.s32 %v2687, 3
    %v2705 = vand.u32 %v2704, 3
    %vm2706 = vcmp.lt.s32.totalorder %v2705, 2
    %vm2707 = vcmp.eq.s32.totalorder %v2705, 0
    %v2708 = vxor.u32 %v2702, 2147483648
    %v2709 = vsel %vm2707, %v2694, %v2708
    %vm2710 = vcmp.eq.s32.totalorder %v2705, 2
    %v2711 = vxor.u32 %v2694, 2147483648
    %v2712 = vsel %vm2710, %v2711, %v2702
    %v2713 = vsel %vm2706, %v2709, %v2712
    %v2714 = vsel %vm2703, nan, %v2713
    %2715 = vset.pattern.permute.xlu0 1
    %2716 = vperm.xlu0 %2715, %v30
    %v2717 = vpop.permute.xlu0 %2716
    %2719 = vset.pattern.permute.xlu0 1
    %2720 = vperm.xlu0 %2719, %v31
    %v2721 = vpop.permute.xlu0 %2720
    %vm2723 = vcmask 130048
    %v2725 = vsel %vm2723, %v22, 0
    %v2728 = vsel %vm2723, %v23, 0
    %2730 = vmatpush.msra.mxu0 0.0
    %2731 = vmatpush.msra.mxu0 0.0
    %2732 = vmatpush.msra.mxu0 0.0
    %2733 = vmatpush.msra.mxu0 0.0
    %2734 = vmatpush.msra.mxu0 0.0
    %2735 = vmatpush.msra.mxu0 0.0
    %2736 = vmatpush.msra.mxu0 0.0
    %2737 = vmatpush.msra.mxu0 0.0
    %2738 = vmatpush.msra.mxu0 0.0
    %2739 = vmatpush.msra.mxu0 0.0
    %2740 = vmatpush.msra.mxu0 0.0
    %2741 = vmatpush.msra.mxu0 0.0
    %2742 = vmatpush.msra.mxu0 0.0
    %2743 = vmatpush.msra.mxu0 0.0
    %2744 = vmatpush.msra.mxu0 %v1629
    %2745 = vmatpush.msra.mxu0 %v389
    %2746 = vmatmul.f32.gmra.mxu0 %v2725
    %v2747 = vpop.f32.mrf.mxu0
    %v2748 = vadd.f32 %v2717, %v2747
    %2749 = vmatmul.f32.gmra.mxu0 %v2728
    %v2750 = vpop.f32.mrf.mxu0
    %v2751 = vadd.f32 %v2721, %v2750
    %2752 = vdwg.mxu0
    %2753 = vmatpush.msra.mxu0 0.0
    %2754 = vmatpush.msra.mxu0 0.0
    %2755 = vmatpush.msra.mxu0 0.0
    %2756 = vmatpush.msra.mxu0 0.0
    %2757 = vmatpush.msra.mxu0 0.0
    %2758 = vmatpush.msra.mxu0 0.0
    %2759 = vmatpush.msra.mxu0 0.0
    %2760 = vmatpush.msra.mxu0 0.0
    %2761 = vmatpush.msra.mxu0 0.0
    %2762 = vmatpush.msra.mxu0 0.0
    %2763 = vmatpush.msra.mxu0 0.0
    %2764 = vmatpush.msra.mxu0 0.0
    %2765 = vmatpush.msra.mxu0 0.0
    %2766 = vmatpush.msra.mxu0 0.0
    %2767 = vmatpush.msra.mxu0 %v1784
    %2768 = vmatpush.msra.mxu0 %v544
    %2769 = vmatmul.f32.gmra.mxu0 %v2725
    %v2770 = vpop.f32.mrf.mxu0
    %v2771 = vadd.f32 %v2717, %v2770
    %2772 = vmatmul.f32.gmra.mxu0 %v2728
    %v2773 = vpop.f32.mrf.mxu0
    %v2774 = vadd.f32 %v2721, %v2773
    %2775 = vdwg.mxu0
    %2776 = vmatpush.msra.mxu0 0.0
    %2777 = vmatpush.msra.mxu0 0.0
    %2778 = vmatpush.msra.mxu0 0.0
    %2779 = vmatpush.msra.mxu0 0.0
    %2780 = vmatpush.msra.mxu0 0.0
    %2781 = vmatpush.msra.mxu0 0.0
    %2782 = vmatpush.msra.mxu0 0.0
    %2783 = vmatpush.msra.mxu0 0.0
    %2784 = vmatpush.msra.mxu0 0.0
    %2785 = vmatpush.msra.mxu0 0.0
    %2786 = vmatpush.msra.mxu0 0.0
    %2787 = vmatpush.msra.mxu0 0.0
    %2788 = vmatpush.msra.mxu0 0.0
    %2789 = vmatpush.msra.mxu0 0.0
    %2790 = vmatpush.msra.mxu0 %v1939
    %2791 = vmatpush.msra.mxu0 %v699
    %2792 = vmatmul.f32.gmra.mxu0 %v2725
    %v2793 = vpop.f32.mrf.mxu0
    %v2794 = vadd.f32 %v2717, %v2793
    %2795 = vmatmul.f32.gmra.mxu0 %v2728
    %v2796 = vpop.f32.mrf.mxu0
    %v2797 = vadd.f32 %v2721, %v2796
    %2798 = vdwg.mxu0
    %2799 = vmatpush.msra.mxu0 0.0
    %2800 = vmatpush.msra.mxu0 0.0
    %2801 = vmatpush.msra.mxu0 0.0
    %2802 = vmatpush.msra.mxu0 0.0
    %2803 = vmatpush.msra.mxu0 0.0
    %2804 = vmatpush.msra.mxu0 0.0
    %2805 = vmatpush.msra.mxu0 0.0
    %2806 = vmatpush.msra.mxu0 0.0
    %2807 = vmatpush.msra.mxu0 0.0
    %2808 = vmatpush.msra.mxu0 0.0
    %2809 = vmatpush.msra.mxu0 0.0
    %2810 = vmatpush.msra.mxu0 0.0
    %2811 = vmatpush.msra.mxu0 0.0
    %2812 = vmatpush.msra.mxu0 0.0
    %2813 = vmatpush.msra.mxu0 %v2094
    %2814 = vmatpush.msra.mxu0 %v854
    %2815 = vmatmul.f32.gmra.mxu0 %v2725
    %v2816 = vpop.f32.mrf.mxu0
    %v2817 = vadd.f32 %v2717, %v2816
    %2818 = vmatmul.f32.gmra.mxu0 %v2728
    %v2819 = vpop.f32.mrf.mxu0
    %v2820 = vadd.f32 %v2721, %v2819
    %2821 = vdwg.mxu0
    %2822 = vmatpush.msra.mxu0 0.0
    %2823 = vmatpush.msra.mxu0 0.0
    %2824 = vmatpush.msra.mxu0 0.0
    %2825 = vmatpush.msra.mxu0 0.0
    %2826 = vmatpush.msra.mxu0 0.0
    %2827 = vmatpush.msra.mxu0 0.0
    %2828 = vmatpush.msra.mxu0 0.0
    %2829 = vmatpush.msra.mxu0 0.0
    %2830 = vmatpush.msra.mxu0 0.0
    %2831 = vmatpush.msra.mxu0 0.0
    %2832 = vmatpush.msra.mxu0 0.0
    %2833 = vmatpush.msra.mxu0 0.0
    %2834 = vmatpush.msra.mxu0 0.0
    %2835 = vmatpush.msra.mxu0 0.0
    %2836 = vmatpush.msra.mxu0 %v2249
    %2837 = vmatpush.msra.mxu0 %v1009
    %2838 = vmatmul.f32.gmra.mxu0 %v2725
    %v2839 = vpop.f32.mrf.mxu0
    %v2840 = vadd.f32 %v2717, %v2839
    %2841 = vmatmul.f32.gmra.mxu0 %v2728
    %v2842 = vpop.f32.mrf.mxu0
    %v2843 = vadd.f32 %v2721, %v2842
    %2844 = vdwg.mxu0
    %2845 = vmatpush.msra.mxu0 0.0
    %2846 = vmatpush.msra.mxu0 0.0
    %2847 = vmatpush.msra.mxu0 0.0
    %2848 = vmatpush.msra.mxu0 0.0
    %2849 = vmatpush.msra.mxu0 0.0
    %2850 = vmatpush.msra.mxu0 0.0
    %2851 = vmatpush.msra.mxu0 0.0
    %2852 = vmatpush.msra.mxu0 0.0
    %2853 = vmatpush.msra.mxu0 0.0
    %2854 = vmatpush.msra.mxu0 0.0
    %2855 = vmatpush.msra.mxu0 0.0
    %2856 = vmatpush.msra.mxu0 0.0
    %2857 = vmatpush.msra.mxu0 0.0
    %2858 = vmatpush.msra.mxu0 0.0
    %2859 = vmatpush.msra.mxu0 %v2404
    %2860 = vmatpush.msra.mxu0 %v1164
    %2861 = vmatmul.f32.gmra.mxu0 %v2725
    %v2862 = vpop.f32.mrf.mxu0
    %v2863 = vadd.f32 %v2717, %v2862
    %2864 = vmatmul.f32.gmra.mxu0 %v2728
    %v2865 = vpop.f32.mrf.mxu0
    %v2866 = vadd.f32 %v2721, %v2865
    %2867 = vdwg.mxu0
    %2868 = vmatpush.msra.mxu0 0.0
    %2869 = vmatpush.msra.mxu0 0.0
    %2870 = vmatpush.msra.mxu0 0.0
    %2871 = vmatpush.msra.mxu0 0.0
    %2872 = vmatpush.msra.mxu0 0.0
    %2873 = vmatpush.msra.mxu0 0.0
    %2874 = vmatpush.msra.mxu0 0.0
    %2875 = vmatpush.msra.mxu0 0.0
    %2876 = vmatpush.msra.mxu0 0.0
    %2877 = vmatpush.msra.mxu0 0.0
    %2878 = vmatpush.msra.mxu0 0.0
    %2879 = vmatpush.msra.mxu0 0.0
    %2880 = vmatpush.msra.mxu0 0.0
    %2881 = vmatpush.msra.mxu0 0.0
    %2882 = vmatpush.msra.mxu0 %v2559
    %2883 = vmatpush.msra.mxu0 %v1319
    %2884 = vmatmul.f32.gmra.mxu0 %v2725
    %v2885 = vpop.f32.mrf.mxu0
    %v2886 = vadd.f32 %v2717, %v2885
    %2887 = vmatmul.f32.gmra.mxu0 %v2728
    %v2888 = vpop.f32.mrf.mxu0
    %v2889 = vadd.f32 %v2721, %v2888
    %2890 = vdwg.mxu0
    %2891 = vmatpush.msra.mxu0 0.0
    %2892 = vmatpush.msra.mxu0 0.0
    %2893 = vmatpush.msra.mxu0 0.0
    %2894 = vmatpush.msra.mxu0 0.0
    %2895 = vmatpush.msra.mxu0 0.0
    %2896 = vmatpush.msra.mxu0 0.0
    %2897 = vmatpush.msra.mxu0 0.0
    %2898 = vmatpush.msra.mxu0 0.0
    %2899 = vmatpush.msra.mxu0 0.0
    %2900 = vmatpush.msra.mxu0 0.0
    %2901 = vmatpush.msra.mxu0 0.0
    %2902 = vmatpush.msra.mxu0 0.0
    %2903 = vmatpush.msra.mxu0 0.0
    %2904 = vmatpush.msra.mxu0 0.0
    %2905 = vmatpush.msra.mxu0 %v2714
    %2906 = vmatpush.msra.mxu0 %v1474
    %2907 = vmatmul.f32.gmra.mxu0 %v2725
    %v2908 = vpop.f32.mrf.mxu0
    %v2909 = vadd.f32 %v2717, %v2908
    %2910 = vmatmul.f32.gmra.mxu0 %v2728
    %v2911 = vpop.f32.mrf.mxu0
    %v2912 = vadd.f32 %v2721, %v2911
    %2913 = vdwg.mxu0
    %v2914 = vand.u32 2147483647, %v2748
    %vm2915 = vcmp.le.f32.partialorder %v2914, 0.7853982
    %vm2916 = vcmp.lt.s32.totalorder %v2748, 0
    %v2917 = vand.u32 %v2748, 2139095040
    %v2918 = vshrl.u32 %v2917, 23
    %v2919 = vsub.s32 %v2918, 127
    %v2920 = vand.u32 2147483647, %v2748
    %v2921 = vand.u32 %v2920, 8388607
    %v2922 = vor.u32 %v2921, 8388608
    %v2923 = vsub.s32 0, %v2922
    %v2924 = vadd.s32 %v2919, 1
    %vm2925 = vcmp.gt.s32.totalorder %v2924, 0
    %v2926 = vsel %vm2925, %v2924, 0
    %v2927 = vshrl.u32 %v2926, 5
    %v2928 = vand.u32 %v2926, 31
    %v2929 = vsub.s32 32, %v2928
    %v2930 = vshrl.u32 683565275, %v2929
    %v2931 = vshll.u32 683565275, %v2928
    %v2932 = vshrl.u32 2475754826, %v2929
    %v2933 = vor.u32 %v2931, %v2932
    %v2934 = vshll.u32 2475754826, %v2928
    %v2935 = vshrl.u32 2131351028, %v2929
    %v2936 = vor.u32 %v2934, %v2935
    %v2937 = vshll.u32 2131351028, %v2928
    %v2938 = vshrl.u32 2102212464, %v2929
    %v2939 = vor.u32 %v2937, %v2938
    %v2940 = vshll.u32 2102212464, %v2928
    %v2941 = vshrl.u32 920167782, %v2929
    %v2942 = vor.u32 %v2940, %v2941
    %v2943 = vshll.u32 920167782, %v2928
    %v2944 = vshrl.u32 1326507024, %v2929
    %v2945 = vor.u32 %v2943, %v2944
    %vm2946 = vcmp.lt.s32.totalorder %v2927, 1
    %vm2947 = vcmp.lt.s32.totalorder %v2927, 2
    %vm2948 = vcmp.lt.s32.totalorder %v2927, 3
    %vm2949 = vcmp.lt.s32.totalorder %v2927, 4
    %v2950 = vsel %vm2946, %v2930, %v2933
    %v2951 = vsel %vm2949, %v2939, 2102212464
    %v2952 = vsel %vm2948, %v2936, %v2951
    %v2953 = vsel %vm2947, %v2950, %v2952
    %v2954 = vsel %vm2946, %v2933, %v2936
    %v2955 = vsel %vm2949, %v2942, 920167782
    %v2956 = vsel %vm2948, %v2939, %v2955
    %v2957 = vsel %vm2947, %v2954, %v2956
    %v2958 = vsel %vm2946, %v2936, %v2939
    %v2959 = vsel %vm2949, %v2945, 1326507024
    %v2960 = vsel %vm2948, %v2942, %v2959
    %v2961 = vsel %vm2947, %v2958, %v2960
    %v2962 = vshll.u32 %v2922, 8
    %v2963 = vand.u32 %v2962, 65535
    %v2964 = vshrl.u32 %v2962, 16
    %v2965 = vand.u32 %v2961, 65535
    %v2966 = vshrl.u32 %v2961, 16
    %v2967 = vmul.u32 %v2963, %v2965
    %v2968 = vmul.u32 %v2963, %v2966
    %v2969 = vmul.u32 %v2964, %v2965
    %v2970 = vmul.u32 %v2964, %v2966
    %v2971 = vshll.u32 %v2968, 16
    %v2972 = vshrl.u32 %v2968, 16
    %v2973 = vshll.u32 %v2969, 16
    %v2974 = vshrl.u32 %v2969, 16
    %vm2975 = vc.u32 %v2967, %v2971
    %v2976 = vsel %vm2975, 1, 0
    %v2977 = vadd.s32 %v2967, %v2971
    %v2978 = vadd.s32 %v2970, %v2976
    %vm2979 = vc.u32 %v2977, %v2973
    %v2980 = vsel %vm2979, 1, 0
    %v2981 = vadd.s32 %v2977, %v2973
    %v2982 = vadd.s32 %v2978, %v2980
    %v2983 = vadd.s32 %v2982, %v2972
    %v2984 = vadd.s32 %v2983, %v2974
    %v2985 = vand.u32 %v2962, 65535
    %v2986 = vshrl.u32 %v2962, 16
    %v2987 = vand.u32 %v2957, 65535
    %v2988 = vshrl.u32 %v2957, 16
    %v2989 = vmul.u32 %v2985, %v2987
    %v2990 = vmul.u32 %v2985, %v2988
    %v2991 = vmul.u32 %v2986, %v2987
    %v2992 = vmul.u32 %v2986, %v2988
    %v2993 = vshll.u32 %v2990, 16
    %v2994 = vshrl.u32 %v2990, 16
    %v2995 = vshll.u32 %v2991, 16
    %v2996 = vshrl.u32 %v2991, 16
    %vm2997 = vc.u32 %v2989, %v2993
    %v2998 = vsel %vm2997, 1, 0
    %v2999 = vadd.s32 %v2989, %v2993
    %v3000 = vadd.s32 %v2992, %v2998
    %vm3001 = vc.u32 %v2999, %v2995
    %v3002 = vsel %vm3001, 1, 0
    %v3003 = vadd.s32 %v2999, %v2995
    %v3004 = vadd.s32 %v3000, %v3002
    %v3005 = vadd.s32 %v3004, %v2994
    %v3006 = vadd.s32 %v3005, %v2996
    %v3007 = vmul.u32 %v2962, %v2953
    %v3008 = vadd.s32 %v2984, %v3003
    %vm3009 = vc.u32 %v2984, %v3003
    %v3010 = vadd.s32 %v3006, 1
    %v3011 = vsel %vm3009, %v3010, %v3006
    %v3012 = vadd.s32 %v3007, %v3011
    %v3013 = vadd.s32 %v3012, 536870912
    %v3014 = vshrl.u32 %v3013, 30
    %v3015 = vshll.u32 %v3014, 30
    %v3016 = vsub.s32 %v3012, %v3015
    %vm3017 = vcmp.lt.s32.totalorder %v3016, 0
    %v3018 = vsub.s32 0, %v3016
    %v3019 = vsel %vm3017, %v3018, %v3016
    %v3020 = vclz %v3019
    %v3021 = vsub.s32 %v3020, 2
    %vm3022 = vcmp.gt.s32.totalorder 0, %v3021
    %v3023 = vsel %vm3022, 0, %v3021
    %v3024 = vsub.s32 32, %v3023
    %v3025 = vshll.u32 %v3016, %v3023
    %v3026 = vshrl.u32 %v3008, %v3024
    %v3027 = vor.u32 %v3025, %v3026
    %v3028 = vsub.s32 4294967266, %v3023
    %v3029 = vadd.s32 %v3028, 127
    %v3030 = vshll.u32 %v3029, 23
    %v3031 = vor.u32 4788187, %v3030
    %v3032 = vand.u32 2147483647, %v3031
    %v3034 = vcvt.s32.f32 %v3027
    %v3035 = vmul.f32 %v3034, %v3032
    %v3036 = vxor.u32 %v3035, 2147483648
    %v3037 = vsel %vm2916, %v3036, %v3035
    %v3038 = vsub.s32 4, %v3014
    %v3039 = vsel %vm2916, %v3038, %v3014
    %v3040 = vsel %vm2915, %v2748, %v3037
    %v3041 = vsel %vm2915, 0, %v3039
    %v3042 = vmul.f32 %v3040, %v3040
    %v3043 = vmul.f32 %v3042, -0.001358992
    %v3044 = vadd.f32 %v3043, 0.041655596
    %v3045 = vmul.f32 %v3042, %v3044
    %v3046 = vadd.f32 %v3045, -0.4999988
    %v3047 = vmul.f32 %v3042, %v3046
    %v3048 = vadd.f32 1.0, %v3047
    %v3049 = vmul.f32 %v3040, %v3040
    %v3050 = vmul.f32 %v3049, -0.00019511016
    %v3051 = vadd.f32 %v3050, 0.008332121
    %v3052 = vmul.f32 %v3049, %v3051
    %v3053 = vadd.f32 %v3052, -0.16666654
    %v3054 = vmul.f32 %v3049, %v3053
    %v3055 = vadd.f32 %v3054, 1.0
    %v3056 = vmul.f32 %v3055, %v3040
    %vm3057 = vweird.f32 %v2748
    %v3058 = vadd.s32 %v3041, 3
    %v3059 = vand.u32 %v3058, 3
    %vm3060 = vcmp.lt.s32.totalorder %v3059, 2
    %vm3061 = vcmp.eq.s32.totalorder %v3059, 0
    %v3062 = vxor.u32 %v3056, 2147483648
    %v3063 = vsel %vm3061, %v3048, %v3062
    %vm3064 = vcmp.eq.s32.totalorder %v3059, 2
    %v3065 = vxor.u32 %v3048, 2147483648
    %v3066 = vsel %vm3064, %v3065, %v3056
    %v3067 = vsel %vm3060, %v3063, %v3066
    %v3068 = vsel %vm3057, nan, %v3067
    %v3069 = vand.u32 2147483647, %v2771
    %vm3070 = vcmp.le.f32.partialorder %v3069, 0.7853982
    %vm3071 = vcmp.lt.s32.totalorder %v2771, 0
    %v3072 = vand.u32 %v2771, 2139095040
    %v3073 = vshrl.u32 %v3072, 23
    %v3074 = vsub.s32 %v3073, 127
    %v3075 = vand.u32 2147483647, %v2771
    %v3076 = vand.u32 %v3075, 8388607
    %v3077 = vor.u32 %v3076, 8388608
    %v3078 = vsub.s32 0, %v3077
    %v3079 = vadd.s32 %v3074, 1
    %vm3080 = vcmp.gt.s32.totalorder %v3079, 0
    %v3081 = vsel %vm3080, %v3079, 0
    %v3082 = vshrl.u32 %v3081, 5
    %v3083 = vand.u32 %v3081, 31
    %v3084 = vsub.s32 32, %v3083
    %v3085 = vshrl.u32 683565275, %v3084
    %v3086 = vshll.u32 683565275, %v3083
    %v3087 = vshrl.u32 2475754826, %v3084
    %v3088 = vor.u32 %v3086, %v3087
    %v3089 = vshll.u32 2475754826, %v3083
    %v3090 = vshrl.u32 2131351028, %v3084
    %v3091 = vor.u32 %v3089, %v3090
    %v3092 = vshll.u32 2131351028, %v3083
    %v3093 = vshrl.u32 2102212464, %v3084
    %v3094 = vor.u32 %v3092, %v3093
    %v3095 = vshll.u32 2102212464, %v3083
    %v3096 = vshrl.u32 920167782, %v3084
    %v3097 = vor.u32 %v3095, %v3096
    %v3098 = vshll.u32 920167782, %v3083
    %v3099 = vshrl.u32 1326507024, %v3084
    %v3100 = vor.u32 %v3098, %v3099
    %vm3101 = vcmp.lt.s32.totalorder %v3082, 1
    %vm3102 = vcmp.lt.s32.totalorder %v3082, 2
    %vm3103 = vcmp.lt.s32.totalorder %v3082, 3
    %vm3104 = vcmp.lt.s32.totalorder %v3082, 4
    %v3105 = vsel %vm3101, %v3085, %v3088
    %v3106 = vsel %vm3104, %v3094, 2102212464
    %v3107 = vsel %vm3103, %v3091, %v3106
    %v3108 = vsel %vm3102, %v3105, %v3107
    %v3109 = vsel %vm3101, %v3088, %v3091
    %v3110 = vsel %vm3104, %v3097, 920167782
    %v3111 = vsel %vm3103, %v3094, %v3110
    %v3112 = vsel %vm3102, %v3109, %v3111
    %v3113 = vsel %vm3101, %v3091, %v3094
    %v3114 = vsel %vm3104, %v3100, 1326507024
    %v3115 = vsel %vm3103, %v3097, %v3114
    %v3116 = vsel %vm3102, %v3113, %v3115
    %v3117 = vshll.u32 %v3077, 8
    %v3118 = vand.u32 %v3117, 65535
    %v3119 = vshrl.u32 %v3117, 16
    %v3120 = vand.u32 %v3116, 65535
    %v3121 = vshrl.u32 %v3116, 16
    %v3122 = vmul.u32 %v3118, %v3120
    %v3123 = vmul.u32 %v3118, %v3121
    %v3124 = vmul.u32 %v3119, %v3120
    %v3125 = vmul.u32 %v3119, %v3121
    %v3126 = vshll.u32 %v3123, 16
    %v3127 = vshrl.u32 %v3123, 16
    %v3128 = vshll.u32 %v3124, 16
    %v3129 = vshrl.u32 %v3124, 16
    %vm3130 = vc.u32 %v3122, %v3126
    %v3131 = vsel %vm3130, 1, 0
    %v3132 = vadd.s32 %v3122, %v3126
    %v3133 = vadd.s32 %v3125, %v3131
    %vm3134 = vc.u32 %v3132, %v3128
    %v3135 = vsel %vm3134, 1, 0
    %v3136 = vadd.s32 %v3132, %v3128
    %v3137 = vadd.s32 %v3133, %v3135
    %v3138 = vadd.s32 %v3137, %v3127
    %v3139 = vadd.s32 %v3138, %v3129
    %v3140 = vand.u32 %v3117, 65535
    %v3141 = vshrl.u32 %v3117, 16
    %v3142 = vand.u32 %v3112, 65535
    %v3143 = vshrl.u32 %v3112, 16
    %v3144 = vmul.u32 %v3140, %v3142
    %v3145 = vmul.u32 %v3140, %v3143
    %v3146 = vmul.u32 %v3141, %v3142
    %v3147 = vmul.u32 %v3141, %v3143
    %v3148 = vshll.u32 %v3145, 16
    %v3149 = vshrl.u32 %v3145, 16
    %v3150 = vshll.u32 %v3146, 16
    %v3151 = vshrl.u32 %v3146, 16
    %vm3152 = vc.u32 %v3144, %v3148
    %v3153 = vsel %vm3152, 1, 0
    %v3154 = vadd.s32 %v3144, %v3148
    %v3155 = vadd.s32 %v3147, %v3153
    %vm3156 = vc.u32 %v3154, %v3150
    %v3157 = vsel %vm3156, 1, 0
    %v3158 = vadd.s32 %v3154, %v3150
    %v3159 = vadd.s32 %v3155, %v3157
    %v3160 = vadd.s32 %v3159, %v3149
    %v3161 = vadd.s32 %v3160, %v3151
    %v3162 = vmul.u32 %v3117, %v3108
    %v3163 = vadd.s32 %v3139, %v3158
    %vm3164 = vc.u32 %v3139, %v3158
    %v3165 = vadd.s32 %v3161, 1
    %v3166 = vsel %vm3164, %v3165, %v3161
    %v3167 = vadd.s32 %v3162, %v3166
    %v3168 = vadd.s32 %v3167, 536870912
    %v3169 = vshrl.u32 %v3168, 30
    %v3170 = vshll.u32 %v3169, 30
    %v3171 = vsub.s32 %v3167, %v3170
    %vm3172 = vcmp.lt.s32.totalorder %v3171, 0
    %v3173 = vsub.s32 0, %v3171
    %v3174 = vsel %vm3172, %v3173, %v3171
    %v3175 = vclz %v3174
    %v3176 = vsub.s32 %v3175, 2
    %vm3177 = vcmp.gt.s32.totalorder 0, %v3176
    %v3178 = vsel %vm3177, 0, %v3176
    %v3179 = vsub.s32 32, %v3178
    %v3180 = vshll.u32 %v3171, %v3178
    %v3181 = vshrl.u32 %v3163, %v3179
    %v3182 = vor.u32 %v3180, %v3181
    %v3183 = vsub.s32 4294967266, %v3178
    %v3184 = vadd.s32 %v3183, 127
    %v3185 = vshll.u32 %v3184, 23
    %v3186 = vor.u32 4788187, %v3185
    %v3187 = vand.u32 2147483647, %v3186
    %v3189 = vcvt.s32.f32 %v3182
    %v3190 = vmul.f32 %v3189, %v3187
    %v3191 = vxor.u32 %v3190, 2147483648
    %v3192 = vsel %vm3071, %v3191, %v3190
    %v3193 = vsub.s32 4, %v3169
    %v3194 = vsel %vm3071, %v3193, %v3169
    %v3195 = vsel %vm3070, %v2771, %v3192
    %v3196 = vsel %vm3070, 0, %v3194
    %v3197 = vmul.f32 %v3195, %v3195
    %v3198 = vmul.f32 %v3197, -0.001358992
    %v3199 = vadd.f32 %v3198, 0.041655596
    %v3200 = vmul.f32 %v3197, %v3199
    %v3201 = vadd.f32 %v3200, -0.4999988
    %v3202 = vmul.f32 %v3197, %v3201
    %v3203 = vadd.f32 1.0, %v3202
    %v3204 = vmul.f32 %v3195, %v3195
    %v3205 = vmul.f32 %v3204, -0.00019511016
    %v3206 = vadd.f32 %v3205, 0.008332121
    %v3207 = vmul.f32 %v3204, %v3206
    %v3208 = vadd.f32 %v3207, -0.16666654
    %v3209 = vmul.f32 %v3204, %v3208
    %v3210 = vadd.f32 %v3209, 1.0
    %v3211 = vmul.f32 %v3210, %v3195
    %vm3212 = vweird.f32 %v2771
    %v3213 = vadd.s32 %v3196, 3
    %v3214 = vand.u32 %v3213, 3
    %vm3215 = vcmp.lt.s32.totalorder %v3214, 2
    %vm3216 = vcmp.eq.s32.totalorder %v3214, 0
    %v3217 = vxor.u32 %v3211, 2147483648
    %v3218 = vsel %vm3216, %v3203, %v3217
    %vm3219 = vcmp.eq.s32.totalorder %v3214, 2
    %v3220 = vxor.u32 %v3203, 2147483648
    %v3221 = vsel %vm3219, %v3220, %v3211
    %v3222 = vsel %vm3215, %v3218, %v3221
    %v3223 = vsel %vm3212, nan, %v3222
    %v3224 = vand.u32 2147483647, %v2794
    %vm3225 = vcmp.le.f32.partialorder %v3224, 0.7853982
    %vm3226 = vcmp.lt.s32.totalorder %v2794, 0
    %v3227 = vand.u32 %v2794, 2139095040
    %v3228 = vshrl.u32 %v3227, 23
    %v3229 = vsub.s32 %v3228, 127
    %v3230 = vand.u32 2147483647, %v2794
    %v3231 = vand.u32 %v3230, 8388607
    %v3232 = vor.u32 %v3231, 8388608
    %v3233 = vsub.s32 0, %v3232
    %v3234 = vadd.s32 %v3229, 1
    %vm3235 = vcmp.gt.s32.totalorder %v3234, 0
    %v3236 = vsel %vm3235, %v3234, 0
    %v3237 = vshrl.u32 %v3236, 5
    %v3238 = vand.u32 %v3236, 31
    %v3239 = vsub.s32 32, %v3238
    %v3240 = vshrl.u32 683565275, %v3239
    %v3241 = vshll.u32 683565275, %v3238
    %v3242 = vshrl.u32 2475754826, %v3239
    %v3243 = vor.u32 %v3241, %v3242
    %v3244 = vshll.u32 2475754826, %v3238
    %v3245 = vshrl.u32 2131351028, %v3239
    %v3246 = vor.u32 %v3244, %v3245
    %v3247 = vshll.u32 2131351028, %v3238
    %v3248 = vshrl.u32 2102212464, %v3239
    %v3249 = vor.u32 %v3247, %v3248
    %v3250 = vshll.u32 2102212464, %v3238
    %v3251 = vshrl.u32 920167782, %v3239
    %v3252 = vor.u32 %v3250, %v3251
    %v3253 = vshll.u32 920167782, %v3238
    %v3254 = vshrl.u32 1326507024, %v3239
    %v3255 = vor.u32 %v3253, %v3254
    %vm3256 = vcmp.lt.s32.totalorder %v3237, 1
    %vm3257 = vcmp.lt.s32.totalorder %v3237, 2
    %vm3258 = vcmp.lt.s32.totalorder %v3237, 3
    %vm3259 = vcmp.lt.s32.totalorder %v3237, 4
    %v3260 = vsel %vm3256, %v3240, %v3243
    %v3261 = vsel %vm3259, %v3249, 2102212464
    %v3262 = vsel %vm3258, %v3246, %v3261
    %v3263 = vsel %vm3257, %v3260, %v3262
    %v3264 = vsel %vm3256, %v3243, %v3246
    %v3265 = vsel %vm3259, %v3252, 920167782
    %v3266 = vsel %vm3258, %v3249, %v3265
    %v3267 = vsel %vm3257, %v3264, %v3266
    %v3268 = vsel %vm3256, %v3246, %v3249
    %v3269 = vsel %vm3259, %v3255, 1326507024
    %v3270 = vsel %vm3258, %v3252, %v3269
    %v3271 = vsel %vm3257, %v3268, %v3270
    %v3272 = vshll.u32 %v3232, 8
    %v3273 = vand.u32 %v3272, 65535
    %v3274 = vshrl.u32 %v3272, 16
    %v3275 = vand.u32 %v3271, 65535
    %v3276 = vshrl.u32 %v3271, 16
    %v3277 = vmul.u32 %v3273, %v3275
    %v3278 = vmul.u32 %v3273, %v3276
    %v3279 = vmul.u32 %v3274, %v3275
    %v3280 = vmul.u32 %v3274, %v3276
    %v3281 = vshll.u32 %v3278, 16
    %v3282 = vshrl.u32 %v3278, 16
    %v3283 = vshll.u32 %v3279, 16
    %v3284 = vshrl.u32 %v3279, 16
    %vm3285 = vc.u32 %v3277, %v3281
    %v3286 = vsel %vm3285, 1, 0
    %v3287 = vadd.s32 %v3277, %v3281
    %v3288 = vadd.s32 %v3280, %v3286
    %vm3289 = vc.u32 %v3287, %v3283
    %v3290 = vsel %vm3289, 1, 0
    %v3291 = vadd.s32 %v3287, %v3283
    %v3292 = vadd.s32 %v3288, %v3290
    %v3293 = vadd.s32 %v3292, %v3282
    %v3294 = vadd.s32 %v3293, %v3284
    %v3295 = vand.u32 %v3272, 65535
    %v3296 = vshrl.u32 %v3272, 16
    %v3297 = vand.u32 %v3267, 65535
    %v3298 = vshrl.u32 %v3267, 16
    %v3299 = vmul.u32 %v3295, %v3297
    %v3300 = vmul.u32 %v3295, %v3298
    %v3301 = vmul.u32 %v3296, %v3297
    %v3302 = vmul.u32 %v3296, %v3298
    %v3303 = vshll.u32 %v3300, 16
    %v3304 = vshrl.u32 %v3300, 16
    %v3305 = vshll.u32 %v3301, 16
    %v3306 = vshrl.u32 %v3301, 16
    %vm3307 = vc.u32 %v3299, %v3303
    %v3308 = vsel %vm3307, 1, 0
    %v3309 = vadd.s32 %v3299, %v3303
    %v3310 = vadd.s32 %v3302, %v3308
    %vm3311 = vc.u32 %v3309, %v3305
    %v3312 = vsel %vm3311, 1, 0
    %v3313 = vadd.s32 %v3309, %v3305
    %v3314 = vadd.s32 %v3310, %v3312
    %v3315 = vadd.s32 %v3314, %v3304
    %v3316 = vadd.s32 %v3315, %v3306
    %v3317 = vmul.u32 %v3272, %v3263
    %v3318 = vadd.s32 %v3294, %v3313
    %vm3319 = vc.u32 %v3294, %v3313
    %v3320 = vadd.s32 %v3316, 1
    %v3321 = vsel %vm3319, %v3320, %v3316
    %v3322 = vadd.s32 %v3317, %v3321
    %v3323 = vadd.s32 %v3322, 536870912
    %v3324 = vshrl.u32 %v3323, 30
    %v3325 = vshll.u32 %v3324, 30
    %v3326 = vsub.s32 %v3322, %v3325
    %vm3327 = vcmp.lt.s32.totalorder %v3326, 0
    %v3328 = vsub.s32 0, %v3326
    %v3329 = vsel %vm3327, %v3328, %v3326
    %v3330 = vclz %v3329
    %v3331 = vsub.s32 %v3330, 2
    %vm3332 = vcmp.gt.s32.totalorder 0, %v3331
    %v3333 = vsel %vm3332, 0, %v3331
    %v3334 = vsub.s32 32, %v3333
    %v3335 = vshll.u32 %v3326, %v3333
    %v3336 = vshrl.u32 %v3318, %v3334
    %v3337 = vor.u32 %v3335, %v3336
    %v3338 = vsub.s32 4294967266, %v3333
    %v3339 = vadd.s32 %v3338, 127
    %v3340 = vshll.u32 %v3339, 23
    %v3341 = vor.u32 4788187, %v3340
    %v3342 = vand.u32 2147483647, %v3341
    %v3344 = vcvt.s32.f32 %v3337
    %v3345 = vmul.f32 %v3344, %v3342
    %v3346 = vxor.u32 %v3345, 2147483648
    %v3347 = vsel %vm3226, %v3346, %v3345
    %v3348 = vsub.s32 4, %v3324
    %v3349 = vsel %vm3226, %v3348, %v3324
    %v3350 = vsel %vm3225, %v2794, %v3347
    %v3351 = vsel %vm3225, 0, %v3349
    %v3352 = vmul.f32 %v3350, %v3350
    %v3353 = vmul.f32 %v3352, -0.001358992
    %v3354 = vadd.f32 %v3353, 0.041655596
    %v3355 = vmul.f32 %v3352, %v3354
    %v3356 = vadd.f32 %v3355, -0.4999988
    %v3357 = vmul.f32 %v3352, %v3356
    %v3358 = vadd.f32 1.0, %v3357
    %v3359 = vmul.f32 %v3350, %v3350
    %v3360 = vmul.f32 %v3359, -0.00019511016
    %v3361 = vadd.f32 %v3360, 0.008332121
    %v3362 = vmul.f32 %v3359, %v3361
    %v3363 = vadd.f32 %v3362, -0.16666654
    %v3364 = vmul.f32 %v3359, %v3363
    %v3365 = vadd.f32 %v3364, 1.0
    %v3366 = vmul.f32 %v3365, %v3350
    %vm3367 = vweird.f32 %v2794
    %v3368 = vadd.s32 %v3351, 3
    %v3369 = vand.u32 %v3368, 3
    %vm3370 = vcmp.lt.s32.totalorder %v3369, 2
    %vm3371 = vcmp.eq.s32.totalorder %v3369, 0
    %v3372 = vxor.u32 %v3366, 2147483648
    %v3373 = vsel %vm3371, %v3358, %v3372
    %vm3374 = vcmp.eq.s32.totalorder %v3369, 2
    %v3375 = vxor.u32 %v3358, 2147483648
    %v3376 = vsel %vm3374, %v3375, %v3366
    %v3377 = vsel %vm3370, %v3373, %v3376
    %v3378 = vsel %vm3367, nan, %v3377
    %v3379 = vand.u32 2147483647, %v2817
    %vm3380 = vcmp.le.f32.partialorder %v3379, 0.7853982
    %vm3381 = vcmp.lt.s32.totalorder %v2817, 0
    %v3382 = vand.u32 %v2817, 2139095040
    %v3383 = vshrl.u32 %v3382, 23
    %v3384 = vsub.s32 %v3383, 127
    %v3385 = vand.u32 2147483647, %v2817
    %v3386 = vand.u32 %v3385, 8388607
    %v3387 = vor.u32 %v3386, 8388608
    %v3388 = vsub.s32 0, %v3387
    %v3389 = vadd.s32 %v3384, 1
    %vm3390 = vcmp.gt.s32.totalorder %v3389, 0
    %v3391 = vsel %vm3390, %v3389, 0
    %v3392 = vshrl.u32 %v3391, 5
    %v3393 = vand.u32 %v3391, 31
    %v3394 = vsub.s32 32, %v3393
    %v3395 = vshrl.u32 683565275, %v3394
    %v3396 = vshll.u32 683565275, %v3393
    %v3397 = vshrl.u32 2475754826, %v3394
    %v3398 = vor.u32 %v3396, %v3397
    %v3399 = vshll.u32 2475754826, %v3393
    %v3400 = vshrl.u32 2131351028, %v3394
    %v3401 = vor.u32 %v3399, %v3400
    %v3402 = vshll.u32 2131351028, %v3393
    %v3403 = vshrl.u32 2102212464, %v3394
    %v3404 = vor.u32 %v3402, %v3403
    %v3405 = vshll.u32 2102212464, %v3393
    %v3406 = vshrl.u32 920167782, %v3394
    %v3407 = vor.u32 %v3405, %v3406
    %v3408 = vshll.u32 920167782, %v3393
    %v3409 = vshrl.u32 1326507024, %v3394
    %v3410 = vor.u32 %v3408, %v3409
    %vm3411 = vcmp.lt.s32.totalorder %v3392, 1
    %vm3412 = vcmp.lt.s32.totalorder %v3392, 2
    %vm3413 = vcmp.lt.s32.totalorder %v3392, 3
    %vm3414 = vcmp.lt.s32.totalorder %v3392, 4
    %v3415 = vsel %vm3411, %v3395, %v3398
    %v3416 = vsel %vm3414, %v3404, 2102212464
    %v3417 = vsel %vm3413, %v3401, %v3416
    %v3418 = vsel %vm3412, %v3415, %v3417
    %v3419 = vsel %vm3411, %v3398, %v3401
    %v3420 = vsel %vm3414, %v3407, 920167782
    %v3421 = vsel %vm3413, %v3404, %v3420
    %v3422 = vsel %vm3412, %v3419, %v3421
    %v3423 = vsel %vm3411, %v3401, %v3404
    %v3424 = vsel %vm3414, %v3410, 1326507024
    %v3425 = vsel %vm3413, %v3407, %v3424
    %v3426 = vsel %vm3412, %v3423, %v3425
    %v3427 = vshll.u32 %v3387, 8
    %v3428 = vand.u32 %v3427, 65535
    %v3429 = vshrl.u32 %v3427, 16
    %v3430 = vand.u32 %v3426, 65535
    %v3431 = vshrl.u32 %v3426, 16
    %v3432 = vmul.u32 %v3428, %v3430
    %v3433 = vmul.u32 %v3428, %v3431
    %v3434 = vmul.u32 %v3429, %v3430
    %v3435 = vmul.u32 %v3429, %v3431
    %v3436 = vshll.u32 %v3433, 16
    %v3437 = vshrl.u32 %v3433, 16
    %v3438 = vshll.u32 %v3434, 16
    %v3439 = vshrl.u32 %v3434, 16
    %vm3440 = vc.u32 %v3432, %v3436
    %v3441 = vsel %vm3440, 1, 0
    %v3442 = vadd.s32 %v3432, %v3436
    %v3443 = vadd.s32 %v3435, %v3441
    %vm3444 = vc.u32 %v3442, %v3438
    %v3445 = vsel %vm3444, 1, 0
    %v3446 = vadd.s32 %v3442, %v3438
    %v3447 = vadd.s32 %v3443, %v3445
    %v3448 = vadd.s32 %v3447, %v3437
    %v3449 = vadd.s32 %v3448, %v3439
    %v3450 = vand.u32 %v3427, 65535
    %v3451 = vshrl.u32 %v3427, 16
    %v3452 = vand.u32 %v3422, 65535
    %v3453 = vshrl.u32 %v3422, 16
    %v3454 = vmul.u32 %v3450, %v3452
    %v3455 = vmul.u32 %v3450, %v3453
    %v3456 = vmul.u32 %v3451, %v3452
    %v3457 = vmul.u32 %v3451, %v3453
    %v3458 = vshll.u32 %v3455, 16
    %v3459 = vshrl.u32 %v3455, 16
    %v3460 = vshll.u32 %v3456, 16
    %v3461 = vshrl.u32 %v3456, 16
    %vm3462 = vc.u32 %v3454, %v3458
    %v3463 = vsel %vm3462, 1, 0
    %v3464 = vadd.s32 %v3454, %v3458
    %v3465 = vadd.s32 %v3457, %v3463
    %vm3466 = vc.u32 %v3464, %v3460
    %v3467 = vsel %vm3466, 1, 0
    %v3468 = vadd.s32 %v3464, %v3460
    %v3469 = vadd.s32 %v3465, %v3467
    %v3470 = vadd.s32 %v3469, %v3459
    %v3471 = vadd.s32 %v3470, %v3461
    %v3472 = vmul.u32 %v3427, %v3418
    %v3473 = vadd.s32 %v3449, %v3468
    %vm3474 = vc.u32 %v3449, %v3468
    %v3475 = vadd.s32 %v3471, 1
    %v3476 = vsel %vm3474, %v3475, %v3471
    %v3477 = vadd.s32 %v3472, %v3476
    %v3478 = vadd.s32 %v3477, 536870912
    %v3479 = vshrl.u32 %v3478, 30
    %v3480 = vshll.u32 %v3479, 30
    %v3481 = vsub.s32 %v3477, %v3480
    %vm3482 = vcmp.lt.s32.totalorder %v3481, 0
    %v3483 = vsub.s32 0, %v3481
    %v3484 = vsel %vm3482, %v3483, %v3481
    %v3485 = vclz %v3484
    %v3486 = vsub.s32 %v3485, 2
    %vm3487 = vcmp.gt.s32.totalorder 0, %v3486
    %v3488 = vsel %vm3487, 0, %v3486
    %v3489 = vsub.s32 32, %v3488
    %v3490 = vshll.u32 %v3481, %v3488
    %v3491 = vshrl.u32 %v3473, %v3489
    %v3492 = vor.u32 %v3490, %v3491
    %v3493 = vsub.s32 4294967266, %v3488
    %v3494 = vadd.s32 %v3493, 127
    %v3495 = vshll.u32 %v3494, 23
    %v3496 = vor.u32 4788187, %v3495
    %v3497 = vand.u32 2147483647, %v3496
    %v3499 = vcvt.s32.f32 %v3492
    %v3500 = vmul.f32 %v3499, %v3497
    %v3501 = vxor.u32 %v3500, 2147483648
    %v3502 = vsel %vm3381, %v3501, %v3500
    %v3503 = vsub.s32 4, %v3479
    %v3504 = vsel %vm3381, %v3503, %v3479
    %v3505 = vsel %vm3380, %v2817, %v3502
    %v3506 = vsel %vm3380, 0, %v3504
    %v3507 = vmul.f32 %v3505, %v3505
    %v3508 = vmul.f32 %v3507, -0.001358992
    %v3509 = vadd.f32 %v3508, 0.041655596
    %v3510 = vmul.f32 %v3507, %v3509
    %v3511 = vadd.f32 %v3510, -0.4999988
    %v3512 = vmul.f32 %v3507, %v3511
    %v3513 = vadd.f32 1.0, %v3512
    %v3514 = vmul.f32 %v3505, %v3505
    %v3515 = vmul.f32 %v3514, -0.00019511016
    %v3516 = vadd.f32 %v3515, 0.008332121
    %v3517 = vmul.f32 %v3514, %v3516
    %v3518 = vadd.f32 %v3517, -0.16666654
    %v3519 = vmul.f32 %v3514, %v3518
    %v3520 = vadd.f32 %v3519, 1.0
    %v3521 = vmul.f32 %v3520, %v3505
    %vm3522 = vweird.f32 %v2817
    %v3523 = vadd.s32 %v3506, 3
    %v3524 = vand.u32 %v3523, 3
    %vm3525 = vcmp.lt.s32.totalorder %v3524, 2
    %vm3526 = vcmp.eq.s32.totalorder %v3524, 0
    %v3527 = vxor.u32 %v3521, 2147483648
    %v3528 = vsel %vm3526, %v3513, %v3527
    %vm3529 = vcmp.eq.s32.totalorder %v3524, 2
    %v3530 = vxor.u32 %v3513, 2147483648
    %v3531 = vsel %vm3529, %v3530, %v3521
    %v3532 = vsel %vm3525, %v3528, %v3531
    %v3533 = vsel %vm3522, nan, %v3532
    %v3534 = vand.u32 2147483647, %v2840
    %vm3535 = vcmp.le.f32.partialorder %v3534, 0.7853982
    %vm3536 = vcmp.lt.s32.totalorder %v2840, 0
    %v3537 = vand.u32 %v2840, 2139095040
    %v3538 = vshrl.u32 %v3537, 23
    %v3539 = vsub.s32 %v3538, 127
    %v3540 = vand.u32 2147483647, %v2840
    %v3541 = vand.u32 %v3540, 8388607
    %v3542 = vor.u32 %v3541, 8388608
    %v3543 = vsub.s32 0, %v3542
    %v3544 = vadd.s32 %v3539, 1
    %vm3545 = vcmp.gt.s32.totalorder %v3544, 0
    %v3546 = vsel %vm3545, %v3544, 0
    %v3547 = vshrl.u32 %v3546, 5
    %v3548 = vand.u32 %v3546, 31
    %v3549 = vsub.s32 32, %v3548
    %v3550 = vshrl.u32 683565275, %v3549
    %v3551 = vshll.u32 683565275, %v3548
    %v3552 = vshrl.u32 2475754826, %v3549
    %v3553 = vor.u32 %v3551, %v3552
    %v3554 = vshll.u32 2475754826, %v3548
    %v3555 = vshrl.u32 2131351028, %v3549
    %v3556 = vor.u32 %v3554, %v3555
    %v3557 = vshll.u32 2131351028, %v3548
    %v3558 = vshrl.u32 2102212464, %v3549
    %v3559 = vor.u32 %v3557, %v3558
    %v3560 = vshll.u32 2102212464, %v3548
    %v3561 = vshrl.u32 920167782, %v3549
    %v3562 = vor.u32 %v3560, %v3561
    %v3563 = vshll.u32 920167782, %v3548
    %v3564 = vshrl.u32 1326507024, %v3549
    %v3565 = vor.u32 %v3563, %v3564
    %vm3566 = vcmp.lt.s32.totalorder %v3547, 1
    %vm3567 = vcmp.lt.s32.totalorder %v3547, 2
    %vm3568 = vcmp.lt.s32.totalorder %v3547, 3
    %vm3569 = vcmp.lt.s32.totalorder %v3547, 4
    %v3570 = vsel %vm3566, %v3550, %v3553
    %v3571 = vsel %vm3569, %v3559, 2102212464
    %v3572 = vsel %vm3568, %v3556, %v3571
    %v3573 = vsel %vm3567, %v3570, %v3572
    %v3574 = vsel %vm3566, %v3553, %v3556
    %v3575 = vsel %vm3569, %v3562, 920167782
    %v3576 = vsel %vm3568, %v3559, %v3575
    %v3577 = vsel %vm3567, %v3574, %v3576
    %v3578 = vsel %vm3566, %v3556, %v3559
    %v3579 = vsel %vm3569, %v3565, 1326507024
    %v3580 = vsel %vm3568, %v3562, %v3579
    %v3581 = vsel %vm3567, %v3578, %v3580
    %v3582 = vshll.u32 %v3542, 8
    %v3583 = vand.u32 %v3582, 65535
    %v3584 = vshrl.u32 %v3582, 16
    %v3585 = vand.u32 %v3581, 65535
    %v3586 = vshrl.u32 %v3581, 16
    %v3587 = vmul.u32 %v3583, %v3585
    %v3588 = vmul.u32 %v3583, %v3586
    %v3589 = vmul.u32 %v3584, %v3585
    %v3590 = vmul.u32 %v3584, %v3586
    %v3591 = vshll.u32 %v3588, 16
    %v3592 = vshrl.u32 %v3588, 16
    %v3593 = vshll.u32 %v3589, 16
    %v3594 = vshrl.u32 %v3589, 16
    %vm3595 = vc.u32 %v3587, %v3591
    %v3596 = vsel %vm3595, 1, 0
    %v3597 = vadd.s32 %v3587, %v3591
    %v3598 = vadd.s32 %v3590, %v3596
    %vm3599 = vc.u32 %v3597, %v3593
    %v3600 = vsel %vm3599, 1, 0
    %v3601 = vadd.s32 %v3597, %v3593
    %v3602 = vadd.s32 %v3598, %v3600
    %v3603 = vadd.s32 %v3602, %v3592
    %v3604 = vadd.s32 %v3603, %v3594
    %v3605 = vand.u32 %v3582, 65535
    %v3606 = vshrl.u32 %v3582, 16
    %v3607 = vand.u32 %v3577, 65535
    %v3608 = vshrl.u32 %v3577, 16
    %v3609 = vmul.u32 %v3605, %v3607
    %v3610 = vmul.u32 %v3605, %v3608
    %v3611 = vmul.u32 %v3606, %v3607
    %v3612 = vmul.u32 %v3606, %v3608
    %v3613 = vshll.u32 %v3610, 16
    %v3614 = vshrl.u32 %v3610, 16
    %v3615 = vshll.u32 %v3611, 16
    %v3616 = vshrl.u32 %v3611, 16
    %vm3617 = vc.u32 %v3609, %v3613
    %v3618 = vsel %vm3617, 1, 0
    %v3619 = vadd.s32 %v3609, %v3613
    %v3620 = vadd.s32 %v3612, %v3618
    %vm3621 = vc.u32 %v3619, %v3615
    %v3622 = vsel %vm3621, 1, 0
    %v3623 = vadd.s32 %v3619, %v3615
    %v3624 = vadd.s32 %v3620, %v3622
    %v3625 = vadd.s32 %v3624, %v3614
    %v3626 = vadd.s32 %v3625, %v3616
    %v3627 = vmul.u32 %v3582, %v3573
    %v3628 = vadd.s32 %v3604, %v3623
    %vm3629 = vc.u32 %v3604, %v3623
    %v3630 = vadd.s32 %v3626, 1
    %v3631 = vsel %vm3629, %v3630, %v3626
    %v3632 = vadd.s32 %v3627, %v3631
    %v3633 = vadd.s32 %v3632, 536870912
    %v3634 = vshrl.u32 %v3633, 30
    %v3635 = vshll.u32 %v3634, 30
    %v3636 = vsub.s32 %v3632, %v3635
    %vm3637 = vcmp.lt.s32.totalorder %v3636, 0
    %v3638 = vsub.s32 0, %v3636
    %v3639 = vsel %vm3637, %v3638, %v3636
    %v3640 = vclz %v3639
    %v3641 = vsub.s32 %v3640, 2
    %vm3642 = vcmp.gt.s32.totalorder 0, %v3641
    %v3643 = vsel %vm3642, 0, %v3641
    %v3644 = vsub.s32 32, %v3643
    %v3645 = vshll.u32 %v3636, %v3643
    %v3646 = vshrl.u32 %v3628, %v3644
    %v3647 = vor.u32 %v3645, %v3646
    %v3648 = vsub.s32 4294967266, %v3643
    %v3649 = vadd.s32 %v3648, 127
    %v3650 = vshll.u32 %v3649, 23
    %v3651 = vor.u32 4788187, %v3650
    %v3652 = vand.u32 2147483647, %v3651
    %v3654 = vcvt.s32.f32 %v3647
    %v3655 = vmul.f32 %v3654, %v3652
    %v3656 = vxor.u32 %v3655, 2147483648
    %v3657 = vsel %vm3536, %v3656, %v3655
    %v3658 = vsub.s32 4, %v3634
    %v3659 = vsel %vm3536, %v3658, %v3634
    %v3660 = vsel %vm3535, %v2840, %v3657
    %v3661 = vsel %vm3535, 0, %v3659
    %v3662 = vmul.f32 %v3660, %v3660
    %v3663 = vmul.f32 %v3662, -0.001358992
    %v3664 = vadd.f32 %v3663, 0.041655596
    %v3665 = vmul.f32 %v3662, %v3664
    %v3666 = vadd.f32 %v3665, -0.4999988
    %v3667 = vmul.f32 %v3662, %v3666
    %v3668 = vadd.f32 1.0, %v3667
    %v3669 = vmul.f32 %v3660, %v3660
    %v3670 = vmul.f32 %v3669, -0.00019511016
    %v3671 = vadd.f32 %v3670, 0.008332121
    %v3672 = vmul.f32 %v3669, %v3671
    %v3673 = vadd.f32 %v3672, -0.16666654
    %v3674 = vmul.f32 %v3669, %v3673
    %v3675 = vadd.f32 %v3674, 1.0
    %v3676 = vmul.f32 %v3675, %v3660
    %vm3677 = vweird.f32 %v2840
    %v3678 = vadd.s32 %v3661, 3
    %v3679 = vand.u32 %v3678, 3
    %vm3680 = vcmp.lt.s32.totalorder %v3679, 2
    %vm3681 = vcmp.eq.s32.totalorder %v3679, 0
    %v3682 = vxor.u32 %v3676, 2147483648
    %v3683 = vsel %vm3681, %v3668, %v3682
    %vm3684 = vcmp.eq.s32.totalorder %v3679, 2
    %v3685 = vxor.u32 %v3668, 2147483648
    %v3686 = vsel %vm3684, %v3685, %v3676
    %v3687 = vsel %vm3680, %v3683, %v3686
    %v3688 = vsel %vm3677, nan, %v3687
    %v3689 = vand.u32 2147483647, %v2863
    %vm3690 = vcmp.le.f32.partialorder %v3689, 0.7853982
    %vm3691 = vcmp.lt.s32.totalorder %v2863, 0
    %v3692 = vand.u32 %v2863, 2139095040
    %v3693 = vshrl.u32 %v3692, 23
    %v3694 = vsub.s32 %v3693, 127
    %v3695 = vand.u32 2147483647, %v2863
    %v3696 = vand.u32 %v3695, 8388607
    %v3697 = vor.u32 %v3696, 8388608
    %v3698 = vsub.s32 0, %v3697
    %v3699 = vadd.s32 %v3694, 1
    %vm3700 = vcmp.gt.s32.totalorder %v3699, 0
    %v3701 = vsel %vm3700, %v3699, 0
    %v3702 = vshrl.u32 %v3701, 5
    %v3703 = vand.u32 %v3701, 31
    %v3704 = vsub.s32 32, %v3703
    %v3705 = vshrl.u32 683565275, %v3704
    %v3706 = vshll.u32 683565275, %v3703
    %v3707 = vshrl.u32 2475754826, %v3704
    %v3708 = vor.u32 %v3706, %v3707
    %v3709 = vshll.u32 2475754826, %v3703
    %v3710 = vshrl.u32 2131351028, %v3704
    %v3711 = vor.u32 %v3709, %v3710
    %v3712 = vshll.u32 2131351028, %v3703
    %v3713 = vshrl.u32 2102212464, %v3704
    %v3714 = vor.u32 %v3712, %v3713
    %v3715 = vshll.u32 2102212464, %v3703
    %v3716 = vshrl.u32 920167782, %v3704
    %v3717 = vor.u32 %v3715, %v3716
    %v3718 = vshll.u32 920167782, %v3703
    %v3719 = vshrl.u32 1326507024, %v3704
    %v3720 = vor.u32 %v3718, %v3719
    %vm3721 = vcmp.lt.s32.totalorder %v3702, 1
    %vm3722 = vcmp.lt.s32.totalorder %v3702, 2
    %vm3723 = vcmp.lt.s32.totalorder %v3702, 3
    %vm3724 = vcmp.lt.s32.totalorder %v3702, 4
    %v3725 = vsel %vm3721, %v3705, %v3708
    %v3726 = vsel %vm3724, %v3714, 2102212464
    %v3727 = vsel %vm3723, %v3711, %v3726
    %v3728 = vsel %vm3722, %v3725, %v3727
    %v3729 = vsel %vm3721, %v3708, %v3711
    %v3730 = vsel %vm3724, %v3717, 920167782
    %v3731 = vsel %vm3723, %v3714, %v3730
    %v3732 = vsel %vm3722, %v3729, %v3731
    %v3733 = vsel %vm3721, %v3711, %v3714
    %v3734 = vsel %vm3724, %v3720, 1326507024
    %v3735 = vsel %vm3723, %v3717, %v3734
    %v3736 = vsel %vm3722, %v3733, %v3735
    %v3737 = vshll.u32 %v3697, 8
    %v3738 = vand.u32 %v3737, 65535
    %v3739 = vshrl.u32 %v3737, 16
    %v3740 = vand.u32 %v3736, 65535
    %v3741 = vshrl.u32 %v3736, 16
    %v3742 = vmul.u32 %v3738, %v3740
    %v3743 = vmul.u32 %v3738, %v3741
    %v3744 = vmul.u32 %v3739, %v3740
    %v3745 = vmul.u32 %v3739, %v3741
    %v3746 = vshll.u32 %v3743, 16
    %v3747 = vshrl.u32 %v3743, 16
    %v3748 = vshll.u32 %v3744, 16
    %v3749 = vshrl.u32 %v3744, 16
    %vm3750 = vc.u32 %v3742, %v3746
    %v3751 = vsel %vm3750, 1, 0
    %v3752 = vadd.s32 %v3742, %v3746
    %v3753 = vadd.s32 %v3745, %v3751
    %vm3754 = vc.u32 %v3752, %v3748
    %v3755 = vsel %vm3754, 1, 0
    %v3756 = vadd.s32 %v3752, %v3748
    %v3757 = vadd.s32 %v3753, %v3755
    %v3758 = vadd.s32 %v3757, %v3747
    %v3759 = vadd.s32 %v3758, %v3749
    %v3760 = vand.u32 %v3737, 65535
    %v3761 = vshrl.u32 %v3737, 16
    %v3762 = vand.u32 %v3732, 65535
    %v3763 = vshrl.u32 %v3732, 16
    %v3764 = vmul.u32 %v3760, %v3762
    %v3765 = vmul.u32 %v3760, %v3763
    %v3766 = vmul.u32 %v3761, %v3762
    %v3767 = vmul.u32 %v3761, %v3763
    %v3768 = vshll.u32 %v3765, 16
    %v3769 = vshrl.u32 %v3765, 16
    %v3770 = vshll.u32 %v3766, 16
    %v3771 = vshrl.u32 %v3766, 16
    %vm3772 = vc.u32 %v3764, %v3768
    %v3773 = vsel %vm3772, 1, 0
    %v3774 = vadd.s32 %v3764, %v3768
    %v3775 = vadd.s32 %v3767, %v3773
    %vm3776 = vc.u32 %v3774, %v3770
    %v3777 = vsel %vm3776, 1, 0
    %v3778 = vadd.s32 %v3774, %v3770
    %v3779 = vadd.s32 %v3775, %v3777
    %v3780 = vadd.s32 %v3779, %v3769
    %v3781 = vadd.s32 %v3780, %v3771
    %v3782 = vmul.u32 %v3737, %v3728
    %v3783 = vadd.s32 %v3759, %v3778
    %vm3784 = vc.u32 %v3759, %v3778
    %v3785 = vadd.s32 %v3781, 1
    %v3786 = vsel %vm3784, %v3785, %v3781
    %v3787 = vadd.s32 %v3782, %v3786
    %v3788 = vadd.s32 %v3787, 536870912
    %v3789 = vshrl.u32 %v3788, 30
    %v3790 = vshll.u32 %v3789, 30
    %v3791 = vsub.s32 %v3787, %v3790
    %vm3792 = vcmp.lt.s32.totalorder %v3791, 0
    %v3793 = vsub.s32 0, %v3791
    %v3794 = vsel %vm3792, %v3793, %v3791
    %v3795 = vclz %v3794
    %v3796 = vsub.s32 %v3795, 2
    %vm3797 = vcmp.gt.s32.totalorder 0, %v3796
    %v3798 = vsel %vm3797, 0, %v3796
    %v3799 = vsub.s32 32, %v3798
    %v3800 = vshll.u32 %v3791, %v3798
    %v3801 = vshrl.u32 %v3783, %v3799
    %v3802 = vor.u32 %v3800, %v3801
    %v3803 = vsub.s32 4294967266, %v3798
    %v3804 = vadd.s32 %v3803, 127
    %v3805 = vshll.u32 %v3804, 23
    %v3806 = vor.u32 4788187, %v3805
    %v3807 = vand.u32 2147483647, %v3806
    %v3809 = vcvt.s32.f32 %v3802
    %v3810 = vmul.f32 %v3809, %v3807
    %v3811 = vxor.u32 %v3810, 2147483648
    %v3812 = vsel %vm3691, %v3811, %v3810
    %v3813 = vsub.s32 4, %v3789
    %v3814 = vsel %vm3691, %v3813, %v3789
    %v3815 = vsel %vm3690, %v2863, %v3812
    %v3816 = vsel %vm3690, 0, %v3814
    %v3817 = vmul.f32 %v3815, %v3815
    %v3818 = vmul.f32 %v3817, -0.001358992
    %v3819 = vadd.f32 %v3818, 0.041655596
    %v3820 = vmul.f32 %v3817, %v3819
    %v3821 = vadd.f32 %v3820, -0.4999988
    %v3822 = vmul.f32 %v3817, %v3821
    %v3823 = vadd.f32 1.0, %v3822
    %v3824 = vmul.f32 %v3815, %v3815
    %v3825 = vmul.f32 %v3824, -0.00019511016
    %v3826 = vadd.f32 %v3825, 0.008332121
    %v3827 = vmul.f32 %v3824, %v3826
    %v3828 = vadd.f32 %v3827, -0.16666654
    %v3829 = vmul.f32 %v3824, %v3828
    %v3830 = vadd.f32 %v3829, 1.0
    %v3831 = vmul.f32 %v3830, %v3815
    %vm3832 = vweird.f32 %v2863
    %v3833 = vadd.s32 %v3816, 3
    %v3834 = vand.u32 %v3833, 3
    %vm3835 = vcmp.lt.s32.totalorder %v3834, 2
    %vm3836 = vcmp.eq.s32.totalorder %v3834, 0
    %v3837 = vxor.u32 %v3831, 2147483648
    %v3838 = vsel %vm3836, %v3823, %v3837
    %vm3839 = vcmp.eq.s32.totalorder %v3834, 2
    %v3840 = vxor.u32 %v3823, 2147483648
    %v3841 = vsel %vm3839, %v3840, %v3831
    %v3842 = vsel %vm3835, %v3838, %v3841
    %v3843 = vsel %vm3832, nan, %v3842
    %v3844 = vand.u32 2147483647, %v2886
    %vm3845 = vcmp.le.f32.partialorder %v3844, 0.7853982
    %vm3846 = vcmp.lt.s32.totalorder %v2886, 0
    %v3847 = vand.u32 %v2886, 2139095040
    %v3848 = vshrl.u32 %v3847, 23
    %v3849 = vsub.s32 %v3848, 127
    %v3850 = vand.u32 2147483647, %v2886
    %v3851 = vand.u32 %v3850, 8388607
    %v3852 = vor.u32 %v3851, 8388608
    %v3853 = vsub.s32 0, %v3852
    %v3854 = vadd.s32 %v3849, 1
    %vm3855 = vcmp.gt.s32.totalorder %v3854, 0
    %v3856 = vsel %vm3855, %v3854, 0
    %v3857 = vshrl.u32 %v3856, 5
    %v3858 = vand.u32 %v3856, 31
    %v3859 = vsub.s32 32, %v3858
    %v3860 = vshrl.u32 683565275, %v3859
    %v3861 = vshll.u32 683565275, %v3858
    %v3862 = vshrl.u32 2475754826, %v3859
    %v3863 = vor.u32 %v3861, %v3862
    %v3864 = vshll.u32 2475754826, %v3858
    %v3865 = vshrl.u32 2131351028, %v3859
    %v3866 = vor.u32 %v3864, %v3865
    %v3867 = vshll.u32 2131351028, %v3858
    %v3868 = vshrl.u32 2102212464, %v3859
    %v3869 = vor.u32 %v3867, %v3868
    %v3870 = vshll.u32 2102212464, %v3858
    %v3871 = vshrl.u32 920167782, %v3859
    %v3872 = vor.u32 %v3870, %v3871
    %v3873 = vshll.u32 920167782, %v3858
    %v3874 = vshrl.u32 1326507024, %v3859
    %v3875 = vor.u32 %v3873, %v3874
    %vm3876 = vcmp.lt.s32.totalorder %v3857, 1
    %vm3877 = vcmp.lt.s32.totalorder %v3857, 2
    %vm3878 = vcmp.lt.s32.totalorder %v3857, 3
    %vm3879 = vcmp.lt.s32.totalorder %v3857, 4
    %v3880 = vsel %vm3876, %v3860, %v3863
    %v3881 = vsel %vm3879, %v3869, 2102212464
    %v3882 = vsel %vm3878, %v3866, %v3881
    %v3883 = vsel %vm3877, %v3880, %v3882
    %v3884 = vsel %vm3876, %v3863, %v3866
    %v3885 = vsel %vm3879, %v3872, 920167782
    %v3886 = vsel %vm3878, %v3869, %v3885
    %v3887 = vsel %vm3877, %v3884, %v3886
    %v3888 = vsel %vm3876, %v3866, %v3869
    %v3889 = vsel %vm3879, %v3875, 1326507024
    %v3890 = vsel %vm3878, %v3872, %v3889
    %v3891 = vsel %vm3877, %v3888, %v3890
    %v3892 = vshll.u32 %v3852, 8
    %v3893 = vand.u32 %v3892, 65535
    %v3894 = vshrl.u32 %v3892, 16
    %v3895 = vand.u32 %v3891, 65535
    %v3896 = vshrl.u32 %v3891, 16
    %v3897 = vmul.u32 %v3893, %v3895
    %v3898 = vmul.u32 %v3893, %v3896
    %v3899 = vmul.u32 %v3894, %v3895
    %v3900 = vmul.u32 %v3894, %v3896
    %v3901 = vshll.u32 %v3898, 16
    %v3902 = vshrl.u32 %v3898, 16
    %v3903 = vshll.u32 %v3899, 16
    %v3904 = vshrl.u32 %v3899, 16
    %vm3905 = vc.u32 %v3897, %v3901
    %v3906 = vsel %vm3905, 1, 0
    %v3907 = vadd.s32 %v3897, %v3901
    %v3908 = vadd.s32 %v3900, %v3906
    %vm3909 = vc.u32 %v3907, %v3903
    %v3910 = vsel %vm3909, 1, 0
    %v3911 = vadd.s32 %v3907, %v3903
    %v3912 = vadd.s32 %v3908, %v3910
    %v3913 = vadd.s32 %v3912, %v3902
    %v3914 = vadd.s32 %v3913, %v3904
    %v3915 = vand.u32 %v3892, 65535
    %v3916 = vshrl.u32 %v3892, 16
    %v3917 = vand.u32 %v3887, 65535
    %v3918 = vshrl.u32 %v3887, 16
    %v3919 = vmul.u32 %v3915, %v3917
    %v3920 = vmul.u32 %v3915, %v3918
    %v3921 = vmul.u32 %v3916, %v3917
    %v3922 = vmul.u32 %v3916, %v3918
    %v3923 = vshll.u32 %v3920, 16
    %v3924 = vshrl.u32 %v3920, 16
    %v3925 = vshll.u32 %v3921, 16
    %v3926 = vshrl.u32 %v3921, 16
    %vm3927 = vc.u32 %v3919, %v3923
    %v3928 = vsel %vm3927, 1, 0
    %v3929 = vadd.s32 %v3919, %v3923
    %v3930 = vadd.s32 %v3922, %v3928
    %vm3931 = vc.u32 %v3929, %v3925
    %v3932 = vsel %vm3931, 1, 0
    %v3933 = vadd.s32 %v3929, %v3925
    %v3934 = vadd.s32 %v3930, %v3932
    %v3935 = vadd.s32 %v3934, %v3924
    %v3936 = vadd.s32 %v3935, %v3926
    %v3937 = vmul.u32 %v3892, %v3883
    %v3938 = vadd.s32 %v3914, %v3933
    %vm3939 = vc.u32 %v3914, %v3933
    %v3940 = vadd.s32 %v3936, 1
    %v3941 = vsel %vm3939, %v3940, %v3936
    %v3942 = vadd.s32 %v3937, %v3941
    %v3943 = vadd.s32 %v3942, 536870912
    %v3944 = vshrl.u32 %v3943, 30
    %v3945 = vshll.u32 %v3944, 30
    %v3946 = vsub.s32 %v3942, %v3945
    %vm3947 = vcmp.lt.s32.totalorder %v3946, 0
    %v3948 = vsub.s32 0, %v3946
    %v3949 = vsel %vm3947, %v3948, %v3946
    %v3950 = vclz %v3949
    %v3951 = vsub.s32 %v3950, 2
    %vm3952 = vcmp.gt.s32.totalorder 0, %v3951
    %v3953 = vsel %vm3952, 0, %v3951
    %v3954 = vsub.s32 32, %v3953
    %v3955 = vshll.u32 %v3946, %v3953
    %v3956 = vshrl.u32 %v3938, %v3954
    %v3957 = vor.u32 %v3955, %v3956
    %v3958 = vsub.s32 4294967266, %v3953
    %v3959 = vadd.s32 %v3958, 127
    %v3960 = vshll.u32 %v3959, 23
    %v3961 = vor.u32 4788187, %v3960
    %v3962 = vand.u32 2147483647, %v3961
    %v3964 = vcvt.s32.f32 %v3957
    %v3965 = vmul.f32 %v3964, %v3962
    %v3966 = vxor.u32 %v3965, 2147483648
    %v3967 = vsel %vm3846, %v3966, %v3965
    %v3968 = vsub.s32 4, %v3944
    %v3969 = vsel %vm3846, %v3968, %v3944
    %v3970 = vsel %vm3845, %v2886, %v3967
    %v3971 = vsel %vm3845, 0, %v3969
    %v3972 = vmul.f32 %v3970, %v3970
    %v3973 = vmul.f32 %v3972, -0.001358992
    %v3974 = vadd.f32 %v3973, 0.041655596
    %v3975 = vmul.f32 %v3972, %v3974
    %v3976 = vadd.f32 %v3975, -0.4999988
    %v3977 = vmul.f32 %v3972, %v3976
    %v3978 = vadd.f32 1.0, %v3977
    %v3979 = vmul.f32 %v3970, %v3970
    %v3980 = vmul.f32 %v3979, -0.00019511016
    %v3981 = vadd.f32 %v3980, 0.008332121
    %v3982 = vmul.f32 %v3979, %v3981
    %v3983 = vadd.f32 %v3982, -0.16666654
    %v3984 = vmul.f32 %v3979, %v3983
    %v3985 = vadd.f32 %v3984, 1.0
    %v3986 = vmul.f32 %v3985, %v3970
    %vm3987 = vweird.f32 %v2886
    %v3988 = vadd.s32 %v3971, 3
    %v3989 = vand.u32 %v3988, 3
    %vm3990 = vcmp.lt.s32.totalorder %v3989, 2
    %vm3991 = vcmp.eq.s32.totalorder %v3989, 0
    %v3992 = vxor.u32 %v3986, 2147483648
    %v3993 = vsel %vm3991, %v3978, %v3992
    %vm3994 = vcmp.eq.s32.totalorder %v3989, 2
    %v3995 = vxor.u32 %v3978, 2147483648
    %v3996 = vsel %vm3994, %v3995, %v3986
    %v3997 = vsel %vm3990, %v3993, %v3996
    %v3998 = vsel %vm3987, nan, %v3997
    %v3999 = vand.u32 2147483647, %v2909
    %vm4000 = vcmp.le.f32.partialorder %v3999, 0.7853982
    %vm4001 = vcmp.lt.s32.totalorder %v2909, 0
    %v4002 = vand.u32 %v2909, 2139095040
    %v4003 = vshrl.u32 %v4002, 23
    %v4004 = vsub.s32 %v4003, 127
    %v4005 = vand.u32 2147483647, %v2909
    %v4006 = vand.u32 %v4005, 8388607
    %v4007 = vor.u32 %v4006, 8388608
    %v4008 = vsub.s32 0, %v4007
    %v4009 = vadd.s32 %v4004, 1
    %vm4010 = vcmp.gt.s32.totalorder %v4009, 0
    %v4011 = vsel %vm4010, %v4009, 0
    %v4012 = vshrl.u32 %v4011, 5
    %v4013 = vand.u32 %v4011, 31
    %v4014 = vsub.s32 32, %v4013
    %v4015 = vshrl.u32 683565275, %v4014
    %v4016 = vshll.u32 683565275, %v4013
    %v4017 = vshrl.u32 2475754826, %v4014
    %v4018 = vor.u32 %v4016, %v4017
    %v4019 = vshll.u32 2475754826, %v4013
    %v4020 = vshrl.u32 2131351028, %v4014
    %v4021 = vor.u32 %v4019, %v4020
    %v4022 = vshll.u32 2131351028, %v4013
    %v4023 = vshrl.u32 2102212464, %v4014
    %v4024 = vor.u32 %v4022, %v4023
    %v4025 = vshll.u32 2102212464, %v4013
    %v4026 = vshrl.u32 920167782, %v4014
    %v4027 = vor.u32 %v4025, %v4026
    %v4028 = vshll.u32 920167782, %v4013
    %v4029 = vshrl.u32 1326507024, %v4014
    %v4030 = vor.u32 %v4028, %v4029
    %vm4031 = vcmp.lt.s32.totalorder %v4012, 1
    %vm4032 = vcmp.lt.s32.totalorder %v4012, 2
    %vm4033 = vcmp.lt.s32.totalorder %v4012, 3
    %vm4034 = vcmp.lt.s32.totalorder %v4012, 4
    %v4035 = vsel %vm4031, %v4015, %v4018
    %v4036 = vsel %vm4034, %v4024, 2102212464
    %v4037 = vsel %vm4033, %v4021, %v4036
    %v4038 = vsel %vm4032, %v4035, %v4037
    %v4039 = vsel %vm4031, %v4018, %v4021
    %v4040 = vsel %vm4034, %v4027, 920167782
    %v4041 = vsel %vm4033, %v4024, %v4040
    %v4042 = vsel %vm4032, %v4039, %v4041
    %v4043 = vsel %vm4031, %v4021, %v4024
    %v4044 = vsel %vm4034, %v4030, 1326507024
    %v4045 = vsel %vm4033, %v4027, %v4044
    %v4046 = vsel %vm4032, %v4043, %v4045
    %v4047 = vshll.u32 %v4007, 8
    %v4048 = vand.u32 %v4047, 65535
    %v4049 = vshrl.u32 %v4047, 16
    %v4050 = vand.u32 %v4046, 65535
    %v4051 = vshrl.u32 %v4046, 16
    %v4052 = vmul.u32 %v4048, %v4050
    %v4053 = vmul.u32 %v4048, %v4051
    %v4054 = vmul.u32 %v4049, %v4050
    %v4055 = vmul.u32 %v4049, %v4051
    %v4056 = vshll.u32 %v4053, 16
    %v4057 = vshrl.u32 %v4053, 16
    %v4058 = vshll.u32 %v4054, 16
    %v4059 = vshrl.u32 %v4054, 16
    %vm4060 = vc.u32 %v4052, %v4056
    %v4061 = vsel %vm4060, 1, 0
    %v4062 = vadd.s32 %v4052, %v4056
    %v4063 = vadd.s32 %v4055, %v4061
    %vm4064 = vc.u32 %v4062, %v4058
    %v4065 = vsel %vm4064, 1, 0
    %v4066 = vadd.s32 %v4062, %v4058
    %v4067 = vadd.s32 %v4063, %v4065
    %v4068 = vadd.s32 %v4067, %v4057
    %v4069 = vadd.s32 %v4068, %v4059
    %v4070 = vand.u32 %v4047, 65535
    %v4071 = vshrl.u32 %v4047, 16
    %v4072 = vand.u32 %v4042, 65535
    %v4073 = vshrl.u32 %v4042, 16
    %v4074 = vmul.u32 %v4070, %v4072
    %v4075 = vmul.u32 %v4070, %v4073
    %v4076 = vmul.u32 %v4071, %v4072
    %v4077 = vmul.u32 %v4071, %v4073
    %v4078 = vshll.u32 %v4075, 16
    %v4079 = vshrl.u32 %v4075, 16
    %v4080 = vshll.u32 %v4076, 16
    %v4081 = vshrl.u32 %v4076, 16
    %vm4082 = vc.u32 %v4074, %v4078
    %v4083 = vsel %vm4082, 1, 0
    %v4084 = vadd.s32 %v4074, %v4078
    %v4085 = vadd.s32 %v4077, %v4083
    %vm4086 = vc.u32 %v4084, %v4080
    %v4087 = vsel %vm4086, 1, 0
    %v4088 = vadd.s32 %v4084, %v4080
    %v4089 = vadd.s32 %v4085, %v4087
    %v4090 = vadd.s32 %v4089, %v4079
    %v4091 = vadd.s32 %v4090, %v4081
    %v4092 = vmul.u32 %v4047, %v4038
    %v4093 = vadd.s32 %v4069, %v4088
    %vm4094 = vc.u32 %v4069, %v4088
    %v4095 = vadd.s32 %v4091, 1
    %v4096 = vsel %vm4094, %v4095, %v4091
    %v4097 = vadd.s32 %v4092, %v4096
    %v4098 = vadd.s32 %v4097, 536870912
    %v4099 = vshrl.u32 %v4098, 30
    %v4100 = vshll.u32 %v4099, 30
    %v4101 = vsub.s32 %v4097, %v4100
    %vm4102 = vcmp.lt.s32.totalorder %v4101, 0
    %v4103 = vsub.s32 0, %v4101
    %v4104 = vsel %vm4102, %v4103, %v4101
    %v4105 = vclz %v4104
    %v4106 = vsub.s32 %v4105, 2
    %vm4107 = vcmp.gt.s32.totalorder 0, %v4106
    %v4108 = vsel %vm4107, 0, %v4106
    %v4109 = vsub.s32 32, %v4108
    %v4110 = vshll.u32 %v4101, %v4108
    %v4111 = vshrl.u32 %v4093, %v4109
    %v4112 = vor.u32 %v4110, %v4111
    %v4113 = vsub.s32 4294967266, %v4108
    %v4114 = vadd.s32 %v4113, 127
    %v4115 = vshll.u32 %v4114, 23
    %v4116 = vor.u32 4788187, %v4115
    %v4117 = vand.u32 2147483647, %v4116
    %v4119 = vcvt.s32.f32 %v4112
    %v4120 = vmul.f32 %v4119, %v4117
    %v4121 = vxor.u32 %v4120, 2147483648
    %v4122 = vsel %vm4001, %v4121, %v4120
    %v4123 = vsub.s32 4, %v4099
    %v4124 = vsel %vm4001, %v4123, %v4099
    %v4125 = vsel %vm4000, %v2909, %v4122
    %v4126 = vsel %vm4000, 0, %v4124
    %v4127 = vmul.f32 %v4125, %v4125
    %v4128 = vmul.f32 %v4127, -0.001358992
    %v4129 = vadd.f32 %v4128, 0.041655596
    %v4130 = vmul.f32 %v4127, %v4129
    %v4131 = vadd.f32 %v4130, -0.4999988
    %v4132 = vmul.f32 %v4127, %v4131
    %v4133 = vadd.f32 1.0, %v4132
    %v4134 = vmul.f32 %v4125, %v4125
    %v4135 = vmul.f32 %v4134, -0.00019511016
    %v4136 = vadd.f32 %v4135, 0.008332121
    %v4137 = vmul.f32 %v4134, %v4136
    %v4138 = vadd.f32 %v4137, -0.16666654
    %v4139 = vmul.f32 %v4134, %v4138
    %v4140 = vadd.f32 %v4139, 1.0
    %v4141 = vmul.f32 %v4140, %v4125
    %vm4142 = vweird.f32 %v2909
    %v4143 = vadd.s32 %v4126, 3
    %v4144 = vand.u32 %v4143, 3
    %vm4145 = vcmp.lt.s32.totalorder %v4144, 2
    %vm4146 = vcmp.eq.s32.totalorder %v4144, 0
    %v4147 = vxor.u32 %v4141, 2147483648
    %v4148 = vsel %vm4146, %v4133, %v4147
    %vm4149 = vcmp.eq.s32.totalorder %v4144, 2
    %v4150 = vxor.u32 %v4133, 2147483648
    %v4151 = vsel %vm4149, %v4150, %v4141
    %v4152 = vsel %vm4145, %v4148, %v4151
    %v4153 = vsel %vm4142, nan, %v4152
    %v4154 = vand.u32 2147483647, %v2751
    %vm4155 = vcmp.le.f32.partialorder %v4154, 0.7853982
    %vm4156 = vcmp.lt.s32.totalorder %v2751, 0
    %v4157 = vand.u32 %v2751, 2139095040
    %v4158 = vshrl.u32 %v4157, 23
    %v4159 = vsub.s32 %v4158, 127
    %v4160 = vand.u32 2147483647, %v2751
    %v4161 = vand.u32 %v4160, 8388607
    %v4162 = vor.u32 %v4161, 8388608
    %v4163 = vsub.s32 0, %v4162
    %v4164 = vadd.s32 %v4159, 1
    %vm4165 = vcmp.gt.s32.totalorder %v4164, 0
    %v4166 = vsel %vm4165, %v4164, 0
    %v4167 = vshrl.u32 %v4166, 5
    %v4168 = vand.u32 %v4166, 31
    %v4169 = vsub.s32 32, %v4168
    %v4170 = vshrl.u32 683565275, %v4169
    %v4171 = vshll.u32 683565275, %v4168
    %v4172 = vshrl.u32 2475754826, %v4169
    %v4173 = vor.u32 %v4171, %v4172
    %v4174 = vshll.u32 2475754826, %v4168
    %v4175 = vshrl.u32 2131351028, %v4169
    %v4176 = vor.u32 %v4174, %v4175
    %v4177 = vshll.u32 2131351028, %v4168
    %v4178 = vshrl.u32 2102212464, %v4169
    %v4179 = vor.u32 %v4177, %v4178
    %v4180 = vshll.u32 2102212464, %v4168
    %v4181 = vshrl.u32 920167782, %v4169
    %v4182 = vor.u32 %v4180, %v4181
    %v4183 = vshll.u32 920167782, %v4168
    %v4184 = vshrl.u32 1326507024, %v4169
    %v4185 = vor.u32 %v4183, %v4184
    %vm4186 = vcmp.lt.s32.totalorder %v4167, 1
    %vm4187 = vcmp.lt.s32.totalorder %v4167, 2
    %vm4188 = vcmp.lt.s32.totalorder %v4167, 3
    %vm4189 = vcmp.lt.s32.totalorder %v4167, 4
    %v4190 = vsel %vm4186, %v4170, %v4173
    %v4191 = vsel %vm4189, %v4179, 2102212464
    %v4192 = vsel %vm4188, %v4176, %v4191
    %v4193 = vsel %vm4187, %v4190, %v4192
    %v4194 = vsel %vm4186, %v4173, %v4176
    %v4195 = vsel %vm4189, %v4182, 920167782
    %v4196 = vsel %vm4188, %v4179, %v4195
    %v4197 = vsel %vm4187, %v4194, %v4196
    %v4198 = vsel %vm4186, %v4176, %v4179
    %v4199 = vsel %vm4189, %v4185, 1326507024
    %v4200 = vsel %vm4188, %v4182, %v4199
    %v4201 = vsel %vm4187, %v4198, %v4200
    %v4202 = vshll.u32 %v4162, 8
    %v4203 = vand.u32 %v4202, 65535
    %v4204 = vshrl.u32 %v4202, 16
    %v4205 = vand.u32 %v4201, 65535
    %v4206 = vshrl.u32 %v4201, 16
    %v4207 = vmul.u32 %v4203, %v4205
    %v4208 = vmul.u32 %v4203, %v4206
    %v4209 = vmul.u32 %v4204, %v4205
    %v4210 = vmul.u32 %v4204, %v4206
    %v4211 = vshll.u32 %v4208, 16
    %v4212 = vshrl.u32 %v4208, 16
    %v4213 = vshll.u32 %v4209, 16
    %v4214 = vshrl.u32 %v4209, 16
    %vm4215 = vc.u32 %v4207, %v4211
    %v4216 = vsel %vm4215, 1, 0
    %v4217 = vadd.s32 %v4207, %v4211
    %v4218 = vadd.s32 %v4210, %v4216
    %vm4219 = vc.u32 %v4217, %v4213
    %v4220 = vsel %vm4219, 1, 0
    %v4221 = vadd.s32 %v4217, %v4213
    %v4222 = vadd.s32 %v4218, %v4220
    %v4223 = vadd.s32 %v4222, %v4212
    %v4224 = vadd.s32 %v4223, %v4214
    %v4225 = vand.u32 %v4202, 65535
    %v4226 = vshrl.u32 %v4202, 16
    %v4227 = vand.u32 %v4197, 65535
    %v4228 = vshrl.u32 %v4197, 16
    %v4229 = vmul.u32 %v4225, %v4227
    %v4230 = vmul.u32 %v4225, %v4228
    %v4231 = vmul.u32 %v4226, %v4227
    %v4232 = vmul.u32 %v4226, %v4228
    %v4233 = vshll.u32 %v4230, 16
    %v4234 = vshrl.u32 %v4230, 16
    %v4235 = vshll.u32 %v4231, 16
    %v4236 = vshrl.u32 %v4231, 16
    %vm4237 = vc.u32 %v4229, %v4233
    %v4238 = vsel %vm4237, 1, 0
    %v4239 = vadd.s32 %v4229, %v4233
    %v4240 = vadd.s32 %v4232, %v4238
    %vm4241 = vc.u32 %v4239, %v4235
    %v4242 = vsel %vm4241, 1, 0
    %v4243 = vadd.s32 %v4239, %v4235
    %v4244 = vadd.s32 %v4240, %v4242
    %v4245 = vadd.s32 %v4244, %v4234
    %v4246 = vadd.s32 %v4245, %v4236
    %v4247 = vmul.u32 %v4202, %v4193
    %v4248 = vadd.s32 %v4224, %v4243
    %vm4249 = vc.u32 %v4224, %v4243
    %v4250 = vadd.s32 %v4246, 1
    %v4251 = vsel %vm4249, %v4250, %v4246
    %v4252 = vadd.s32 %v4247, %v4251
    %v4253 = vadd.s32 %v4252, 536870912
    %v4254 = vshrl.u32 %v4253, 30
    %v4255 = vshll.u32 %v4254, 30
    %v4256 = vsub.s32 %v4252, %v4255
    %vm4257 = vcmp.lt.s32.totalorder %v4256, 0
    %v4258 = vsub.s32 0, %v4256
    %v4259 = vsel %vm4257, %v4258, %v4256
    %v4260 = vclz %v4259
    %v4261 = vsub.s32 %v4260, 2
    %vm4262 = vcmp.gt.s32.totalorder 0, %v4261
    %v4263 = vsel %vm4262, 0, %v4261
    %v4264 = vsub.s32 32, %v4263
    %v4265 = vshll.u32 %v4256, %v4263
    %v4266 = vshrl.u32 %v4248, %v4264
    %v4267 = vor.u32 %v4265, %v4266
    %v4268 = vsub.s32 4294967266, %v4263
    %v4269 = vadd.s32 %v4268, 127
    %v4270 = vshll.u32 %v4269, 23
    %v4271 = vor.u32 4788187, %v4270
    %v4272 = vand.u32 2147483647, %v4271
    %v4274 = vcvt.s32.f32 %v4267
    %v4275 = vmul.f32 %v4274, %v4272
    %v4276 = vxor.u32 %v4275, 2147483648
    %v4277 = vsel %vm4156, %v4276, %v4275
    %v4278 = vsub.s32 4, %v4254
    %v4279 = vsel %vm4156, %v4278, %v4254
    %v4280 = vsel %vm4155, %v2751, %v4277
    %v4281 = vsel %vm4155, 0, %v4279
    %v4282 = vmul.f32 %v4280, %v4280
    %v4283 = vmul.f32 %v4282, -0.001358992
    %v4284 = vadd.f32 %v4283, 0.041655596
    %v4285 = vmul.f32 %v4282, %v4284
    %v4286 = vadd.f32 %v4285, -0.4999988
    %v4287 = vmul.f32 %v4282, %v4286
    %v4288 = vadd.f32 1.0, %v4287
    %v4289 = vmul.f32 %v4280, %v4280
    %v4290 = vmul.f32 %v4289, -0.00019511016
    %v4291 = vadd.f32 %v4290, 0.008332121
    %v4292 = vmul.f32 %v4289, %v4291
    %v4293 = vadd.f32 %v4292, -0.16666654
    %v4294 = vmul.f32 %v4289, %v4293
    %v4295 = vadd.f32 %v4294, 1.0
    %v4296 = vmul.f32 %v4295, %v4280
    %vm4297 = vweird.f32 %v2751
    %v4298 = vadd.s32 %v4281, 3
    %v4299 = vand.u32 %v4298, 3
    %vm4300 = vcmp.lt.s32.totalorder %v4299, 2
    %vm4301 = vcmp.eq.s32.totalorder %v4299, 0
    %v4302 = vxor.u32 %v4296, 2147483648
    %v4303 = vsel %vm4301, %v4288, %v4302
    %vm4304 = vcmp.eq.s32.totalorder %v4299, 2
    %v4305 = vxor.u32 %v4288, 2147483648
    %v4306 = vsel %vm4304, %v4305, %v4296
    %v4307 = vsel %vm4300, %v4303, %v4306
    %v4308 = vsel %vm4297, nan, %v4307
    %v4309 = vand.u32 2147483647, %v2774
    %vm4310 = vcmp.le.f32.partialorder %v4309, 0.7853982
    %vm4311 = vcmp.lt.s32.totalorder %v2774, 0
    %v4312 = vand.u32 %v2774, 2139095040
    %v4313 = vshrl.u32 %v4312, 23
    %v4314 = vsub.s32 %v4313, 127
    %v4315 = vand.u32 2147483647, %v2774
    %v4316 = vand.u32 %v4315, 8388607
    %v4317 = vor.u32 %v4316, 8388608
    %v4318 = vsub.s32 0, %v4317
    %v4319 = vadd.s32 %v4314, 1
    %vm4320 = vcmp.gt.s32.totalorder %v4319, 0
    %v4321 = vsel %vm4320, %v4319, 0
    %v4322 = vshrl.u32 %v4321, 5
    %v4323 = vand.u32 %v4321, 31
    %v4324 = vsub.s32 32, %v4323
    %v4325 = vshrl.u32 683565275, %v4324
    %v4326 = vshll.u32 683565275, %v4323
    %v4327 = vshrl.u32 2475754826, %v4324
    %v4328 = vor.u32 %v4326, %v4327
    %v4329 = vshll.u32 2475754826, %v4323
    %v4330 = vshrl.u32 2131351028, %v4324
    %v4331 = vor.u32 %v4329, %v4330
    %v4332 = vshll.u32 2131351028, %v4323
    %v4333 = vshrl.u32 2102212464, %v4324
    %v4334 = vor.u32 %v4332, %v4333
    %v4335 = vshll.u32 2102212464, %v4323
    %v4336 = vshrl.u32 920167782, %v4324
    %v4337 = vor.u32 %v4335, %v4336
    %v4338 = vshll.u32 920167782, %v4323
    %v4339 = vshrl.u32 1326507024, %v4324
    %v4340 = vor.u32 %v4338, %v4339
    %vm4341 = vcmp.lt.s32.totalorder %v4322, 1
    %vm4342 = vcmp.lt.s32.totalorder %v4322, 2
    %vm4343 = vcmp.lt.s32.totalorder %v4322, 3
    %vm4344 = vcmp.lt.s32.totalorder %v4322, 4
    %v4345 = vsel %vm4341, %v4325, %v4328
    %v4346 = vsel %vm4344, %v4334, 2102212464
    %v4347 = vsel %vm4343, %v4331, %v4346
    %v4348 = vsel %vm4342, %v4345, %v4347
    %v4349 = vsel %vm4341, %v4328, %v4331
    %v4350 = vsel %vm4344, %v4337, 920167782
    %v4351 = vsel %vm4343, %v4334, %v4350
    %v4352 = vsel %vm4342, %v4349, %v4351
    %v4353 = vsel %vm4341, %v4331, %v4334
    %v4354 = vsel %vm4344, %v4340, 1326507024
    %v4355 = vsel %vm4343, %v4337, %v4354
    %v4356 = vsel %vm4342, %v4353, %v4355
    %v4357 = vshll.u32 %v4317, 8
    %v4358 = vand.u32 %v4357, 65535
    %v4359 = vshrl.u32 %v4357, 16
    %v4360 = vand.u32 %v4356, 65535
    %v4361 = vshrl.u32 %v4356, 16
    %v4362 = vmul.u32 %v4358, %v4360
    %v4363 = vmul.u32 %v4358, %v4361
    %v4364 = vmul.u32 %v4359, %v4360
    %v4365 = vmul.u32 %v4359, %v4361
    %v4366 = vshll.u32 %v4363, 16
    %v4367 = vshrl.u32 %v4363, 16
    %v4368 = vshll.u32 %v4364, 16
    %v4369 = vshrl.u32 %v4364, 16
    %vm4370 = vc.u32 %v4362, %v4366
    %v4371 = vsel %vm4370, 1, 0
    %v4372 = vadd.s32 %v4362, %v4366
    %v4373 = vadd.s32 %v4365, %v4371
    %vm4374 = vc.u32 %v4372, %v4368
    %v4375 = vsel %vm4374, 1, 0
    %v4376 = vadd.s32 %v4372, %v4368
    %v4377 = vadd.s32 %v4373, %v4375
    %v4378 = vadd.s32 %v4377, %v4367
    %v4379 = vadd.s32 %v4378, %v4369
    %v4380 = vand.u32 %v4357, 65535
    %v4381 = vshrl.u32 %v4357, 16
    %v4382 = vand.u32 %v4352, 65535
    %v4383 = vshrl.u32 %v4352, 16
    %v4384 = vmul.u32 %v4380, %v4382
    %v4385 = vmul.u32 %v4380, %v4383
    %v4386 = vmul.u32 %v4381, %v4382
    %v4387 = vmul.u32 %v4381, %v4383
    %v4388 = vshll.u32 %v4385, 16
    %v4389 = vshrl.u32 %v4385, 16
    %v4390 = vshll.u32 %v4386, 16
    %v4391 = vshrl.u32 %v4386, 16
    %vm4392 = vc.u32 %v4384, %v4388
    %v4393 = vsel %vm4392, 1, 0
    %v4394 = vadd.s32 %v4384, %v4388
    %v4395 = vadd.s32 %v4387, %v4393
    %vm4396 = vc.u32 %v4394, %v4390
    %v4397 = vsel %vm4396, 1, 0
    %v4398 = vadd.s32 %v4394, %v4390
    %v4399 = vadd.s32 %v4395, %v4397
    %v4400 = vadd.s32 %v4399, %v4389
    %v4401 = vadd.s32 %v4400, %v4391
    %v4402 = vmul.u32 %v4357, %v4348
    %v4403 = vadd.s32 %v4379, %v4398
    %vm4404 = vc.u32 %v4379, %v4398
    %v4405 = vadd.s32 %v4401, 1
    %v4406 = vsel %vm4404, %v4405, %v4401
    %v4407 = vadd.s32 %v4402, %v4406
    %v4408 = vadd.s32 %v4407, 536870912
    %v4409 = vshrl.u32 %v4408, 30
    %v4410 = vshll.u32 %v4409, 30
    %v4411 = vsub.s32 %v4407, %v4410
    %vm4412 = vcmp.lt.s32.totalorder %v4411, 0
    %v4413 = vsub.s32 0, %v4411
    %v4414 = vsel %vm4412, %v4413, %v4411
    %v4415 = vclz %v4414
    %v4416 = vsub.s32 %v4415, 2
    %vm4417 = vcmp.gt.s32.totalorder 0, %v4416
    %v4418 = vsel %vm4417, 0, %v4416
    %v4419 = vsub.s32 32, %v4418
    %v4420 = vshll.u32 %v4411, %v4418
    %v4421 = vshrl.u32 %v4403, %v4419
    %v4422 = vor.u32 %v4420, %v4421
    %v4423 = vsub.s32 4294967266, %v4418
    %v4424 = vadd.s32 %v4423, 127
    %v4425 = vshll.u32 %v4424, 23
    %v4426 = vor.u32 4788187, %v4425
    %v4427 = vand.u32 2147483647, %v4426
    %v4429 = vcvt.s32.f32 %v4422
    %v4430 = vmul.f32 %v4429, %v4427
    %v4431 = vxor.u32 %v4430, 2147483648
    %v4432 = vsel %vm4311, %v4431, %v4430
    %v4433 = vsub.s32 4, %v4409
    %v4434 = vsel %vm4311, %v4433, %v4409
    %v4435 = vsel %vm4310, %v2774, %v4432
    %v4436 = vsel %vm4310, 0, %v4434
    %v4437 = vmul.f32 %v4435, %v4435
    %v4438 = vmul.f32 %v4437, -0.001358992
    %v4439 = vadd.f32 %v4438, 0.041655596
    %v4440 = vmul.f32 %v4437, %v4439
    %v4441 = vadd.f32 %v4440, -0.4999988
    %v4442 = vmul.f32 %v4437, %v4441
    %v4443 = vadd.f32 1.0, %v4442
    %v4444 = vmul.f32 %v4435, %v4435
    %v4445 = vmul.f32 %v4444, -0.00019511016
    %v4446 = vadd.f32 %v4445, 0.008332121
    %v4447 = vmul.f32 %v4444, %v4446
    %v4448 = vadd.f32 %v4447, -0.16666654
    %v4449 = vmul.f32 %v4444, %v4448
    %v4450 = vadd.f32 %v4449, 1.0
    %v4451 = vmul.f32 %v4450, %v4435
    %vm4452 = vweird.f32 %v2774
    %v4453 = vadd.s32 %v4436, 3
    %v4454 = vand.u32 %v4453, 3
    %vm4455 = vcmp.lt.s32.totalorder %v4454, 2
    %vm4456 = vcmp.eq.s32.totalorder %v4454, 0
    %v4457 = vxor.u32 %v4451, 2147483648
    %v4458 = vsel %vm4456, %v4443, %v4457
    %vm4459 = vcmp.eq.s32.totalorder %v4454, 2
    %v4460 = vxor.u32 %v4443, 2147483648
    %v4461 = vsel %vm4459, %v4460, %v4451
    %v4462 = vsel %vm4455, %v4458, %v4461
    %v4463 = vsel %vm4452, nan, %v4462
    %v4464 = vand.u32 2147483647, %v2797
    %vm4465 = vcmp.le.f32.partialorder %v4464, 0.7853982
    %vm4466 = vcmp.lt.s32.totalorder %v2797, 0
    %v4467 = vand.u32 %v2797, 2139095040
    %v4468 = vshrl.u32 %v4467, 23
    %v4469 = vsub.s32 %v4468, 127
    %v4470 = vand.u32 2147483647, %v2797
    %v4471 = vand.u32 %v4470, 8388607
    %v4472 = vor.u32 %v4471, 8388608
    %v4473 = vsub.s32 0, %v4472
    %v4474 = vadd.s32 %v4469, 1
    %vm4475 = vcmp.gt.s32.totalorder %v4474, 0
    %v4476 = vsel %vm4475, %v4474, 0
    %v4477 = vshrl.u32 %v4476, 5
    %v4478 = vand.u32 %v4476, 31
    %v4479 = vsub.s32 32, %v4478
    %v4480 = vshrl.u32 683565275, %v4479
    %v4481 = vshll.u32 683565275, %v4478
    %v4482 = vshrl.u32 2475754826, %v4479
    %v4483 = vor.u32 %v4481, %v4482
    %v4484 = vshll.u32 2475754826, %v4478
    %v4485 = vshrl.u32 2131351028, %v4479
    %v4486 = vor.u32 %v4484, %v4485
    %v4487 = vshll.u32 2131351028, %v4478
    %v4488 = vshrl.u32 2102212464, %v4479
    %v4489 = vor.u32 %v4487, %v4488
    %v4490 = vshll.u32 2102212464, %v4478
    %v4491 = vshrl.u32 920167782, %v4479
    %v4492 = vor.u32 %v4490, %v4491
    %v4493 = vshll.u32 920167782, %v4478
    %v4494 = vshrl.u32 1326507024, %v4479
    %v4495 = vor.u32 %v4493, %v4494
    %vm4496 = vcmp.lt.s32.totalorder %v4477, 1
    %vm4497 = vcmp.lt.s32.totalorder %v4477, 2
    %vm4498 = vcmp.lt.s32.totalorder %v4477, 3
    %vm4499 = vcmp.lt.s32.totalorder %v4477, 4
    %v4500 = vsel %vm4496, %v4480, %v4483
    %v4501 = vsel %vm4499, %v4489, 2102212464
    %v4502 = vsel %vm4498, %v4486, %v4501
    %v4503 = vsel %vm4497, %v4500, %v4502
    %v4504 = vsel %vm4496, %v4483, %v4486
    %v4505 = vsel %vm4499, %v4492, 920167782
    %v4506 = vsel %vm4498, %v4489, %v4505
    %v4507 = vsel %vm4497, %v4504, %v4506
    %v4508 = vsel %vm4496, %v4486, %v4489
    %v4509 = vsel %vm4499, %v4495, 1326507024
    %v4510 = vsel %vm4498, %v4492, %v4509
    %v4511 = vsel %vm4497, %v4508, %v4510
    %v4512 = vshll.u32 %v4472, 8
    %v4513 = vand.u32 %v4512, 65535
    %v4514 = vshrl.u32 %v4512, 16
    %v4515 = vand.u32 %v4511, 65535
    %v4516 = vshrl.u32 %v4511, 16
    %v4517 = vmul.u32 %v4513, %v4515
    %v4518 = vmul.u32 %v4513, %v4516
    %v4519 = vmul.u32 %v4514, %v4515
    %v4520 = vmul.u32 %v4514, %v4516
    %v4521 = vshll.u32 %v4518, 16
    %v4522 = vshrl.u32 %v4518, 16
    %v4523 = vshll.u32 %v4519, 16
    %v4524 = vshrl.u32 %v4519, 16
    %vm4525 = vc.u32 %v4517, %v4521
    %v4526 = vsel %vm4525, 1, 0
    %v4527 = vadd.s32 %v4517, %v4521
    %v4528 = vadd.s32 %v4520, %v4526
    %vm4529 = vc.u32 %v4527, %v4523
    %v4530 = vsel %vm4529, 1, 0
    %v4531 = vadd.s32 %v4527, %v4523
    %v4532 = vadd.s32 %v4528, %v4530
    %v4533 = vadd.s32 %v4532, %v4522
    %v4534 = vadd.s32 %v4533, %v4524
    %v4535 = vand.u32 %v4512, 65535
    %v4536 = vshrl.u32 %v4512, 16
    %v4537 = vand.u32 %v4507, 65535
    %v4538 = vshrl.u32 %v4507, 16
    %v4539 = vmul.u32 %v4535, %v4537
    %v4540 = vmul.u32 %v4535, %v4538
    %v4541 = vmul.u32 %v4536, %v4537
    %v4542 = vmul.u32 %v4536, %v4538
    %v4543 = vshll.u32 %v4540, 16
    %v4544 = vshrl.u32 %v4540, 16
    %v4545 = vshll.u32 %v4541, 16
    %v4546 = vshrl.u32 %v4541, 16
    %vm4547 = vc.u32 %v4539, %v4543
    %v4548 = vsel %vm4547, 1, 0
    %v4549 = vadd.s32 %v4539, %v4543
    %v4550 = vadd.s32 %v4542, %v4548
    %vm4551 = vc.u32 %v4549, %v4545
    %v4552 = vsel %vm4551, 1, 0
    %v4553 = vadd.s32 %v4549, %v4545
    %v4554 = vadd.s32 %v4550, %v4552
    %v4555 = vadd.s32 %v4554, %v4544
    %v4556 = vadd.s32 %v4555, %v4546
    %v4557 = vmul.u32 %v4512, %v4503
    %v4558 = vadd.s32 %v4534, %v4553
    %vm4559 = vc.u32 %v4534, %v4553
    %v4560 = vadd.s32 %v4556, 1
    %v4561 = vsel %vm4559, %v4560, %v4556
    %v4562 = vadd.s32 %v4557, %v4561
    %v4563 = vadd.s32 %v4562, 536870912
    %v4564 = vshrl.u32 %v4563, 30
    %v4565 = vshll.u32 %v4564, 30
    %v4566 = vsub.s32 %v4562, %v4565
    %vm4567 = vcmp.lt.s32.totalorder %v4566, 0
    %v4568 = vsub.s32 0, %v4566
    %v4569 = vsel %vm4567, %v4568, %v4566
    %v4570 = vclz %v4569
    %v4571 = vsub.s32 %v4570, 2
    %vm4572 = vcmp.gt.s32.totalorder 0, %v4571
    %v4573 = vsel %vm4572, 0, %v4571
    %v4574 = vsub.s32 32, %v4573
    %v4575 = vshll.u32 %v4566, %v4573
    %v4576 = vshrl.u32 %v4558, %v4574
    %v4577 = vor.u32 %v4575, %v4576
    %v4578 = vsub.s32 4294967266, %v4573
    %v4579 = vadd.s32 %v4578, 127
    %v4580 = vshll.u32 %v4579, 23
    %v4581 = vor.u32 4788187, %v4580
    %v4582 = vand.u32 2147483647, %v4581
    %v4584 = vcvt.s32.f32 %v4577
    %v4585 = vmul.f32 %v4584, %v4582
    %v4586 = vxor.u32 %v4585, 2147483648
    %v4587 = vsel %vm4466, %v4586, %v4585
    %v4588 = vsub.s32 4, %v4564
    %v4589 = vsel %vm4466, %v4588, %v4564
    %v4590 = vsel %vm4465, %v2797, %v4587
    %v4591 = vsel %vm4465, 0, %v4589
    %v4592 = vmul.f32 %v4590, %v4590
    %v4593 = vmul.f32 %v4592, -0.001358992
    %v4594 = vadd.f32 %v4593, 0.041655596
    %v4595 = vmul.f32 %v4592, %v4594
    %v4596 = vadd.f32 %v4595, -0.4999988
    %v4597 = vmul.f32 %v4592, %v4596
    %v4598 = vadd.f32 1.0, %v4597
    %v4599 = vmul.f32 %v4590, %v4590
    %v4600 = vmul.f32 %v4599, -0.00019511016
    %v4601 = vadd.f32 %v4600, 0.008332121
    %v4602 = vmul.f32 %v4599, %v4601
    %v4603 = vadd.f32 %v4602, -0.16666654
    %v4604 = vmul.f32 %v4599, %v4603
    %v4605 = vadd.f32 %v4604, 1.0
    %v4606 = vmul.f32 %v4605, %v4590
    %vm4607 = vweird.f32 %v2797
    %v4608 = vadd.s32 %v4591, 3
    %v4609 = vand.u32 %v4608, 3
    %vm4610 = vcmp.lt.s32.totalorder %v4609, 2
    %vm4611 = vcmp.eq.s32.totalorder %v4609, 0
    %v4612 = vxor.u32 %v4606, 2147483648
    %v4613 = vsel %vm4611, %v4598, %v4612
    %vm4614 = vcmp.eq.s32.totalorder %v4609, 2
    %v4615 = vxor.u32 %v4598, 2147483648
    %v4616 = vsel %vm4614, %v4615, %v4606
    %v4617 = vsel %vm4610, %v4613, %v4616
    %v4618 = vsel %vm4607, nan, %v4617
    %v4619 = vand.u32 2147483647, %v2820
    %vm4620 = vcmp.le.f32.partialorder %v4619, 0.7853982
    %vm4621 = vcmp.lt.s32.totalorder %v2820, 0
    %v4622 = vand.u32 %v2820, 2139095040
    %v4623 = vshrl.u32 %v4622, 23
    %v4624 = vsub.s32 %v4623, 127
    %v4625 = vand.u32 2147483647, %v2820
    %v4626 = vand.u32 %v4625, 8388607
    %v4627 = vor.u32 %v4626, 8388608
    %v4628 = vsub.s32 0, %v4627
    %v4629 = vadd.s32 %v4624, 1
    %vm4630 = vcmp.gt.s32.totalorder %v4629, 0
    %v4631 = vsel %vm4630, %v4629, 0
    %v4632 = vshrl.u32 %v4631, 5
    %v4633 = vand.u32 %v4631, 31
    %v4634 = vsub.s32 32, %v4633
    %v4635 = vshrl.u32 683565275, %v4634
    %v4636 = vshll.u32 683565275, %v4633
    %v4637 = vshrl.u32 2475754826, %v4634
    %v4638 = vor.u32 %v4636, %v4637
    %v4639 = vshll.u32 2475754826, %v4633
    %v4640 = vshrl.u32 2131351028, %v4634
    %v4641 = vor.u32 %v4639, %v4640
    %v4642 = vshll.u32 2131351028, %v4633
    %v4643 = vshrl.u32 2102212464, %v4634
    %v4644 = vor.u32 %v4642, %v4643
    %v4645 = vshll.u32 2102212464, %v4633
    %v4646 = vshrl.u32 920167782, %v4634
    %v4647 = vor.u32 %v4645, %v4646
    %v4648 = vshll.u32 920167782, %v4633
    %v4649 = vshrl.u32 1326507024, %v4634
    %v4650 = vor.u32 %v4648, %v4649
    %vm4651 = vcmp.lt.s32.totalorder %v4632, 1
    %vm4652 = vcmp.lt.s32.totalorder %v4632, 2
    %vm4653 = vcmp.lt.s32.totalorder %v4632, 3
    %vm4654 = vcmp.lt.s32.totalorder %v4632, 4
    %v4655 = vsel %vm4651, %v4635, %v4638
    %v4656 = vsel %vm4654, %v4644, 2102212464
    %v4657 = vsel %vm4653, %v4641, %v4656
    %v4658 = vsel %vm4652, %v4655, %v4657
    %v4659 = vsel %vm4651, %v4638, %v4641
    %v4660 = vsel %vm4654, %v4647, 920167782
    %v4661 = vsel %vm4653, %v4644, %v4660
    %v4662 = vsel %vm4652, %v4659, %v4661
    %v4663 = vsel %vm4651, %v4641, %v4644
    %v4664 = vsel %vm4654, %v4650, 1326507024
    %v4665 = vsel %vm4653, %v4647, %v4664
    %v4666 = vsel %vm4652, %v4663, %v4665
    %v4667 = vshll.u32 %v4627, 8
    %v4668 = vand.u32 %v4667, 65535
    %v4669 = vshrl.u32 %v4667, 16
    %v4670 = vand.u32 %v4666, 65535
    %v4671 = vshrl.u32 %v4666, 16
    %v4672 = vmul.u32 %v4668, %v4670
    %v4673 = vmul.u32 %v4668, %v4671
    %v4674 = vmul.u32 %v4669, %v4670
    %v4675 = vmul.u32 %v4669, %v4671
    %v4676 = vshll.u32 %v4673, 16
    %v4677 = vshrl.u32 %v4673, 16
    %v4678 = vshll.u32 %v4674, 16
    %v4679 = vshrl.u32 %v4674, 16
    %vm4680 = vc.u32 %v4672, %v4676
    %v4681 = vsel %vm4680, 1, 0
    %v4682 = vadd.s32 %v4672, %v4676
    %v4683 = vadd.s32 %v4675, %v4681
    %vm4684 = vc.u32 %v4682, %v4678
    %v4685 = vsel %vm4684, 1, 0
    %v4686 = vadd.s32 %v4682, %v4678
    %v4687 = vadd.s32 %v4683, %v4685
    %v4688 = vadd.s32 %v4687, %v4677
    %v4689 = vadd.s32 %v4688, %v4679
    %v4690 = vand.u32 %v4667, 65535
    %v4691 = vshrl.u32 %v4667, 16
    %v4692 = vand.u32 %v4662, 65535
    %v4693 = vshrl.u32 %v4662, 16
    %v4694 = vmul.u32 %v4690, %v4692
    %v4695 = vmul.u32 %v4690, %v4693
    %v4696 = vmul.u32 %v4691, %v4692
    %v4697 = vmul.u32 %v4691, %v4693
    %v4698 = vshll.u32 %v4695, 16
    %v4699 = vshrl.u32 %v4695, 16
    %v4700 = vshll.u32 %v4696, 16
    %v4701 = vshrl.u32 %v4696, 16
    %vm4702 = vc.u32 %v4694, %v4698
    %v4703 = vsel %vm4702, 1, 0
    %v4704 = vadd.s32 %v4694, %v4698
    %v4705 = vadd.s32 %v4697, %v4703
    %vm4706 = vc.u32 %v4704, %v4700
    %v4707 = vsel %vm4706, 1, 0
    %v4708 = vadd.s32 %v4704, %v4700
    %v4709 = vadd.s32 %v4705, %v4707
    %v4710 = vadd.s32 %v4709, %v4699
    %v4711 = vadd.s32 %v4710, %v4701
    %v4712 = vmul.u32 %v4667, %v4658
    %v4713 = vadd.s32 %v4689, %v4708
    %vm4714 = vc.u32 %v4689, %v4708
    %v4715 = vadd.s32 %v4711, 1
    %v4716 = vsel %vm4714, %v4715, %v4711
    %v4717 = vadd.s32 %v4712, %v4716
    %v4718 = vadd.s32 %v4717, 536870912
    %v4719 = vshrl.u32 %v4718, 30
    %v4720 = vshll.u32 %v4719, 30
    %v4721 = vsub.s32 %v4717, %v4720
    %vm4722 = vcmp.lt.s32.totalorder %v4721, 0
    %v4723 = vsub.s32 0, %v4721
    %v4724 = vsel %vm4722, %v4723, %v4721
    %v4725 = vclz %v4724
    %v4726 = vsub.s32 %v4725, 2
    %vm4727 = vcmp.gt.s32.totalorder 0, %v4726
    %v4728 = vsel %vm4727, 0, %v4726
    %v4729 = vsub.s32 32, %v4728
    %v4730 = vshll.u32 %v4721, %v4728
    %v4731 = vshrl.u32 %v4713, %v4729
    %v4732 = vor.u32 %v4730, %v4731
    %v4733 = vsub.s32 4294967266, %v4728
    %v4734 = vadd.s32 %v4733, 127
    %v4735 = vshll.u32 %v4734, 23
    %v4736 = vor.u32 4788187, %v4735
    %v4737 = vand.u32 2147483647, %v4736
    %v4739 = vcvt.s32.f32 %v4732
    %v4740 = vmul.f32 %v4739, %v4737
    %v4741 = vxor.u32 %v4740, 2147483648
    %v4742 = vsel %vm4621, %v4741, %v4740
    %v4743 = vsub.s32 4, %v4719
    %v4744 = vsel %vm4621, %v4743, %v4719
    %v4745 = vsel %vm4620, %v2820, %v4742
    %v4746 = vsel %vm4620, 0, %v4744
    %v4747 = vmul.f32 %v4745, %v4745
    %v4748 = vmul.f32 %v4747, -0.001358992
    %v4749 = vadd.f32 %v4748, 0.041655596
    %v4750 = vmul.f32 %v4747, %v4749
    %v4751 = vadd.f32 %v4750, -0.4999988
    %v4752 = vmul.f32 %v4747, %v4751
    %v4753 = vadd.f32 1.0, %v4752
    %v4754 = vmul.f32 %v4745, %v4745
    %v4755 = vmul.f32 %v4754, -0.00019511016
    %v4756 = vadd.f32 %v4755, 0.008332121
    %v4757 = vmul.f32 %v4754, %v4756
    %v4758 = vadd.f32 %v4757, -0.16666654
    %v4759 = vmul.f32 %v4754, %v4758
    %v4760 = vadd.f32 %v4759, 1.0
    %v4761 = vmul.f32 %v4760, %v4745
    %vm4762 = vweird.f32 %v2820
    %v4763 = vadd.s32 %v4746, 3
    %v4764 = vand.u32 %v4763, 3
    %vm4765 = vcmp.lt.s32.totalorder %v4764, 2
    %vm4766 = vcmp.eq.s32.totalorder %v4764, 0
    %v4767 = vxor.u32 %v4761, 2147483648
    %v4768 = vsel %vm4766, %v4753, %v4767
    %vm4769 = vcmp.eq.s32.totalorder %v4764, 2
    %v4770 = vxor.u32 %v4753, 2147483648
    %v4771 = vsel %vm4769, %v4770, %v4761
    %v4772 = vsel %vm4765, %v4768, %v4771
    %v4773 = vsel %vm4762, nan, %v4772
    %v4774 = vand.u32 2147483647, %v2843
    %vm4775 = vcmp.le.f32.partialorder %v4774, 0.7853982
    %vm4776 = vcmp.lt.s32.totalorder %v2843, 0
    %v4777 = vand.u32 %v2843, 2139095040
    %v4778 = vshrl.u32 %v4777, 23
    %v4779 = vsub.s32 %v4778, 127
    %v4780 = vand.u32 2147483647, %v2843
    %v4781 = vand.u32 %v4780, 8388607
    %v4782 = vor.u32 %v4781, 8388608
    %v4783 = vsub.s32 0, %v4782
    %v4784 = vadd.s32 %v4779, 1
    %vm4785 = vcmp.gt.s32.totalorder %v4784, 0
    %v4786 = vsel %vm4785, %v4784, 0
    %v4787 = vshrl.u32 %v4786, 5
    %v4788 = vand.u32 %v4786, 31
    %v4789 = vsub.s32 32, %v4788
    %v4790 = vshrl.u32 683565275, %v4789
    %v4791 = vshll.u32 683565275, %v4788
    %v4792 = vshrl.u32 2475754826, %v4789
    %v4793 = vor.u32 %v4791, %v4792
    %v4794 = vshll.u32 2475754826, %v4788
    %v4795 = vshrl.u32 2131351028, %v4789
    %v4796 = vor.u32 %v4794, %v4795
    %v4797 = vshll.u32 2131351028, %v4788
    %v4798 = vshrl.u32 2102212464, %v4789
    %v4799 = vor.u32 %v4797, %v4798
    %v4800 = vshll.u32 2102212464, %v4788
    %v4801 = vshrl.u32 920167782, %v4789
    %v4802 = vor.u32 %v4800, %v4801
    %v4803 = vshll.u32 920167782, %v4788
    %v4804 = vshrl.u32 1326507024, %v4789
    %v4805 = vor.u32 %v4803, %v4804
    %vm4806 = vcmp.lt.s32.totalorder %v4787, 1
    %vm4807 = vcmp.lt.s32.totalorder %v4787, 2
    %vm4808 = vcmp.lt.s32.totalorder %v4787, 3
    %vm4809 = vcmp.lt.s32.totalorder %v4787, 4
    %v4810 = vsel %vm4806, %v4790, %v4793
    %v4811 = vsel %vm4809, %v4799, 2102212464
    %v4812 = vsel %vm4808, %v4796, %v4811
    %v4813 = vsel %vm4807, %v4810, %v4812
    %v4814 = vsel %vm4806, %v4793, %v4796
    %v4815 = vsel %vm4809, %v4802, 920167782
    %v4816 = vsel %vm4808, %v4799, %v4815
    %v4817 = vsel %vm4807, %v4814, %v4816
    %v4818 = vsel %vm4806, %v4796, %v4799
    %v4819 = vsel %vm4809, %v4805, 1326507024
    %v4820 = vsel %vm4808, %v4802, %v4819
    %v4821 = vsel %vm4807, %v4818, %v4820
    %v4822 = vshll.u32 %v4782, 8
    %v4823 = vand.u32 %v4822, 65535
    %v4824 = vshrl.u32 %v4822, 16
    %v4825 = vand.u32 %v4821, 65535
    %v4826 = vshrl.u32 %v4821, 16
    %v4827 = vmul.u32 %v4823, %v4825
    %v4828 = vmul.u32 %v4823, %v4826
    %v4829 = vmul.u32 %v4824, %v4825
    %v4830 = vmul.u32 %v4824, %v4826
    %v4831 = vshll.u32 %v4828, 16
    %v4832 = vshrl.u32 %v4828, 16
    %v4833 = vshll.u32 %v4829, 16
    %v4834 = vshrl.u32 %v4829, 16
    %vm4835 = vc.u32 %v4827, %v4831
    %v4836 = vsel %vm4835, 1, 0
    %v4837 = vadd.s32 %v4827, %v4831
    %v4838 = vadd.s32 %v4830, %v4836
    %vm4839 = vc.u32 %v4837, %v4833
    %v4840 = vsel %vm4839, 1, 0
    %v4841 = vadd.s32 %v4837, %v4833
    %v4842 = vadd.s32 %v4838, %v4840
    %v4843 = vadd.s32 %v4842, %v4832
    %v4844 = vadd.s32 %v4843, %v4834
    %v4845 = vand.u32 %v4822, 65535
    %v4846 = vshrl.u32 %v4822, 16
    %v4847 = vand.u32 %v4817, 65535
    %v4848 = vshrl.u32 %v4817, 16
    %v4849 = vmul.u32 %v4845, %v4847
    %v4850 = vmul.u32 %v4845, %v4848
    %v4851 = vmul.u32 %v4846, %v4847
    %v4852 = vmul.u32 %v4846, %v4848
    %v4853 = vshll.u32 %v4850, 16
    %v4854 = vshrl.u32 %v4850, 16
    %v4855 = vshll.u32 %v4851, 16
    %v4856 = vshrl.u32 %v4851, 16
    %vm4857 = vc.u32 %v4849, %v4853
    %v4858 = vsel %vm4857, 1, 0
    %v4859 = vadd.s32 %v4849, %v4853
    %v4860 = vadd.s32 %v4852, %v4858
    %vm4861 = vc.u32 %v4859, %v4855
    %v4862 = vsel %vm4861, 1, 0
    %v4863 = vadd.s32 %v4859, %v4855
    %v4864 = vadd.s32 %v4860, %v4862
    %v4865 = vadd.s32 %v4864, %v4854
    %v4866 = vadd.s32 %v4865, %v4856
    %v4867 = vmul.u32 %v4822, %v4813
    %v4868 = vadd.s32 %v4844, %v4863
    %vm4869 = vc.u32 %v4844, %v4863
    %v4870 = vadd.s32 %v4866, 1
    %v4871 = vsel %vm4869, %v4870, %v4866
    %v4872 = vadd.s32 %v4867, %v4871
    %v4873 = vadd.s32 %v4872, 536870912
    %v4874 = vshrl.u32 %v4873, 30
    %v4875 = vshll.u32 %v4874, 30
    %v4876 = vsub.s32 %v4872, %v4875
    %vm4877 = vcmp.lt.s32.totalorder %v4876, 0
    %v4878 = vsub.s32 0, %v4876
    %v4879 = vsel %vm4877, %v4878, %v4876
    %v4880 = vclz %v4879
    %v4881 = vsub.s32 %v4880, 2
    %vm4882 = vcmp.gt.s32.totalorder 0, %v4881
    %v4883 = vsel %vm4882, 0, %v4881
    %v4884 = vsub.s32 32, %v4883
    %v4885 = vshll.u32 %v4876, %v4883
    %v4886 = vshrl.u32 %v4868, %v4884
    %v4887 = vor.u32 %v4885, %v4886
    %v4888 = vsub.s32 4294967266, %v4883
    %v4889 = vadd.s32 %v4888, 127
    %v4890 = vshll.u32 %v4889, 23
    %v4891 = vor.u32 4788187, %v4890
    %v4892 = vand.u32 2147483647, %v4891
    %v4894 = vcvt.s32.f32 %v4887
    %v4895 = vmul.f32 %v4894, %v4892
    %v4896 = vxor.u32 %v4895, 2147483648
    %v4897 = vsel %vm4776, %v4896, %v4895
    %v4898 = vsub.s32 4, %v4874
    %v4899 = vsel %vm4776, %v4898, %v4874
    %v4900 = vsel %vm4775, %v2843, %v4897
    %v4901 = vsel %vm4775, 0, %v4899
    %v4902 = vmul.f32 %v4900, %v4900
    %v4903 = vmul.f32 %v4902, -0.001358992
    %v4904 = vadd.f32 %v4903, 0.041655596
    %v4905 = vmul.f32 %v4902, %v4904
    %v4906 = vadd.f32 %v4905, -0.4999988
    %v4907 = vmul.f32 %v4902, %v4906
    %v4908 = vadd.f32 1.0, %v4907
    %v4909 = vmul.f32 %v4900, %v4900
    %v4910 = vmul.f32 %v4909, -0.00019511016
    %v4911 = vadd.f32 %v4910, 0.008332121
    %v4912 = vmul.f32 %v4909, %v4911
    %v4913 = vadd.f32 %v4912, -0.16666654
    %v4914 = vmul.f32 %v4909, %v4913
    %v4915 = vadd.f32 %v4914, 1.0
    %v4916 = vmul.f32 %v4915, %v4900
    %vm4917 = vweird.f32 %v2843
    %v4918 = vadd.s32 %v4901, 3
    %v4919 = vand.u32 %v4918, 3
    %vm4920 = vcmp.lt.s32.totalorder %v4919, 2
    %vm4921 = vcmp.eq.s32.totalorder %v4919, 0
    %v4922 = vxor.u32 %v4916, 2147483648
    %v4923 = vsel %vm4921, %v4908, %v4922
    %vm4924 = vcmp.eq.s32.totalorder %v4919, 2
    %v4925 = vxor.u32 %v4908, 2147483648
    %v4926 = vsel %vm4924, %v4925, %v4916
    %v4927 = vsel %vm4920, %v4923, %v4926
    %v4928 = vsel %vm4917, nan, %v4927
    %v4929 = vand.u32 2147483647, %v2866
    %vm4930 = vcmp.le.f32.partialorder %v4929, 0.7853982
    %vm4931 = vcmp.lt.s32.totalorder %v2866, 0
    %v4932 = vand.u32 %v2866, 2139095040
    %v4933 = vshrl.u32 %v4932, 23
    %v4934 = vsub.s32 %v4933, 127
    %v4935 = vand.u32 2147483647, %v2866
    %v4936 = vand.u32 %v4935, 8388607
    %v4937 = vor.u32 %v4936, 8388608
    %v4938 = vsub.s32 0, %v4937
    %v4939 = vadd.s32 %v4934, 1
    %vm4940 = vcmp.gt.s32.totalorder %v4939, 0
    %v4941 = vsel %vm4940, %v4939, 0
    %v4942 = vshrl.u32 %v4941, 5
    %v4943 = vand.u32 %v4941, 31
    %v4944 = vsub.s32 32, %v4943
    %v4945 = vshrl.u32 683565275, %v4944
    %v4946 = vshll.u32 683565275, %v4943
    %v4947 = vshrl.u32 2475754826, %v4944
    %v4948 = vor.u32 %v4946, %v4947
    %v4949 = vshll.u32 2475754826, %v4943
    %v4950 = vshrl.u32 2131351028, %v4944
    %v4951 = vor.u32 %v4949, %v4950
    %v4952 = vshll.u32 2131351028, %v4943
    %v4953 = vshrl.u32 2102212464, %v4944
    %v4954 = vor.u32 %v4952, %v4953
    %v4955 = vshll.u32 2102212464, %v4943
    %v4956 = vshrl.u32 920167782, %v4944
    %v4957 = vor.u32 %v4955, %v4956
    %v4958 = vshll.u32 920167782, %v4943
    %v4959 = vshrl.u32 1326507024, %v4944
    %v4960 = vor.u32 %v4958, %v4959
    %vm4961 = vcmp.lt.s32.totalorder %v4942, 1
    %vm4962 = vcmp.lt.s32.totalorder %v4942, 2
    %vm4963 = vcmp.lt.s32.totalorder %v4942, 3
    %vm4964 = vcmp.lt.s32.totalorder %v4942, 4
    %v4965 = vsel %vm4961, %v4945, %v4948
    %v4966 = vsel %vm4964, %v4954, 2102212464
    %v4967 = vsel %vm4963, %v4951, %v4966
    %v4968 = vsel %vm4962, %v4965, %v4967
    %v4969 = vsel %vm4961, %v4948, %v4951
    %v4970 = vsel %vm4964, %v4957, 920167782
    %v4971 = vsel %vm4963, %v4954, %v4970
    %v4972 = vsel %vm4962, %v4969, %v4971
    %v4973 = vsel %vm4961, %v4951, %v4954
    %v4974 = vsel %vm4964, %v4960, 1326507024
    %v4975 = vsel %vm4963, %v4957, %v4974
    %v4976 = vsel %vm4962, %v4973, %v4975
    %v4977 = vshll.u32 %v4937, 8
    %v4978 = vand.u32 %v4977, 65535
    %v4979 = vshrl.u32 %v4977, 16
    %v4980 = vand.u32 %v4976, 65535
    %v4981 = vshrl.u32 %v4976, 16
    %v4982 = vmul.u32 %v4978, %v4980
    %v4983 = vmul.u32 %v4978, %v4981
    %v4984 = vmul.u32 %v4979, %v4980
    %v4985 = vmul.u32 %v4979, %v4981
    %v4986 = vshll.u32 %v4983, 16
    %v4987 = vshrl.u32 %v4983, 16
    %v4988 = vshll.u32 %v4984, 16
    %v4989 = vshrl.u32 %v4984, 16
    %vm4990 = vc.u32 %v4982, %v4986
    %v4991 = vsel %vm4990, 1, 0
    %v4992 = vadd.s32 %v4982, %v4986
    %v4993 = vadd.s32 %v4985, %v4991
    %vm4994 = vc.u32 %v4992, %v4988
    %v4995 = vsel %vm4994, 1, 0
    %v4996 = vadd.s32 %v4992, %v4988
    %v4997 = vadd.s32 %v4993, %v4995
    %v4998 = vadd.s32 %v4997, %v4987
    %v4999 = vadd.s32 %v4998, %v4989
    %v5000 = vand.u32 %v4977, 65535
    %v5001 = vshrl.u32 %v4977, 16
    %v5002 = vand.u32 %v4972, 65535
    %v5003 = vshrl.u32 %v4972, 16
    %v5004 = vmul.u32 %v5000, %v5002
    %v5005 = vmul.u32 %v5000, %v5003
    %v5006 = vmul.u32 %v5001, %v5002
    %v5007 = vmul.u32 %v5001, %v5003
    %v5008 = vshll.u32 %v5005, 16
    %v5009 = vshrl.u32 %v5005, 16
    %v5010 = vshll.u32 %v5006, 16
    %v5011 = vshrl.u32 %v5006, 16
    %vm5012 = vc.u32 %v5004, %v5008
    %v5013 = vsel %vm5012, 1, 0
    %v5014 = vadd.s32 %v5004, %v5008
    %v5015 = vadd.s32 %v5007, %v5013
    %vm5016 = vc.u32 %v5014, %v5010
    %v5017 = vsel %vm5016, 1, 0
    %v5018 = vadd.s32 %v5014, %v5010
    %v5019 = vadd.s32 %v5015, %v5017
    %v5020 = vadd.s32 %v5019, %v5009
    %v5021 = vadd.s32 %v5020, %v5011
    %v5022 = vmul.u32 %v4977, %v4968
    %v5023 = vadd.s32 %v4999, %v5018
    %vm5024 = vc.u32 %v4999, %v5018
    %v5025 = vadd.s32 %v5021, 1
    %v5026 = vsel %vm5024, %v5025, %v5021
    %v5027 = vadd.s32 %v5022, %v5026
    %v5028 = vadd.s32 %v5027, 536870912
    %v5029 = vshrl.u32 %v5028, 30
    %v5030 = vshll.u32 %v5029, 30
    %v5031 = vsub.s32 %v5027, %v5030
    %vm5032 = vcmp.lt.s32.totalorder %v5031, 0
    %v5033 = vsub.s32 0, %v5031
    %v5034 = vsel %vm5032, %v5033, %v5031
    %v5035 = vclz %v5034
    %v5036 = vsub.s32 %v5035, 2
    %vm5037 = vcmp.gt.s32.totalorder 0, %v5036
    %v5038 = vsel %vm5037, 0, %v5036
    %v5039 = vsub.s32 32, %v5038
    %v5040 = vshll.u32 %v5031, %v5038
    %v5041 = vshrl.u32 %v5023, %v5039
    %v5042 = vor.u32 %v5040, %v5041
    %v5043 = vsub.s32 4294967266, %v5038
    %v5044 = vadd.s32 %v5043, 127
    %v5045 = vshll.u32 %v5044, 23
    %v5046 = vor.u32 4788187, %v5045
    %v5047 = vand.u32 2147483647, %v5046
    %v5049 = vcvt.s32.f32 %v5042
    %v5050 = vmul.f32 %v5049, %v5047
    %v5051 = vxor.u32 %v5050, 2147483648
    %v5052 = vsel %vm4931, %v5051, %v5050
    %v5053 = vsub.s32 4, %v5029
    %v5054 = vsel %vm4931, %v5053, %v5029
    %v5055 = vsel %vm4930, %v2866, %v5052
    %v5056 = vsel %vm4930, 0, %v5054
    %v5057 = vmul.f32 %v5055, %v5055
    %v5058 = vmul.f32 %v5057, -0.001358992
    %v5059 = vadd.f32 %v5058, 0.041655596
    %v5060 = vmul.f32 %v5057, %v5059
    %v5061 = vadd.f32 %v5060, -0.4999988
    %v5062 = vmul.f32 %v5057, %v5061
    %v5063 = vadd.f32 1.0, %v5062
    %v5064 = vmul.f32 %v5055, %v5055
    %v5065 = vmul.f32 %v5064, -0.00019511016
    %v5066 = vadd.f32 %v5065, 0.008332121
    %v5067 = vmul.f32 %v5064, %v5066
    %v5068 = vadd.f32 %v5067, -0.16666654
    %v5069 = vmul.f32 %v5064, %v5068
    %v5070 = vadd.f32 %v5069, 1.0
    %v5071 = vmul.f32 %v5070, %v5055
    %vm5072 = vweird.f32 %v2866
    %v5073 = vadd.s32 %v5056, 3
    %v5074 = vand.u32 %v5073, 3
    %vm5075 = vcmp.lt.s32.totalorder %v5074, 2
    %vm5076 = vcmp.eq.s32.totalorder %v5074, 0
    %v5077 = vxor.u32 %v5071, 2147483648
    %v5078 = vsel %vm5076, %v5063, %v5077
    %vm5079 = vcmp.eq.s32.totalorder %v5074, 2
    %v5080 = vxor.u32 %v5063, 2147483648
    %v5081 = vsel %vm5079, %v5080, %v5071
    %v5082 = vsel %vm5075, %v5078, %v5081
    %v5083 = vsel %vm5072, nan, %v5082
    %v5084 = vand.u32 2147483647, %v2889
    %vm5085 = vcmp.le.f32.partialorder %v5084, 0.7853982
    %vm5086 = vcmp.lt.s32.totalorder %v2889, 0
    %v5087 = vand.u32 %v2889, 2139095040
    %v5088 = vshrl.u32 %v5087, 23
    %v5089 = vsub.s32 %v5088, 127
    %v5090 = vand.u32 2147483647, %v2889
    %v5091 = vand.u32 %v5090, 8388607
    %v5092 = vor.u32 %v5091, 8388608
    %v5093 = vsub.s32 0, %v5092
    %v5094 = vadd.s32 %v5089, 1
    %vm5095 = vcmp.gt.s32.totalorder %v5094, 0
    %v5096 = vsel %vm5095, %v5094, 0
    %v5097 = vshrl.u32 %v5096, 5
    %v5098 = vand.u32 %v5096, 31
    %v5099 = vsub.s32 32, %v5098
    %v5100 = vshrl.u32 683565275, %v5099
    %v5101 = vshll.u32 683565275, %v5098
    %v5102 = vshrl.u32 2475754826, %v5099
    %v5103 = vor.u32 %v5101, %v5102
    %v5104 = vshll.u32 2475754826, %v5098
    %v5105 = vshrl.u32 2131351028, %v5099
    %v5106 = vor.u32 %v5104, %v5105
    %v5107 = vshll.u32 2131351028, %v5098
    %v5108 = vshrl.u32 2102212464, %v5099
    %v5109 = vor.u32 %v5107, %v5108
    %v5110 = vshll.u32 2102212464, %v5098
    %v5111 = vshrl.u32 920167782, %v5099
    %v5112 = vor.u32 %v5110, %v5111
    %v5113 = vshll.u32 920167782, %v5098
    %v5114 = vshrl.u32 1326507024, %v5099
    %v5115 = vor.u32 %v5113, %v5114
    %vm5116 = vcmp.lt.s32.totalorder %v5097, 1
    %vm5117 = vcmp.lt.s32.totalorder %v5097, 2
    %vm5118 = vcmp.lt.s32.totalorder %v5097, 3
    %vm5119 = vcmp.lt.s32.totalorder %v5097, 4
    %v5120 = vsel %vm5116, %v5100, %v5103
    %v5121 = vsel %vm5119, %v5109, 2102212464
    %v5122 = vsel %vm5118, %v5106, %v5121
    %v5123 = vsel %vm5117, %v5120, %v5122
    %v5124 = vsel %vm5116, %v5103, %v5106
    %v5125 = vsel %vm5119, %v5112, 920167782
    %v5126 = vsel %vm5118, %v5109, %v5125
    %v5127 = vsel %vm5117, %v5124, %v5126
    %v5128 = vsel %vm5116, %v5106, %v5109
    %v5129 = vsel %vm5119, %v5115, 1326507024
    %v5130 = vsel %vm5118, %v5112, %v5129
    %v5131 = vsel %vm5117, %v5128, %v5130
    %v5132 = vshll.u32 %v5092, 8
    %v5133 = vand.u32 %v5132, 65535
    %v5134 = vshrl.u32 %v5132, 16
    %v5135 = vand.u32 %v5131, 65535
    %v5136 = vshrl.u32 %v5131, 16
    %v5137 = vmul.u32 %v5133, %v5135
    %v5138 = vmul.u32 %v5133, %v5136
    %v5139 = vmul.u32 %v5134, %v5135
    %v5140 = vmul.u32 %v5134, %v5136
    %v5141 = vshll.u32 %v5138, 16
    %v5142 = vshrl.u32 %v5138, 16
    %v5143 = vshll.u32 %v5139, 16
    %v5144 = vshrl.u32 %v5139, 16
    %vm5145 = vc.u32 %v5137, %v5141
    %v5146 = vsel %vm5145, 1, 0
    %v5147 = vadd.s32 %v5137, %v5141
    %v5148 = vadd.s32 %v5140, %v5146
    %vm5149 = vc.u32 %v5147, %v5143
    %v5150 = vsel %vm5149, 1, 0
    %v5151 = vadd.s32 %v5147, %v5143
    %v5152 = vadd.s32 %v5148, %v5150
    %v5153 = vadd.s32 %v5152, %v5142
    %v5154 = vadd.s32 %v5153, %v5144
    %v5155 = vand.u32 %v5132, 65535
    %v5156 = vshrl.u32 %v5132, 16
    %v5157 = vand.u32 %v5127, 65535
    %v5158 = vshrl.u32 %v5127, 16
    %v5159 = vmul.u32 %v5155, %v5157
    %v5160 = vmul.u32 %v5155, %v5158
    %v5161 = vmul.u32 %v5156, %v5157
    %v5162 = vmul.u32 %v5156, %v5158
    %v5163 = vshll.u32 %v5160, 16
    %v5164 = vshrl.u32 %v5160, 16
    %v5165 = vshll.u32 %v5161, 16
    %v5166 = vshrl.u32 %v5161, 16
    %vm5167 = vc.u32 %v5159, %v5163
    %v5168 = vsel %vm5167, 1, 0
    %v5169 = vadd.s32 %v5159, %v5163
    %v5170 = vadd.s32 %v5162, %v5168
    %vm5171 = vc.u32 %v5169, %v5165
    %v5172 = vsel %vm5171, 1, 0
    %v5173 = vadd.s32 %v5169, %v5165
    %v5174 = vadd.s32 %v5170, %v5172
    %v5175 = vadd.s32 %v5174, %v5164
    %v5176 = vadd.s32 %v5175, %v5166
    %v5177 = vmul.u32 %v5132, %v5123
    %v5178 = vadd.s32 %v5154, %v5173
    %vm5179 = vc.u32 %v5154, %v5173
    %v5180 = vadd.s32 %v5176, 1
    %v5181 = vsel %vm5179, %v5180, %v5176
    %v5182 = vadd.s32 %v5177, %v5181
    %v5183 = vadd.s32 %v5182, 536870912
    %v5184 = vshrl.u32 %v5183, 30
    %v5185 = vshll.u32 %v5184, 30
    %v5186 = vsub.s32 %v5182, %v5185
    %vm5187 = vcmp.lt.s32.totalorder %v5186, 0
    %v5188 = vsub.s32 0, %v5186
    %v5189 = vsel %vm5187, %v5188, %v5186
    %v5190 = vclz %v5189
    %v5191 = vsub.s32 %v5190, 2
    %vm5192 = vcmp.gt.s32.totalorder 0, %v5191
    %v5193 = vsel %vm5192, 0, %v5191
    %v5194 = vsub.s32 32, %v5193
    %v5195 = vshll.u32 %v5186, %v5193
    %v5196 = vshrl.u32 %v5178, %v5194
    %v5197 = vor.u32 %v5195, %v5196
    %v5198 = vsub.s32 4294967266, %v5193
    %v5199 = vadd.s32 %v5198, 127
    %v5200 = vshll.u32 %v5199, 23
    %v5201 = vor.u32 4788187, %v5200
    %v5202 = vand.u32 2147483647, %v5201
    %v5204 = vcvt.s32.f32 %v5197
    %v5205 = vmul.f32 %v5204, %v5202
    %v5206 = vxor.u32 %v5205, 2147483648
    %v5207 = vsel %vm5086, %v5206, %v5205
    %v5208 = vsub.s32 4, %v5184
    %v5209 = vsel %vm5086, %v5208, %v5184
    %v5210 = vsel %vm5085, %v2889, %v5207
    %v5211 = vsel %vm5085, 0, %v5209
    %v5212 = vmul.f32 %v5210, %v5210
    %v5213 = vmul.f32 %v5212, -0.001358992
    %v5214 = vadd.f32 %v5213, 0.041655596
    %v5215 = vmul.f32 %v5212, %v5214
    %v5216 = vadd.f32 %v5215, -0.4999988
    %v5217 = vmul.f32 %v5212, %v5216
    %v5218 = vadd.f32 1.0, %v5217
    %v5219 = vmul.f32 %v5210, %v5210
    %v5220 = vmul.f32 %v5219, -0.00019511016
    %v5221 = vadd.f32 %v5220, 0.008332121
    %v5222 = vmul.f32 %v5219, %v5221
    %v5223 = vadd.f32 %v5222, -0.16666654
    %v5224 = vmul.f32 %v5219, %v5223
    %v5225 = vadd.f32 %v5224, 1.0
    %v5226 = vmul.f32 %v5225, %v5210
    %vm5227 = vweird.f32 %v2889
    %v5228 = vadd.s32 %v5211, 3
    %v5229 = vand.u32 %v5228, 3
    %vm5230 = vcmp.lt.s32.totalorder %v5229, 2
    %vm5231 = vcmp.eq.s32.totalorder %v5229, 0
    %v5232 = vxor.u32 %v5226, 2147483648
    %v5233 = vsel %vm5231, %v5218, %v5232
    %vm5234 = vcmp.eq.s32.totalorder %v5229, 2
    %v5235 = vxor.u32 %v5218, 2147483648
    %v5236 = vsel %vm5234, %v5235, %v5226
    %v5237 = vsel %vm5230, %v5233, %v5236
    %v5238 = vsel %vm5227, nan, %v5237
    %v5239 = vand.u32 2147483647, %v2912
    %vm5240 = vcmp.le.f32.partialorder %v5239, 0.7853982
    %vm5241 = vcmp.lt.s32.totalorder %v2912, 0
    %v5242 = vand.u32 %v2912, 2139095040
    %v5243 = vshrl.u32 %v5242, 23
    %v5244 = vsub.s32 %v5243, 127
    %v5245 = vand.u32 2147483647, %v2912
    %v5246 = vand.u32 %v5245, 8388607
    %v5247 = vor.u32 %v5246, 8388608
    %v5248 = vsub.s32 0, %v5247
    %v5249 = vadd.s32 %v5244, 1
    %vm5250 = vcmp.gt.s32.totalorder %v5249, 0
    %v5251 = vsel %vm5250, %v5249, 0
    %v5252 = vshrl.u32 %v5251, 5
    %v5253 = vand.u32 %v5251, 31
    %v5254 = vsub.s32 32, %v5253
    %v5255 = vshrl.u32 683565275, %v5254
    %v5256 = vshll.u32 683565275, %v5253
    %v5257 = vshrl.u32 2475754826, %v5254
    %v5258 = vor.u32 %v5256, %v5257
    %v5259 = vshll.u32 2475754826, %v5253
    %v5260 = vshrl.u32 2131351028, %v5254
    %v5261 = vor.u32 %v5259, %v5260
    %v5262 = vshll.u32 2131351028, %v5253
    %v5263 = vshrl.u32 2102212464, %v5254
    %v5264 = vor.u32 %v5262, %v5263
    %v5265 = vshll.u32 2102212464, %v5253
    %v5266 = vshrl.u32 920167782, %v5254
    %v5267 = vor.u32 %v5265, %v5266
    %v5268 = vshll.u32 920167782, %v5253
    %v5269 = vshrl.u32 1326507024, %v5254
    %v5270 = vor.u32 %v5268, %v5269
    %vm5271 = vcmp.lt.s32.totalorder %v5252, 1
    %vm5272 = vcmp.lt.s32.totalorder %v5252, 2
    %vm5273 = vcmp.lt.s32.totalorder %v5252, 3
    %vm5274 = vcmp.lt.s32.totalorder %v5252, 4
    %v5275 = vsel %vm5271, %v5255, %v5258
    %v5276 = vsel %vm5274, %v5264, 2102212464
    %v5277 = vsel %vm5273, %v5261, %v5276
    %v5278 = vsel %vm5272, %v5275, %v5277
    %v5279 = vsel %vm5271, %v5258, %v5261
    %v5280 = vsel %vm5274, %v5267, 920167782
    %v5281 = vsel %vm5273, %v5264, %v5280
    %v5282 = vsel %vm5272, %v5279, %v5281
    %v5283 = vsel %vm5271, %v5261, %v5264
    %v5284 = vsel %vm5274, %v5270, 1326507024
    %v5285 = vsel %vm5273, %v5267, %v5284
    %v5286 = vsel %vm5272, %v5283, %v5285
    %v5287 = vshll.u32 %v5247, 8
    %v5288 = vand.u32 %v5287, 65535
    %v5289 = vshrl.u32 %v5287, 16
    %v5290 = vand.u32 %v5286, 65535
    %v5291 = vshrl.u32 %v5286, 16
    %v5292 = vmul.u32 %v5288, %v5290
    %v5293 = vmul.u32 %v5288, %v5291
    %v5294 = vmul.u32 %v5289, %v5290
    %v5295 = vmul.u32 %v5289, %v5291
    %v5296 = vshll.u32 %v5293, 16
    %v5297 = vshrl.u32 %v5293, 16
    %v5298 = vshll.u32 %v5294, 16
    %v5299 = vshrl.u32 %v5294, 16
    %vm5300 = vc.u32 %v5292, %v5296
    %v5301 = vsel %vm5300, 1, 0
    %v5302 = vadd.s32 %v5292, %v5296
    %v5303 = vadd.s32 %v5295, %v5301
    %vm5304 = vc.u32 %v5302, %v5298
    %v5305 = vsel %vm5304, 1, 0
    %v5306 = vadd.s32 %v5302, %v5298
    %v5307 = vadd.s32 %v5303, %v5305
    %v5308 = vadd.s32 %v5307, %v5297
    %v5309 = vadd.s32 %v5308, %v5299
    %v5310 = vand.u32 %v5287, 65535
    %v5311 = vshrl.u32 %v5287, 16
    %v5312 = vand.u32 %v5282, 65535
    %v5313 = vshrl.u32 %v5282, 16
    %v5314 = vmul.u32 %v5310, %v5312
    %v5315 = vmul.u32 %v5310, %v5313
    %v5316 = vmul.u32 %v5311, %v5312
    %v5317 = vmul.u32 %v5311, %v5313
    %v5318 = vshll.u32 %v5315, 16
    %v5319 = vshrl.u32 %v5315, 16
    %v5320 = vshll.u32 %v5316, 16
    %v5321 = vshrl.u32 %v5316, 16
    %vm5322 = vc.u32 %v5314, %v5318
    %v5323 = vsel %vm5322, 1, 0
    %v5324 = vadd.s32 %v5314, %v5318
    %v5325 = vadd.s32 %v5317, %v5323
    %vm5326 = vc.u32 %v5324, %v5320
    %v5327 = vsel %vm5326, 1, 0
    %v5328 = vadd.s32 %v5324, %v5320
    %v5329 = vadd.s32 %v5325, %v5327
    %v5330 = vadd.s32 %v5329, %v5319
    %v5331 = vadd.s32 %v5330, %v5321
    %v5332 = vmul.u32 %v5287, %v5278
    %v5333 = vadd.s32 %v5309, %v5328
    %vm5334 = vc.u32 %v5309, %v5328
    %v5335 = vadd.s32 %v5331, 1
    %v5336 = vsel %vm5334, %v5335, %v5331
    %v5337 = vadd.s32 %v5332, %v5336
    %v5338 = vadd.s32 %v5337, 536870912
    %v5339 = vshrl.u32 %v5338, 30
    %v5340 = vshll.u32 %v5339, 30
    %v5341 = vsub.s32 %v5337, %v5340
    %vm5342 = vcmp.lt.s32.totalorder %v5341, 0
    %v5343 = vsub.s32 0, %v5341
    %v5344 = vsel %vm5342, %v5343, %v5341
    %v5345 = vclz %v5344
    %v5346 = vsub.s32 %v5345, 2
    %vm5347 = vcmp.gt.s32.totalorder 0, %v5346
    %v5348 = vsel %vm5347, 0, %v5346
    %v5349 = vsub.s32 32, %v5348
    %v5350 = vshll.u32 %v5341, %v5348
    %v5351 = vshrl.u32 %v5333, %v5349
    %v5352 = vor.u32 %v5350, %v5351
    %v5353 = vsub.s32 4294967266, %v5348
    %v5354 = vadd.s32 %v5353, 127
    %v5355 = vshll.u32 %v5354, 23
    %v5356 = vor.u32 4788187, %v5355
    %v5357 = vand.u32 2147483647, %v5356
    %v5359 = vcvt.s32.f32 %v5352
    %v5360 = vmul.f32 %v5359, %v5357
    %v5361 = vxor.u32 %v5360, 2147483648
    %v5362 = vsel %vm5241, %v5361, %v5360
    %v5363 = vsub.s32 4, %v5339
    %v5364 = vsel %vm5241, %v5363, %v5339
    %v5365 = vsel %vm5240, %v2912, %v5362
    %v5366 = vsel %vm5240, 0, %v5364
    %v5367 = vmul.f32 %v5365, %v5365
    %v5368 = vmul.f32 %v5367, -0.001358992
    %v5369 = vadd.f32 %v5368, 0.041655596
    %v5370 = vmul.f32 %v5367, %v5369
    %v5371 = vadd.f32 %v5370, -0.4999988
    %v5372 = vmul.f32 %v5367, %v5371
    %v5373 = vadd.f32 1.0, %v5372
    %v5374 = vmul.f32 %v5365, %v5365
    %v5375 = vmul.f32 %v5374, -0.00019511016
    %v5376 = vadd.f32 %v5375, 0.008332121
    %v5377 = vmul.f32 %v5374, %v5376
    %v5378 = vadd.f32 %v5377, -0.16666654
    %v5379 = vmul.f32 %v5374, %v5378
    %v5380 = vadd.f32 %v5379, 1.0
    %v5381 = vmul.f32 %v5380, %v5365
    %vm5382 = vweird.f32 %v2912
    %v5383 = vadd.s32 %v5366, 3
    %v5384 = vand.u32 %v5383, 3
    %vm5385 = vcmp.lt.s32.totalorder %v5384, 2
    %vm5386 = vcmp.eq.s32.totalorder %v5384, 0
    %v5387 = vxor.u32 %v5381, 2147483648
    %v5388 = vsel %vm5386, %v5373, %v5387
    %vm5389 = vcmp.eq.s32.totalorder %v5384, 2
    %v5390 = vxor.u32 %v5373, 2147483648
    %v5391 = vsel %vm5389, %v5390, %v5381
    %v5392 = vsel %vm5385, %v5388, %v5391
    %v5393 = vsel %vm5382, nan, %v5392
    %5394 = vset.pattern.permute.xlu0 2
    %5395 = vperm.xlu0 %5394, %v30
    %v5396 = vpop.permute.xlu0 %5395
    %5398 = vset.pattern.permute.xlu0 2
    %5399 = vperm.xlu0 %5398, %v31
    %v5400 = vpop.permute.xlu0 %5399
    %v5403 = vsel %vm2723, %v24, 0
    %v5406 = vsel %vm2723, %v25, 0
    %5408 = vmatpush.msra.mxu0 0.0
    %5409 = vmatpush.msra.mxu0 0.0
    %5410 = vmatpush.msra.mxu0 0.0
    %5411 = vmatpush.msra.mxu0 0.0
    %5412 = vmatpush.msra.mxu0 0.0
    %5413 = vmatpush.msra.mxu0 0.0
    %5414 = vmatpush.msra.mxu0 0.0
    %5415 = vmatpush.msra.mxu0 0.0
    %5416 = vmatpush.msra.mxu0 0.0
    %5417 = vmatpush.msra.mxu0 0.0
    %5418 = vmatpush.msra.mxu0 0.0
    %5419 = vmatpush.msra.mxu0 0.0
    %5420 = vmatpush.msra.mxu0 0.0
    %5421 = vmatpush.msra.mxu0 0.0
    %5422 = vmatpush.msra.mxu0 %v4308
    %5423 = vmatpush.msra.mxu0 %v3068
    %5424 = vmatmul.f32.gmra.mxu0 %v5403
    %v5425 = vpop.f32.mrf.mxu0
    %v5426 = vadd.f32 %v5396, %v5425
    %5427 = vmatmul.f32.gmra.mxu0 %v5406
    %v5428 = vpop.f32.mrf.mxu0
    %v5429 = vadd.f32 %v5400, %v5428
    %5430 = vdwg.mxu0
    %5431 = vmatpush.msra.mxu0 0.0
    %5432 = vmatpush.msra.mxu0 0.0
    %5433 = vmatpush.msra.mxu0 0.0
    %5434 = vmatpush.msra.mxu0 0.0
    %5435 = vmatpush.msra.mxu0 0.0
    %5436 = vmatpush.msra.mxu0 0.0
    %5437 = vmatpush.msra.mxu0 0.0
    %5438 = vmatpush.msra.mxu0 0.0
    %5439 = vmatpush.msra.mxu0 0.0
    %5440 = vmatpush.msra.mxu0 0.0
    %5441 = vmatpush.msra.mxu0 0.0
    %5442 = vmatpush.msra.mxu0 0.0
    %5443 = vmatpush.msra.mxu0 0.0
    %5444 = vmatpush.msra.mxu0 0.0
    %5445 = vmatpush.msra.mxu0 %v4463
    %5446 = vmatpush.msra.mxu0 %v3223
    %5447 = vmatmul.f32.gmra.mxu0 %v5403
    %v5448 = vpop.f32.mrf.mxu0
    %v5449 = vadd.f32 %v5396, %v5448
    %5450 = vmatmul.f32.gmra.mxu0 %v5406
    %v5451 = vpop.f32.mrf.mxu0
    %v5452 = vadd.f32 %v5400, %v5451
    %5453 = vdwg.mxu0
    %5454 = vmatpush.msra.mxu0 0.0
    %5455 = vmatpush.msra.mxu0 0.0
    %5456 = vmatpush.msra.mxu0 0.0
    %5457 = vmatpush.msra.mxu0 0.0
    %5458 = vmatpush.msra.mxu0 0.0
    %5459 = vmatpush.msra.mxu0 0.0
    %5460 = vmatpush.msra.mxu0 0.0
    %5461 = vmatpush.msra.mxu0 0.0
    %5462 = vmatpush.msra.mxu0 0.0
    %5463 = vmatpush.msra.mxu0 0.0
    %5464 = vmatpush.msra.mxu0 0.0
    %5465 = vmatpush.msra.mxu0 0.0
    %5466 = vmatpush.msra.mxu0 0.0
    %5467 = vmatpush.msra.mxu0 0.0
    %5468 = vmatpush.msra.mxu0 %v4618
    %5469 = vmatpush.msra.mxu0 %v3378
    %5470 = vmatmul.f32.gmra.mxu0 %v5403
    %v5471 = vpop.f32.mrf.mxu0
    %v5472 = vadd.f32 %v5396, %v5471
    %5473 = vmatmul.f32.gmra.mxu0 %v5406
    %v5474 = vpop.f32.mrf.mxu0
    %v5475 = vadd.f32 %v5400, %v5474
    %5476 = vdwg.mxu0
    %5477 = vmatpush.msra.mxu0 0.0
    %5478 = vmatpush.msra.mxu0 0.0
    %5479 = vmatpush.msra.mxu0 0.0
    %5480 = vmatpush.msra.mxu0 0.0
    %5481 = vmatpush.msra.mxu0 0.0
    %5482 = vmatpush.msra.mxu0 0.0
    %5483 = vmatpush.msra.mxu0 0.0
    %5484 = vmatpush.msra.mxu0 0.0
    %5485 = vmatpush.msra.mxu0 0.0
    %5486 = vmatpush.msra.mxu0 0.0
    %5487 = vmatpush.msra.mxu0 0.0
    %5488 = vmatpush.msra.mxu0 0.0
    %5489 = vmatpush.msra.mxu0 0.0
    %5490 = vmatpush.msra.mxu0 0.0
    %5491 = vmatpush.msra.mxu0 %v4773
    %5492 = vmatpush.msra.mxu0 %v3533
    %5493 = vmatmul.f32.gmra.mxu0 %v5403
    %v5494 = vpop.f32.mrf.mxu0
    %v5495 = vadd.f32 %v5396, %v5494
    %5496 = vmatmul.f32.gmra.mxu0 %v5406
    %v5497 = vpop.f32.mrf.mxu0
    %v5498 = vadd.f32 %v5400, %v5497
    %5499 = vdwg.mxu0
    %5500 = vmatpush.msra.mxu0 0.0
    %5501 = vmatpush.msra.mxu0 0.0
    %5502 = vmatpush.msra.mxu0 0.0
    %5503 = vmatpush.msra.mxu0 0.0
    %5504 = vmatpush.msra.mxu0 0.0
    %5505 = vmatpush.msra.mxu0 0.0
    %5506 = vmatpush.msra.mxu0 0.0
    %5507 = vmatpush.msra.mxu0 0.0
    %5508 = vmatpush.msra.mxu0 0.0
    %5509 = vmatpush.msra.mxu0 0.0
    %5510 = vmatpush.msra.mxu0 0.0
    %5511 = vmatpush.msra.mxu0 0.0
    %5512 = vmatpush.msra.mxu0 0.0
    %5513 = vmatpush.msra.mxu0 0.0
    %5514 = vmatpush.msra.mxu0 %v4928
    %5515 = vmatpush.msra.mxu0 %v3688
    %5516 = vmatmul.f32.gmra.mxu0 %v5403
    %v5517 = vpop.f32.mrf.mxu0
    %v5518 = vadd.f32 %v5396, %v5517
    %5519 = vmatmul.f32.gmra.mxu0 %v5406
    %v5520 = vpop.f32.mrf.mxu0
    %v5521 = vadd.f32 %v5400, %v5520
    %5522 = vdwg.mxu0
    %5523 = vmatpush.msra.mxu0 0.0
    %5524 = vmatpush.msra.mxu0 0.0
    %5525 = vmatpush.msra.mxu0 0.0
    %5526 = vmatpush.msra.mxu0 0.0
    %5527 = vmatpush.msra.mxu0 0.0
    %5528 = vmatpush.msra.mxu0 0.0
    %5529 = vmatpush.msra.mxu0 0.0
    %5530 = vmatpush.msra.mxu0 0.0
    %5531 = vmatpush.msra.mxu0 0.0
    %5532 = vmatpush.msra.mxu0 0.0
    %5533 = vmatpush.msra.mxu0 0.0
    %5534 = vmatpush.msra.mxu0 0.0
    %5535 = vmatpush.msra.mxu0 0.0
    %5536 = vmatpush.msra.mxu0 0.0
    %5537 = vmatpush.msra.mxu0 %v5083
    %5538 = vmatpush.msra.mxu0 %v3843
    %5539 = vmatmul.f32.gmra.mxu0 %v5403
    %v5540 = vpop.f32.mrf.mxu0
    %v5541 = vadd.f32 %v5396, %v5540
    %5542 = vmatmul.f32.gmra.mxu0 %v5406
    %v5543 = vpop.f32.mrf.mxu0
    %v5544 = vadd.f32 %v5400, %v5543
    %5545 = vdwg.mxu0
    %5546 = vmatpush.msra.mxu0 0.0
    %5547 = vmatpush.msra.mxu0 0.0
    %5548 = vmatpush.msra.mxu0 0.0
    %5549 = vmatpush.msra.mxu0 0.0
    %5550 = vmatpush.msra.mxu0 0.0
    %5551 = vmatpush.msra.mxu0 0.0
    %5552 = vmatpush.msra.mxu0 0.0
    %5553 = vmatpush.msra.mxu0 0.0
    %5554 = vmatpush.msra.mxu0 0.0
    %5555 = vmatpush.msra.mxu0 0.0
    %5556 = vmatpush.msra.mxu0 0.0
    %5557 = vmatpush.msra.mxu0 0.0
    %5558 = vmatpush.msra.mxu0 0.0
    %5559 = vmatpush.msra.mxu0 0.0
    %5560 = vmatpush.msra.mxu0 %v5238
    %5561 = vmatpush.msra.mxu0 %v3998
    %5562 = vmatmul.f32.gmra.mxu0 %v5403
    %v5563 = vpop.f32.mrf.mxu0
    %v5564 = vadd.f32 %v5396, %v5563
    %5565 = vmatmul.f32.gmra.mxu0 %v5406
    %v5566 = vpop.f32.mrf.mxu0
    %v5567 = vadd.f32 %v5400, %v5566
    %5568 = vdwg.mxu0
    %5569 = vmatpush.msra.mxu0 0.0
    %5570 = vmatpush.msra.mxu0 0.0
    %5571 = vmatpush.msra.mxu0 0.0
    %5572 = vmatpush.msra.mxu0 0.0
    %5573 = vmatpush.msra.mxu0 0.0
    %5574 = vmatpush.msra.mxu0 0.0
    %5575 = vmatpush.msra.mxu0 0.0
    %5576 = vmatpush.msra.mxu0 0.0
    %5577 = vmatpush.msra.mxu0 0.0
    %5578 = vmatpush.msra.mxu0 0.0
    %5579 = vmatpush.msra.mxu0 0.0
    %5580 = vmatpush.msra.mxu0 0.0
    %5581 = vmatpush.msra.mxu0 0.0
    %5582 = vmatpush.msra.mxu0 0.0
    %5583 = vmatpush.msra.mxu0 %v5393
    %5584 = vmatpush.msra.mxu0 %v4153
    %5585 = vmatmul.f32.gmra.mxu0 %v5403
    %v5586 = vpop.f32.mrf.mxu0
    %v5587 = vadd.f32 %v5396, %v5586
    %5588 = vmatmul.f32.gmra.mxu0 %v5406
    %v5589 = vpop.f32.mrf.mxu0
    %v5590 = vadd.f32 %v5400, %v5589
    %5591 = vdwg.mxu0
    %v5592 = vand.u32 2147483647, %v5426
    %vm5593 = vcmp.le.f32.partialorder %v5592, 0.7853982
    %vm5594 = vcmp.lt.s32.totalorder %v5426, 0
    %v5595 = vand.u32 %v5426, 2139095040
    %v5596 = vshrl.u32 %v5595, 23
    %v5597 = vsub.s32 %v5596, 127
    %v5598 = vand.u32 2147483647, %v5426
    %v5599 = vand.u32 %v5598, 8388607
    %v5600 = vor.u32 %v5599, 8388608
    %v5601 = vsub.s32 0, %v5600
    %v5602 = vadd.s32 %v5597, 1
    %vm5603 = vcmp.gt.s32.totalorder %v5602, 0
    %v5604 = vsel %vm5603, %v5602, 0
    %v5605 = vshrl.u32 %v5604, 5
    %v5606 = vand.u32 %v5604, 31
    %v5607 = vsub.s32 32, %v5606
    %v5608 = vshrl.u32 683565275, %v5607
    %v5609 = vshll.u32 683565275, %v5606
    %v5610 = vshrl.u32 2475754826, %v5607
    %v5611 = vor.u32 %v5609, %v5610
    %v5612 = vshll.u32 2475754826, %v5606
    %v5613 = vshrl.u32 2131351028, %v5607
    %v5614 = vor.u32 %v5612, %v5613
    %v5615 = vshll.u32 2131351028, %v5606
    %v5616 = vshrl.u32 2102212464, %v5607
    %v5617 = vor.u32 %v5615, %v5616
    %v5618 = vshll.u32 2102212464, %v5606
    %v5619 = vshrl.u32 920167782, %v5607
    %v5620 = vor.u32 %v5618, %v5619
    %v5621 = vshll.u32 920167782, %v5606
    %v5622 = vshrl.u32 1326507024, %v5607
    %v5623 = vor.u32 %v5621, %v5622
    %vm5624 = vcmp.lt.s32.totalorder %v5605, 1
    %vm5625 = vcmp.lt.s32.totalorder %v5605, 2
    %vm5626 = vcmp.lt.s32.totalorder %v5605, 3
    %vm5627 = vcmp.lt.s32.totalorder %v5605, 4
    %v5628 = vsel %vm5624, %v5608, %v5611
    %v5629 = vsel %vm5627, %v5617, 2102212464
    %v5630 = vsel %vm5626, %v5614, %v5629
    %v5631 = vsel %vm5625, %v5628, %v5630
    %v5632 = vsel %vm5624, %v5611, %v5614
    %v5633 = vsel %vm5627, %v5620, 920167782
    %v5634 = vsel %vm5626, %v5617, %v5633
    %v5635 = vsel %vm5625, %v5632, %v5634
    %v5636 = vsel %vm5624, %v5614, %v5617
    %v5637 = vsel %vm5627, %v5623, 1326507024
    %v5638 = vsel %vm5626, %v5620, %v5637
    %v5639 = vsel %vm5625, %v5636, %v5638
    %v5640 = vshll.u32 %v5600, 8
    %v5641 = vand.u32 %v5640, 65535
    %v5642 = vshrl.u32 %v5640, 16
    %v5643 = vand.u32 %v5639, 65535
    %v5644 = vshrl.u32 %v5639, 16
    %v5645 = vmul.u32 %v5641, %v5643
    %v5646 = vmul.u32 %v5641, %v5644
    %v5647 = vmul.u32 %v5642, %v5643
    %v5648 = vmul.u32 %v5642, %v5644
    %v5649 = vshll.u32 %v5646, 16
    %v5650 = vshrl.u32 %v5646, 16
    %v5651 = vshll.u32 %v5647, 16
    %v5652 = vshrl.u32 %v5647, 16
    %vm5653 = vc.u32 %v5645, %v5649
    %v5654 = vsel %vm5653, 1, 0
    %v5655 = vadd.s32 %v5645, %v5649
    %v5656 = vadd.s32 %v5648, %v5654
    %vm5657 = vc.u32 %v5655, %v5651
    %v5658 = vsel %vm5657, 1, 0
    %v5659 = vadd.s32 %v5655, %v5651
    %v5660 = vadd.s32 %v5656, %v5658
    %v5661 = vadd.s32 %v5660, %v5650
    %v5662 = vadd.s32 %v5661, %v5652
    %v5663 = vand.u32 %v5640, 65535
    %v5664 = vshrl.u32 %v5640, 16
    %v5665 = vand.u32 %v5635, 65535
    %v5666 = vshrl.u32 %v5635, 16
    %v5667 = vmul.u32 %v5663, %v5665
    %v5668 = vmul.u32 %v5663, %v5666
    %v5669 = vmul.u32 %v5664, %v5665
    %v5670 = vmul.u32 %v5664, %v5666
    %v5671 = vshll.u32 %v5668, 16
    %v5672 = vshrl.u32 %v5668, 16
    %v5673 = vshll.u32 %v5669, 16
    %v5674 = vshrl.u32 %v5669, 16
    %vm5675 = vc.u32 %v5667, %v5671
    %v5676 = vsel %vm5675, 1, 0
    %v5677 = vadd.s32 %v5667, %v5671
    %v5678 = vadd.s32 %v5670, %v5676
    %vm5679 = vc.u32 %v5677, %v5673
    %v5680 = vsel %vm5679, 1, 0
    %v5681 = vadd.s32 %v5677, %v5673
    %v5682 = vadd.s32 %v5678, %v5680
    %v5683 = vadd.s32 %v5682, %v5672
    %v5684 = vadd.s32 %v5683, %v5674
    %v5685 = vmul.u32 %v5640, %v5631
    %v5686 = vadd.s32 %v5662, %v5681
    %vm5687 = vc.u32 %v5662, %v5681
    %v5688 = vadd.s32 %v5684, 1
    %v5689 = vsel %vm5687, %v5688, %v5684
    %v5690 = vadd.s32 %v5685, %v5689
    %v5691 = vadd.s32 %v5690, 536870912
    %v5692 = vshrl.u32 %v5691, 30
    %v5693 = vshll.u32 %v5692, 30
    %v5694 = vsub.s32 %v5690, %v5693
    %vm5695 = vcmp.lt.s32.totalorder %v5694, 0
    %v5696 = vsub.s32 0, %v5694
    %v5697 = vsel %vm5695, %v5696, %v5694
    %v5698 = vclz %v5697
    %v5699 = vsub.s32 %v5698, 2
    %vm5700 = vcmp.gt.s32.totalorder 0, %v5699
    %v5701 = vsel %vm5700, 0, %v5699
    %v5702 = vsub.s32 32, %v5701
    %v5703 = vshll.u32 %v5694, %v5701
    %v5704 = vshrl.u32 %v5686, %v5702
    %v5705 = vor.u32 %v5703, %v5704
    %v5706 = vsub.s32 4294967266, %v5701
    %v5707 = vadd.s32 %v5706, 127
    %v5708 = vshll.u32 %v5707, 23
    %v5709 = vor.u32 4788187, %v5708
    %v5710 = vand.u32 2147483647, %v5709
    %v5712 = vcvt.s32.f32 %v5705
    %v5713 = vmul.f32 %v5712, %v5710
    %v5714 = vxor.u32 %v5713, 2147483648
    %v5715 = vsel %vm5594, %v5714, %v5713
    %v5716 = vsub.s32 4, %v5692
    %v5717 = vsel %vm5594, %v5716, %v5692
    %v5718 = vsel %vm5593, %v5426, %v5715
    %v5719 = vsel %vm5593, 0, %v5717
    %v5720 = vmul.f32 %v5718, %v5718
    %v5721 = vmul.f32 %v5720, -0.001358992
    %v5722 = vadd.f32 %v5721, 0.041655596
    %v5723 = vmul.f32 %v5720, %v5722
    %v5724 = vadd.f32 %v5723, -0.4999988
    %v5725 = vmul.f32 %v5720, %v5724
    %v5726 = vadd.f32 1.0, %v5725
    %v5727 = vmul.f32 %v5718, %v5718
    %v5728 = vmul.f32 %v5727, -0.00019511016
    %v5729 = vadd.f32 %v5728, 0.008332121
    %v5730 = vmul.f32 %v5727, %v5729
    %v5731 = vadd.f32 %v5730, -0.16666654
    %v5732 = vmul.f32 %v5727, %v5731
    %v5733 = vadd.f32 %v5732, 1.0
    %v5734 = vmul.f32 %v5733, %v5718
    %vm5735 = vweird.f32 %v5426
    %v5736 = vadd.s32 %v5719, 3
    %v5737 = vand.u32 %v5736, 3
    %vm5738 = vcmp.lt.s32.totalorder %v5737, 2
    %vm5739 = vcmp.eq.s32.totalorder %v5737, 0
    %v5740 = vxor.u32 %v5734, 2147483648
    %v5741 = vsel %vm5739, %v5726, %v5740
    %vm5742 = vcmp.eq.s32.totalorder %v5737, 2
    %v5743 = vxor.u32 %v5726, 2147483648
    %v5744 = vsel %vm5742, %v5743, %v5734
    %v5745 = vsel %vm5738, %v5741, %v5744
    %v5746 = vsel %vm5735, nan, %v5745
    %v5747 = vand.u32 2147483647, %v5449
    %vm5748 = vcmp.le.f32.partialorder %v5747, 0.7853982
    %vm5749 = vcmp.lt.s32.totalorder %v5449, 0
    %v5750 = vand.u32 %v5449, 2139095040
    %v5751 = vshrl.u32 %v5750, 23
    %v5752 = vsub.s32 %v5751, 127
    %v5753 = vand.u32 2147483647, %v5449
    %v5754 = vand.u32 %v5753, 8388607
    %v5755 = vor.u32 %v5754, 8388608
    %v5756 = vsub.s32 0, %v5755
    %v5757 = vadd.s32 %v5752, 1
    %vm5758 = vcmp.gt.s32.totalorder %v5757, 0
    %v5759 = vsel %vm5758, %v5757, 0
    %v5760 = vshrl.u32 %v5759, 5
    %v5761 = vand.u32 %v5759, 31
    %v5762 = vsub.s32 32, %v5761
    %v5763 = vshrl.u32 683565275, %v5762
    %v5764 = vshll.u32 683565275, %v5761
    %v5765 = vshrl.u32 2475754826, %v5762
    %v5766 = vor.u32 %v5764, %v5765
    %v5767 = vshll.u32 2475754826, %v5761
    %v5768 = vshrl.u32 2131351028, %v5762
    %v5769 = vor.u32 %v5767, %v5768
    %v5770 = vshll.u32 2131351028, %v5761
    %v5771 = vshrl.u32 2102212464, %v5762
    %v5772 = vor.u32 %v5770, %v5771
    %v5773 = vshll.u32 2102212464, %v5761
    %v5774 = vshrl.u32 920167782, %v5762
    %v5775 = vor.u32 %v5773, %v5774
    %v5776 = vshll.u32 920167782, %v5761
    %v5777 = vshrl.u32 1326507024, %v5762
    %v5778 = vor.u32 %v5776, %v5777
    %vm5779 = vcmp.lt.s32.totalorder %v5760, 1
    %vm5780 = vcmp.lt.s32.totalorder %v5760, 2
    %vm5781 = vcmp.lt.s32.totalorder %v5760, 3
    %vm5782 = vcmp.lt.s32.totalorder %v5760, 4
    %v5783 = vsel %vm5779, %v5763, %v5766
    %v5784 = vsel %vm5782, %v5772, 2102212464
    %v5785 = vsel %vm5781, %v5769, %v5784
    %v5786 = vsel %vm5780, %v5783, %v5785
    %v5787 = vsel %vm5779, %v5766, %v5769
    %v5788 = vsel %vm5782, %v5775, 920167782
    %v5789 = vsel %vm5781, %v5772, %v5788
    %v5790 = vsel %vm5780, %v5787, %v5789
    %v5791 = vsel %vm5779, %v5769, %v5772
    %v5792 = vsel %vm5782, %v5778, 1326507024
    %v5793 = vsel %vm5781, %v5775, %v5792
    %v5794 = vsel %vm5780, %v5791, %v5793
    %v5795 = vshll.u32 %v5755, 8
    %v5796 = vand.u32 %v5795, 65535
    %v5797 = vshrl.u32 %v5795, 16
    %v5798 = vand.u32 %v5794, 65535
    %v5799 = vshrl.u32 %v5794, 16
    %v5800 = vmul.u32 %v5796, %v5798
    %v5801 = vmul.u32 %v5796, %v5799
    %v5802 = vmul.u32 %v5797, %v5798
    %v5803 = vmul.u32 %v5797, %v5799
    %v5804 = vshll.u32 %v5801, 16
    %v5805 = vshrl.u32 %v5801, 16
    %v5806 = vshll.u32 %v5802, 16
    %v5807 = vshrl.u32 %v5802, 16
    %vm5808 = vc.u32 %v5800, %v5804
    %v5809 = vsel %vm5808, 1, 0
    %v5810 = vadd.s32 %v5800, %v5804
    %v5811 = vadd.s32 %v5803, %v5809
    %vm5812 = vc.u32 %v5810, %v5806
    %v5813 = vsel %vm5812, 1, 0
    %v5814 = vadd.s32 %v5810, %v5806
    %v5815 = vadd.s32 %v5811, %v5813
    %v5816 = vadd.s32 %v5815, %v5805
    %v5817 = vadd.s32 %v5816, %v5807
    %v5818 = vand.u32 %v5795, 65535
    %v5819 = vshrl.u32 %v5795, 16
    %v5820 = vand.u32 %v5790, 65535
    %v5821 = vshrl.u32 %v5790, 16
    %v5822 = vmul.u32 %v5818, %v5820
    %v5823 = vmul.u32 %v5818, %v5821
    %v5824 = vmul.u32 %v5819, %v5820
    %v5825 = vmul.u32 %v5819, %v5821
    %v5826 = vshll.u32 %v5823, 16
    %v5827 = vshrl.u32 %v5823, 16
    %v5828 = vshll.u32 %v5824, 16
    %v5829 = vshrl.u32 %v5824, 16
    %vm5830 = vc.u32 %v5822, %v5826
    %v5831 = vsel %vm5830, 1, 0
    %v5832 = vadd.s32 %v5822, %v5826
    %v5833 = vadd.s32 %v5825, %v5831
    %vm5834 = vc.u32 %v5832, %v5828
    %v5835 = vsel %vm5834, 1, 0
    %v5836 = vadd.s32 %v5832, %v5828
    %v5837 = vadd.s32 %v5833, %v5835
    %v5838 = vadd.s32 %v5837, %v5827
    %v5839 = vadd.s32 %v5838, %v5829
    %v5840 = vmul.u32 %v5795, %v5786
    %v5841 = vadd.s32 %v5817, %v5836
    %vm5842 = vc.u32 %v5817, %v5836
    %v5843 = vadd.s32 %v5839, 1
    %v5844 = vsel %vm5842, %v5843, %v5839
    %v5845 = vadd.s32 %v5840, %v5844
    %v5846 = vadd.s32 %v5845, 536870912
    %v5847 = vshrl.u32 %v5846, 30
    %v5848 = vshll.u32 %v5847, 30
    %v5849 = vsub.s32 %v5845, %v5848
    %vm5850 = vcmp.lt.s32.totalorder %v5849, 0
    %v5851 = vsub.s32 0, %v5849
    %v5852 = vsel %vm5850, %v5851, %v5849
    %v5853 = vclz %v5852
    %v5854 = vsub.s32 %v5853, 2
    %vm5855 = vcmp.gt.s32.totalorder 0, %v5854
    %v5856 = vsel %vm5855, 0, %v5854
    %v5857 = vsub.s32 32, %v5856
    %v5858 = vshll.u32 %v5849, %v5856
    %v5859 = vshrl.u32 %v5841, %v5857
    %v5860 = vor.u32 %v5858, %v5859
    %v5861 = vsub.s32 4294967266, %v5856
    %v5862 = vadd.s32 %v5861, 127
    %v5863 = vshll.u32 %v5862, 23
    %v5864 = vor.u32 4788187, %v5863
    %v5865 = vand.u32 2147483647, %v5864
    %v5867 = vcvt.s32.f32 %v5860
    %v5868 = vmul.f32 %v5867, %v5865
    %v5869 = vxor.u32 %v5868, 2147483648
    %v5870 = vsel %vm5749, %v5869, %v5868
    %v5871 = vsub.s32 4, %v5847
    %v5872 = vsel %vm5749, %v5871, %v5847
    %v5873 = vsel %vm5748, %v5449, %v5870
    %v5874 = vsel %vm5748, 0, %v5872
    %v5875 = vmul.f32 %v5873, %v5873
    %v5876 = vmul.f32 %v5875, -0.001358992
    %v5877 = vadd.f32 %v5876, 0.041655596
    %v5878 = vmul.f32 %v5875, %v5877
    %v5879 = vadd.f32 %v5878, -0.4999988
    %v5880 = vmul.f32 %v5875, %v5879
    %v5881 = vadd.f32 1.0, %v5880
    %v5882 = vmul.f32 %v5873, %v5873
    %v5883 = vmul.f32 %v5882, -0.00019511016
    %v5884 = vadd.f32 %v5883, 0.008332121
    %v5885 = vmul.f32 %v5882, %v5884
    %v5886 = vadd.f32 %v5885, -0.16666654
    %v5887 = vmul.f32 %v5882, %v5886
    %v5888 = vadd.f32 %v5887, 1.0
    %v5889 = vmul.f32 %v5888, %v5873
    %vm5890 = vweird.f32 %v5449
    %v5891 = vadd.s32 %v5874, 3
    %v5892 = vand.u32 %v5891, 3
    %vm5893 = vcmp.lt.s32.totalorder %v5892, 2
    %vm5894 = vcmp.eq.s32.totalorder %v5892, 0
    %v5895 = vxor.u32 %v5889, 2147483648
    %v5896 = vsel %vm5894, %v5881, %v5895
    %vm5897 = vcmp.eq.s32.totalorder %v5892, 2
    %v5898 = vxor.u32 %v5881, 2147483648
    %v5899 = vsel %vm5897, %v5898, %v5889
    %v5900 = vsel %vm5893, %v5896, %v5899
    %v5901 = vsel %vm5890, nan, %v5900
    %v5902 = vand.u32 2147483647, %v5472
    %vm5903 = vcmp.le.f32.partialorder %v5902, 0.7853982
    %vm5904 = vcmp.lt.s32.totalorder %v5472, 0
    %v5905 = vand.u32 %v5472, 2139095040
    %v5906 = vshrl.u32 %v5905, 23
    %v5907 = vsub.s32 %v5906, 127
    %v5908 = vand.u32 2147483647, %v5472
    %v5909 = vand.u32 %v5908, 8388607
    %v5910 = vor.u32 %v5909, 8388608
    %v5911 = vsub.s32 0, %v5910
    %v5912 = vadd.s32 %v5907, 1
    %vm5913 = vcmp.gt.s32.totalorder %v5912, 0
    %v5914 = vsel %vm5913, %v5912, 0
    %v5915 = vshrl.u32 %v5914, 5
    %v5916 = vand.u32 %v5914, 31
    %v5917 = vsub.s32 32, %v5916
    %v5918 = vshrl.u32 683565275, %v5917
    %v5919 = vshll.u32 683565275, %v5916
    %v5920 = vshrl.u32 2475754826, %v5917
    %v5921 = vor.u32 %v5919, %v5920
    %v5922 = vshll.u32 2475754826, %v5916
    %v5923 = vshrl.u32 2131351028, %v5917
    %v5924 = vor.u32 %v5922, %v5923
    %v5925 = vshll.u32 2131351028, %v5916
    %v5926 = vshrl.u32 2102212464, %v5917
    %v5927 = vor.u32 %v5925, %v5926
    %v5928 = vshll.u32 2102212464, %v5916
    %v5929 = vshrl.u32 920167782, %v5917
    %v5930 = vor.u32 %v5928, %v5929
    %v5931 = vshll.u32 920167782, %v5916
    %v5932 = vshrl.u32 1326507024, %v5917
    %v5933 = vor.u32 %v5931, %v5932
    %vm5934 = vcmp.lt.s32.totalorder %v5915, 1
    %vm5935 = vcmp.lt.s32.totalorder %v5915, 2
    %vm5936 = vcmp.lt.s32.totalorder %v5915, 3
    %vm5937 = vcmp.lt.s32.totalorder %v5915, 4
    %v5938 = vsel %vm5934, %v5918, %v5921
    %v5939 = vsel %vm5937, %v5927, 2102212464
    %v5940 = vsel %vm5936, %v5924, %v5939
    %v5941 = vsel %vm5935, %v5938, %v5940
    %v5942 = vsel %vm5934, %v5921, %v5924
    %v5943 = vsel %vm5937, %v5930, 920167782
    %v5944 = vsel %vm5936, %v5927, %v5943
    %v5945 = vsel %vm5935, %v5942, %v5944
    %v5946 = vsel %vm5934, %v5924, %v5927
    %v5947 = vsel %vm5937, %v5933, 1326507024
    %v5948 = vsel %vm5936, %v5930, %v5947
    %v5949 = vsel %vm5935, %v5946, %v5948
    %v5950 = vshll.u32 %v5910, 8
    %v5951 = vand.u32 %v5950, 65535
    %v5952 = vshrl.u32 %v5950, 16
    %v5953 = vand.u32 %v5949, 65535
    %v5954 = vshrl.u32 %v5949, 16
    %v5955 = vmul.u32 %v5951, %v5953
    %v5956 = vmul.u32 %v5951, %v5954
    %v5957 = vmul.u32 %v5952, %v5953
    %v5958 = vmul.u32 %v5952, %v5954
    %v5959 = vshll.u32 %v5956, 16
    %v5960 = vshrl.u32 %v5956, 16
    %v5961 = vshll.u32 %v5957, 16
    %v5962 = vshrl.u32 %v5957, 16
    %vm5963 = vc.u32 %v5955, %v5959
    %v5964 = vsel %vm5963, 1, 0
    %v5965 = vadd.s32 %v5955, %v5959
    %v5966 = vadd.s32 %v5958, %v5964
    %vm5967 = vc.u32 %v5965, %v5961
    %v5968 = vsel %vm5967, 1, 0
    %v5969 = vadd.s32 %v5965, %v5961
    %v5970 = vadd.s32 %v5966, %v5968
    %v5971 = vadd.s32 %v5970, %v5960
    %v5972 = vadd.s32 %v5971, %v5962
    %v5973 = vand.u32 %v5950, 65535
    %v5974 = vshrl.u32 %v5950, 16
    %v5975 = vand.u32 %v5945, 65535
    %v5976 = vshrl.u32 %v5945, 16
    %v5977 = vmul.u32 %v5973, %v5975
    %v5978 = vmul.u32 %v5973, %v5976
    %v5979 = vmul.u32 %v5974, %v5975
    %v5980 = vmul.u32 %v5974, %v5976
    %v5981 = vshll.u32 %v5978, 16
    %v5982 = vshrl.u32 %v5978, 16
    %v5983 = vshll.u32 %v5979, 16
    %v5984 = vshrl.u32 %v5979, 16
    %vm5985 = vc.u32 %v5977, %v5981
    %v5986 = vsel %vm5985, 1, 0
    %v5987 = vadd.s32 %v5977, %v5981
    %v5988 = vadd.s32 %v5980, %v5986
    %vm5989 = vc.u32 %v5987, %v5983
    %v5990 = vsel %vm5989, 1, 0
    %v5991 = vadd.s32 %v5987, %v5983
    %v5992 = vadd.s32 %v5988, %v5990
    %v5993 = vadd.s32 %v5992, %v5982
    %v5994 = vadd.s32 %v5993, %v5984
    %v5995 = vmul.u32 %v5950, %v5941
    %v5996 = vadd.s32 %v5972, %v5991
    %vm5997 = vc.u32 %v5972, %v5991
    %v5998 = vadd.s32 %v5994, 1
    %v5999 = vsel %vm5997, %v5998, %v5994
    %v6000 = vadd.s32 %v5995, %v5999
    %v6001 = vadd.s32 %v6000, 536870912
    %v6002 = vshrl.u32 %v6001, 30
    %v6003 = vshll.u32 %v6002, 30
    %v6004 = vsub.s32 %v6000, %v6003
    %vm6005 = vcmp.lt.s32.totalorder %v6004, 0
    %v6006 = vsub.s32 0, %v6004
    %v6007 = vsel %vm6005, %v6006, %v6004
    %v6008 = vclz %v6007
    %v6009 = vsub.s32 %v6008, 2
    %vm6010 = vcmp.gt.s32.totalorder 0, %v6009
    %v6011 = vsel %vm6010, 0, %v6009
    %v6012 = vsub.s32 32, %v6011
    %v6013 = vshll.u32 %v6004, %v6011
    %v6014 = vshrl.u32 %v5996, %v6012
    %v6015 = vor.u32 %v6013, %v6014
    %v6016 = vsub.s32 4294967266, %v6011
    %v6017 = vadd.s32 %v6016, 127
    %v6018 = vshll.u32 %v6017, 23
    %v6019 = vor.u32 4788187, %v6018
    %v6020 = vand.u32 2147483647, %v6019
    %v6022 = vcvt.s32.f32 %v6015
    %v6023 = vmul.f32 %v6022, %v6020
    %v6024 = vxor.u32 %v6023, 2147483648
    %v6025 = vsel %vm5904, %v6024, %v6023
    %v6026 = vsub.s32 4, %v6002
    %v6027 = vsel %vm5904, %v6026, %v6002
    %v6028 = vsel %vm5903, %v5472, %v6025
    %v6029 = vsel %vm5903, 0, %v6027
    %v6030 = vmul.f32 %v6028, %v6028
    %v6031 = vmul.f32 %v6030, -0.001358992
    %v6032 = vadd.f32 %v6031, 0.041655596
    %v6033 = vmul.f32 %v6030, %v6032
    %v6034 = vadd.f32 %v6033, -0.4999988
    %v6035 = vmul.f32 %v6030, %v6034
    %v6036 = vadd.f32 1.0, %v6035
    %v6037 = vmul.f32 %v6028, %v6028
    %v6038 = vmul.f32 %v6037, -0.00019511016
    %v6039 = vadd.f32 %v6038, 0.008332121
    %v6040 = vmul.f32 %v6037, %v6039
    %v6041 = vadd.f32 %v6040, -0.16666654
    %v6042 = vmul.f32 %v6037, %v6041
    %v6043 = vadd.f32 %v6042, 1.0
    %v6044 = vmul.f32 %v6043, %v6028
    %vm6045 = vweird.f32 %v5472
    %v6046 = vadd.s32 %v6029, 3
    %v6047 = vand.u32 %v6046, 3
    %vm6048 = vcmp.lt.s32.totalorder %v6047, 2
    %vm6049 = vcmp.eq.s32.totalorder %v6047, 0
    %v6050 = vxor.u32 %v6044, 2147483648
    %v6051 = vsel %vm6049, %v6036, %v6050
    %vm6052 = vcmp.eq.s32.totalorder %v6047, 2
    %v6053 = vxor.u32 %v6036, 2147483648
    %v6054 = vsel %vm6052, %v6053, %v6044
    %v6055 = vsel %vm6048, %v6051, %v6054
    %v6056 = vsel %vm6045, nan, %v6055
    %v6057 = vand.u32 2147483647, %v5495
    %vm6058 = vcmp.le.f32.partialorder %v6057, 0.7853982
    %vm6059 = vcmp.lt.s32.totalorder %v5495, 0
    %v6060 = vand.u32 %v5495, 2139095040
    %v6061 = vshrl.u32 %v6060, 23
    %v6062 = vsub.s32 %v6061, 127
    %v6063 = vand.u32 2147483647, %v5495
    %v6064 = vand.u32 %v6063, 8388607
    %v6065 = vor.u32 %v6064, 8388608
    %v6066 = vsub.s32 0, %v6065
    %v6067 = vadd.s32 %v6062, 1
    %vm6068 = vcmp.gt.s32.totalorder %v6067, 0
    %v6069 = vsel %vm6068, %v6067, 0
    %v6070 = vshrl.u32 %v6069, 5
    %v6071 = vand.u32 %v6069, 31
    %v6072 = vsub.s32 32, %v6071
    %v6073 = vshrl.u32 683565275, %v6072
    %v6074 = vshll.u32 683565275, %v6071
    %v6075 = vshrl.u32 2475754826, %v6072
    %v6076 = vor.u32 %v6074, %v6075
    %v6077 = vshll.u32 2475754826, %v6071
    %v6078 = vshrl.u32 2131351028, %v6072
    %v6079 = vor.u32 %v6077, %v6078
    %v6080 = vshll.u32 2131351028, %v6071
    %v6081 = vshrl.u32 2102212464, %v6072
    %v6082 = vor.u32 %v6080, %v6081
    %v6083 = vshll.u32 2102212464, %v6071
    %v6084 = vshrl.u32 920167782, %v6072
    %v6085 = vor.u32 %v6083, %v6084
    %v6086 = vshll.u32 920167782, %v6071
    %v6087 = vshrl.u32 1326507024, %v6072
    %v6088 = vor.u32 %v6086, %v6087
    %vm6089 = vcmp.lt.s32.totalorder %v6070, 1
    %vm6090 = vcmp.lt.s32.totalorder %v6070, 2
    %vm6091 = vcmp.lt.s32.totalorder %v6070, 3
    %vm6092 = vcmp.lt.s32.totalorder %v6070, 4
    %v6093 = vsel %vm6089, %v6073, %v6076
    %v6094 = vsel %vm6092, %v6082, 2102212464
    %v6095 = vsel %vm6091, %v6079, %v6094
    %v6096 = vsel %vm6090, %v6093, %v6095
    %v6097 = vsel %vm6089, %v6076, %v6079
    %v6098 = vsel %vm6092, %v6085, 920167782
    %v6099 = vsel %vm6091, %v6082, %v6098
    %v6100 = vsel %vm6090, %v6097, %v6099
    %v6101 = vsel %vm6089, %v6079, %v6082
    %v6102 = vsel %vm6092, %v6088, 1326507024
    %v6103 = vsel %vm6091, %v6085, %v6102
    %v6104 = vsel %vm6090, %v6101, %v6103
    %v6105 = vshll.u32 %v6065, 8
    %v6106 = vand.u32 %v6105, 65535
    %v6107 = vshrl.u32 %v6105, 16
    %v6108 = vand.u32 %v6104, 65535
    %v6109 = vshrl.u32 %v6104, 16
    %v6110 = vmul.u32 %v6106, %v6108
    %v6111 = vmul.u32 %v6106, %v6109
    %v6112 = vmul.u32 %v6107, %v6108
    %v6113 = vmul.u32 %v6107, %v6109
    %v6114 = vshll.u32 %v6111, 16
    %v6115 = vshrl.u32 %v6111, 16
    %v6116 = vshll.u32 %v6112, 16
    %v6117 = vshrl.u32 %v6112, 16
    %vm6118 = vc.u32 %v6110, %v6114
    %v6119 = vsel %vm6118, 1, 0
    %v6120 = vadd.s32 %v6110, %v6114
    %v6121 = vadd.s32 %v6113, %v6119
    %vm6122 = vc.u32 %v6120, %v6116
    %v6123 = vsel %vm6122, 1, 0
    %v6124 = vadd.s32 %v6120, %v6116
    %v6125 = vadd.s32 %v6121, %v6123
    %v6126 = vadd.s32 %v6125, %v6115
    %v6127 = vadd.s32 %v6126, %v6117
    %v6128 = vand.u32 %v6105, 65535
    %v6129 = vshrl.u32 %v6105, 16
    %v6130 = vand.u32 %v6100, 65535
    %v6131 = vshrl.u32 %v6100, 16
    %v6132 = vmul.u32 %v6128, %v6130
    %v6133 = vmul.u32 %v6128, %v6131
    %v6134 = vmul.u32 %v6129, %v6130
    %v6135 = vmul.u32 %v6129, %v6131
    %v6136 = vshll.u32 %v6133, 16
    %v6137 = vshrl.u32 %v6133, 16
    %v6138 = vshll.u32 %v6134, 16
    %v6139 = vshrl.u32 %v6134, 16
    %vm6140 = vc.u32 %v6132, %v6136
    %v6141 = vsel %vm6140, 1, 0
    %v6142 = vadd.s32 %v6132, %v6136
    %v6143 = vadd.s32 %v6135, %v6141
    %vm6144 = vc.u32 %v6142, %v6138
    %v6145 = vsel %vm6144, 1, 0
    %v6146 = vadd.s32 %v6142, %v6138
    %v6147 = vadd.s32 %v6143, %v6145
    %v6148 = vadd.s32 %v6147, %v6137
    %v6149 = vadd.s32 %v6148, %v6139
    %v6150 = vmul.u32 %v6105, %v6096
    %v6151 = vadd.s32 %v6127, %v6146
    %vm6152 = vc.u32 %v6127, %v6146
    %v6153 = vadd.s32 %v6149, 1
    %v6154 = vsel %vm6152, %v6153, %v6149
    %v6155 = vadd.s32 %v6150, %v6154
    %v6156 = vadd.s32 %v6155, 536870912
    %v6157 = vshrl.u32 %v6156, 30
    %v6158 = vshll.u32 %v6157, 30
    %v6159 = vsub.s32 %v6155, %v6158
    %vm6160 = vcmp.lt.s32.totalorder %v6159, 0
    %v6161 = vsub.s32 0, %v6159
    %v6162 = vsel %vm6160, %v6161, %v6159
    %v6163 = vclz %v6162
    %v6164 = vsub.s32 %v6163, 2
    %vm6165 = vcmp.gt.s32.totalorder 0, %v6164
    %v6166 = vsel %vm6165, 0, %v6164
    %v6167 = vsub.s32 32, %v6166
    %v6168 = vshll.u32 %v6159, %v6166
    %v6169 = vshrl.u32 %v6151, %v6167
    %v6170 = vor.u32 %v6168, %v6169
    %v6171 = vsub.s32 4294967266, %v6166
    %v6172 = vadd.s32 %v6171, 127
    %v6173 = vshll.u32 %v6172, 23
    %v6174 = vor.u32 4788187, %v6173
    %v6175 = vand.u32 2147483647, %v6174
    %v6177 = vcvt.s32.f32 %v6170
    %v6178 = vmul.f32 %v6177, %v6175
    %v6179 = vxor.u32 %v6178, 2147483648
    %v6180 = vsel %vm6059, %v6179, %v6178
    %v6181 = vsub.s32 4, %v6157
    %v6182 = vsel %vm6059, %v6181, %v6157
    %v6183 = vsel %vm6058, %v5495, %v6180
    %v6184 = vsel %vm6058, 0, %v6182
    %v6185 = vmul.f32 %v6183, %v6183
    %v6186 = vmul.f32 %v6185, -0.001358992
    %v6187 = vadd.f32 %v6186, 0.041655596
    %v6188 = vmul.f32 %v6185, %v6187
    %v6189 = vadd.f32 %v6188, -0.4999988
    %v6190 = vmul.f32 %v6185, %v6189
    %v6191 = vadd.f32 1.0, %v6190
    %v6192 = vmul.f32 %v6183, %v6183
    %v6193 = vmul.f32 %v6192, -0.00019511016
    %v6194 = vadd.f32 %v6193, 0.008332121
    %v6195 = vmul.f32 %v6192, %v6194
    %v6196 = vadd.f32 %v6195, -0.16666654
    %v6197 = vmul.f32 %v6192, %v6196
    %v6198 = vadd.f32 %v6197, 1.0
    %v6199 = vmul.f32 %v6198, %v6183
    %vm6200 = vweird.f32 %v5495
    %v6201 = vadd.s32 %v6184, 3
    %v6202 = vand.u32 %v6201, 3
    %vm6203 = vcmp.lt.s32.totalorder %v6202, 2
    %vm6204 = vcmp.eq.s32.totalorder %v6202, 0
    %v6205 = vxor.u32 %v6199, 2147483648
    %v6206 = vsel %vm6204, %v6191, %v6205
    %vm6207 = vcmp.eq.s32.totalorder %v6202, 2
    %v6208 = vxor.u32 %v6191, 2147483648
    %v6209 = vsel %vm6207, %v6208, %v6199
    %v6210 = vsel %vm6203, %v6206, %v6209
    %v6211 = vsel %vm6200, nan, %v6210
    %v6212 = vand.u32 2147483647, %v5518
    %vm6213 = vcmp.le.f32.partialorder %v6212, 0.7853982
    %vm6214 = vcmp.lt.s32.totalorder %v5518, 0
    %v6215 = vand.u32 %v5518, 2139095040
    %v6216 = vshrl.u32 %v6215, 23
    %v6217 = vsub.s32 %v6216, 127
    %v6218 = vand.u32 2147483647, %v5518
    %v6219 = vand.u32 %v6218, 8388607
    %v6220 = vor.u32 %v6219, 8388608
    %v6221 = vsub.s32 0, %v6220
    %v6222 = vadd.s32 %v6217, 1
    %vm6223 = vcmp.gt.s32.totalorder %v6222, 0
    %v6224 = vsel %vm6223, %v6222, 0
    %v6225 = vshrl.u32 %v6224, 5
    %v6226 = vand.u32 %v6224, 31
    %v6227 = vsub.s32 32, %v6226
    %v6228 = vshrl.u32 683565275, %v6227
    %v6229 = vshll.u32 683565275, %v6226
    %v6230 = vshrl.u32 2475754826, %v6227
    %v6231 = vor.u32 %v6229, %v6230
    %v6232 = vshll.u32 2475754826, %v6226
    %v6233 = vshrl.u32 2131351028, %v6227
    %v6234 = vor.u32 %v6232, %v6233
    %v6235 = vshll.u32 2131351028, %v6226
    %v6236 = vshrl.u32 2102212464, %v6227
    %v6237 = vor.u32 %v6235, %v6236
    %v6238 = vshll.u32 2102212464, %v6226
    %v6239 = vshrl.u32 920167782, %v6227
    %v6240 = vor.u32 %v6238, %v6239
    %v6241 = vshll.u32 920167782, %v6226
    %v6242 = vshrl.u32 1326507024, %v6227
    %v6243 = vor.u32 %v6241, %v6242
    %vm6244 = vcmp.lt.s32.totalorder %v6225, 1
    %vm6245 = vcmp.lt.s32.totalorder %v6225, 2
    %vm6246 = vcmp.lt.s32.totalorder %v6225, 3
    %vm6247 = vcmp.lt.s32.totalorder %v6225, 4
    %v6248 = vsel %vm6244, %v6228, %v6231
    %v6249 = vsel %vm6247, %v6237, 2102212464
    %v6250 = vsel %vm6246, %v6234, %v6249
    %v6251 = vsel %vm6245, %v6248, %v6250
    %v6252 = vsel %vm6244, %v6231, %v6234
    %v6253 = vsel %vm6247, %v6240, 920167782
    %v6254 = vsel %vm6246, %v6237, %v6253
    %v6255 = vsel %vm6245, %v6252, %v6254
    %v6256 = vsel %vm6244, %v6234, %v6237
    %v6257 = vsel %vm6247, %v6243, 1326507024
    %v6258 = vsel %vm6246, %v6240, %v6257
    %v6259 = vsel %vm6245, %v6256, %v6258
    %v6260 = vshll.u32 %v6220, 8
    %v6261 = vand.u32 %v6260, 65535
    %v6262 = vshrl.u32 %v6260, 16
    %v6263 = vand.u32 %v6259, 65535
    %v6264 = vshrl.u32 %v6259, 16
    %v6265 = vmul.u32 %v6261, %v6263
    %v6266 = vmul.u32 %v6261, %v6264
    %v6267 = vmul.u32 %v6262, %v6263
    %v6268 = vmul.u32 %v6262, %v6264
    %v6269 = vshll.u32 %v6266, 16
    %v6270 = vshrl.u32 %v6266, 16
    %v6271 = vshll.u32 %v6267, 16
    %v6272 = vshrl.u32 %v6267, 16
    %vm6273 = vc.u32 %v6265, %v6269
    %v6274 = vsel %vm6273, 1, 0
    %v6275 = vadd.s32 %v6265, %v6269
    %v6276 = vadd.s32 %v6268, %v6274
    %vm6277 = vc.u32 %v6275, %v6271
    %v6278 = vsel %vm6277, 1, 0
    %v6279 = vadd.s32 %v6275, %v6271
    %v6280 = vadd.s32 %v6276, %v6278
    %v6281 = vadd.s32 %v6280, %v6270
    %v6282 = vadd.s32 %v6281, %v6272
    %v6283 = vand.u32 %v6260, 65535
    %v6284 = vshrl.u32 %v6260, 16
    %v6285 = vand.u32 %v6255, 65535
    %v6286 = vshrl.u32 %v6255, 16
    %v6287 = vmul.u32 %v6283, %v6285
    %v6288 = vmul.u32 %v6283, %v6286
    %v6289 = vmul.u32 %v6284, %v6285
    %v6290 = vmul.u32 %v6284, %v6286
    %v6291 = vshll.u32 %v6288, 16
    %v6292 = vshrl.u32 %v6288, 16
    %v6293 = vshll.u32 %v6289, 16
    %v6294 = vshrl.u32 %v6289, 16
    %vm6295 = vc.u32 %v6287, %v6291
    %v6296 = vsel %vm6295, 1, 0
    %v6297 = vadd.s32 %v6287, %v6291
    %v6298 = vadd.s32 %v6290, %v6296
    %vm6299 = vc.u32 %v6297, %v6293
    %v6300 = vsel %vm6299, 1, 0
    %v6301 = vadd.s32 %v6297, %v6293
    %v6302 = vadd.s32 %v6298, %v6300
    %v6303 = vadd.s32 %v6302, %v6292
    %v6304 = vadd.s32 %v6303, %v6294
    %v6305 = vmul.u32 %v6260, %v6251
    %v6306 = vadd.s32 %v6282, %v6301
    %vm6307 = vc.u32 %v6282, %v6301
    %v6308 = vadd.s32 %v6304, 1
    %v6309 = vsel %vm6307, %v6308, %v6304
    %v6310 = vadd.s32 %v6305, %v6309
    %v6311 = vadd.s32 %v6310, 536870912
    %v6312 = vshrl.u32 %v6311, 30
    %v6313 = vshll.u32 %v6312, 30
    %v6314 = vsub.s32 %v6310, %v6313
    %vm6315 = vcmp.lt.s32.totalorder %v6314, 0
    %v6316 = vsub.s32 0, %v6314
    %v6317 = vsel %vm6315, %v6316, %v6314
    %v6318 = vclz %v6317
    %v6319 = vsub.s32 %v6318, 2
    %vm6320 = vcmp.gt.s32.totalorder 0, %v6319
    %v6321 = vsel %vm6320, 0, %v6319
    %v6322 = vsub.s32 32, %v6321
    %v6323 = vshll.u32 %v6314, %v6321
    %v6324 = vshrl.u32 %v6306, %v6322
    %v6325 = vor.u32 %v6323, %v6324
    %v6326 = vsub.s32 4294967266, %v6321
    %v6327 = vadd.s32 %v6326, 127
    %v6328 = vshll.u32 %v6327, 23
    %v6329 = vor.u32 4788187, %v6328
    %v6330 = vand.u32 2147483647, %v6329
    %v6332 = vcvt.s32.f32 %v6325
    %v6333 = vmul.f32 %v6332, %v6330
    %v6334 = vxor.u32 %v6333, 2147483648
    %v6335 = vsel %vm6214, %v6334, %v6333
    %v6336 = vsub.s32 4, %v6312
    %v6337 = vsel %vm6214, %v6336, %v6312
    %v6338 = vsel %vm6213, %v5518, %v6335
    %v6339 = vsel %vm6213, 0, %v6337
    %v6340 = vmul.f32 %v6338, %v6338
    %v6341 = vmul.f32 %v6340, -0.001358992
    %v6342 = vadd.f32 %v6341, 0.041655596
    %v6343 = vmul.f32 %v6340, %v6342
    %v6344 = vadd.f32 %v6343, -0.4999988
    %v6345 = vmul.f32 %v6340, %v6344
    %v6346 = vadd.f32 1.0, %v6345
    %v6347 = vmul.f32 %v6338, %v6338
    %v6348 = vmul.f32 %v6347, -0.00019511016
    %v6349 = vadd.f32 %v6348, 0.008332121
    %v6350 = vmul.f32 %v6347, %v6349
    %v6351 = vadd.f32 %v6350, -0.16666654
    %v6352 = vmul.f32 %v6347, %v6351
    %v6353 = vadd.f32 %v6352, 1.0
    %v6354 = vmul.f32 %v6353, %v6338
    %vm6355 = vweird.f32 %v5518
    %v6356 = vadd.s32 %v6339, 3
    %v6357 = vand.u32 %v6356, 3
    %vm6358 = vcmp.lt.s32.totalorder %v6357, 2
    %vm6359 = vcmp.eq.s32.totalorder %v6357, 0
    %v6360 = vxor.u32 %v6354, 2147483648
    %v6361 = vsel %vm6359, %v6346, %v6360
    %vm6362 = vcmp.eq.s32.totalorder %v6357, 2
    %v6363 = vxor.u32 %v6346, 2147483648
    %v6364 = vsel %vm6362, %v6363, %v6354
    %v6365 = vsel %vm6358, %v6361, %v6364
    %v6366 = vsel %vm6355, nan, %v6365
    %v6367 = vand.u32 2147483647, %v5541
    %vm6368 = vcmp.le.f32.partialorder %v6367, 0.7853982
    %vm6369 = vcmp.lt.s32.totalorder %v5541, 0
    %v6370 = vand.u32 %v5541, 2139095040
    %v6371 = vshrl.u32 %v6370, 23
    %v6372 = vsub.s32 %v6371, 127
    %v6373 = vand.u32 2147483647, %v5541
    %v6374 = vand.u32 %v6373, 8388607
    %v6375 = vor.u32 %v6374, 8388608
    %v6376 = vsub.s32 0, %v6375
    %v6377 = vadd.s32 %v6372, 1
    %vm6378 = vcmp.gt.s32.totalorder %v6377, 0
    %v6379 = vsel %vm6378, %v6377, 0
    %v6380 = vshrl.u32 %v6379, 5
    %v6381 = vand.u32 %v6379, 31
    %v6382 = vsub.s32 32, %v6381
    %v6383 = vshrl.u32 683565275, %v6382
    %v6384 = vshll.u32 683565275, %v6381
    %v6385 = vshrl.u32 2475754826, %v6382
    %v6386 = vor.u32 %v6384, %v6385
    %v6387 = vshll.u32 2475754826, %v6381
    %v6388 = vshrl.u32 2131351028, %v6382
    %v6389 = vor.u32 %v6387, %v6388
    %v6390 = vshll.u32 2131351028, %v6381
    %v6391 = vshrl.u32 2102212464, %v6382
    %v6392 = vor.u32 %v6390, %v6391
    %v6393 = vshll.u32 2102212464, %v6381
    %v6394 = vshrl.u32 920167782, %v6382
    %v6395 = vor.u32 %v6393, %v6394
    %v6396 = vshll.u32 920167782, %v6381
    %v6397 = vshrl.u32 1326507024, %v6382
    %v6398 = vor.u32 %v6396, %v6397
    %vm6399 = vcmp.lt.s32.totalorder %v6380, 1
    %vm6400 = vcmp.lt.s32.totalorder %v6380, 2
    %vm6401 = vcmp.lt.s32.totalorder %v6380, 3
    %vm6402 = vcmp.lt.s32.totalorder %v6380, 4
    %v6403 = vsel %vm6399, %v6383, %v6386
    %v6404 = vsel %vm6402, %v6392, 2102212464
    %v6405 = vsel %vm6401, %v6389, %v6404
    %v6406 = vsel %vm6400, %v6403, %v6405
    %v6407 = vsel %vm6399, %v6386, %v6389
    %v6408 = vsel %vm6402, %v6395, 920167782
    %v6409 = vsel %vm6401, %v6392, %v6408
    %v6410 = vsel %vm6400, %v6407, %v6409
    %v6411 = vsel %vm6399, %v6389, %v6392
    %v6412 = vsel %vm6402, %v6398, 1326507024
    %v6413 = vsel %vm6401, %v6395, %v6412
    %v6414 = vsel %vm6400, %v6411, %v6413
    %v6415 = vshll.u32 %v6375, 8
    %v6416 = vand.u32 %v6415, 65535
    %v6417 = vshrl.u32 %v6415, 16
    %v6418 = vand.u32 %v6414, 65535
    %v6419 = vshrl.u32 %v6414, 16
    %v6420 = vmul.u32 %v6416, %v6418
    %v6421 = vmul.u32 %v6416, %v6419
    %v6422 = vmul.u32 %v6417, %v6418
    %v6423 = vmul.u32 %v6417, %v6419
    %v6424 = vshll.u32 %v6421, 16
    %v6425 = vshrl.u32 %v6421, 16
    %v6426 = vshll.u32 %v6422, 16
    %v6427 = vshrl.u32 %v6422, 16
    %vm6428 = vc.u32 %v6420, %v6424
    %v6429 = vsel %vm6428, 1, 0
    %v6430 = vadd.s32 %v6420, %v6424
    %v6431 = vadd.s32 %v6423, %v6429
    %vm6432 = vc.u32 %v6430, %v6426
    %v6433 = vsel %vm6432, 1, 0
    %v6434 = vadd.s32 %v6430, %v6426
    %v6435 = vadd.s32 %v6431, %v6433
    %v6436 = vadd.s32 %v6435, %v6425
    %v6437 = vadd.s32 %v6436, %v6427
    %v6438 = vand.u32 %v6415, 65535
    %v6439 = vshrl.u32 %v6415, 16
    %v6440 = vand.u32 %v6410, 65535
    %v6441 = vshrl.u32 %v6410, 16
    %v6442 = vmul.u32 %v6438, %v6440
    %v6443 = vmul.u32 %v6438, %v6441
    %v6444 = vmul.u32 %v6439, %v6440
    %v6445 = vmul.u32 %v6439, %v6441
    %v6446 = vshll.u32 %v6443, 16
    %v6447 = vshrl.u32 %v6443, 16
    %v6448 = vshll.u32 %v6444, 16
    %v6449 = vshrl.u32 %v6444, 16
    %vm6450 = vc.u32 %v6442, %v6446
    %v6451 = vsel %vm6450, 1, 0
    %v6452 = vadd.s32 %v6442, %v6446
    %v6453 = vadd.s32 %v6445, %v6451
    %vm6454 = vc.u32 %v6452, %v6448
    %v6455 = vsel %vm6454, 1, 0
    %v6456 = vadd.s32 %v6452, %v6448
    %v6457 = vadd.s32 %v6453, %v6455
    %v6458 = vadd.s32 %v6457, %v6447
    %v6459 = vadd.s32 %v6458, %v6449
    %v6460 = vmul.u32 %v6415, %v6406
    %v6461 = vadd.s32 %v6437, %v6456
    %vm6462 = vc.u32 %v6437, %v6456
    %v6463 = vadd.s32 %v6459, 1
    %v6464 = vsel %vm6462, %v6463, %v6459
    %v6465 = vadd.s32 %v6460, %v6464
    %v6466 = vadd.s32 %v6465, 536870912
    %v6467 = vshrl.u32 %v6466, 30
    %v6468 = vshll.u32 %v6467, 30
    %v6469 = vsub.s32 %v6465, %v6468
    %vm6470 = vcmp.lt.s32.totalorder %v6469, 0
    %v6471 = vsub.s32 0, %v6469
    %v6472 = vsel %vm6470, %v6471, %v6469
    %v6473 = vclz %v6472
    %v6474 = vsub.s32 %v6473, 2
    %vm6475 = vcmp.gt.s32.totalorder 0, %v6474
    %v6476 = vsel %vm6475, 0, %v6474
    %v6477 = vsub.s32 32, %v6476
    %v6478 = vshll.u32 %v6469, %v6476
    %v6479 = vshrl.u32 %v6461, %v6477
    %v6480 = vor.u32 %v6478, %v6479
    %v6481 = vsub.s32 4294967266, %v6476
    %v6482 = vadd.s32 %v6481, 127
    %v6483 = vshll.u32 %v6482, 23
    %v6484 = vor.u32 4788187, %v6483
    %v6485 = vand.u32 2147483647, %v6484
    %v6487 = vcvt.s32.f32 %v6480
    %v6488 = vmul.f32 %v6487, %v6485
    %v6489 = vxor.u32 %v6488, 2147483648
    %v6490 = vsel %vm6369, %v6489, %v6488
    %v6491 = vsub.s32 4, %v6467
    %v6492 = vsel %vm6369, %v6491, %v6467
    %v6493 = vsel %vm6368, %v5541, %v6490
    %v6494 = vsel %vm6368, 0, %v6492
    %v6495 = vmul.f32 %v6493, %v6493
    %v6496 = vmul.f32 %v6495, -0.001358992
    %v6497 = vadd.f32 %v6496, 0.041655596
    %v6498 = vmul.f32 %v6495, %v6497
    %v6499 = vadd.f32 %v6498, -0.4999988
    %v6500 = vmul.f32 %v6495, %v6499
    %v6501 = vadd.f32 1.0, %v6500
    %v6502 = vmul.f32 %v6493, %v6493
    %v6503 = vmul.f32 %v6502, -0.00019511016
    %v6504 = vadd.f32 %v6503, 0.008332121
    %v6505 = vmul.f32 %v6502, %v6504
    %v6506 = vadd.f32 %v6505, -0.16666654
    %v6507 = vmul.f32 %v6502, %v6506
    %v6508 = vadd.f32 %v6507, 1.0
    %v6509 = vmul.f32 %v6508, %v6493
    %vm6510 = vweird.f32 %v5541
    %v6511 = vadd.s32 %v6494, 3
    %v6512 = vand.u32 %v6511, 3
    %vm6513 = vcmp.lt.s32.totalorder %v6512, 2
    %vm6514 = vcmp.eq.s32.totalorder %v6512, 0
    %v6515 = vxor.u32 %v6509, 2147483648
    %v6516 = vsel %vm6514, %v6501, %v6515
    %vm6517 = vcmp.eq.s32.totalorder %v6512, 2
    %v6518 = vxor.u32 %v6501, 2147483648
    %v6519 = vsel %vm6517, %v6518, %v6509
    %v6520 = vsel %vm6513, %v6516, %v6519
    %v6521 = vsel %vm6510, nan, %v6520
    %v6522 = vand.u32 2147483647, %v5564
    %vm6523 = vcmp.le.f32.partialorder %v6522, 0.7853982
    %vm6524 = vcmp.lt.s32.totalorder %v5564, 0
    %v6525 = vand.u32 %v5564, 2139095040
    %v6526 = vshrl.u32 %v6525, 23
    %v6527 = vsub.s32 %v6526, 127
    %v6528 = vand.u32 2147483647, %v5564
    %v6529 = vand.u32 %v6528, 8388607
    %v6530 = vor.u32 %v6529, 8388608
    %v6531 = vsub.s32 0, %v6530
    %v6532 = vadd.s32 %v6527, 1
    %vm6533 = vcmp.gt.s32.totalorder %v6532, 0
    %v6534 = vsel %vm6533, %v6532, 0
    %v6535 = vshrl.u32 %v6534, 5
    %v6536 = vand.u32 %v6534, 31
    %v6537 = vsub.s32 32, %v6536
    %v6538 = vshrl.u32 683565275, %v6537
    %v6539 = vshll.u32 683565275, %v6536
    %v6540 = vshrl.u32 2475754826, %v6537
    %v6541 = vor.u32 %v6539, %v6540
    %v6542 = vshll.u32 2475754826, %v6536
    %v6543 = vshrl.u32 2131351028, %v6537
    %v6544 = vor.u32 %v6542, %v6543
    %v6545 = vshll.u32 2131351028, %v6536
    %v6546 = vshrl.u32 2102212464, %v6537
    %v6547 = vor.u32 %v6545, %v6546
    %v6548 = vshll.u32 2102212464, %v6536
    %v6549 = vshrl.u32 920167782, %v6537
    %v6550 = vor.u32 %v6548, %v6549
    %v6551 = vshll.u32 920167782, %v6536
    %v6552 = vshrl.u32 1326507024, %v6537
    %v6553 = vor.u32 %v6551, %v6552
    %vm6554 = vcmp.lt.s32.totalorder %v6535, 1
    %vm6555 = vcmp.lt.s32.totalorder %v6535, 2
    %vm6556 = vcmp.lt.s32.totalorder %v6535, 3
    %vm6557 = vcmp.lt.s32.totalorder %v6535, 4
    %v6558 = vsel %vm6554, %v6538, %v6541
    %v6559 = vsel %vm6557, %v6547, 2102212464
    %v6560 = vsel %vm6556, %v6544, %v6559
    %v6561 = vsel %vm6555, %v6558, %v6560
    %v6562 = vsel %vm6554, %v6541, %v6544
    %v6563 = vsel %vm6557, %v6550, 920167782
    %v6564 = vsel %vm6556, %v6547, %v6563
    %v6565 = vsel %vm6555, %v6562, %v6564
    %v6566 = vsel %vm6554, %v6544, %v6547
    %v6567 = vsel %vm6557, %v6553, 1326507024
    %v6568 = vsel %vm6556, %v6550, %v6567
    %v6569 = vsel %vm6555, %v6566, %v6568
    %v6570 = vshll.u32 %v6530, 8
    %v6571 = vand.u32 %v6570, 65535
    %v6572 = vshrl.u32 %v6570, 16
    %v6573 = vand.u32 %v6569, 65535
    %v6574 = vshrl.u32 %v6569, 16
    %v6575 = vmul.u32 %v6571, %v6573
    %v6576 = vmul.u32 %v6571, %v6574
    %v6577 = vmul.u32 %v6572, %v6573
    %v6578 = vmul.u32 %v6572, %v6574
    %v6579 = vshll.u32 %v6576, 16
    %v6580 = vshrl.u32 %v6576, 16
    %v6581 = vshll.u32 %v6577, 16
    %v6582 = vshrl.u32 %v6577, 16
    %vm6583 = vc.u32 %v6575, %v6579
    %v6584 = vsel %vm6583, 1, 0
    %v6585 = vadd.s32 %v6575, %v6579
    %v6586 = vadd.s32 %v6578, %v6584
    %vm6587 = vc.u32 %v6585, %v6581
    %v6588 = vsel %vm6587, 1, 0
    %v6589 = vadd.s32 %v6585, %v6581
    %v6590 = vadd.s32 %v6586, %v6588
    %v6591 = vadd.s32 %v6590, %v6580
    %v6592 = vadd.s32 %v6591, %v6582
    %v6593 = vand.u32 %v6570, 65535
    %v6594 = vshrl.u32 %v6570, 16
    %v6595 = vand.u32 %v6565, 65535
    %v6596 = vshrl.u32 %v6565, 16
    %v6597 = vmul.u32 %v6593, %v6595
    %v6598 = vmul.u32 %v6593, %v6596
    %v6599 = vmul.u32 %v6594, %v6595
    %v6600 = vmul.u32 %v6594, %v6596
    %v6601 = vshll.u32 %v6598, 16
    %v6602 = vshrl.u32 %v6598, 16
    %v6603 = vshll.u32 %v6599, 16
    %v6604 = vshrl.u32 %v6599, 16
    %vm6605 = vc.u32 %v6597, %v6601
    %v6606 = vsel %vm6605, 1, 0
    %v6607 = vadd.s32 %v6597, %v6601
    %v6608 = vadd.s32 %v6600, %v6606
    %vm6609 = vc.u32 %v6607, %v6603
    %v6610 = vsel %vm6609, 1, 0
    %v6611 = vadd.s32 %v6607, %v6603
    %v6612 = vadd.s32 %v6608, %v6610
    %v6613 = vadd.s32 %v6612, %v6602
    %v6614 = vadd.s32 %v6613, %v6604
    %v6615 = vmul.u32 %v6570, %v6561
    %v6616 = vadd.s32 %v6592, %v6611
    %vm6617 = vc.u32 %v6592, %v6611
    %v6618 = vadd.s32 %v6614, 1
    %v6619 = vsel %vm6617, %v6618, %v6614
    %v6620 = vadd.s32 %v6615, %v6619
    %v6621 = vadd.s32 %v6620, 536870912
    %v6622 = vshrl.u32 %v6621, 30
    %v6623 = vshll.u32 %v6622, 30
    %v6624 = vsub.s32 %v6620, %v6623
    %vm6625 = vcmp.lt.s32.totalorder %v6624, 0
    %v6626 = vsub.s32 0, %v6624
    %v6627 = vsel %vm6625, %v6626, %v6624
    %v6628 = vclz %v6627
    %v6629 = vsub.s32 %v6628, 2
    %vm6630 = vcmp.gt.s32.totalorder 0, %v6629
    %v6631 = vsel %vm6630, 0, %v6629
    %v6632 = vsub.s32 32, %v6631
    %v6633 = vshll.u32 %v6624, %v6631
    %v6634 = vshrl.u32 %v6616, %v6632
    %v6635 = vor.u32 %v6633, %v6634
    %v6636 = vsub.s32 4294967266, %v6631
    %v6637 = vadd.s32 %v6636, 127
    %v6638 = vshll.u32 %v6637, 23
    %v6639 = vor.u32 4788187, %v6638
    %v6640 = vand.u32 2147483647, %v6639
    %v6642 = vcvt.s32.f32 %v6635
    %v6643 = vmul.f32 %v6642, %v6640
    %v6644 = vxor.u32 %v6643, 2147483648
    %v6645 = vsel %vm6524, %v6644, %v6643
    %v6646 = vsub.s32 4, %v6622
    %v6647 = vsel %vm6524, %v6646, %v6622
    %v6648 = vsel %vm6523, %v5564, %v6645
    %v6649 = vsel %vm6523, 0, %v6647
    %v6650 = vmul.f32 %v6648, %v6648
    %v6651 = vmul.f32 %v6650, -0.001358992
    %v6652 = vadd.f32 %v6651, 0.041655596
    %v6653 = vmul.f32 %v6650, %v6652
    %v6654 = vadd.f32 %v6653, -0.4999988
    %v6655 = vmul.f32 %v6650, %v6654
    %v6656 = vadd.f32 1.0, %v6655
    %v6657 = vmul.f32 %v6648, %v6648
    %v6658 = vmul.f32 %v6657, -0.00019511016
    %v6659 = vadd.f32 %v6658, 0.008332121
    %v6660 = vmul.f32 %v6657, %v6659
    %v6661 = vadd.f32 %v6660, -0.16666654
    %v6662 = vmul.f32 %v6657, %v6661
    %v6663 = vadd.f32 %v6662, 1.0
    %v6664 = vmul.f32 %v6663, %v6648
    %vm6665 = vweird.f32 %v5564
    %v6666 = vadd.s32 %v6649, 3
    %v6667 = vand.u32 %v6666, 3
    %vm6668 = vcmp.lt.s32.totalorder %v6667, 2
    %vm6669 = vcmp.eq.s32.totalorder %v6667, 0
    %v6670 = vxor.u32 %v6664, 2147483648
    %v6671 = vsel %vm6669, %v6656, %v6670
    %vm6672 = vcmp.eq.s32.totalorder %v6667, 2
    %v6673 = vxor.u32 %v6656, 2147483648
    %v6674 = vsel %vm6672, %v6673, %v6664
    %v6675 = vsel %vm6668, %v6671, %v6674
    %v6676 = vsel %vm6665, nan, %v6675
    %v6677 = vand.u32 2147483647, %v5587
    %vm6678 = vcmp.le.f32.partialorder %v6677, 0.7853982
    %vm6679 = vcmp.lt.s32.totalorder %v5587, 0
    %v6680 = vand.u32 %v5587, 2139095040
    %v6681 = vshrl.u32 %v6680, 23
    %v6682 = vsub.s32 %v6681, 127
    %v6683 = vand.u32 2147483647, %v5587
    %v6684 = vand.u32 %v6683, 8388607
    %v6685 = vor.u32 %v6684, 8388608
    %v6686 = vsub.s32 0, %v6685
    %v6687 = vadd.s32 %v6682, 1
    %vm6688 = vcmp.gt.s32.totalorder %v6687, 0
    %v6689 = vsel %vm6688, %v6687, 0
    %v6690 = vshrl.u32 %v6689, 5
    %v6691 = vand.u32 %v6689, 31
    %v6692 = vsub.s32 32, %v6691
    %v6693 = vshrl.u32 683565275, %v6692
    %v6694 = vshll.u32 683565275, %v6691
    %v6695 = vshrl.u32 2475754826, %v6692
    %v6696 = vor.u32 %v6694, %v6695
    %v6697 = vshll.u32 2475754826, %v6691
    %v6698 = vshrl.u32 2131351028, %v6692
    %v6699 = vor.u32 %v6697, %v6698
    %v6700 = vshll.u32 2131351028, %v6691
    %v6701 = vshrl.u32 2102212464, %v6692
    %v6702 = vor.u32 %v6700, %v6701
    %v6703 = vshll.u32 2102212464, %v6691
    %v6704 = vshrl.u32 920167782, %v6692
    %v6705 = vor.u32 %v6703, %v6704
    %v6706 = vshll.u32 920167782, %v6691
    %v6707 = vshrl.u32 1326507024, %v6692
    %v6708 = vor.u32 %v6706, %v6707
    %vm6709 = vcmp.lt.s32.totalorder %v6690, 1
    %vm6710 = vcmp.lt.s32.totalorder %v6690, 2
    %vm6711 = vcmp.lt.s32.totalorder %v6690, 3
    %vm6712 = vcmp.lt.s32.totalorder %v6690, 4
    %v6713 = vsel %vm6709, %v6693, %v6696
    %v6714 = vsel %vm6712, %v6702, 2102212464
    %v6715 = vsel %vm6711, %v6699, %v6714
    %v6716 = vsel %vm6710, %v6713, %v6715
    %v6717 = vsel %vm6709, %v6696, %v6699
    %v6718 = vsel %vm6712, %v6705, 920167782
    %v6719 = vsel %vm6711, %v6702, %v6718
    %v6720 = vsel %vm6710, %v6717, %v6719
    %v6721 = vsel %vm6709, %v6699, %v6702
    %v6722 = vsel %vm6712, %v6708, 1326507024
    %v6723 = vsel %vm6711, %v6705, %v6722
    %v6724 = vsel %vm6710, %v6721, %v6723
    %v6725 = vshll.u32 %v6685, 8
    %v6726 = vand.u32 %v6725, 65535
    %v6727 = vshrl.u32 %v6725, 16
    %v6728 = vand.u32 %v6724, 65535
    %v6729 = vshrl.u32 %v6724, 16
    %v6730 = vmul.u32 %v6726, %v6728
    %v6731 = vmul.u32 %v6726, %v6729
    %v6732 = vmul.u32 %v6727, %v6728
    %v6733 = vmul.u32 %v6727, %v6729
    %v6734 = vshll.u32 %v6731, 16
    %v6735 = vshrl.u32 %v6731, 16
    %v6736 = vshll.u32 %v6732, 16
    %v6737 = vshrl.u32 %v6732, 16
    %vm6738 = vc.u32 %v6730, %v6734
    %v6739 = vsel %vm6738, 1, 0
    %v6740 = vadd.s32 %v6730, %v6734
    %v6741 = vadd.s32 %v6733, %v6739
    %vm6742 = vc.u32 %v6740, %v6736
    %v6743 = vsel %vm6742, 1, 0
    %v6744 = vadd.s32 %v6740, %v6736
    %v6745 = vadd.s32 %v6741, %v6743
    %v6746 = vadd.s32 %v6745, %v6735
    %v6747 = vadd.s32 %v6746, %v6737
    %v6748 = vand.u32 %v6725, 65535
    %v6749 = vshrl.u32 %v6725, 16
    %v6750 = vand.u32 %v6720, 65535
    %v6751 = vshrl.u32 %v6720, 16
    %v6752 = vmul.u32 %v6748, %v6750
    %v6753 = vmul.u32 %v6748, %v6751
    %v6754 = vmul.u32 %v6749, %v6750
    %v6755 = vmul.u32 %v6749, %v6751
    %v6756 = vshll.u32 %v6753, 16
    %v6757 = vshrl.u32 %v6753, 16
    %v6758 = vshll.u32 %v6754, 16
    %v6759 = vshrl.u32 %v6754, 16
    %vm6760 = vc.u32 %v6752, %v6756
    %v6761 = vsel %vm6760, 1, 0
    %v6762 = vadd.s32 %v6752, %v6756
    %v6763 = vadd.s32 %v6755, %v6761
    %vm6764 = vc.u32 %v6762, %v6758
    %v6765 = vsel %vm6764, 1, 0
    %v6766 = vadd.s32 %v6762, %v6758
    %v6767 = vadd.s32 %v6763, %v6765
    %v6768 = vadd.s32 %v6767, %v6757
    %v6769 = vadd.s32 %v6768, %v6759
    %v6770 = vmul.u32 %v6725, %v6716
    %v6771 = vadd.s32 %v6747, %v6766
    %vm6772 = vc.u32 %v6747, %v6766
    %v6773 = vadd.s32 %v6769, 1
    %v6774 = vsel %vm6772, %v6773, %v6769
    %v6775 = vadd.s32 %v6770, %v6774
    %v6776 = vadd.s32 %v6775, 536870912
    %v6777 = vshrl.u32 %v6776, 30
    %v6778 = vshll.u32 %v6777, 30
    %v6779 = vsub.s32 %v6775, %v6778
    %vm6780 = vcmp.lt.s32.totalorder %v6779, 0
    %v6781 = vsub.s32 0, %v6779
    %v6782 = vsel %vm6780, %v6781, %v6779
    %v6783 = vclz %v6782
    %v6784 = vsub.s32 %v6783, 2
    %vm6785 = vcmp.gt.s32.totalorder 0, %v6784
    %v6786 = vsel %vm6785, 0, %v6784
    %v6787 = vsub.s32 32, %v6786
    %v6788 = vshll.u32 %v6779, %v6786
    %v6789 = vshrl.u32 %v6771, %v6787
    %v6790 = vor.u32 %v6788, %v6789
    %v6791 = vsub.s32 4294967266, %v6786
    %v6792 = vadd.s32 %v6791, 127
    %v6793 = vshll.u32 %v6792, 23
    %v6794 = vor.u32 4788187, %v6793
    %v6795 = vand.u32 2147483647, %v6794
    %v6797 = vcvt.s32.f32 %v6790
    %v6798 = vmul.f32 %v6797, %v6795
    %v6799 = vxor.u32 %v6798, 2147483648
    %v6800 = vsel %vm6679, %v6799, %v6798
    %v6801 = vsub.s32 4, %v6777
    %v6802 = vsel %vm6679, %v6801, %v6777
    %v6803 = vsel %vm6678, %v5587, %v6800
    %v6804 = vsel %vm6678, 0, %v6802
    %v6805 = vmul.f32 %v6803, %v6803
    %v6806 = vmul.f32 %v6805, -0.001358992
    %v6807 = vadd.f32 %v6806, 0.041655596
    %v6808 = vmul.f32 %v6805, %v6807
    %v6809 = vadd.f32 %v6808, -0.4999988
    %v6810 = vmul.f32 %v6805, %v6809
    %v6811 = vadd.f32 1.0, %v6810
    %v6812 = vmul.f32 %v6803, %v6803
    %v6813 = vmul.f32 %v6812, -0.00019511016
    %v6814 = vadd.f32 %v6813, 0.008332121
    %v6815 = vmul.f32 %v6812, %v6814
    %v6816 = vadd.f32 %v6815, -0.16666654
    %v6817 = vmul.f32 %v6812, %v6816
    %v6818 = vadd.f32 %v6817, 1.0
    %v6819 = vmul.f32 %v6818, %v6803
    %vm6820 = vweird.f32 %v5587
    %v6821 = vadd.s32 %v6804, 3
    %v6822 = vand.u32 %v6821, 3
    %vm6823 = vcmp.lt.s32.totalorder %v6822, 2
    %vm6824 = vcmp.eq.s32.totalorder %v6822, 0
    %v6825 = vxor.u32 %v6819, 2147483648
    %v6826 = vsel %vm6824, %v6811, %v6825
    %vm6827 = vcmp.eq.s32.totalorder %v6822, 2
    %v6828 = vxor.u32 %v6811, 2147483648
    %v6829 = vsel %vm6827, %v6828, %v6819
    %v6830 = vsel %vm6823, %v6826, %v6829
    %v6831 = vsel %vm6820, nan, %v6830
    %v6832 = vand.u32 2147483647, %v5429
    %vm6833 = vcmp.le.f32.partialorder %v6832, 0.7853982
    %vm6834 = vcmp.lt.s32.totalorder %v5429, 0
    %v6835 = vand.u32 %v5429, 2139095040
    %v6836 = vshrl.u32 %v6835, 23
    %v6837 = vsub.s32 %v6836, 127
    %v6838 = vand.u32 2147483647, %v5429
    %v6839 = vand.u32 %v6838, 8388607
    %v6840 = vor.u32 %v6839, 8388608
    %v6841 = vsub.s32 0, %v6840
    %v6842 = vadd.s32 %v6837, 1
    %vm6843 = vcmp.gt.s32.totalorder %v6842, 0
    %v6844 = vsel %vm6843, %v6842, 0
    %v6845 = vshrl.u32 %v6844, 5
    %v6846 = vand.u32 %v6844, 31
    %v6847 = vsub.s32 32, %v6846
    %v6848 = vshrl.u32 683565275, %v6847
    %v6849 = vshll.u32 683565275, %v6846
    %v6850 = vshrl.u32 2475754826, %v6847
    %v6851 = vor.u32 %v6849, %v6850
    %v6852 = vshll.u32 2475754826, %v6846
    %v6853 = vshrl.u32 2131351028, %v6847
    %v6854 = vor.u32 %v6852, %v6853
    %v6855 = vshll.u32 2131351028, %v6846
    %v6856 = vshrl.u32 2102212464, %v6847
    %v6857 = vor.u32 %v6855, %v6856
    %v6858 = vshll.u32 2102212464, %v6846
    %v6859 = vshrl.u32 920167782, %v6847
    %v6860 = vor.u32 %v6858, %v6859
    %v6861 = vshll.u32 920167782, %v6846
    %v6862 = vshrl.u32 1326507024, %v6847
    %v6863 = vor.u32 %v6861, %v6862
    %vm6864 = vcmp.lt.s32.totalorder %v6845, 1
    %vm6865 = vcmp.lt.s32.totalorder %v6845, 2
    %vm6866 = vcmp.lt.s32.totalorder %v6845, 3
    %vm6867 = vcmp.lt.s32.totalorder %v6845, 4
    %v6868 = vsel %vm6864, %v6848, %v6851
    %v6869 = vsel %vm6867, %v6857, 2102212464
    %v6870 = vsel %vm6866, %v6854, %v6869
    %v6871 = vsel %vm6865, %v6868, %v6870
    %v6872 = vsel %vm6864, %v6851, %v6854
    %v6873 = vsel %vm6867, %v6860, 920167782
    %v6874 = vsel %vm6866, %v6857, %v6873
    %v6875 = vsel %vm6865, %v6872, %v6874
    %v6876 = vsel %vm6864, %v6854, %v6857
    %v6877 = vsel %vm6867, %v6863, 1326507024
    %v6878 = vsel %vm6866, %v6860, %v6877
    %v6879 = vsel %vm6865, %v6876, %v6878
    %v6880 = vshll.u32 %v6840, 8
    %v6881 = vand.u32 %v6880, 65535
    %v6882 = vshrl.u32 %v6880, 16
    %v6883 = vand.u32 %v6879, 65535
    %v6884 = vshrl.u32 %v6879, 16
    %v6885 = vmul.u32 %v6881, %v6883
    %v6886 = vmul.u32 %v6881, %v6884
    %v6887 = vmul.u32 %v6882, %v6883
    %v6888 = vmul.u32 %v6882, %v6884
    %v6889 = vshll.u32 %v6886, 16
    %v6890 = vshrl.u32 %v6886, 16
    %v6891 = vshll.u32 %v6887, 16
    %v6892 = vshrl.u32 %v6887, 16
    %vm6893 = vc.u32 %v6885, %v6889
    %v6894 = vsel %vm6893, 1, 0
    %v6895 = vadd.s32 %v6885, %v6889
    %v6896 = vadd.s32 %v6888, %v6894
    %vm6897 = vc.u32 %v6895, %v6891
    %v6898 = vsel %vm6897, 1, 0
    %v6899 = vadd.s32 %v6895, %v6891
    %v6900 = vadd.s32 %v6896, %v6898
    %v6901 = vadd.s32 %v6900, %v6890
    %v6902 = vadd.s32 %v6901, %v6892
    %v6903 = vand.u32 %v6880, 65535
    %v6904 = vshrl.u32 %v6880, 16
    %v6905 = vand.u32 %v6875, 65535
    %v6906 = vshrl.u32 %v6875, 16
    %v6907 = vmul.u32 %v6903, %v6905
    %v6908 = vmul.u32 %v6903, %v6906
    %v6909 = vmul.u32 %v6904, %v6905
    %v6910 = vmul.u32 %v6904, %v6906
    %v6911 = vshll.u32 %v6908, 16
    %v6912 = vshrl.u32 %v6908, 16
    %v6913 = vshll.u32 %v6909, 16
    %v6914 = vshrl.u32 %v6909, 16
    %vm6915 = vc.u32 %v6907, %v6911
    %v6916 = vsel %vm6915, 1, 0
    %v6917 = vadd.s32 %v6907, %v6911
    %v6918 = vadd.s32 %v6910, %v6916
    %vm6919 = vc.u32 %v6917, %v6913
    %v6920 = vsel %vm6919, 1, 0
    %v6921 = vadd.s32 %v6917, %v6913
    %v6922 = vadd.s32 %v6918, %v6920
    %v6923 = vadd.s32 %v6922, %v6912
    %v6924 = vadd.s32 %v6923, %v6914
    %v6925 = vmul.u32 %v6880, %v6871
    %v6926 = vadd.s32 %v6902, %v6921
    %vm6927 = vc.u32 %v6902, %v6921
    %v6928 = vadd.s32 %v6924, 1
    %v6929 = vsel %vm6927, %v6928, %v6924
    %v6930 = vadd.s32 %v6925, %v6929
    %v6931 = vadd.s32 %v6930, 536870912
    %v6932 = vshrl.u32 %v6931, 30
    %v6933 = vshll.u32 %v6932, 30
    %v6934 = vsub.s32 %v6930, %v6933
    %vm6935 = vcmp.lt.s32.totalorder %v6934, 0
    %v6936 = vsub.s32 0, %v6934
    %v6937 = vsel %vm6935, %v6936, %v6934
    %v6938 = vclz %v6937
    %v6939 = vsub.s32 %v6938, 2
    %vm6940 = vcmp.gt.s32.totalorder 0, %v6939
    %v6941 = vsel %vm6940, 0, %v6939
    %v6942 = vsub.s32 32, %v6941
    %v6943 = vshll.u32 %v6934, %v6941
    %v6944 = vshrl.u32 %v6926, %v6942
    %v6945 = vor.u32 %v6943, %v6944
    %v6946 = vsub.s32 4294967266, %v6941
    %v6947 = vadd.s32 %v6946, 127
    %v6948 = vshll.u32 %v6947, 23
    %v6949 = vor.u32 4788187, %v6948
    %v6950 = vand.u32 2147483647, %v6949
    %v6952 = vcvt.s32.f32 %v6945
    %v6953 = vmul.f32 %v6952, %v6950
    %v6954 = vxor.u32 %v6953, 2147483648
    %v6955 = vsel %vm6834, %v6954, %v6953
    %v6956 = vsub.s32 4, %v6932
    %v6957 = vsel %vm6834, %v6956, %v6932
    %v6958 = vsel %vm6833, %v5429, %v6955
    %v6959 = vsel %vm6833, 0, %v6957
    %v6960 = vmul.f32 %v6958, %v6958
    %v6961 = vmul.f32 %v6960, -0.001358992
    %v6962 = vadd.f32 %v6961, 0.041655596
    %v6963 = vmul.f32 %v6960, %v6962
    %v6964 = vadd.f32 %v6963, -0.4999988
    %v6965 = vmul.f32 %v6960, %v6964
    %v6966 = vadd.f32 1.0, %v6965
    %v6967 = vmul.f32 %v6958, %v6958
    %v6968 = vmul.f32 %v6967, -0.00019511016
    %v6969 = vadd.f32 %v6968, 0.008332121
    %v6970 = vmul.f32 %v6967, %v6969
    %v6971 = vadd.f32 %v6970, -0.16666654
    %v6972 = vmul.f32 %v6967, %v6971
    %v6973 = vadd.f32 %v6972, 1.0
    %v6974 = vmul.f32 %v6973, %v6958
    %vm6975 = vweird.f32 %v5429
    %v6976 = vadd.s32 %v6959, 3
    %v6977 = vand.u32 %v6976, 3
    %vm6978 = vcmp.lt.s32.totalorder %v6977, 2
    %vm6979 = vcmp.eq.s32.totalorder %v6977, 0
    %v6980 = vxor.u32 %v6974, 2147483648
    %v6981 = vsel %vm6979, %v6966, %v6980
    %vm6982 = vcmp.eq.s32.totalorder %v6977, 2
    %v6983 = vxor.u32 %v6966, 2147483648
    %v6984 = vsel %vm6982, %v6983, %v6974
    %v6985 = vsel %vm6978, %v6981, %v6984
    %v6986 = vsel %vm6975, nan, %v6985
    %v6987 = vand.u32 2147483647, %v5452
    %vm6988 = vcmp.le.f32.partialorder %v6987, 0.7853982
    %vm6989 = vcmp.lt.s32.totalorder %v5452, 0
    %v6990 = vand.u32 %v5452, 2139095040
    %v6991 = vshrl.u32 %v6990, 23
    %v6992 = vsub.s32 %v6991, 127
    %v6993 = vand.u32 2147483647, %v5452
    %v6994 = vand.u32 %v6993, 8388607
    %v6995 = vor.u32 %v6994, 8388608
    %v6996 = vsub.s32 0, %v6995
    %v6997 = vadd.s32 %v6992, 1
    %vm6998 = vcmp.gt.s32.totalorder %v6997, 0
    %v6999 = vsel %vm6998, %v6997, 0
    %v7000 = vshrl.u32 %v6999, 5
    %v7001 = vand.u32 %v6999, 31
    %v7002 = vsub.s32 32, %v7001
    %v7003 = vshrl.u32 683565275, %v7002
    %v7004 = vshll.u32 683565275, %v7001
    %v7005 = vshrl.u32 2475754826, %v7002
    %v7006 = vor.u32 %v7004, %v7005
    %v7007 = vshll.u32 2475754826, %v7001
    %v7008 = vshrl.u32 2131351028, %v7002
    %v7009 = vor.u32 %v7007, %v7008
    %v7010 = vshll.u32 2131351028, %v7001
    %v7011 = vshrl.u32 2102212464, %v7002
    %v7012 = vor.u32 %v7010, %v7011
    %v7013 = vshll.u32 2102212464, %v7001
    %v7014 = vshrl.u32 920167782, %v7002
    %v7015 = vor.u32 %v7013, %v7014
    %v7016 = vshll.u32 920167782, %v7001
    %v7017 = vshrl.u32 1326507024, %v7002
    %v7018 = vor.u32 %v7016, %v7017
    %vm7019 = vcmp.lt.s32.totalorder %v7000, 1
    %vm7020 = vcmp.lt.s32.totalorder %v7000, 2
    %vm7021 = vcmp.lt.s32.totalorder %v7000, 3
    %vm7022 = vcmp.lt.s32.totalorder %v7000, 4
    %v7023 = vsel %vm7019, %v7003, %v7006
    %v7024 = vsel %vm7022, %v7012, 2102212464
    %v7025 = vsel %vm7021, %v7009, %v7024
    %v7026 = vsel %vm7020, %v7023, %v7025
    %v7027 = vsel %vm7019, %v7006, %v7009
    %v7028 = vsel %vm7022, %v7015, 920167782
    %v7029 = vsel %vm7021, %v7012, %v7028
    %v7030 = vsel %vm7020, %v7027, %v7029
    %v7031 = vsel %vm7019, %v7009, %v7012
    %v7032 = vsel %vm7022, %v7018, 1326507024
    %v7033 = vsel %vm7021, %v7015, %v7032
    %v7034 = vsel %vm7020, %v7031, %v7033
    %v7035 = vshll.u32 %v6995, 8
    %v7036 = vand.u32 %v7035, 65535
    %v7037 = vshrl.u32 %v7035, 16
    %v7038 = vand.u32 %v7034, 65535
    %v7039 = vshrl.u32 %v7034, 16
    %v7040 = vmul.u32 %v7036, %v7038
    %v7041 = vmul.u32 %v7036, %v7039
    %v7042 = vmul.u32 %v7037, %v7038
    %v7043 = vmul.u32 %v7037, %v7039
    %v7044 = vshll.u32 %v7041, 16
    %v7045 = vshrl.u32 %v7041, 16
    %v7046 = vshll.u32 %v7042, 16
    %v7047 = vshrl.u32 %v7042, 16
    %vm7048 = vc.u32 %v7040, %v7044
    %v7049 = vsel %vm7048, 1, 0
    %v7050 = vadd.s32 %v7040, %v7044
    %v7051 = vadd.s32 %v7043, %v7049
    %vm7052 = vc.u32 %v7050, %v7046
    %v7053 = vsel %vm7052, 1, 0
    %v7054 = vadd.s32 %v7050, %v7046
    %v7055 = vadd.s32 %v7051, %v7053
    %v7056 = vadd.s32 %v7055, %v7045
    %v7057 = vadd.s32 %v7056, %v7047
    %v7058 = vand.u32 %v7035, 65535
    %v7059 = vshrl.u32 %v7035, 16
    %v7060 = vand.u32 %v7030, 65535
    %v7061 = vshrl.u32 %v7030, 16
    %v7062 = vmul.u32 %v7058, %v7060
    %v7063 = vmul.u32 %v7058, %v7061
    %v7064 = vmul.u32 %v7059, %v7060
    %v7065 = vmul.u32 %v7059, %v7061
    %v7066 = vshll.u32 %v7063, 16
    %v7067 = vshrl.u32 %v7063, 16
    %v7068 = vshll.u32 %v7064, 16
    %v7069 = vshrl.u32 %v7064, 16
    %vm7070 = vc.u32 %v7062, %v7066
    %v7071 = vsel %vm7070, 1, 0
    %v7072 = vadd.s32 %v7062, %v7066
    %v7073 = vadd.s32 %v7065, %v7071
    %vm7074 = vc.u32 %v7072, %v7068
    %v7075 = vsel %vm7074, 1, 0
    %v7076 = vadd.s32 %v7072, %v7068
    %v7077 = vadd.s32 %v7073, %v7075
    %v7078 = vadd.s32 %v7077, %v7067
    %v7079 = vadd.s32 %v7078, %v7069
    %v7080 = vmul.u32 %v7035, %v7026
    %v7081 = vadd.s32 %v7057, %v7076
    %vm7082 = vc.u32 %v7057, %v7076
    %v7083 = vadd.s32 %v7079, 1
    %v7084 = vsel %vm7082, %v7083, %v7079
    %v7085 = vadd.s32 %v7080, %v7084
    %v7086 = vadd.s32 %v7085, 536870912
    %v7087 = vshrl.u32 %v7086, 30
    %v7088 = vshll.u32 %v7087, 30
    %v7089 = vsub.s32 %v7085, %v7088
    %vm7090 = vcmp.lt.s32.totalorder %v7089, 0
    %v7091 = vsub.s32 0, %v7089
    %v7092 = vsel %vm7090, %v7091, %v7089
    %v7093 = vclz %v7092
    %v7094 = vsub.s32 %v7093, 2
    %vm7095 = vcmp.gt.s32.totalorder 0, %v7094
    %v7096 = vsel %vm7095, 0, %v7094
    %v7097 = vsub.s32 32, %v7096
    %v7098 = vshll.u32 %v7089, %v7096
    %v7099 = vshrl.u32 %v7081, %v7097
    %v7100 = vor.u32 %v7098, %v7099
    %v7101 = vsub.s32 4294967266, %v7096
    %v7102 = vadd.s32 %v7101, 127
    %v7103 = vshll.u32 %v7102, 23
    %v7104 = vor.u32 4788187, %v7103
    %v7105 = vand.u32 2147483647, %v7104
    %v7107 = vcvt.s32.f32 %v7100
    %v7108 = vmul.f32 %v7107, %v7105
    %v7109 = vxor.u32 %v7108, 2147483648
    %v7110 = vsel %vm6989, %v7109, %v7108
    %v7111 = vsub.s32 4, %v7087
    %v7112 = vsel %vm6989, %v7111, %v7087
    %v7113 = vsel %vm6988, %v5452, %v7110
    %v7114 = vsel %vm6988, 0, %v7112
    %v7115 = vmul.f32 %v7113, %v7113
    %v7116 = vmul.f32 %v7115, -0.001358992
    %v7117 = vadd.f32 %v7116, 0.041655596
    %v7118 = vmul.f32 %v7115, %v7117
    %v7119 = vadd.f32 %v7118, -0.4999988
    %v7120 = vmul.f32 %v7115, %v7119
    %v7121 = vadd.f32 1.0, %v7120
    %v7122 = vmul.f32 %v7113, %v7113
    %v7123 = vmul.f32 %v7122, -0.00019511016
    %v7124 = vadd.f32 %v7123, 0.008332121
    %v7125 = vmul.f32 %v7122, %v7124
    %v7126 = vadd.f32 %v7125, -0.16666654
    %v7127 = vmul.f32 %v7122, %v7126
    %v7128 = vadd.f32 %v7127, 1.0
    %v7129 = vmul.f32 %v7128, %v7113
    %vm7130 = vweird.f32 %v5452
    %v7131 = vadd.s32 %v7114, 3
    %v7132 = vand.u32 %v7131, 3
    %vm7133 = vcmp.lt.s32.totalorder %v7132, 2
    %vm7134 = vcmp.eq.s32.totalorder %v7132, 0
    %v7135 = vxor.u32 %v7129, 2147483648
    %v7136 = vsel %vm7134, %v7121, %v7135
    %vm7137 = vcmp.eq.s32.totalorder %v7132, 2
    %v7138 = vxor.u32 %v7121, 2147483648
    %v7139 = vsel %vm7137, %v7138, %v7129
    %v7140 = vsel %vm7133, %v7136, %v7139
    %v7141 = vsel %vm7130, nan, %v7140
    %v7142 = vand.u32 2147483647, %v5475
    %vm7143 = vcmp.le.f32.partialorder %v7142, 0.7853982
    %vm7144 = vcmp.lt.s32.totalorder %v5475, 0
    %v7145 = vand.u32 %v5475, 2139095040
    %v7146 = vshrl.u32 %v7145, 23
    %v7147 = vsub.s32 %v7146, 127
    %v7148 = vand.u32 2147483647, %v5475
    %v7149 = vand.u32 %v7148, 8388607
    %v7150 = vor.u32 %v7149, 8388608
    %v7151 = vsub.s32 0, %v7150
    %v7152 = vadd.s32 %v7147, 1
    %vm7153 = vcmp.gt.s32.totalorder %v7152, 0
    %v7154 = vsel %vm7153, %v7152, 0
    %v7155 = vshrl.u32 %v7154, 5
    %v7156 = vand.u32 %v7154, 31
    %v7157 = vsub.s32 32, %v7156
    %v7158 = vshrl.u32 683565275, %v7157
    %v7159 = vshll.u32 683565275, %v7156
    %v7160 = vshrl.u32 2475754826, %v7157
    %v7161 = vor.u32 %v7159, %v7160
    %v7162 = vshll.u32 2475754826, %v7156
    %v7163 = vshrl.u32 2131351028, %v7157
    %v7164 = vor.u32 %v7162, %v7163
    %v7165 = vshll.u32 2131351028, %v7156
    %v7166 = vshrl.u32 2102212464, %v7157
    %v7167 = vor.u32 %v7165, %v7166
    %v7168 = vshll.u32 2102212464, %v7156
    %v7169 = vshrl.u32 920167782, %v7157
    %v7170 = vor.u32 %v7168, %v7169
    %v7171 = vshll.u32 920167782, %v7156
    %v7172 = vshrl.u32 1326507024, %v7157
    %v7173 = vor.u32 %v7171, %v7172
    %vm7174 = vcmp.lt.s32.totalorder %v7155, 1
    %vm7175 = vcmp.lt.s32.totalorder %v7155, 2
    %vm7176 = vcmp.lt.s32.totalorder %v7155, 3
    %vm7177 = vcmp.lt.s32.totalorder %v7155, 4
    %v7178 = vsel %vm7174, %v7158, %v7161
    %v7179 = vsel %vm7177, %v7167, 2102212464
    %v7180 = vsel %vm7176, %v7164, %v7179
    %v7181 = vsel %vm7175, %v7178, %v7180
    %v7182 = vsel %vm7174, %v7161, %v7164
    %v7183 = vsel %vm7177, %v7170, 920167782
    %v7184 = vsel %vm7176, %v7167, %v7183
    %v7185 = vsel %vm7175, %v7182, %v7184
    %v7186 = vsel %vm7174, %v7164, %v7167
    %v7187 = vsel %vm7177, %v7173, 1326507024
    %v7188 = vsel %vm7176, %v7170, %v7187
    %v7189 = vsel %vm7175, %v7186, %v7188
    %v7190 = vshll.u32 %v7150, 8
    %v7191 = vand.u32 %v7190, 65535
    %v7192 = vshrl.u32 %v7190, 16
    %v7193 = vand.u32 %v7189, 65535
    %v7194 = vshrl.u32 %v7189, 16
    %v7195 = vmul.u32 %v7191, %v7193
    %v7196 = vmul.u32 %v7191, %v7194
    %v7197 = vmul.u32 %v7192, %v7193
    %v7198 = vmul.u32 %v7192, %v7194
    %v7199 = vshll.u32 %v7196, 16
    %v7200 = vshrl.u32 %v7196, 16
    %v7201 = vshll.u32 %v7197, 16
    %v7202 = vshrl.u32 %v7197, 16
    %vm7203 = vc.u32 %v7195, %v7199
    %v7204 = vsel %vm7203, 1, 0
    %v7205 = vadd.s32 %v7195, %v7199
    %v7206 = vadd.s32 %v7198, %v7204
    %vm7207 = vc.u32 %v7205, %v7201
    %v7208 = vsel %vm7207, 1, 0
    %v7209 = vadd.s32 %v7205, %v7201
    %v7210 = vadd.s32 %v7206, %v7208
    %v7211 = vadd.s32 %v7210, %v7200
    %v7212 = vadd.s32 %v7211, %v7202
    %v7213 = vand.u32 %v7190, 65535
    %v7214 = vshrl.u32 %v7190, 16
    %v7215 = vand.u32 %v7185, 65535
    %v7216 = vshrl.u32 %v7185, 16
    %v7217 = vmul.u32 %v7213, %v7215
    %v7218 = vmul.u32 %v7213, %v7216
    %v7219 = vmul.u32 %v7214, %v7215
    %v7220 = vmul.u32 %v7214, %v7216
    %v7221 = vshll.u32 %v7218, 16
    %v7222 = vshrl.u32 %v7218, 16
    %v7223 = vshll.u32 %v7219, 16
    %v7224 = vshrl.u32 %v7219, 16
    %vm7225 = vc.u32 %v7217, %v7221
    %v7226 = vsel %vm7225, 1, 0
    %v7227 = vadd.s32 %v7217, %v7221
    %v7228 = vadd.s32 %v7220, %v7226
    %vm7229 = vc.u32 %v7227, %v7223
    %v7230 = vsel %vm7229, 1, 0
    %v7231 = vadd.s32 %v7227, %v7223
    %v7232 = vadd.s32 %v7228, %v7230
    %v7233 = vadd.s32 %v7232, %v7222
    %v7234 = vadd.s32 %v7233, %v7224
    %v7235 = vmul.u32 %v7190, %v7181
    %v7236 = vadd.s32 %v7212, %v7231
    %vm7237 = vc.u32 %v7212, %v7231
    %v7238 = vadd.s32 %v7234, 1
    %v7239 = vsel %vm7237, %v7238, %v7234
    %v7240 = vadd.s32 %v7235, %v7239
    %v7241 = vadd.s32 %v7240, 536870912
    %v7242 = vshrl.u32 %v7241, 30
    %v7243 = vshll.u32 %v7242, 30
    %v7244 = vsub.s32 %v7240, %v7243
    %vm7245 = vcmp.lt.s32.totalorder %v7244, 0
    %v7246 = vsub.s32 0, %v7244
    %v7247 = vsel %vm7245, %v7246, %v7244
    %v7248 = vclz %v7247
    %v7249 = vsub.s32 %v7248, 2
    %vm7250 = vcmp.gt.s32.totalorder 0, %v7249
    %v7251 = vsel %vm7250, 0, %v7249
    %v7252 = vsub.s32 32, %v7251
    %v7253 = vshll.u32 %v7244, %v7251
    %v7254 = vshrl.u32 %v7236, %v7252
    %v7255 = vor.u32 %v7253, %v7254
    %v7256 = vsub.s32 4294967266, %v7251
    %v7257 = vadd.s32 %v7256, 127
    %v7258 = vshll.u32 %v7257, 23
    %v7259 = vor.u32 4788187, %v7258
    %v7260 = vand.u32 2147483647, %v7259
    %v7262 = vcvt.s32.f32 %v7255
    %v7263 = vmul.f32 %v7262, %v7260
    %v7264 = vxor.u32 %v7263, 2147483648
    %v7265 = vsel %vm7144, %v7264, %v7263
    %v7266 = vsub.s32 4, %v7242
    %v7267 = vsel %vm7144, %v7266, %v7242
    %v7268 = vsel %vm7143, %v5475, %v7265
    %v7269 = vsel %vm7143, 0, %v7267
    %v7270 = vmul.f32 %v7268, %v7268
    %v7271 = vmul.f32 %v7270, -0.001358992
    %v7272 = vadd.f32 %v7271, 0.041655596
    %v7273 = vmul.f32 %v7270, %v7272
    %v7274 = vadd.f32 %v7273, -0.4999988
    %v7275 = vmul.f32 %v7270, %v7274
    %v7276 = vadd.f32 1.0, %v7275
    %v7277 = vmul.f32 %v7268, %v7268
    %v7278 = vmul.f32 %v7277, -0.00019511016
    %v7279 = vadd.f32 %v7278, 0.008332121
    %v7280 = vmul.f32 %v7277, %v7279
    %v7281 = vadd.f32 %v7280, -0.16666654
    %v7282 = vmul.f32 %v7277, %v7281
    %v7283 = vadd.f32 %v7282, 1.0
    %v7284 = vmul.f32 %v7283, %v7268
    %vm7285 = vweird.f32 %v5475
    %v7286 = vadd.s32 %v7269, 3
    %v7287 = vand.u32 %v7286, 3
    %vm7288 = vcmp.lt.s32.totalorder %v7287, 2
    %vm7289 = vcmp.eq.s32.totalorder %v7287, 0
    %v7290 = vxor.u32 %v7284, 2147483648
    %v7291 = vsel %vm7289, %v7276, %v7290
    %vm7292 = vcmp.eq.s32.totalorder %v7287, 2
    %v7293 = vxor.u32 %v7276, 2147483648
    %v7294 = vsel %vm7292, %v7293, %v7284
    %v7295 = vsel %vm7288, %v7291, %v7294
    %v7296 = vsel %vm7285, nan, %v7295
    %v7297 = vand.u32 2147483647, %v5498
    %vm7298 = vcmp.le.f32.partialorder %v7297, 0.7853982
    %vm7299 = vcmp.lt.s32.totalorder %v5498, 0
    %v7300 = vand.u32 %v5498, 2139095040
    %v7301 = vshrl.u32 %v7300, 23
    %v7302 = vsub.s32 %v7301, 127
    %v7303 = vand.u32 2147483647, %v5498
    %v7304 = vand.u32 %v7303, 8388607
    %v7305 = vor.u32 %v7304, 8388608
    %v7306 = vsub.s32 0, %v7305
    %v7307 = vadd.s32 %v7302, 1
    %vm7308 = vcmp.gt.s32.totalorder %v7307, 0
    %v7309 = vsel %vm7308, %v7307, 0
    %v7310 = vshrl.u32 %v7309, 5
    %v7311 = vand.u32 %v7309, 31
    %v7312 = vsub.s32 32, %v7311
    %v7313 = vshrl.u32 683565275, %v7312
    %v7314 = vshll.u32 683565275, %v7311
    %v7315 = vshrl.u32 2475754826, %v7312
    %v7316 = vor.u32 %v7314, %v7315
    %v7317 = vshll.u32 2475754826, %v7311
    %v7318 = vshrl.u32 2131351028, %v7312
    %v7319 = vor.u32 %v7317, %v7318
    %v7320 = vshll.u32 2131351028, %v7311
    %v7321 = vshrl.u32 2102212464, %v7312
    %v7322 = vor.u32 %v7320, %v7321
    %v7323 = vshll.u32 2102212464, %v7311
    %v7324 = vshrl.u32 920167782, %v7312
    %v7325 = vor.u32 %v7323, %v7324
    %v7326 = vshll.u32 920167782, %v7311
    %v7327 = vshrl.u32 1326507024, %v7312
    %v7328 = vor.u32 %v7326, %v7327
    %vm7329 = vcmp.lt.s32.totalorder %v7310, 1
    %vm7330 = vcmp.lt.s32.totalorder %v7310, 2
    %vm7331 = vcmp.lt.s32.totalorder %v7310, 3
    %vm7332 = vcmp.lt.s32.totalorder %v7310, 4
    %v7333 = vsel %vm7329, %v7313, %v7316
    %v7334 = vsel %vm7332, %v7322, 2102212464
    %v7335 = vsel %vm7331, %v7319, %v7334
    %v7336 = vsel %vm7330, %v7333, %v7335
    %v7337 = vsel %vm7329, %v7316, %v7319
    %v7338 = vsel %vm7332, %v7325, 920167782
    %v7339 = vsel %vm7331, %v7322, %v7338
    %v7340 = vsel %vm7330, %v7337, %v7339
    %v7341 = vsel %vm7329, %v7319, %v7322
    %v7342 = vsel %vm7332, %v7328, 1326507024
    %v7343 = vsel %vm7331, %v7325, %v7342
    %v7344 = vsel %vm7330, %v7341, %v7343
    %v7345 = vshll.u32 %v7305, 8
    %v7346 = vand.u32 %v7345, 65535
    %v7347 = vshrl.u32 %v7345, 16
    %v7348 = vand.u32 %v7344, 65535
    %v7349 = vshrl.u32 %v7344, 16
    %v7350 = vmul.u32 %v7346, %v7348
    %v7351 = vmul.u32 %v7346, %v7349
    %v7352 = vmul.u32 %v7347, %v7348
    %v7353 = vmul.u32 %v7347, %v7349
    %v7354 = vshll.u32 %v7351, 16
    %v7355 = vshrl.u32 %v7351, 16
    %v7356 = vshll.u32 %v7352, 16
    %v7357 = vshrl.u32 %v7352, 16
    %vm7358 = vc.u32 %v7350, %v7354
    %v7359 = vsel %vm7358, 1, 0
    %v7360 = vadd.s32 %v7350, %v7354
    %v7361 = vadd.s32 %v7353, %v7359
    %vm7362 = vc.u32 %v7360, %v7356
    %v7363 = vsel %vm7362, 1, 0
    %v7364 = vadd.s32 %v7360, %v7356
    %v7365 = vadd.s32 %v7361, %v7363
    %v7366 = vadd.s32 %v7365, %v7355
    %v7367 = vadd.s32 %v7366, %v7357
    %v7368 = vand.u32 %v7345, 65535
    %v7369 = vshrl.u32 %v7345, 16
    %v7370 = vand.u32 %v7340, 65535
    %v7371 = vshrl.u32 %v7340, 16
    %v7372 = vmul.u32 %v7368, %v7370
    %v7373 = vmul.u32 %v7368, %v7371
    %v7374 = vmul.u32 %v7369, %v7370
    %v7375 = vmul.u32 %v7369, %v7371
    %v7376 = vshll.u32 %v7373, 16
    %v7377 = vshrl.u32 %v7373, 16
    %v7378 = vshll.u32 %v7374, 16
    %v7379 = vshrl.u32 %v7374, 16
    %vm7380 = vc.u32 %v7372, %v7376
    %v7381 = vsel %vm7380, 1, 0
    %v7382 = vadd.s32 %v7372, %v7376
    %v7383 = vadd.s32 %v7375, %v7381
    %vm7384 = vc.u32 %v7382, %v7378
    %v7385 = vsel %vm7384, 1, 0
    %v7386 = vadd.s32 %v7382, %v7378
    %v7387 = vadd.s32 %v7383, %v7385
    %v7388 = vadd.s32 %v7387, %v7377
    %v7389 = vadd.s32 %v7388, %v7379
    %v7390 = vmul.u32 %v7345, %v7336
    %v7391 = vadd.s32 %v7367, %v7386
    %vm7392 = vc.u32 %v7367, %v7386
    %v7393 = vadd.s32 %v7389, 1
    %v7394 = vsel %vm7392, %v7393, %v7389
    %v7395 = vadd.s32 %v7390, %v7394
    %v7396 = vadd.s32 %v7395, 536870912
    %v7397 = vshrl.u32 %v7396, 30
    %v7398 = vshll.u32 %v7397, 30
    %v7399 = vsub.s32 %v7395, %v7398
    %vm7400 = vcmp.lt.s32.totalorder %v7399, 0
    %v7401 = vsub.s32 0, %v7399
    %v7402 = vsel %vm7400, %v7401, %v7399
    %v7403 = vclz %v7402
    %v7404 = vsub.s32 %v7403, 2
    %vm7405 = vcmp.gt.s32.totalorder 0, %v7404
    %v7406 = vsel %vm7405, 0, %v7404
    %v7407 = vsub.s32 32, %v7406
    %v7408 = vshll.u32 %v7399, %v7406
    %v7409 = vshrl.u32 %v7391, %v7407
    %v7410 = vor.u32 %v7408, %v7409
    %v7411 = vsub.s32 4294967266, %v7406
    %v7412 = vadd.s32 %v7411, 127
    %v7413 = vshll.u32 %v7412, 23
    %v7414 = vor.u32 4788187, %v7413
    %v7415 = vand.u32 2147483647, %v7414
    %v7417 = vcvt.s32.f32 %v7410
    %v7418 = vmul.f32 %v7417, %v7415
    %v7419 = vxor.u32 %v7418, 2147483648
    %v7420 = vsel %vm7299, %v7419, %v7418
    %v7421 = vsub.s32 4, %v7397
    %v7422 = vsel %vm7299, %v7421, %v7397
    %v7423 = vsel %vm7298, %v5498, %v7420
    %v7424 = vsel %vm7298, 0, %v7422
    %v7425 = vmul.f32 %v7423, %v7423
    %v7426 = vmul.f32 %v7425, -0.001358992
    %v7427 = vadd.f32 %v7426, 0.041655596
    %v7428 = vmul.f32 %v7425, %v7427
    %v7429 = vadd.f32 %v7428, -0.4999988
    %v7430 = vmul.f32 %v7425, %v7429
    %v7431 = vadd.f32 1.0, %v7430
    %v7432 = vmul.f32 %v7423, %v7423
    %v7433 = vmul.f32 %v7432, -0.00019511016
    %v7434 = vadd.f32 %v7433, 0.008332121
    %v7435 = vmul.f32 %v7432, %v7434
    %v7436 = vadd.f32 %v7435, -0.16666654
    %v7437 = vmul.f32 %v7432, %v7436
    %v7438 = vadd.f32 %v7437, 1.0
    %v7439 = vmul.f32 %v7438, %v7423
    %vm7440 = vweird.f32 %v5498
    %v7441 = vadd.s32 %v7424, 3
    %v7442 = vand.u32 %v7441, 3
    %vm7443 = vcmp.lt.s32.totalorder %v7442, 2
    %vm7444 = vcmp.eq.s32.totalorder %v7442, 0
    %v7445 = vxor.u32 %v7439, 2147483648
    %v7446 = vsel %vm7444, %v7431, %v7445
    %vm7447 = vcmp.eq.s32.totalorder %v7442, 2
    %v7448 = vxor.u32 %v7431, 2147483648
    %v7449 = vsel %vm7447, %v7448, %v7439
    %v7450 = vsel %vm7443, %v7446, %v7449
    %v7451 = vsel %vm7440, nan, %v7450
    %v7452 = vand.u32 2147483647, %v5521
    %vm7453 = vcmp.le.f32.partialorder %v7452, 0.7853982
    %vm7454 = vcmp.lt.s32.totalorder %v5521, 0
    %v7455 = vand.u32 %v5521, 2139095040
    %v7456 = vshrl.u32 %v7455, 23
    %v7457 = vsub.s32 %v7456, 127
    %v7458 = vand.u32 2147483647, %v5521
    %v7459 = vand.u32 %v7458, 8388607
    %v7460 = vor.u32 %v7459, 8388608
    %v7461 = vsub.s32 0, %v7460
    %v7462 = vadd.s32 %v7457, 1
    %vm7463 = vcmp.gt.s32.totalorder %v7462, 0
    %v7464 = vsel %vm7463, %v7462, 0
    %v7465 = vshrl.u32 %v7464, 5
    %v7466 = vand.u32 %v7464, 31
    %v7467 = vsub.s32 32, %v7466
    %v7468 = vshrl.u32 683565275, %v7467
    %v7469 = vshll.u32 683565275, %v7466
    %v7470 = vshrl.u32 2475754826, %v7467
    %v7471 = vor.u32 %v7469, %v7470
    %v7472 = vshll.u32 2475754826, %v7466
    %v7473 = vshrl.u32 2131351028, %v7467
    %v7474 = vor.u32 %v7472, %v7473
    %v7475 = vshll.u32 2131351028, %v7466
    %v7476 = vshrl.u32 2102212464, %v7467
    %v7477 = vor.u32 %v7475, %v7476
    %v7478 = vshll.u32 2102212464, %v7466
    %v7479 = vshrl.u32 920167782, %v7467
    %v7480 = vor.u32 %v7478, %v7479
    %v7481 = vshll.u32 920167782, %v7466
    %v7482 = vshrl.u32 1326507024, %v7467
    %v7483 = vor.u32 %v7481, %v7482
    %vm7484 = vcmp.lt.s32.totalorder %v7465, 1
    %vm7485 = vcmp.lt.s32.totalorder %v7465, 2
    %vm7486 = vcmp.lt.s32.totalorder %v7465, 3
    %vm7487 = vcmp.lt.s32.totalorder %v7465, 4
    %v7488 = vsel %vm7484, %v7468, %v7471
    %v7489 = vsel %vm7487, %v7477, 2102212464
    %v7490 = vsel %vm7486, %v7474, %v7489
    %v7491 = vsel %vm7485, %v7488, %v7490
    %v7492 = vsel %vm7484, %v7471, %v7474
    %v7493 = vsel %vm7487, %v7480, 920167782
    %v7494 = vsel %vm7486, %v7477, %v7493
    %v7495 = vsel %vm7485, %v7492, %v7494
    %v7496 = vsel %vm7484, %v7474, %v7477
    %v7497 = vsel %vm7487, %v7483, 1326507024
    %v7498 = vsel %vm7486, %v7480, %v7497
    %v7499 = vsel %vm7485, %v7496, %v7498
    %v7500 = vshll.u32 %v7460, 8
    %v7501 = vand.u32 %v7500, 65535
    %v7502 = vshrl.u32 %v7500, 16
    %v7503 = vand.u32 %v7499, 65535
    %v7504 = vshrl.u32 %v7499, 16
    %v7505 = vmul.u32 %v7501, %v7503
    %v7506 = vmul.u32 %v7501, %v7504
    %v7507 = vmul.u32 %v7502, %v7503
    %v7508 = vmul.u32 %v7502, %v7504
    %v7509 = vshll.u32 %v7506, 16
    %v7510 = vshrl.u32 %v7506, 16
    %v7511 = vshll.u32 %v7507, 16
    %v7512 = vshrl.u32 %v7507, 16
    %vm7513 = vc.u32 %v7505, %v7509
    %v7514 = vsel %vm7513, 1, 0
    %v7515 = vadd.s32 %v7505, %v7509
    %v7516 = vadd.s32 %v7508, %v7514
    %vm7517 = vc.u32 %v7515, %v7511
    %v7518 = vsel %vm7517, 1, 0
    %v7519 = vadd.s32 %v7515, %v7511
    %v7520 = vadd.s32 %v7516, %v7518
    %v7521 = vadd.s32 %v7520, %v7510
    %v7522 = vadd.s32 %v7521, %v7512
    %v7523 = vand.u32 %v7500, 65535
    %v7524 = vshrl.u32 %v7500, 16
    %v7525 = vand.u32 %v7495, 65535
    %v7526 = vshrl.u32 %v7495, 16
    %v7527 = vmul.u32 %v7523, %v7525
    %v7528 = vmul.u32 %v7523, %v7526
    %v7529 = vmul.u32 %v7524, %v7525
    %v7530 = vmul.u32 %v7524, %v7526
    %v7531 = vshll.u32 %v7528, 16
    %v7532 = vshrl.u32 %v7528, 16
    %v7533 = vshll.u32 %v7529, 16
    %v7534 = vshrl.u32 %v7529, 16
    %vm7535 = vc.u32 %v7527, %v7531
    %v7536 = vsel %vm7535, 1, 0
    %v7537 = vadd.s32 %v7527, %v7531
    %v7538 = vadd.s32 %v7530, %v7536
    %vm7539 = vc.u32 %v7537, %v7533
    %v7540 = vsel %vm7539, 1, 0
    %v7541 = vadd.s32 %v7537, %v7533
    %v7542 = vadd.s32 %v7538, %v7540
    %v7543 = vadd.s32 %v7542, %v7532
    %v7544 = vadd.s32 %v7543, %v7534
    %v7545 = vmul.u32 %v7500, %v7491
    %v7546 = vadd.s32 %v7522, %v7541
    %vm7547 = vc.u32 %v7522, %v7541
    %v7548 = vadd.s32 %v7544, 1
    %v7549 = vsel %vm7547, %v7548, %v7544
    %v7550 = vadd.s32 %v7545, %v7549
    %v7551 = vadd.s32 %v7550, 536870912
    %v7552 = vshrl.u32 %v7551, 30
    %v7553 = vshll.u32 %v7552, 30
    %v7554 = vsub.s32 %v7550, %v7553
    %vm7555 = vcmp.lt.s32.totalorder %v7554, 0
    %v7556 = vsub.s32 0, %v7554
    %v7557 = vsel %vm7555, %v7556, %v7554
    %v7558 = vclz %v7557
    %v7559 = vsub.s32 %v7558, 2
    %vm7560 = vcmp.gt.s32.totalorder 0, %v7559
    %v7561 = vsel %vm7560, 0, %v7559
    %v7562 = vsub.s32 32, %v7561
    %v7563 = vshll.u32 %v7554, %v7561
    %v7564 = vshrl.u32 %v7546, %v7562
    %v7565 = vor.u32 %v7563, %v7564
    %v7566 = vsub.s32 4294967266, %v7561
    %v7567 = vadd.s32 %v7566, 127
    %v7568 = vshll.u32 %v7567, 23
    %v7569 = vor.u32 4788187, %v7568
    %v7570 = vand.u32 2147483647, %v7569
    %v7572 = vcvt.s32.f32 %v7565
    %v7573 = vmul.f32 %v7572, %v7570
    %v7574 = vxor.u32 %v7573, 2147483648
    %v7575 = vsel %vm7454, %v7574, %v7573
    %v7576 = vsub.s32 4, %v7552
    %v7577 = vsel %vm7454, %v7576, %v7552
    %v7578 = vsel %vm7453, %v5521, %v7575
    %v7579 = vsel %vm7453, 0, %v7577
    %v7580 = vmul.f32 %v7578, %v7578
    %v7581 = vmul.f32 %v7580, -0.001358992
    %v7582 = vadd.f32 %v7581, 0.041655596
    %v7583 = vmul.f32 %v7580, %v7582
    %v7584 = vadd.f32 %v7583, -0.4999988
    %v7585 = vmul.f32 %v7580, %v7584
    %v7586 = vadd.f32 1.0, %v7585
    %v7587 = vmul.f32 %v7578, %v7578
    %v7588 = vmul.f32 %v7587, -0.00019511016
    %v7589 = vadd.f32 %v7588, 0.008332121
    %v7590 = vmul.f32 %v7587, %v7589
    %v7591 = vadd.f32 %v7590, -0.16666654
    %v7592 = vmul.f32 %v7587, %v7591
    %v7593 = vadd.f32 %v7592, 1.0
    %v7594 = vmul.f32 %v7593, %v7578
    %vm7595 = vweird.f32 %v5521
    %v7596 = vadd.s32 %v7579, 3
    %v7597 = vand.u32 %v7596, 3
    %vm7598 = vcmp.lt.s32.totalorder %v7597, 2
    %vm7599 = vcmp.eq.s32.totalorder %v7597, 0
    %v7600 = vxor.u32 %v7594, 2147483648
    %v7601 = vsel %vm7599, %v7586, %v7600
    %vm7602 = vcmp.eq.s32.totalorder %v7597, 2
    %v7603 = vxor.u32 %v7586, 2147483648
    %v7604 = vsel %vm7602, %v7603, %v7594
    %v7605 = vsel %vm7598, %v7601, %v7604
    %v7606 = vsel %vm7595, nan, %v7605
    %v7607 = vand.u32 2147483647, %v5544
    %vm7608 = vcmp.le.f32.partialorder %v7607, 0.7853982
    %vm7609 = vcmp.lt.s32.totalorder %v5544, 0
    %v7610 = vand.u32 %v5544, 2139095040
    %v7611 = vshrl.u32 %v7610, 23
    %v7612 = vsub.s32 %v7611, 127
    %v7613 = vand.u32 2147483647, %v5544
    %v7614 = vand.u32 %v7613, 8388607
    %v7615 = vor.u32 %v7614, 8388608
    %v7616 = vsub.s32 0, %v7615
    %v7617 = vadd.s32 %v7612, 1
    %vm7618 = vcmp.gt.s32.totalorder %v7617, 0
    %v7619 = vsel %vm7618, %v7617, 0
    %v7620 = vshrl.u32 %v7619, 5
    %v7621 = vand.u32 %v7619, 31
    %v7622 = vsub.s32 32, %v7621
    %v7623 = vshrl.u32 683565275, %v7622
    %v7624 = vshll.u32 683565275, %v7621
    %v7625 = vshrl.u32 2475754826, %v7622
    %v7626 = vor.u32 %v7624, %v7625
    %v7627 = vshll.u32 2475754826, %v7621
    %v7628 = vshrl.u32 2131351028, %v7622
    %v7629 = vor.u32 %v7627, %v7628
    %v7630 = vshll.u32 2131351028, %v7621
    %v7631 = vshrl.u32 2102212464, %v7622
    %v7632 = vor.u32 %v7630, %v7631
    %v7633 = vshll.u32 2102212464, %v7621
    %v7634 = vshrl.u32 920167782, %v7622
    %v7635 = vor.u32 %v7633, %v7634
    %v7636 = vshll.u32 920167782, %v7621
    %v7637 = vshrl.u32 1326507024, %v7622
    %v7638 = vor.u32 %v7636, %v7637
    %vm7639 = vcmp.lt.s32.totalorder %v7620, 1
    %vm7640 = vcmp.lt.s32.totalorder %v7620, 2
    %vm7641 = vcmp.lt.s32.totalorder %v7620, 3
    %vm7642 = vcmp.lt.s32.totalorder %v7620, 4
    %v7643 = vsel %vm7639, %v7623, %v7626
    %v7644 = vsel %vm7642, %v7632, 2102212464
    %v7645 = vsel %vm7641, %v7629, %v7644
    %v7646 = vsel %vm7640, %v7643, %v7645
    %v7647 = vsel %vm7639, %v7626, %v7629
    %v7648 = vsel %vm7642, %v7635, 920167782
    %v7649 = vsel %vm7641, %v7632, %v7648
    %v7650 = vsel %vm7640, %v7647, %v7649
    %v7651 = vsel %vm7639, %v7629, %v7632
    %v7652 = vsel %vm7642, %v7638, 1326507024
    %v7653 = vsel %vm7641, %v7635, %v7652
    %v7654 = vsel %vm7640, %v7651, %v7653
    %v7655 = vshll.u32 %v7615, 8
    %v7656 = vand.u32 %v7655, 65535
    %v7657 = vshrl.u32 %v7655, 16
    %v7658 = vand.u32 %v7654, 65535
    %v7659 = vshrl.u32 %v7654, 16
    %v7660 = vmul.u32 %v7656, %v7658
    %v7661 = vmul.u32 %v7656, %v7659
    %v7662 = vmul.u32 %v7657, %v7658
    %v7663 = vmul.u32 %v7657, %v7659
    %v7664 = vshll.u32 %v7661, 16
    %v7665 = vshrl.u32 %v7661, 16
    %v7666 = vshll.u32 %v7662, 16
    %v7667 = vshrl.u32 %v7662, 16
    %vm7668 = vc.u32 %v7660, %v7664
    %v7669 = vsel %vm7668, 1, 0
    %v7670 = vadd.s32 %v7660, %v7664
    %v7671 = vadd.s32 %v7663, %v7669
    %vm7672 = vc.u32 %v7670, %v7666
    %v7673 = vsel %vm7672, 1, 0
    %v7674 = vadd.s32 %v7670, %v7666
    %v7675 = vadd.s32 %v7671, %v7673
    %v7676 = vadd.s32 %v7675, %v7665
    %v7677 = vadd.s32 %v7676, %v7667
    %v7678 = vand.u32 %v7655, 65535
    %v7679 = vshrl.u32 %v7655, 16
    %v7680 = vand.u32 %v7650, 65535
    %v7681 = vshrl.u32 %v7650, 16
    %v7682 = vmul.u32 %v7678, %v7680
    %v7683 = vmul.u32 %v7678, %v7681
    %v7684 = vmul.u32 %v7679, %v7680
    %v7685 = vmul.u32 %v7679, %v7681
    %v7686 = vshll.u32 %v7683, 16
    %v7687 = vshrl.u32 %v7683, 16
    %v7688 = vshll.u32 %v7684, 16
    %v7689 = vshrl.u32 %v7684, 16
    %vm7690 = vc.u32 %v7682, %v7686
    %v7691 = vsel %vm7690, 1, 0
    %v7692 = vadd.s32 %v7682, %v7686
    %v7693 = vadd.s32 %v7685, %v7691
    %vm7694 = vc.u32 %v7692, %v7688
    %v7695 = vsel %vm7694, 1, 0
    %v7696 = vadd.s32 %v7692, %v7688
    %v7697 = vadd.s32 %v7693, %v7695
    %v7698 = vadd.s32 %v7697, %v7687
    %v7699 = vadd.s32 %v7698, %v7689
    %v7700 = vmul.u32 %v7655, %v7646
    %v7701 = vadd.s32 %v7677, %v7696
    %vm7702 = vc.u32 %v7677, %v7696
    %v7703 = vadd.s32 %v7699, 1
    %v7704 = vsel %vm7702, %v7703, %v7699
    %v7705 = vadd.s32 %v7700, %v7704
    %v7706 = vadd.s32 %v7705, 536870912
    %v7707 = vshrl.u32 %v7706, 30
    %v7708 = vshll.u32 %v7707, 30
    %v7709 = vsub.s32 %v7705, %v7708
    %vm7710 = vcmp.lt.s32.totalorder %v7709, 0
    %v7711 = vsub.s32 0, %v7709
    %v7712 = vsel %vm7710, %v7711, %v7709
    %v7713 = vclz %v7712
    %v7714 = vsub.s32 %v7713, 2
    %vm7715 = vcmp.gt.s32.totalorder 0, %v7714
    %v7716 = vsel %vm7715, 0, %v7714
    %v7717 = vsub.s32 32, %v7716
    %v7718 = vshll.u32 %v7709, %v7716
    %v7719 = vshrl.u32 %v7701, %v7717
    %v7720 = vor.u32 %v7718, %v7719
    %v7721 = vsub.s32 4294967266, %v7716
    %v7722 = vadd.s32 %v7721, 127
    %v7723 = vshll.u32 %v7722, 23
    %v7724 = vor.u32 4788187, %v7723
    %v7725 = vand.u32 2147483647, %v7724
    %v7727 = vcvt.s32.f32 %v7720
    %v7728 = vmul.f32 %v7727, %v7725
    %v7729 = vxor.u32 %v7728, 2147483648
    %v7730 = vsel %vm7609, %v7729, %v7728
    %v7731 = vsub.s32 4, %v7707
    %v7732 = vsel %vm7609, %v7731, %v7707
    %v7733 = vsel %vm7608, %v5544, %v7730
    %v7734 = vsel %vm7608, 0, %v7732
    %v7735 = vmul.f32 %v7733, %v7733
    %v7736 = vmul.f32 %v7735, -0.001358992
    %v7737 = vadd.f32 %v7736, 0.041655596
    %v7738 = vmul.f32 %v7735, %v7737
    %v7739 = vadd.f32 %v7738, -0.4999988
    %v7740 = vmul.f32 %v7735, %v7739
    %v7741 = vadd.f32 1.0, %v7740
    %v7742 = vmul.f32 %v7733, %v7733
    %v7743 = vmul.f32 %v7742, -0.00019511016
    %v7744 = vadd.f32 %v7743, 0.008332121
    %v7745 = vmul.f32 %v7742, %v7744
    %v7746 = vadd.f32 %v7745, -0.16666654
    %v7747 = vmul.f32 %v7742, %v7746
    %v7748 = vadd.f32 %v7747, 1.0
    %v7749 = vmul.f32 %v7748, %v7733
    %vm7750 = vweird.f32 %v5544
    %v7751 = vadd.s32 %v7734, 3
    %v7752 = vand.u32 %v7751, 3
    %vm7753 = vcmp.lt.s32.totalorder %v7752, 2
    %vm7754 = vcmp.eq.s32.totalorder %v7752, 0
    %v7755 = vxor.u32 %v7749, 2147483648
    %v7756 = vsel %vm7754, %v7741, %v7755
    %vm7757 = vcmp.eq.s32.totalorder %v7752, 2
    %v7758 = vxor.u32 %v7741, 2147483648
    %v7759 = vsel %vm7757, %v7758, %v7749
    %v7760 = vsel %vm7753, %v7756, %v7759
    %v7761 = vsel %vm7750, nan, %v7760
    %v7762 = vand.u32 2147483647, %v5567
    %vm7763 = vcmp.le.f32.partialorder %v7762, 0.7853982
    %vm7764 = vcmp.lt.s32.totalorder %v5567, 0
    %v7765 = vand.u32 %v5567, 2139095040
    %v7766 = vshrl.u32 %v7765, 23
    %v7767 = vsub.s32 %v7766, 127
    %v7768 = vand.u32 2147483647, %v5567
    %v7769 = vand.u32 %v7768, 8388607
    %v7770 = vor.u32 %v7769, 8388608
    %v7771 = vsub.s32 0, %v7770
    %v7772 = vadd.s32 %v7767, 1
    %vm7773 = vcmp.gt.s32.totalorder %v7772, 0
    %v7774 = vsel %vm7773, %v7772, 0
    %v7775 = vshrl.u32 %v7774, 5
    %v7776 = vand.u32 %v7774, 31
    %v7777 = vsub.s32 32, %v7776
    %v7778 = vshrl.u32 683565275, %v7777
    %v7779 = vshll.u32 683565275, %v7776
    %v7780 = vshrl.u32 2475754826, %v7777
    %v7781 = vor.u32 %v7779, %v7780
    %v7782 = vshll.u32 2475754826, %v7776
    %v7783 = vshrl.u32 2131351028, %v7777
    %v7784 = vor.u32 %v7782, %v7783
    %v7785 = vshll.u32 2131351028, %v7776
    %v7786 = vshrl.u32 2102212464, %v7777
    %v7787 = vor.u32 %v7785, %v7786
    %v7788 = vshll.u32 2102212464, %v7776
    %v7789 = vshrl.u32 920167782, %v7777
    %v7790 = vor.u32 %v7788, %v7789
    %v7791 = vshll.u32 920167782, %v7776
    %v7792 = vshrl.u32 1326507024, %v7777
    %v7793 = vor.u32 %v7791, %v7792
    %vm7794 = vcmp.lt.s32.totalorder %v7775, 1
    %vm7795 = vcmp.lt.s32.totalorder %v7775, 2
    %vm7796 = vcmp.lt.s32.totalorder %v7775, 3
    %vm7797 = vcmp.lt.s32.totalorder %v7775, 4
    %v7798 = vsel %vm7794, %v7778, %v7781
    %v7799 = vsel %vm7797, %v7787, 2102212464
    %v7800 = vsel %vm7796, %v7784, %v7799
    %v7801 = vsel %vm7795, %v7798, %v7800
    %v7802 = vsel %vm7794, %v7781, %v7784
    %v7803 = vsel %vm7797, %v7790, 920167782
    %v7804 = vsel %vm7796, %v7787, %v7803
    %v7805 = vsel %vm7795, %v7802, %v7804
    %v7806 = vsel %vm7794, %v7784, %v7787
    %v7807 = vsel %vm7797, %v7793, 1326507024
    %v7808 = vsel %vm7796, %v7790, %v7807
    %v7809 = vsel %vm7795, %v7806, %v7808
    %v7810 = vshll.u32 %v7770, 8
    %v7811 = vand.u32 %v7810, 65535
    %v7812 = vshrl.u32 %v7810, 16
    %v7813 = vand.u32 %v7809, 65535
    %v7814 = vshrl.u32 %v7809, 16
    %v7815 = vmul.u32 %v7811, %v7813
    %v7816 = vmul.u32 %v7811, %v7814
    %v7817 = vmul.u32 %v7812, %v7813
    %v7818 = vmul.u32 %v7812, %v7814
    %v7819 = vshll.u32 %v7816, 16
    %v7820 = vshrl.u32 %v7816, 16
    %v7821 = vshll.u32 %v7817, 16
    %v7822 = vshrl.u32 %v7817, 16
    %vm7823 = vc.u32 %v7815, %v7819
    %v7824 = vsel %vm7823, 1, 0
    %v7825 = vadd.s32 %v7815, %v7819
    %v7826 = vadd.s32 %v7818, %v7824
    %vm7827 = vc.u32 %v7825, %v7821
    %v7828 = vsel %vm7827, 1, 0
    %v7829 = vadd.s32 %v7825, %v7821
    %v7830 = vadd.s32 %v7826, %v7828
    %v7831 = vadd.s32 %v7830, %v7820
    %v7832 = vadd.s32 %v7831, %v7822
    %v7833 = vand.u32 %v7810, 65535
    %v7834 = vshrl.u32 %v7810, 16
    %v7835 = vand.u32 %v7805, 65535
    %v7836 = vshrl.u32 %v7805, 16
    %v7837 = vmul.u32 %v7833, %v7835
    %v7838 = vmul.u32 %v7833, %v7836
    %v7839 = vmul.u32 %v7834, %v7835
    %v7840 = vmul.u32 %v7834, %v7836
    %v7841 = vshll.u32 %v7838, 16
    %v7842 = vshrl.u32 %v7838, 16
    %v7843 = vshll.u32 %v7839, 16
    %v7844 = vshrl.u32 %v7839, 16
    %vm7845 = vc.u32 %v7837, %v7841
    %v7846 = vsel %vm7845, 1, 0
    %v7847 = vadd.s32 %v7837, %v7841
    %v7848 = vadd.s32 %v7840, %v7846
    %vm7849 = vc.u32 %v7847, %v7843
    %v7850 = vsel %vm7849, 1, 0
    %v7851 = vadd.s32 %v7847, %v7843
    %v7852 = vadd.s32 %v7848, %v7850
    %v7853 = vadd.s32 %v7852, %v7842
    %v7854 = vadd.s32 %v7853, %v7844
    %v7855 = vmul.u32 %v7810, %v7801
    %v7856 = vadd.s32 %v7832, %v7851
    %vm7857 = vc.u32 %v7832, %v7851
    %v7858 = vadd.s32 %v7854, 1
    %v7859 = vsel %vm7857, %v7858, %v7854
    %v7860 = vadd.s32 %v7855, %v7859
    %v7861 = vadd.s32 %v7860, 536870912
    %v7862 = vshrl.u32 %v7861, 30
    %v7863 = vshll.u32 %v7862, 30
    %v7864 = vsub.s32 %v7860, %v7863
    %vm7865 = vcmp.lt.s32.totalorder %v7864, 0
    %v7866 = vsub.s32 0, %v7864
    %v7867 = vsel %vm7865, %v7866, %v7864
    %v7868 = vclz %v7867
    %v7869 = vsub.s32 %v7868, 2
    %vm7870 = vcmp.gt.s32.totalorder 0, %v7869
    %v7871 = vsel %vm7870, 0, %v7869
    %v7872 = vsub.s32 32, %v7871
    %v7873 = vshll.u32 %v7864, %v7871
    %v7874 = vshrl.u32 %v7856, %v7872
    %v7875 = vor.u32 %v7873, %v7874
    %v7876 = vsub.s32 4294967266, %v7871
    %v7877 = vadd.s32 %v7876, 127
    %v7878 = vshll.u32 %v7877, 23
    %v7879 = vor.u32 4788187, %v7878
    %v7880 = vand.u32 2147483647, %v7879
    %v7882 = vcvt.s32.f32 %v7875
    %v7883 = vmul.f32 %v7882, %v7880
    %v7884 = vxor.u32 %v7883, 2147483648
    %v7885 = vsel %vm7764, %v7884, %v7883
    %v7886 = vsub.s32 4, %v7862
    %v7887 = vsel %vm7764, %v7886, %v7862
    %v7888 = vsel %vm7763, %v5567, %v7885
    %v7889 = vsel %vm7763, 0, %v7887
    %v7890 = vmul.f32 %v7888, %v7888
    %v7891 = vmul.f32 %v7890, -0.001358992
    %v7892 = vadd.f32 %v7891, 0.041655596
    %v7893 = vmul.f32 %v7890, %v7892
    %v7894 = vadd.f32 %v7893, -0.4999988
    %v7895 = vmul.f32 %v7890, %v7894
    %v7896 = vadd.f32 1.0, %v7895
    %v7897 = vmul.f32 %v7888, %v7888
    %v7898 = vmul.f32 %v7897, -0.00019511016
    %v7899 = vadd.f32 %v7898, 0.008332121
    %v7900 = vmul.f32 %v7897, %v7899
    %v7901 = vadd.f32 %v7900, -0.16666654
    %v7902 = vmul.f32 %v7897, %v7901
    %v7903 = vadd.f32 %v7902, 1.0
    %v7904 = vmul.f32 %v7903, %v7888
    %vm7905 = vweird.f32 %v5567
    %v7906 = vadd.s32 %v7889, 3
    %v7907 = vand.u32 %v7906, 3
    %vm7908 = vcmp.lt.s32.totalorder %v7907, 2
    %vm7909 = vcmp.eq.s32.totalorder %v7907, 0
    %v7910 = vxor.u32 %v7904, 2147483648
    %v7911 = vsel %vm7909, %v7896, %v7910
    %vm7912 = vcmp.eq.s32.totalorder %v7907, 2
    %v7913 = vxor.u32 %v7896, 2147483648
    %v7914 = vsel %vm7912, %v7913, %v7904
    %v7915 = vsel %vm7908, %v7911, %v7914
    %v7916 = vsel %vm7905, nan, %v7915
    %v7917 = vand.u32 2147483647, %v5590
    %vm7918 = vcmp.le.f32.partialorder %v7917, 0.7853982
    %vm7919 = vcmp.lt.s32.totalorder %v5590, 0
    %v7920 = vand.u32 %v5590, 2139095040
    %v7921 = vshrl.u32 %v7920, 23
    %v7922 = vsub.s32 %v7921, 127
    %v7923 = vand.u32 2147483647, %v5590
    %v7924 = vand.u32 %v7923, 8388607
    %v7925 = vor.u32 %v7924, 8388608
    %v7926 = vsub.s32 0, %v7925
    %v7927 = vadd.s32 %v7922, 1
    %vm7928 = vcmp.gt.s32.totalorder %v7927, 0
    %v7929 = vsel %vm7928, %v7927, 0
    %v7930 = vshrl.u32 %v7929, 5
    %v7931 = vand.u32 %v7929, 31
    %v7932 = vsub.s32 32, %v7931
    %v7933 = vshrl.u32 683565275, %v7932
    %v7934 = vshll.u32 683565275, %v7931
    %v7935 = vshrl.u32 2475754826, %v7932
    %v7936 = vor.u32 %v7934, %v7935
    %v7937 = vshll.u32 2475754826, %v7931
    %v7938 = vshrl.u32 2131351028, %v7932
    %v7939 = vor.u32 %v7937, %v7938
    %v7940 = vshll.u32 2131351028, %v7931
    %v7941 = vshrl.u32 2102212464, %v7932
    %v7942 = vor.u32 %v7940, %v7941
    %v7943 = vshll.u32 2102212464, %v7931
    %v7944 = vshrl.u32 920167782, %v7932
    %v7945 = vor.u32 %v7943, %v7944
    %v7946 = vshll.u32 920167782, %v7931
    %v7947 = vshrl.u32 1326507024, %v7932
    %v7948 = vor.u32 %v7946, %v7947
    %vm7949 = vcmp.lt.s32.totalorder %v7930, 1
    %vm7950 = vcmp.lt.s32.totalorder %v7930, 2
    %vm7951 = vcmp.lt.s32.totalorder %v7930, 3
    %vm7952 = vcmp.lt.s32.totalorder %v7930, 4
    %v7953 = vsel %vm7949, %v7933, %v7936
    %v7954 = vsel %vm7952, %v7942, 2102212464
    %v7955 = vsel %vm7951, %v7939, %v7954
    %v7956 = vsel %vm7950, %v7953, %v7955
    %v7957 = vsel %vm7949, %v7936, %v7939
    %v7958 = vsel %vm7952, %v7945, 920167782
    %v7959 = vsel %vm7951, %v7942, %v7958
    %v7960 = vsel %vm7950, %v7957, %v7959
    %v7961 = vsel %vm7949, %v7939, %v7942
    %v7962 = vsel %vm7952, %v7948, 1326507024
    %v7963 = vsel %vm7951, %v7945, %v7962
    %v7964 = vsel %vm7950, %v7961, %v7963
    %v7965 = vshll.u32 %v7925, 8
    %v7966 = vand.u32 %v7965, 65535
    %v7967 = vshrl.u32 %v7965, 16
    %v7968 = vand.u32 %v7964, 65535
    %v7969 = vshrl.u32 %v7964, 16
    %v7970 = vmul.u32 %v7966, %v7968
    %v7971 = vmul.u32 %v7966, %v7969
    %v7972 = vmul.u32 %v7967, %v7968
    %v7973 = vmul.u32 %v7967, %v7969
    %v7974 = vshll.u32 %v7971, 16
    %v7975 = vshrl.u32 %v7971, 16
    %v7976 = vshll.u32 %v7972, 16
    %v7977 = vshrl.u32 %v7972, 16
    %vm7978 = vc.u32 %v7970, %v7974
    %v7979 = vsel %vm7978, 1, 0
    %v7980 = vadd.s32 %v7970, %v7974
    %v7981 = vadd.s32 %v7973, %v7979
    %vm7982 = vc.u32 %v7980, %v7976
    %v7983 = vsel %vm7982, 1, 0
    %v7984 = vadd.s32 %v7980, %v7976
    %v7985 = vadd.s32 %v7981, %v7983
    %v7986 = vadd.s32 %v7985, %v7975
    %v7987 = vadd.s32 %v7986, %v7977
    %v7988 = vand.u32 %v7965, 65535
    %v7989 = vshrl.u32 %v7965, 16
    %v7990 = vand.u32 %v7960, 65535
    %v7991 = vshrl.u32 %v7960, 16
    %v7992 = vmul.u32 %v7988, %v7990
    %v7993 = vmul.u32 %v7988, %v7991
    %v7994 = vmul.u32 %v7989, %v7990
    %v7995 = vmul.u32 %v7989, %v7991
    %v7996 = vshll.u32 %v7993, 16
    %v7997 = vshrl.u32 %v7993, 16
    %v7998 = vshll.u32 %v7994, 16
    %v7999 = vshrl.u32 %v7994, 16
    %vm8000 = vc.u32 %v7992, %v7996
    %v8001 = vsel %vm8000, 1, 0
    %v8002 = vadd.s32 %v7992, %v7996
    %v8003 = vadd.s32 %v7995, %v8001
    %vm8004 = vc.u32 %v8002, %v7998
    %v8005 = vsel %vm8004, 1, 0
    %v8006 = vadd.s32 %v8002, %v7998
    %v8007 = vadd.s32 %v8003, %v8005
    %v8008 = vadd.s32 %v8007, %v7997
    %v8009 = vadd.s32 %v8008, %v7999
    %v8010 = vmul.u32 %v7965, %v7956
    %v8011 = vadd.s32 %v7987, %v8006
    %vm8012 = vc.u32 %v7987, %v8006
    %v8013 = vadd.s32 %v8009, 1
    %v8014 = vsel %vm8012, %v8013, %v8009
    %v8015 = vadd.s32 %v8010, %v8014
    %v8016 = vadd.s32 %v8015, 536870912
    %v8017 = vshrl.u32 %v8016, 30
    %v8018 = vshll.u32 %v8017, 30
    %v8019 = vsub.s32 %v8015, %v8018
    %vm8020 = vcmp.lt.s32.totalorder %v8019, 0
    %v8021 = vsub.s32 0, %v8019
    %v8022 = vsel %vm8020, %v8021, %v8019
    %v8023 = vclz %v8022
    %v8024 = vsub.s32 %v8023, 2
    %vm8025 = vcmp.gt.s32.totalorder 0, %v8024
    %v8026 = vsel %vm8025, 0, %v8024
    %v8027 = vsub.s32 32, %v8026
    %v8028 = vshll.u32 %v8019, %v8026
    %v8029 = vshrl.u32 %v8011, %v8027
    %v8030 = vor.u32 %v8028, %v8029
    %v8031 = vsub.s32 4294967266, %v8026
    %v8032 = vadd.s32 %v8031, 127
    %v8033 = vshll.u32 %v8032, 23
    %v8034 = vor.u32 4788187, %v8033
    %v8035 = vand.u32 2147483647, %v8034
    %v8037 = vcvt.s32.f32 %v8030
    %v8038 = vmul.f32 %v8037, %v8035
    %v8039 = vxor.u32 %v8038, 2147483648
    %v8040 = vsel %vm7919, %v8039, %v8038
    %v8041 = vsub.s32 4, %v8017
    %v8042 = vsel %vm7919, %v8041, %v8017
    %v8043 = vsel %vm7918, %v5590, %v8040
    %v8044 = vsel %vm7918, 0, %v8042
    %v8045 = vmul.f32 %v8043, %v8043
    %v8046 = vmul.f32 %v8045, -0.001358992
    %v8047 = vadd.f32 %v8046, 0.041655596
    %v8048 = vmul.f32 %v8045, %v8047
    %v8049 = vadd.f32 %v8048, -0.4999988
    %v8050 = vmul.f32 %v8045, %v8049
    %v8051 = vadd.f32 1.0, %v8050
    %v8052 = vmul.f32 %v8043, %v8043
    %v8053 = vmul.f32 %v8052, -0.00019511016
    %v8054 = vadd.f32 %v8053, 0.008332121
    %v8055 = vmul.f32 %v8052, %v8054
    %v8056 = vadd.f32 %v8055, -0.16666654
    %v8057 = vmul.f32 %v8052, %v8056
    %v8058 = vadd.f32 %v8057, 1.0
    %v8059 = vmul.f32 %v8058, %v8043
    %vm8060 = vweird.f32 %v5590
    %v8061 = vadd.s32 %v8044, 3
    %v8062 = vand.u32 %v8061, 3
    %vm8063 = vcmp.lt.s32.totalorder %v8062, 2
    %vm8064 = vcmp.eq.s32.totalorder %v8062, 0
    %v8065 = vxor.u32 %v8059, 2147483648
    %v8066 = vsel %vm8064, %v8051, %v8065
    %vm8067 = vcmp.eq.s32.totalorder %v8062, 2
    %v8068 = vxor.u32 %v8051, 2147483648
    %v8069 = vsel %vm8067, %v8068, %v8059
    %v8070 = vsel %vm8063, %v8066, %v8069
    %v8071 = vsel %vm8060, nan, %v8070
    %v8073 = vsel %vm2723, %v26, 0
    %v8076 = vsel %vm2723, %v27, 0
    %v8079 = vsel %vm2723, %v28, 0
    %v8082 = vsel %vm2723, %v29, 0
    %8084 = vmatpush.msra.mxu0 0.0
    %8085 = vmatpush.msra.mxu0 0.0
    %8086 = vmatpush.msra.mxu0 0.0
    %8087 = vmatpush.msra.mxu0 0.0
    %8088 = vmatpush.msra.mxu0 0.0
    %8089 = vmatpush.msra.mxu0 0.0
    %8090 = vmatpush.msra.mxu0 0.0
    %8091 = vmatpush.msra.mxu0 0.0
    %8092 = vmatpush.msra.mxu0 0.0
    %8093 = vmatpush.msra.mxu0 0.0
    %8094 = vmatpush.msra.mxu0 0.0
    %8095 = vmatpush.msra.mxu0 0.0
    %8096 = vmatpush.msra.mxu0 0.0
    %8097 = vmatpush.msra.mxu0 0.0
    %8098 = vmatpush.msra.mxu0 %v6986
    %8099 = vmatpush.msra.mxu0 %v5746
    %8100 = vmatmul.f32.gmra.mxu0 %v8073
    %v8101 = vpop.f32.mrf.mxu0
    %v8102 = vadd.f32 0.0, %v8101
    %8103 = vmatmul.f32.gmra.mxu0 %v8076
    %v8104 = vpop.f32.mrf.mxu0
    %v8105 = vadd.f32 0.0, %v8104
    %8106 = vmatmul.f32.gmra.mxu0 %v8079
    %v8107 = vpop.f32.mrf.mxu0
    %v8108 = vadd.f32 0.0, %v8107
    %8109 = vmatmul.f32.gmra.mxu0 %v8082
    %v8110 = vpop.f32.mrf.mxu0
    %v8111 = vadd.f32 0.0, %v8110
    %8112 = vdwg.mxu0
    %8113 = vmatpush.msra.mxu0 0.0
    %8114 = vmatpush.msra.mxu0 0.0
    %8115 = vmatpush.msra.mxu0 0.0
    %8116 = vmatpush.msra.mxu0 0.0
    %8117 = vmatpush.msra.mxu0 0.0
    %8118 = vmatpush.msra.mxu0 0.0
    %8119 = vmatpush.msra.mxu0 0.0
    %8120 = vmatpush.msra.mxu0 0.0
    %8121 = vmatpush.msra.mxu0 0.0
    %8122 = vmatpush.msra.mxu0 0.0
    %8123 = vmatpush.msra.mxu0 0.0
    %8124 = vmatpush.msra.mxu0 0.0
    %8125 = vmatpush.msra.mxu0 0.0
    %8126 = vmatpush.msra.mxu0 0.0
    %8127 = vmatpush.msra.mxu0 %v7141
    %8128 = vmatpush.msra.mxu0 %v5901
    %8129 = vmatmul.f32.gmra.mxu0 %v8073
    %v8130 = vpop.f32.mrf.mxu0
    %v8131 = vadd.f32 0.0, %v8130
    %8132 = vmatmul.f32.gmra.mxu0 %v8076
    %v8133 = vpop.f32.mrf.mxu0
    %v8134 = vadd.f32 0.0, %v8133
    %8135 = vmatmul.f32.gmra.mxu0 %v8079
    %v8136 = vpop.f32.mrf.mxu0
    %v8137 = vadd.f32 0.0, %v8136
    %8138 = vmatmul.f32.gmra.mxu0 %v8082
    %v8139 = vpop.f32.mrf.mxu0
    %v8140 = vadd.f32 0.0, %v8139
    %8141 = vdwg.mxu0
    %8142 = vmatpush.msra.mxu0 0.0
    %8143 = vmatpush.msra.mxu0 0.0
    %8144 = vmatpush.msra.mxu0 0.0
    %8145 = vmatpush.msra.mxu0 0.0
    %8146 = vmatpush.msra.mxu0 0.0
    %8147 = vmatpush.msra.mxu0 0.0
    %8148 = vmatpush.msra.mxu0 0.0
    %8149 = vmatpush.msra.mxu0 0.0
    %8150 = vmatpush.msra.mxu0 0.0
    %8151 = vmatpush.msra.mxu0 0.0
    %8152 = vmatpush.msra.mxu0 0.0
    %8153 = vmatpush.msra.mxu0 0.0
    %8154 = vmatpush.msra.mxu0 0.0
    %8155 = vmatpush.msra.mxu0 0.0
    %8156 = vmatpush.msra.mxu0 %v7296
    %8157 = vmatpush.msra.mxu0 %v6056
    %8158 = vmatmul.f32.gmra.mxu0 %v8073
    %v8159 = vpop.f32.mrf.mxu0
    %v8160 = vadd.f32 0.0, %v8159
    %8161 = vmatmul.f32.gmra.mxu0 %v8076
    %v8162 = vpop.f32.mrf.mxu0
    %v8163 = vadd.f32 0.0, %v8162
    %8164 = vmatmul.f32.gmra.mxu0 %v8079
    %v8165 = vpop.f32.mrf.mxu0
    %v8166 = vadd.f32 0.0, %v8165
    %8167 = vmatmul.f32.gmra.mxu0 %v8082
    %v8168 = vpop.f32.mrf.mxu0
    %v8169 = vadd.f32 0.0, %v8168
    %8170 = vdwg.mxu0
    %8171 = vmatpush.msra.mxu0 0.0
    %8172 = vmatpush.msra.mxu0 0.0
    %8173 = vmatpush.msra.mxu0 0.0
    %8174 = vmatpush.msra.mxu0 0.0
    %8175 = vmatpush.msra.mxu0 0.0
    %8176 = vmatpush.msra.mxu0 0.0
    %8177 = vmatpush.msra.mxu0 0.0
    %8178 = vmatpush.msra.mxu0 0.0
    %8179 = vmatpush.msra.mxu0 0.0
    %8180 = vmatpush.msra.mxu0 0.0
    %8181 = vmatpush.msra.mxu0 0.0
    %8182 = vmatpush.msra.mxu0 0.0
    %8183 = vmatpush.msra.mxu0 0.0
    %8184 = vmatpush.msra.mxu0 0.0
    %8185 = vmatpush.msra.mxu0 %v7451
    %8186 = vmatpush.msra.mxu0 %v6211
    %8187 = vmatmul.f32.gmra.mxu0 %v8073
    %v8188 = vpop.f32.mrf.mxu0
    %v8189 = vadd.f32 0.0, %v8188
    %8190 = vmatmul.f32.gmra.mxu0 %v8076
    %v8191 = vpop.f32.mrf.mxu0
    %v8192 = vadd.f32 0.0, %v8191
    %8193 = vmatmul.f32.gmra.mxu0 %v8079
    %v8194 = vpop.f32.mrf.mxu0
    %v8195 = vadd.f32 0.0, %v8194
    %8196 = vmatmul.f32.gmra.mxu0 %v8082
    %v8197 = vpop.f32.mrf.mxu0
    %v8198 = vadd.f32 0.0, %v8197
    %8199 = vdwg.mxu0
    %8200 = vmatpush.msra.mxu0 0.0
    %8201 = vmatpush.msra.mxu0 0.0
    %8202 = vmatpush.msra.mxu0 0.0
    %8203 = vmatpush.msra.mxu0 0.0
    %8204 = vmatpush.msra.mxu0 0.0
    %8205 = vmatpush.msra.mxu0 0.0
    %8206 = vmatpush.msra.mxu0 0.0
    %8207 = vmatpush.msra.mxu0 0.0
    %8208 = vmatpush.msra.mxu0 0.0
    %8209 = vmatpush.msra.mxu0 0.0
    %8210 = vmatpush.msra.mxu0 0.0
    %8211 = vmatpush.msra.mxu0 0.0
    %8212 = vmatpush.msra.mxu0 0.0
    %8213 = vmatpush.msra.mxu0 0.0
    %8214 = vmatpush.msra.mxu0 %v7606
    %8215 = vmatpush.msra.mxu0 %v6366
    %8216 = vmatmul.f32.gmra.mxu0 %v8073
    %v8217 = vpop.f32.mrf.mxu0
    %v8218 = vadd.f32 0.0, %v8217
    %8219 = vmatmul.f32.gmra.mxu0 %v8076
    %v8220 = vpop.f32.mrf.mxu0
    %v8221 = vadd.f32 0.0, %v8220
    %8222 = vmatmul.f32.gmra.mxu0 %v8079
    %v8223 = vpop.f32.mrf.mxu0
    %v8224 = vadd.f32 0.0, %v8223
    %8225 = vmatmul.f32.gmra.mxu0 %v8082
    %v8226 = vpop.f32.mrf.mxu0
    %v8227 = vadd.f32 0.0, %v8226
    %8228 = vdwg.mxu0
    %8229 = vmatpush.msra.mxu0 0.0
    %8230 = vmatpush.msra.mxu0 0.0
    %8231 = vmatpush.msra.mxu0 0.0
    %8232 = vmatpush.msra.mxu0 0.0
    %8233 = vmatpush.msra.mxu0 0.0
    %8234 = vmatpush.msra.mxu0 0.0
    %8235 = vmatpush.msra.mxu0 0.0
    %8236 = vmatpush.msra.mxu0 0.0
    %8237 = vmatpush.msra.mxu0 0.0
    %8238 = vmatpush.msra.mxu0 0.0
    %8239 = vmatpush.msra.mxu0 0.0
    %8240 = vmatpush.msra.mxu0 0.0
    %8241 = vmatpush.msra.mxu0 0.0
    %8242 = vmatpush.msra.mxu0 0.0
    %8243 = vmatpush.msra.mxu0 %v7761
    %8244 = vmatpush.msra.mxu0 %v6521
    %8245 = vmatmul.f32.gmra.mxu0 %v8073
    %v8246 = vpop.f32.mrf.mxu0
    %v8247 = vadd.f32 0.0, %v8246
    %8248 = vmatmul.f32.gmra.mxu0 %v8076
    %v8249 = vpop.f32.mrf.mxu0
    %v8250 = vadd.f32 0.0, %v8249
    %8251 = vmatmul.f32.gmra.mxu0 %v8079
    %v8252 = vpop.f32.mrf.mxu0
    %v8253 = vadd.f32 0.0, %v8252
    %8254 = vmatmul.f32.gmra.mxu0 %v8082
    %v8255 = vpop.f32.mrf.mxu0
    %v8256 = vadd.f32 0.0, %v8255
    %8257 = vdwg.mxu0
    %8258 = vmatpush.msra.mxu0 0.0
    %8259 = vmatpush.msra.mxu0 0.0
    %8260 = vmatpush.msra.mxu0 0.0
    %8261 = vmatpush.msra.mxu0 0.0
    %8262 = vmatpush.msra.mxu0 0.0
    %8263 = vmatpush.msra.mxu0 0.0
    %8264 = vmatpush.msra.mxu0 0.0
    %8265 = vmatpush.msra.mxu0 0.0
    %8266 = vmatpush.msra.mxu0 0.0
    %8267 = vmatpush.msra.mxu0 0.0
    %8268 = vmatpush.msra.mxu0 0.0
    %8269 = vmatpush.msra.mxu0 0.0
    %8270 = vmatpush.msra.mxu0 0.0
    %8271 = vmatpush.msra.mxu0 0.0
    %8272 = vmatpush.msra.mxu0 %v7916
    %8273 = vmatpush.msra.mxu0 %v6676
    %8274 = vmatmul.f32.gmra.mxu0 %v8073
    %v8275 = vpop.f32.mrf.mxu0
    %v8276 = vadd.f32 0.0, %v8275
    %8277 = vmatmul.f32.gmra.mxu0 %v8076
    %v8278 = vpop.f32.mrf.mxu0
    %v8279 = vadd.f32 0.0, %v8278
    %8280 = vmatmul.f32.gmra.mxu0 %v8079
    %v8281 = vpop.f32.mrf.mxu0
    %v8282 = vadd.f32 0.0, %v8281
    %8283 = vmatmul.f32.gmra.mxu0 %v8082
    %v8284 = vpop.f32.mrf.mxu0
    %v8285 = vadd.f32 0.0, %v8284
    %8286 = vdwg.mxu0
    %8287 = vmatpush.msra.mxu0 0.0
    %8288 = vmatpush.msra.mxu0 0.0
    %8289 = vmatpush.msra.mxu0 0.0
    %8290 = vmatpush.msra.mxu0 0.0
    %8291 = vmatpush.msra.mxu0 0.0
    %8292 = vmatpush.msra.mxu0 0.0
    %8293 = vmatpush.msra.mxu0 0.0
    %8294 = vmatpush.msra.mxu0 0.0
    %8295 = vmatpush.msra.mxu0 0.0
    %8296 = vmatpush.msra.mxu0 0.0
    %8297 = vmatpush.msra.mxu0 0.0
    %8298 = vmatpush.msra.mxu0 0.0
    %8299 = vmatpush.msra.mxu0 0.0
    %8300 = vmatpush.msra.mxu0 0.0
    %8301 = vmatpush.msra.mxu0 %v8071
    %8302 = vmatpush.msra.mxu0 %v6831
    %8303 = vmatmul.f32.gmra.mxu0 %v8073
    %v8304 = vpop.f32.mrf.mxu0
    %v8305 = vadd.f32 0.0, %v8304
    %8306 = vmatmul.f32.gmra.mxu0 %v8076
    %v8307 = vpop.f32.mrf.mxu0
    %v8308 = vadd.f32 0.0, %v8307
    %8309 = vmatmul.f32.gmra.mxu0 %v8079
    %v8310 = vpop.f32.mrf.mxu0
    %v8311 = vadd.f32 0.0, %v8310
    %8312 = vmatmul.f32.gmra.mxu0 %v8082
    %v8313 = vpop.f32.mrf.mxu0
    %v8314 = vadd.f32 0.0, %v8313
    %8315 = vdwg.mxu0
    %v8316 = vperm.slane %v12, 0
    %v8317 = vperm.slane %v13, 0
    %v8318 = vperm.slane %v14, 0
    %v8319 = vperm.slane %v15, 0
    %v8320 = vperm.slane %v16, 0
    %v8321 = vperm.slane %v17, 0
    %v8322 = vperm.slane %v18, 0
    %v8323 = vperm.slane %v19, 0
    %8324 = vset.pattern.permute.xlu0 3
    %8325 = vperm.xlu0 %8324, %v30
    %v8326 = vpop.permute.xlu0 %8325
    %8328 = vset.pattern.permute.xlu0 3
    %8329 = vperm.xlu0 %8328, %v31
    %v8330 = vpop.permute.xlu0 %8329
    %8333 = vset.pattern.permute.xlu0 3
    %8334 = vperm.xlu0 %8333, %v32
    %v8335 = vpop.permute.xlu0 %8334
    %8338 = vset.pattern.permute.xlu0 3
    %8339 = vperm.xlu0 %8338, %v33
    %v8340 = vpop.permute.xlu0 %8339
    %v8342 = vmul.f32 %v8316, %v8326
    %v8343 = vmul.f32 %v8317, %v8326
    %v8344 = vmul.f32 %v8318, %v8326
    %v8345 = vmul.f32 %v8319, %v8326
    %v8346 = vmul.f32 %v8320, %v8326
    %v8347 = vmul.f32 %v8321, %v8326
    %v8348 = vmul.f32 %v8322, %v8326
    %v8349 = vmul.f32 %v8323, %v8326
    %v8350 = vmul.f32 %v8316, %v8330
    %v8351 = vmul.f32 %v8317, %v8330
    %v8352 = vmul.f32 %v8318, %v8330
    %v8353 = vmul.f32 %v8319, %v8330
    %v8354 = vmul.f32 %v8320, %v8330
    %v8355 = vmul.f32 %v8321, %v8330
    %v8356 = vmul.f32 %v8322, %v8330
    %v8357 = vmul.f32 %v8323, %v8330
    %v8358 = vmul.f32 %v8316, %v8335
    %v8359 = vmul.f32 %v8317, %v8335
    %v8360 = vmul.f32 %v8318, %v8335
    %v8361 = vmul.f32 %v8319, %v8335
    %v8362 = vmul.f32 %v8320, %v8335
    %v8363 = vmul.f32 %v8321, %v8335
    %v8364 = vmul.f32 %v8322, %v8335
    %v8365 = vmul.f32 %v8323, %v8335
    %v8366 = vmul.f32 %v8316, %v8340
    %v8367 = vmul.f32 %v8317, %v8340
    %v8368 = vmul.f32 %v8318, %v8340
    %v8369 = vmul.f32 %v8319, %v8340
    %v8370 = vmul.f32 %v8320, %v8340
    %v8371 = vmul.f32 %v8321, %v8340
    %v8372 = vmul.f32 %v8322, %v8340
    %v8373 = vmul.f32 %v8323, %v8340
    %v8374 = vmul.f32 %v8342, 1.442695
    %v8375 = vpow.pop %v8374
    %v8376 = vmul.f32 %v8343, 1.442695
    %v8377 = vpow.pop %v8376
    %v8378 = vmul.f32 %v8344, 1.442695
    %v8379 = vpow.pop %v8378
    %v8380 = vmul.f32 %v8345, 1.442695
    %v8381 = vpow.pop %v8380
    %v8382 = vmul.f32 %v8346, 1.442695
    %v8383 = vpow.pop %v8382
    %v8384 = vmul.f32 %v8347, 1.442695
    %v8385 = vpow.pop %v8384
    %v8386 = vmul.f32 %v8348, 1.442695
    %v8387 = vpow.pop %v8386
    %v8388 = vmul.f32 %v8349, 1.442695
    %v8389 = vpow.pop %v8388
    %v8390 = vmul.f32 %v8350, 1.442695
    %v8391 = vpow.pop %v8390
    %v8392 = vmul.f32 %v8351, 1.442695
    %v8393 = vpow.pop %v8392
    %v8394 = vmul.f32 %v8352, 1.442695
    %v8395 = vpow.pop %v8394
    %v8396 = vmul.f32 %v8353, 1.442695
    %v8397 = vpow.pop %v8396
    %v8398 = vmul.f32 %v8354, 1.442695
    %v8399 = vpow.pop %v8398
    %v8400 = vmul.f32 %v8355, 1.442695
    %v8401 = vpow.pop %v8400
    %v8402 = vmul.f32 %v8356, 1.442695
    %v8403 = vpow.pop %v8402
    %v8404 = vmul.f32 %v8357, 1.442695
    %v8405 = vpow.pop %v8404
    %v8406 = vmul.f32 %v8358, 1.442695
    %v8407 = vpow.pop %v8406
    %v8408 = vmul.f32 %v8359, 1.442695
    %v8409 = vpow.pop %v8408
    %v8410 = vmul.f32 %v8360, 1.442695
    %v8411 = vpow.pop %v8410
    %v8412 = vmul.f32 %v8361, 1.442695
    %v8413 = vpow.pop %v8412
    %v8414 = vmul.f32 %v8362, 1.442695
    %v8415 = vpow.pop %v8414
    %v8416 = vmul.f32 %v8363, 1.442695
    %v8417 = vpow.pop %v8416
    %v8418 = vmul.f32 %v8364, 1.442695
    %v8419 = vpow.pop %v8418
    %v8420 = vmul.f32 %v8365, 1.442695
    %v8421 = vpow.pop %v8420
    %v8422 = vmul.f32 %v8366, 1.442695
    %v8423 = vpow.pop %v8422
    %v8424 = vmul.f32 %v8367, 1.442695
    %v8425 = vpow.pop %v8424
    %v8426 = vmul.f32 %v8368, 1.442695
    %v8427 = vpow.pop %v8426
    %v8428 = vmul.f32 %v8369, 1.442695
    %v8429 = vpow.pop %v8428
    %v8430 = vmul.f32 %v8370, 1.442695
    %v8431 = vpow.pop %v8430
    %v8432 = vmul.f32 %v8371, 1.442695
    %v8433 = vpow.pop %v8432
    %v8434 = vmul.f32 %v8372, 1.442695
    %v8435 = vpow.pop %v8434
    %v8436 = vmul.f32 %v8373, 1.442695
    %v8437 = vpow.pop %v8436
    %v8438 = vmul.f32 %v8102, %v8375
    %v8439 = vmul.f32 %v8131, %v8377
    %v8440 = vmul.f32 %v8160, %v8379
    %v8441 = vmul.f32 %v8189, %v8381
    %v8442 = vmul.f32 %v8218, %v8383
    %v8443 = vmul.f32 %v8247, %v8385
    %v8444 = vmul.f32 %v8276, %v8387
    %v8445 = vmul.f32 %v8305, %v8389
    %v8446 = vmul.f32 %v8105, %v8391
    %v8447 = vmul.f32 %v8134, %v8393
    %v8448 = vmul.f32 %v8163, %v8395
    %v8449 = vmul.f32 %v8192, %v8397
    %v8450 = vmul.f32 %v8221, %v8399
    %v8451 = vmul.f32 %v8250, %v8401
    %v8452 = vmul.f32 %v8279, %v8403
    %v8453 = vmul.f32 %v8308, %v8405
    %v8454 = vmul.f32 %v8108, %v8407
    %v8455 = vmul.f32 %v8137, %v8409
    %v8456 = vmul.f32 %v8166, %v8411
    %v8457 = vmul.f32 %v8195, %v8413
    %v8458 = vmul.f32 %v8224, %v8415
    %v8459 = vmul.f32 %v8253, %v8417
    %v8460 = vmul.f32 %v8282, %v8419
    %v8461 = vmul.f32 %v8311, %v8421
    %v8462 = vmul.f32 %v8111, %v8423
    %v8463 = vmul.f32 %v8140, %v8425
    %v8464 = vmul.f32 %v8169, %v8427
    %v8465 = vmul.f32 %v8198, %v8429
    %v8466 = vmul.f32 %v8227, %v8431
    %v8467 = vmul.f32 %v8256, %v8433
    %v8468 = vmul.f32 %v8285, %v8435
    %v8469 = vmul.f32 %v8314, %v8437
    %8470 = vst [vmem:[#allocation2] sm:$0xff] %v8438
    %8471 = vst [vmem:[#allocation2 + $0x8] sm:$0xff] %v8439
    %8472 = vst [vmem:[#allocation2 + $0x10] sm:$0xff] %v8440
    %8473 = vst [vmem:[#allocation2 + $0x18] sm:$0xff] %v8441
    %8474 = vst [vmem:[#allocation2 + $0x20] sm:$0xff] %v8442
    %8475 = vst [vmem:[#allocation2 + $0x28] sm:$0xff] %v8443
    %8476 = vst [vmem:[#allocation2 + $0x30] sm:$0xff] %v8444
    %8477 = vst [vmem:[#allocation2 + $0x38] sm:$0xff] %v8445
    %8478 = vst [vmem:[#allocation2 + $0x40] sm:$0xff] %v8446
    %8479 = vst [vmem:[#allocation2 + $0x48] sm:$0xff] %v8447
    %8480 = vst [vmem:[#allocation2 + $0x50] sm:$0xff] %v8448
    %8481 = vst [vmem:[#allocation2 + $0x58] sm:$0xff] %v8449
    %8482 = vst [vmem:[#allocation2 + $0x60] sm:$0xff] %v8450
    %8483 = vst [vmem:[#allocation2 + $0x68] sm:$0xff] %v8451
    %8484 = vst [vmem:[#allocation2 + $0x70] sm:$0xff] %v8452
    %8485 = vst [vmem:[#allocation2 + $0x78] sm:$0xff] %v8453
    %8486 = vst [vmem:[#allocation2 + $0x80] sm:$0xff] %v8454
    %8487 = vst [vmem:[#allocation2 + $0x88] sm:$0xff] %v8455
    %8488 = vst [vmem:[#allocation2 + $0x90] sm:$0xff] %v8456
    %8489 = vst [vmem:[#allocation2 + $0x98] sm:$0xff] %v8457
    %8490 = vst [vmem:[#allocation2 + $0xa0] sm:$0xff] %v8458
    %8491 = vst [vmem:[#allocation2 + $0xa8] sm:$0xff] %v8459
    %8492 = vst [vmem:[#allocation2 + $0xb0] sm:$0xff] %v8460
    %8493 = vst [vmem:[#allocation2 + $0xb8] sm:$0xff] %v8461
    %8494 = vst [vmem:[#allocation2 + $0xc0] sm:$0xff] %v8462
    %8495 = vst [vmem:[#allocation2 + $0xc8] sm:$0xff] %v8463
    %8496 = vst [vmem:[#allocation2 + $0xd0] sm:$0xff] %v8464
    %8497 = vst [vmem:[#allocation2 + $0xd8] sm:$0xff] %v8465
    %8498 = vst [vmem:[#allocation2 + $0xe0] sm:$0xff] %v8466
    %8499 = vst [vmem:[#allocation2 + $0xe8] sm:$0xff] %v8467
    %8500 = vst [vmem:[#allocation2 + $0xf0] sm:$0xff] %v8468
    %8501 = vst [vmem:[#allocation2 + $0xf8] sm:$0xff] %v8469
    // Predicated region
    $region10: #{implicit_freeform_filter.1} parent=1 // pred_check
      _
    $region11: #{implicit_freeform_filter.1} parent=1 // pred_check_branch
      %8503 = sbr.rel (0) target = $region13
    $region12: #{implicit_freeform_filter.1} parent=1 // pred_region
      %8505 = vsyncadd [#allocation3], 0
      %s8506 = sshll.u32 [#allocation2], 4
      %s8507 = int_to_ptr.vmem [resolvable:$true] %s8506
      %s8508 = sshll.u32 %s2, 4
      %s8509 = int_to_ptr.hbm [resolvable:$true] %s8508
      %8514 = dma.vmem_to_hbm [thread:$0]  %s8507, 4096, %s8509, [#allocation3], 1024, 1024, 64
    $region13: #{implicit_freeform_filter.1} parent=1 // pred_fallthru
      _
    // Predicated region
    $region14: #{implicit_freeform_filter.1} parent=1 // pred_check
      _
    $region15: #{implicit_freeform_filter.1} parent=1 // pred_check_branch
      %8516 = sbr.rel (0) target = $region17
    $region16: #{implicit_freeform_filter.1} parent=1 // pred_region
      %8518 = dma.done [#allocation3], 4096
    $region17: #{implicit_freeform_filter.1} parent=1 // pred_fallthru
      _
    %8519 = vsyncpa [#allocation3], 1

</llo_original>
